<compile_context>
chip_gen: v6e
topology: v6e:2x2x1
jax: 0.10.0
libtpu: 0.0.40
codegen_flags: <defaults>
</compile_context>

<pallas_src>
import functools

import jax
import jax.numpy as jnp
import numpy as np
from jax.experimental import pallas as pl
from jax.experimental.pallas import tpu as pltpu

LANE = 128


def _round_up(x, m):
    return (x + m - 1) // m * m


# ------------------------------ Fused kernel -------------------------------- #

def _make_fused_kernel(*, H, W, out_h, out_w, stride, identity, has_expand,
                       cin, oup):
    def kernel(*refs):
        if has_expand:
            (x_ref, w_exp_ref, shift1_ref, w_dw_ref, shift2_ref,
             w_proj_ref, shift3_ref, o_ref, hid_ref, dw_ref, xpad_ref) = refs
        else:
            (x_ref, w_dw_ref, shift2_ref,
             w_proj_ref, shift3_ref, o_ref, hid_ref, dw_ref) = refs

        chid = hid_ref.shape[-1]

        # One-time scratch init (grid axis is "arbitrary" => strictly
        # sequential, so step 0 runs first on the core owning the scratch).
        # The interior of hid_ref is fully rewritten every step; only the 1-px
        # halo (and the padded lanes of xpad_ref) must stay zero.
        @pl.when(pl.program_id(0) == 0)
        def _():
            hid_ref[...] = jnp.zeros(hid_ref.shape, hid_ref.dtype)
            if has_expand:
                xpad_ref[...] = jnp.zeros(xpad_ref.shape, xpad_ref.dtype)

        xb = x_ref[0]              # (H*W, cin) bf16  [(H*W, chid) if no expand]

        # ---- stage 1: 1x1 expand conv (MXU, f32 acc) + BN shift + ReLU6 ----
        if has_expand:
            # Lane-pad the activation inside VMEM (pad lanes remain zero from
            # the one-time init) so the matmul contraction dim is 128-aligned;
            # the HBM DMA stays at the true cin width.
            xpad_ref[:, :cin] = xb
            h = jnp.dot(xpad_ref[...], w_exp_ref[...],
                        preferred_element_type=jnp.float32)
            h = jnp.clip(h + shift1_ref[...], 0.0, 6.0).astype(hid_ref.dtype)
        else:
            h = xb
        hid_ref[1:H + 1, 1:W + 1, :] = h.reshape(H, W, chid)

        # ---- stage 2: 3x3 depthwise conv (VPU) + BN shift + ReLU6 ----
        # Register accumulation per output row; each row stored exactly once.
        # (Static Python loop: out_h is small here; use fori_loop for large H.)
        shift2 = shift2_ref[...]                                  # (1, chid)
        for y in range(out_h):
            acc = jnp.zeros((out_w, chid), jnp.float32)
            for kh in range(3):
                row = stride * y + kh
                for kw in range(3):
                    if stride == 1:
                        patch = hid_ref[row, kw:kw + out_w, :]
                    else:
                        # TODO(synk): strided sublane load, unexercised below.
                        patch = hid_ref[row, pl.ds(kw, out_w, stride), :]
                    tap = w_dw_ref[kh * 3 + kw:kh * 3 + kw + 1, :]  # (1, chid)
                    acc = acc + patch.astype(jnp.float32) * tap
            dwv = jnp.clip(acc + shift2, 0.0, 6.0).astype(dw_ref.dtype)
            dw_ref[y * out_w:(y + 1) * out_w, :] = dwv

        # ---- stage 3: 1x1 project conv (MXU) + BN shift (+ residual) ----
        out = jnp.dot(dw_ref[...], w_proj_ref[...],
                      preferred_element_type=jnp.float32)         # (M, oup_p)
        out = out[:, :oup] + shift3_ref[...]                      # true channels
        if identity:
            out = out + xb[:, :oup].astype(jnp.float32)
        o_ref[0] = out.astype(o_ref.dtype)

    return kernel


# ------------------------------ Host wrapper --------------------------------- #

def _fold_matmul_weight(w, scale, rows_to, cols_to):
    """Fold BN scale into a (cin, cout) 1x1-conv weight, zero-pad, cast bf16."""
    wf = w * scale[None, :]
    wf = jnp.pad(wf, ((0, rows_to - wf.shape[0]), (0, cols_to - wf.shape[1])))
    return wf.astype(jnp.bfloat16)


def _pad_shift(shift, to):
    return jnp.pad(shift, (0, to - shift.shape[0])).reshape(1, to).astype(jnp.float32)


@functools.partial(jax.jit, static_argnames=("stride", "identity"))
def inverted_residual(x_nchw, params, *, stride, identity):
    """InvertedResidual forward.  Input/output in NCHW (PyTorch layout)."""
    x = jnp.transpose(x_nchw, (0, 2, 3, 1)).astype(jnp.float32)   # -> NHWC
    n, h, w, cin = x.shape
    has_expand = params["w_expand"] is not None
    hidden = params["w_dw"].shape[1]
    oup = params["w_proj"].shape[1]

    cin_p = _round_up(cin, LANE)
    hid_p = _round_up(hidden, LANE)
    oup_p = _round_up(oup, LANE)

    out_h = (h - 1) // stride + 1      # k=3, pad=1
    out_w = (w - 1) // stride + 1
    m_out = out_h * out_w

    # Activation DMA is unpadded (true cin) on the common expand path; only the
    # rare no-expand path (hidden == cin) pads channels on the host so its
    # hidden-scratch store stays full width.
    if has_expand:
        xb = x.reshape(n, h * w, cin).astype(jnp.bfloat16)
        x_lanes = cin
    else:
        xb = jnp.pad(x, ((0, 0), (0, 0), (0, 0), (0, hid_p - cin)))
        xb = xb.reshape(n, h * w, hid_p).astype(jnp.bfloat16)
        x_lanes = hid_p

    args = [xb]
    in_specs = [pl.BlockSpec((1, h * w, x_lanes), lambda i: (i, 0, 0))]
    scratch_shapes = [
        pltpu.VMEM((h + 2, w + 2, hid_p), jnp.bfloat16),   # padded hidden act
        pltpu.VMEM((m_out, hid_p), jnp.bfloat16),          # depthwise output
    ]

    if has_expand:
        w_exp = _fold_matmul_weight(params["w_expand"], params["scale1"],
                                    cin_p, hid_p)
        shift1 = _pad_shift(params["shift1"], hid_p)
        args += [w_exp, shift1]
        in_specs += [pl.BlockSpec((cin_p, hid_p), lambda i: (0, 0)),
                     pl.BlockSpec((1, hid_p), lambda i: (0, 0))]
        scratch_shapes.append(pltpu.VMEM((h * w, cin_p), jnp.bfloat16))

    w_dw = params["w_dw"] * params["scale2"][None, :]
    w_dw = jnp.pad(w_dw, ((0, 0), (0, hid_p - hidden))).astype(jnp.float32)
    shift2 = _pad_shift(params["shift2"], hid_p)
    w_proj = _fold_matmul_weight(params["w_proj"], params["scale3"],
                                 hid_p, oup_p)
    shift3 = params["shift3"].reshape(1, oup).astype(jnp.float32)
    args += [w_dw, shift2, w_proj, shift3]
    in_specs += [pl.BlockSpec((9, hid_p), lambda i: (0, 0)),
                 pl.BlockSpec((1, hid_p), lambda i: (0, 0)),
                 pl.BlockSpec((hid_p, oup_p), lambda i: (0, 0)),
                 pl.BlockSpec((1, oup), lambda i: (0, 0))]

    kernel = _make_fused_kernel(H=h, W=w, out_h=out_h, out_w=out_w,
                                stride=stride, identity=identity,
                                has_expand=has_expand, cin=cin, oup=oup)

    out = pl.pallas_call(
        kernel,
        out_shape=jax.ShapeDtypeStruct((n, m_out, oup), jnp.float32),
        grid_spec=pltpu.PrefetchScalarGridSpec(
            num_scalar_prefetch=0,
            grid=(n,),
            in_specs=in_specs,
            out_specs=pl.BlockSpec((1, m_out, oup), lambda i: (i, 0, 0)),
            scratch_shapes=scratch_shapes,
        ),
        compiler_params=pltpu.CompilerParams(
            # "arbitrary": the grid runs sequentially, so the one-time scratch
            # init at program_id(0)==0 is valid on every chip generation
            # (parallel vs arbitrary is a measured no-op on single-TC chips).
            dimension_semantics=("arbitrary",),
            # Plenty for these scratches; raise for large v6e configs (128 MiB
            # physical), keep <= 32-48 MiB on v7x.
            vmem_limit_bytes=32 * 1024 * 1024,
        ),
    )(*args)

    out = out.reshape(n, out_h, out_w, oup)
    return jnp.transpose(out, (0, 3, 1, 2))                      # -> NCHW


# ------------------------------ Parameter setup ------------------------------ #

def _bn_fold(kg, kb, km, kv, c):
    gamma = jax.random.uniform(kg, (c,), minval=0.5, maxval=1.5)
    beta = jax.random.normal(kb, (c,)) * 0.1
    mean = jax.random.normal(km, (c,)) * 0.1
    var = jax.random.uniform(kv, (c,), minval=0.5, maxval=1.5)
    scale = gamma / jnp.sqrt(var + 1e-5)
    shift = beta - mean * scale
    return scale.astype(jnp.float32), shift.astype(jnp.float32)


def make_params(key, inp, oup, expand_ratio):
    hidden = int(round(inp * expand_ratio))
    k = jax.random.split(key, 16)
    p = {}
    if expand_ratio != 1:
        # Conv2d(inp, hidden, 1) weight (hidden, inp, 1, 1) -> (inp, hidden)
        p["w_expand"] = (jax.random.normal(k[0], (inp, hidden)) * 0.2).astype(jnp.float32)
        p["scale1"], p["shift1"] = _bn_fold(k[1], k[2], k[3], k[4], hidden)
    else:
        p["w_expand"], p["scale1"], p["shift1"] = None, None, None
    # depthwise Conv2d(hidden, hidden, 3, groups=hidden) weight -> (9, hidden)
    p["w_dw"] = (jax.random.normal(k[5], (9, hidden)) * 0.2).astype(jnp.float32)
    p["scale2"], p["shift2"] = _bn_fold(k[6], k[7], k[8], k[9], hidden)
    # Conv2d(hidden, oup, 1) weight (oup, hidden, 1, 1) -> (hidden, oup)
    p["w_proj"] = (jax.random.normal(k[10], (hidden, oup)) * 0.2).astype(jnp.float32)
    p["scale3"], p["shift3"] = _bn_fold(k[11], k[12], k[13], k[14], oup)
    return p


# -------------------------------- Reference ---------------------------------- #
# Mirrors the kernel's bf16 intermediate rounding so the comparison is tight.

def ref_inverted_residual(x_nchw, p, *, stride, identity):
    f32, bf16 = jnp.float32, jnp.bfloat16
    x = jnp.transpose(x_nchw, (0, 2, 3, 1)).astype(f32)
    xb = x.astype(bf16).astype(f32)
    if p["w_expand"] is not None:
        we = (p["w_expand"] * p["scale1"][None, :]).astype(bf16).astype(f32)
        h = jnp.einsum("nhwc,cd->nhwd", xb, we) + p["shift1"]
        h = jnp.clip(h, 0.0, 6.0).astype(bf16).astype(f32)
    else:
        h = xb
    wd = (p["w_dw"] * p["scale2"][None, :]).astype(f32)
    n, H, W, c = h.shape
    hp = jnp.pad(h, ((0, 0), (1, 1), (1, 1), (0, 0)))
    oh = (H - 1) // stride + 1
    ow = (W - 1) // stride + 1
    acc = jnp.zeros((n, oh, ow, c), f32)
    for kh in range(3):
        for kw in range(3):
            acc = acc + hp[:, kh:kh + stride * (oh - 1) + 1:stride,
                           kw:kw + stride * (ow - 1) + 1:stride, :] * wd[kh * 3 + kw]
    d = jnp.clip(acc + p["shift2"], 0.0, 6.0).astype(bf16).astype(f32)
    wp = (p["w_proj"] * p["scale3"][None, :]).astype(bf16).astype(f32)
    out = jnp.einsum("nhwc,cd->nhwd", d, wp) + p["shift3"]
    if identity:
        out = out + xb
    return jnp.transpose(out, (0, 3, 1, 2))


# ---------------------------------- Main ------------------------------------- #

if __name__ == "__main__":
    key = jax.random.PRNGKey(0)
    kx, kp1, kp2 = jax.random.split(key, 3)

    N, H, W = 2, 16, 16

    # Config 1: expand_ratio > 1, identity residual (inp == oup, stride == 1)
    inp, oup, stride, expand_ratio = 4, 4, 1, 4
    x = jax.random.normal(kx, (N, inp, H, W), dtype=jnp.float32)
    params = make_params(kp1, inp, oup, expand_ratio)
    identity = (stride == 1 and inp == oup)
    y = inverted_residual(x, params, stride=stride, identity=identity)
    jax.block_until_ready(y)
    y_ref = ref_inverted_residual(x, params, stride=stride, identity=identity)
    np.testing.assert_allclose(np.asarray(y), np.asarray(y_ref), rtol=1e-2, atol=1e-2)

    # Config 2: expand_ratio == 1 branch, no identity (inp != oup)
    inp2, oup2, stride2, er2 = 4, 6, 1, 1
    params2 = make_params(kp2, inp2, oup2, er2)
    identity2 = (stride2 == 1 and inp2 == oup2)
    y2 = inverted_residual(x, params2, stride=stride2, identity=identity2)
    jax.block_until_ready(y2)
    y2_ref = ref_inverted_residual(x, params2, stride=stride2, identity=identity2)
    np.testing.assert_allclose(np.asarray(y2), np.asarray(y2_ref), rtol=1e-2, atol=1e-2)

    print("KERNEL_OK")
</pallas_src>

<mosaic_0001>
module attributes {stable_mosaic.version = 11 : i64} {
  func.func @kernel(%arg0: i32, %arg1: memref<1x256x4xbf16, #tpu.memory_space<vmem>>, %arg2: memref<128x128xbf16, #tpu.memory_space<vmem>>, %arg3: memref<1x128xf32, #tpu.memory_space<vmem>>, %arg4: memref<9x128xf32, #tpu.memory_space<vmem>>, %arg5: memref<1x128xf32, #tpu.memory_space<vmem>>, %arg6: memref<128x128xbf16, #tpu.memory_space<vmem>>, %arg7: memref<1x4xf32, #tpu.memory_space<vmem>>, %arg8: memref<1x256x4xf32, #tpu.memory_space<vmem>>, %arg9: memref<18x18x128xbf16, #tpu.memory_space<vmem>>, %arg10: memref<256x128xbf16, #tpu.memory_space<vmem>>, %arg11: memref<256x128xbf16, #tpu.memory_space<vmem>>) attributes {dimension_semantics = [#tpu.dimension_semantics<arbitrary>], iteration_bounds = array<i64: 2>, scalar_prefetch = 0 : i64, scratch_operands = 3 : i64, tpu.core_type = #tpu.core_type<tc>, window_params = [{transform_indices = @transform_0, window_bounds = array<i64: 1, 256, 4>}, {pipeline_mode = #tpu.pipeline_mode<synchronous>, transform_indices = @transform_1, window_bounds = array<i64: 128, 128>}, {pipeline_mode = #tpu.pipeline_mode<synchronous>, transform_indices = @transform_2, window_bounds = array<i64: 1, 128>}, {pipeline_mode = #tpu.pipeline_mode<synchronous>, transform_indices = @transform_3, window_bounds = array<i64: 9, 128>}, {pipeline_mode = #tpu.pipeline_mode<synchronous>, transform_indices = @transform_4, window_bounds = array<i64: 1, 128>}, {pipeline_mode = #tpu.pipeline_mode<synchronous>, transform_indices = @transform_5, window_bounds = array<i64: 128, 128>}, {pipeline_mode = #tpu.pipeline_mode<synchronous>, transform_indices = @transform_6, window_bounds = array<i64: 1, 4>}, {transform_indices = @transform_7, window_bounds = array<i64: 1, 256, 4>}]} {
    %c0_i32 = arith.constant 0 : i32
    %0 = arith.cmpi eq, %arg0, %c0_i32 : i32
    %1 = arith.extui %0 : i1 to i32
    %c0_i32_0 = arith.constant 0 : i32
    %2 = arith.cmpi ne, %1, %c0_i32_0 : i32
    scf.if %2 {
      %cst_797 = arith.constant 0.000000e+00 : bf16
      %1184 = vector.broadcast %cst_797 : bf16 to vector<18x18x128xbf16>
      %c0_798 = arith.constant 0 : index
      %c0_799 = arith.constant 0 : index
      %c0_800 = arith.constant 0 : index
      %1185 = vector.load %arg9[%c0_798, %c0_799, %c0_800] : memref<18x18x128xbf16, #tpu.memory_space<vmem>>, vector<18x18x128xbf16>
      tpu.vector_store %arg9[%c0_798, %c0_799, %c0_800], %1184 {strides = array<i32>} : memref<18x18x128xbf16, #tpu.memory_space<vmem>>, vector<18x18x128xbf16>,
      %cst_801 = arith.constant 0.000000e+00 : bf16
      %1186 = vector.broadcast %cst_801 : bf16 to vector<256x128xbf16>
      %c0_802 = arith.constant 0 : index
      %c0_803 = arith.constant 0 : index
      %1187 = vector.load %arg11[%c0_802, %c0_803] : memref<256x128xbf16, #tpu.memory_space<vmem>>, vector<256x128xbf16>
      tpu.vector_store %arg11[%c0_802, %c0_803], %1186 {strides = array<i32>} : memref<256x128xbf16, #tpu.memory_space<vmem>>, vector<256x128xbf16>,
    } else {
    }
    %c0 = arith.constant 0 : index
    %c0_1 = arith.constant 0 : index
    %c0_2 = arith.constant 0 : index
    %3 = vector.load %arg1[%c0, %c0_1, %c0_2] : memref<1x256x4xbf16, #tpu.memory_space<vmem>>, vector<1x256x4xbf16>
    %4 = vector.shape_cast %3 : vector<1x256x4xbf16> to vector<256x4xbf16>
    %c0_3 = arith.constant 0 : index
    %c0_4 = arith.constant 0 : index
    %5 = vector.load %arg11[%c0_3, %c0_4] : memref<256x128xbf16, #tpu.memory_space<vmem>>, vector<256x4xbf16>
    tpu.vector_store %arg11[%c0_3, %c0_4], %4 {strides = array<i32>} : memref<256x128xbf16, #tpu.memory_space<vmem>>, vector<256x4xbf16>,
    %c0_5 = arith.constant 0 : index
    %c0_6 = arith.constant 0 : index
    %6 = vector.load %arg11[%c0_5, %c0_6] : memref<256x128xbf16, #tpu.memory_space<vmem>>, vector<256x128xbf16>
    %c0_7 = arith.constant 0 : index
    %c0_8 = arith.constant 0 : index
    %7 = vector.load %arg2[%c0_7, %c0_8] : memref<128x128xbf16, #tpu.memory_space<vmem>>, vector<128x128xbf16>
    %cst = arith.constant dense<0.000000e+00> : vector<256x128xf32>
    %8 = tpu.matmul %6, %7, %cst {dimension_numbers = #tpu.dot_dimension_numbers<[1], [0], [0], [1], [0, 0, 1, 1], [], []>} : vector<256x128xbf16>, vector<128x128xbf16>, vector<256x128xf32> -> vector<256x128xf32>
    %c0_9 = arith.constant 0 : index
    %c0_10 = arith.constant 0 : index
    %9 = vector.load %arg3[%c0_9, %c0_10] : memref<1x128xf32, #tpu.memory_space<vmem>>, vector<1x128xf32>
    %10 = vector.broadcast %9 : vector<1x128xf32> to vector<256x128xf32>
    %11 = arith.addf %8, %10 : vector<256x128xf32>
    %cst_11 = arith.constant 0.000000e+00 : f32
    %cst_12 = arith.constant 6.000000e+00 : f32
    %12 = vector.broadcast %cst_11 : f32 to vector<256x128xf32>
    %13 = arith.maximumf %12, %11 : vector<256x128xf32>
    %14 = vector.broadcast %cst_12 : f32 to vector<256x128xf32>
    %15 = arith.minimumf %14, %13 : vector<256x128xf32>
    %16 = arith.truncf %15 : vector<256x128xf32> to vector<256x128xbf16>
    %17 = vector.shape_cast %16 : vector<256x128xbf16> to vector<16x16x128xbf16>
    %c1 = arith.constant 1 : index
    %c1_13 = arith.constant 1 : index
    %c0_14 = arith.constant 0 : index
    %18 = vector.load %arg9[%c1, %c1_13, %c0_14] : memref<18x18x128xbf16, #tpu.memory_space<vmem>>, vector<16x16x128xbf16>
    tpu.vector_store %arg9[%c1, %c1_13, %c0_14], %17 {strides = array<i32>} : memref<18x18x128xbf16, #tpu.memory_space<vmem>>, vector<16x16x128xbf16>,
    %c0_15 = arith.constant 0 : index
    %c0_16 = arith.constant 0 : index
    %19 = vector.load %arg5[%c0_15, %c0_16] : memref<1x128xf32, #tpu.memory_space<vmem>>, vector<1x128xf32>
    %cst_17 = arith.constant 0.000000e+00 : f32
    %20 = vector.broadcast %cst_17 : f32 to vector<16x128xf32>
    %c0_18 = arith.constant 0 : index
    %c0_19 = arith.constant 0 : index
    %c0_20 = arith.constant 0 : index
    %21 = vector.load %arg9[%c0_18, %c0_19, %c0_20] : memref<18x18x128xbf16, #tpu.memory_space<vmem>>, vector<1x16x128xbf16>
    %22 = vector.shape_cast %21 : vector<1x16x128xbf16> to vector<16x128xbf16>
    %c0_21 = arith.constant 0 : index
    %c0_22 = arith.constant 0 : index
    %23 = vector.load %arg4[%c0_21, %c0_22] : memref<9x128xf32, #tpu.memory_space<vmem>>, vector<1x128xf32>
    %24 = arith.extf %22 : vector<16x128xbf16> to vector<16x128xf32>
    %25 = vector.broadcast %23 : vector<1x128xf32> to vector<16x128xf32>
    %26 = arith.mulf %24, %25 : vector<16x128xf32>
    %27 = arith.addf %20, %26 : vector<16x128xf32>
    %c0_23 = arith.constant 0 : index
    %c1_24 = arith.constant 1 : index
    %c0_25 = arith.constant 0 : index
    %28 = vector.load %arg9[%c0_23, %c1_24, %c0_25] : memref<18x18x128xbf16, #tpu.memory_space<vmem>>, vector<1x16x128xbf16>
    %29 = vector.shape_cast %28 : vector<1x16x128xbf16> to vector<16x128xbf16>
    %c1_26 = arith.constant 1 : index
    %c0_27 = arith.constant 0 : index
    %30 = vector.load %arg4[%c1_26, %c0_27] : memref<9x128xf32, #tpu.memory_space<vmem>>, vector<1x128xf32>
    %31 = arith.extf %29 : vector<16x128xbf16> to vector<16x128xf32>
    %32 = vector.broadcast %30 : vector<1x128xf32> to vector<16x128xf32>
    %33 = arith.mulf %31, %32 : vector<16x128xf32>
    %34 = arith.addf %27, %33 : vector<16x128xf32>
    %c0_28 = arith.constant 0 : index
    %c2 = arith.constant 2 : index
    %c0_29 = arith.constant 0 : index
    %35 = vector.load %arg9[%c0_28, %c2, %c0_29] : memref<18x18x128xbf16, #tpu.memory_space<vmem>>, vector<1x16x128xbf16>
    %36 = vector.shape_cast %35 : vector<1x16x128xbf16> to vector<16x128xbf16>
    %c2_30 = arith.constant 2 : index
    %c0_31 = arith.constant 0 : index
    %37 = vector.load %arg4[%c2_30, %c0_31] : memref<9x128xf32, #tpu.memory_space<vmem>>, vector<1x128xf32>
    %38 = arith.extf %36 : vector<16x128xbf16> to vector<16x128xf32>
    %39 = vector.broadcast %37 : vector<1x128xf32> to vector<16x128xf32>
    %40 = arith.mulf %38, %39 : vector<16x128xf32>
    %41 = arith.addf %34, %40 : vector<16x128xf32>
    %c1_32 = arith.constant 1 : index
    %c0_33 = arith.constant 0 : index
    %c0_34 = arith.constant 0 : index
    %42 = vector.load %arg9[%c1_32, %c0_33, %c0_34] : memref<18x18x128xbf16, #tpu.memory_space<vmem>>, vector<1x16x128xbf16>
    %43 = vector.shape_cast %42 : vector<1x16x128xbf16> to vector<16x128xbf16>
    %c3 = arith.constant 3 : index
    %c0_35 = arith.constant 0 : index
    %44 = vector.load %arg4[%c3, %c0_35] : memref<9x128xf32, #tpu.memory_space<vmem>>, vector<1x128xf32>
    %45 = arith.extf %43 : vector<16x128xbf16> to vector<16x128xf32>
    %46 = vector.broadcast %44 : vector<1x128xf32> to vector<16x128xf32>
    %47 = arith.mulf %45, %46 : vector<16x128xf32>
    %48 = arith.addf %41, %47 : vector<16x128xf32>
    %c1_36 = arith.constant 1 : index
    %c1_37 = arith.constant 1 : index
    %c0_38 = arith.constant 0 : index
    %49 = vector.load %arg9[%c1_36, %c1_37, %c0_38] : memref<18x18x128xbf16, #tpu.memory_space<vmem>>, vector<1x16x128xbf16>
    %50 = vector.shape_cast %49 : vector<1x16x128xbf16> to vector<16x128xbf16>
    %c4 = arith.constant 4 : index
    %c0_39 = arith.constant 0 : index
    %51 = vector.load %arg4[%c4, %c0_39] : memref<9x128xf32, #tpu.memory_space<vmem>>, vector<1x128xf32>
    %52 = arith.extf %50 : vector<16x128xbf16> to vector<16x128xf32>
    %53 = vector.broadcast %51 : vector<1x128xf32> to vector<16x128xf32>
    %54 = arith.mulf %52, %53 : vector<16x128xf32>
    %55 = arith.addf %48, %54 : vector<16x128xf32>
    %c1_40 = arith.constant 1 : index
    %c2_41 = arith.constant 2 : index
    %c0_42 = arith.constant 0 : index
    %56 = vector.load %arg9[%c1_40, %c2_41, %c0_42] : memref<18x18x128xbf16, #tpu.memory_space<vmem>>, vector<1x16x128xbf16>
    %57 = vector.shape_cast %56 : vector<1x16x128xbf16> to vector<16x128xbf16>
    %c5 = arith.constant 5 : index
    %c0_43 = arith.constant 0 : index
    %58 = vector.load %arg4[%c5, %c0_43] : memref<9x128xf32, #tpu.memory_space<vmem>>, vector<1x128xf32>
    %59 = arith.extf %57 : vector<16x128xbf16> to vector<16x128xf32>
    %60 = vector.broadcast %58 : vector<1x128xf32> to vector<16x128xf32>
    %61 = arith.mulf %59, %60 : vector<16x128xf32>
    %62 = arith.addf %55, %61 : vector<16x128xf32>
    %c2_44 = arith.constant 2 : index
    %c0_45 = arith.constant 0 : index
    %c0_46 = arith.constant 0 : index
    %63 = vector.load %arg9[%c2_44, %c0_45, %c0_46] : memref<18x18x128xbf16, #tpu.memory_space<vmem>>, vector<1x16x128xbf16>
    %64 = vector.shape_cast %63 : vector<1x16x128xbf16> to vector<16x128xbf16>
    %c6 = arith.constant 6 : index
    %c0_47 = arith.constant 0 : index
    %65 = vector.load %arg4[%c6, %c0_47] : memref<9x128xf32, #tpu.memory_space<vmem>>, vector<1x128xf32>
    %66 = arith.extf %64 : vector<16x128xbf16> to vector<16x128xf32>
    %67 = vector.broadcast %65 : vector<1x128xf32> to vector<16x128xf32>
    %68 = arith.mulf %66, %67 : vector<16x128xf32>
    %69 = arith.addf %62, %68 : vector<16x128xf32>
    %c2_48 = arith.constant 2 : index
    %c1_49 = arith.constant 1 : index
    %c0_50 = arith.constant 0 : index
    %70 = vector.load %arg9[%c2_48, %c1_49, %c0_50] : memref<18x18x128xbf16, #tpu.memory_space<vmem>>, vector<1x16x128xbf16>
    %71 = vector.shape_cast %70 : vector<1x16x128xbf16> to vector<16x128xbf16>
    %c7 = arith.constant 7 : index
    %c0_51 = arith.constant 0 : index
    %72 = vector.load %arg4[%c7, %c0_51] : memref<9x128xf32, #tpu.memory_space<vmem>>, vector<1x128xf32>
    %73 = arith.extf %71 : vector<16x128xbf16> to vector<16x128xf32>
    %74 = vector.broadcast %72 : vector<1x128xf32> to vector<16x128xf32>
    %75 = arith.mulf %73, %74 : vector<16x128xf32>
    %76 = arith.addf %69, %75 : vector<16x128xf32>
    %c2_52 = arith.constant 2 : index
    %c2_53 = arith.constant 2 : index
    %c0_54 = arith.constant 0 : index
    %77 = vector.load %arg9[%c2_52, %c2_53, %c0_54] : memref<18x18x128xbf16, #tpu.memory_space<vmem>>, vector<1x16x128xbf16>
    %78 = vector.shape_cast %77 : vector<1x16x128xbf16> to vector<16x128xbf16>
    %c8 = arith.constant 8 : index
    %c0_55 = arith.constant 0 : index
    %79 = vector.load %arg4[%c8, %c0_55] : memref<9x128xf32, #tpu.memory_space<vmem>>, vector<1x128xf32>
    %80 = arith.extf %78 : vector<16x128xbf16> to vector<16x128xf32>
    %81 = vector.broadcast %79 : vector<1x128xf32> to vector<16x128xf32>
    %82 = arith.mulf %80, %81 : vector<16x128xf32>
    %83 = arith.addf %76, %82 : vector<16x128xf32>
    %84 = vector.broadcast %19 : vector<1x128xf32> to vector<16x128xf32>
    %85 = arith.addf %83, %84 : vector<16x128xf32>
    %cst_56 = arith.constant 0.000000e+00 : f32
    %cst_57 = arith.constant 6.000000e+00 : f32
    %86 = vector.broadcast %cst_56 : f32 to vector<16x128xf32>
    %87 = arith.maximumf %86, %85 : vector<16x128xf32>
    %88 = vector.broadcast %cst_57 : f32 to vector<16x128xf32>
    %89 = arith.minimumf %88, %87 : vector<16x128xf32>
    %90 = arith.truncf %89 : vector<16x128xf32> to vector<16x128xbf16>
    %c0_58 = arith.constant 0 : index
    %c0_59 = arith.constant 0 : index
    %91 = vector.load %arg10[%c0_58, %c0_59] : memref<256x128xbf16, #tpu.memory_space<vmem>>, vector<16x128xbf16>
    tpu.vector_store %arg10[%c0_58, %c0_59], %90 {strides = array<i32>} : memref<256x128xbf16, #tpu.memory_space<vmem>>, vector<16x128xbf16>,
    %cst_60 = arith.constant 0.000000e+00 : f32
    %92 = vector.broadcast %cst_60 : f32 to vector<16x128xf32>
    %c1_61 = arith.constant 1 : index
    %c0_62 = arith.constant 0 : index
    %c0_63 = arith.constant 0 : index
    %93 = vector.load %arg9[%c1_61, %c0_62, %c0_63] : memref<18x18x128xbf16, #tpu.memory_space<vmem>>, vector<1x16x128xbf16>
    %94 = vector.shape_cast %93 : vector<1x16x128xbf16> to vector<16x128xbf16>
    %c0_64 = arith.constant 0 : index
    %c0_65 = arith.constant 0 : index
    %95 = vector.load %arg4[%c0_64, %c0_65] : memref<9x128xf32, #tpu.memory_space<vmem>>, vector<1x128xf32>
    %96 = arith.extf %94 : vector<16x128xbf16> to vector<16x128xf32>
    %97 = vector.broadcast %95 : vector<1x128xf32> to vector<16x128xf32>
    %98 = arith.mulf %96, %97 : vector<16x128xf32>
    %99 = arith.addf %92, %98 : vector<16x128xf32>
    %c1_66 = arith.constant 1 : index
    %c1_67 = arith.constant 1 : index
    %c0_68 = arith.constant 0 : index
    %100 = vector.load %arg9[%c1_66, %c1_67, %c0_68] : memref<18x18x128xbf16, #tpu.memory_space<vmem>>, vector<1x16x128xbf16>
    %101 = vector.shape_cast %100 : vector<1x16x128xbf16> to vector<16x128xbf16>
    %c1_69 = arith.constant 1 : index
    %c0_70 = arith.constant 0 : index
    %102 = vector.load %arg4[%c1_69, %c0_70] : memref<9x128xf32, #tpu.memory_space<vmem>>, vector<1x128xf32>
    %103 = arith.extf %101 : vector<16x128xbf16> to vector<16x128xf32>
    %104 = vector.broadcast %102 : vector<1x128xf32> to vector<16x128xf32>
    %105 = arith.mulf %103, %104 : vector<16x128xf32>
    %106 = arith.addf %99, %105 : vector<16x128xf32>
    %c1_71 = arith.constant 1 : index
    %c2_72 = arith.constant 2 : index
    %c0_73 = arith.constant 0 : index
    %107 = vector.load %arg9[%c1_71, %c2_72, %c0_73] : memref<18x18x128xbf16, #tpu.memory_space<vmem>>, vector<1x16x128xbf16>
    %108 = vector.shape_cast %107 : vector<1x16x128xbf16> to vector<16x128xbf16>
    %c2_74 = arith.constant 2 : index
    %c0_75 = arith.constant 0 : index
    %109 = vector.load %arg4[%c2_74, %c0_75] : memref<9x128xf32, #tpu.memory_space<vmem>>, vector<1x128xf32>
    %110 = arith.extf %108 : vector<16x128xbf16> to vector<16x128xf32>
    %111 = vector.broadcast %109 : vector<1x128xf32> to vector<16x128xf32>
    %112 = arith.mulf %110, %111 : vector<16x128xf32>
    %113 = arith.addf %106, %112 : vector<16x128xf32>
    %c2_76 = arith.constant 2 : index
    %c0_77 = arith.constant 0 : index
    %c0_78 = arith.constant 0 : index
    %114 = vector.load %arg9[%c2_76, %c0_77, %c0_78] : memref<18x18x128xbf16, #tpu.memory_space<vmem>>, vector<1x16x128xbf16>
    %115 = vector.shape_cast %114 : vector<1x16x128xbf16> to vector<16x128xbf16>
    %c3_79 = arith.constant 3 : index
    %c0_80 = arith.constant 0 : index
    %116 = vector.load %arg4[%c3_79, %c0_80] : memref<9x128xf32, #tpu.memory_space<vmem>>, vector<1x128xf32>
    %117 = arith.extf %115 : vector<16x128xbf16> to vector<16x128xf32>
    %118 = vector.broadcast %116 : vector<1x128xf32> to vector<16x128xf32>
    %119 = arith.mulf %117, %118 : vector<16x128xf32>
    %120 = arith.addf %113, %119 : vector<16x128xf32>
    %c2_81 = arith.constant 2 : index
    %c1_82 = arith.constant 1 : index
    %c0_83 = arith.constant 0 : index
    %121 = vector.load %arg9[%c2_81, %c1_82, %c0_83] : memref<18x18x128xbf16, #tpu.memory_space<vmem>>, vector<1x16x128xbf16>
    %122 = vector.shape_cast %121 : vector<1x16x128xbf16> to vector<16x128xbf16>
    %c4_84 = arith.constant 4 : index
    %c0_85 = arith.constant 0 : index
    %123 = vector.load %arg4[%c4_84, %c0_85] : memref<9x128xf32, #tpu.memory_space<vmem>>, vector<1x128xf32>
    %124 = arith.extf %122 : vector<16x128xbf16> to vector<16x128xf32>
    %125 = vector.broadcast %123 : vector<1x128xf32> to vector<16x128xf32>
    %126 = arith.mulf %124, %125 : vector<16x128xf32>
    %127 = arith.addf %120, %126 : vector<16x128xf32>
    %c2_86 = arith.constant 2 : index
    %c2_87 = arith.constant 2 : index
    %c0_88 = arith.constant 0 : index
    %128 = vector.load %arg9[%c2_86, %c2_87, %c0_88] : memref<18x18x128xbf16, #tpu.memory_space<vmem>>, vector<1x16x128xbf16>
    %129 = vector.shape_cast %128 : vector<1x16x128xbf16> to vector<16x128xbf16>
    %c5_89 = arith.constant 5 : index
    %c0_90 = arith.constant 0 : index
    %130 = vector.load %arg4[%c5_89, %c0_90] : memref<9x128xf32, #tpu.memory_space<vmem>>, vector<1x128xf32>
    %131 = arith.extf %129 : vector<16x128xbf16> to vector<16x128xf32>
    %132 = vector.broadcast %130 : vector<1x128xf32> to vector<16x128xf32>
    %133 = arith.mulf %131, %132 : vector<16x128xf32>
    %134 = arith.addf %127, %133 : vector<16x128xf32>
    %c3_91 = arith.constant 3 : index
    %c0_92 = arith.constant 0 : index
    %c0_93 = arith.constant 0 : index
    %135 = vector.load %arg9[%c3_91, %c0_92, %c0_93] : memref<18x18x128xbf16, #tpu.memory_space<vmem>>, vector<1x16x128xbf16>
    %136 = vector.shape_cast %135 : vector<1x16x128xbf16> to vector<16x128xbf16>
    %c6_94 = arith.constant 6 : index
    %c0_95 = arith.constant 0 : index
    %137 = vector.load %arg4[%c6_94, %c0_95] : memref<9x128xf32, #tpu.memory_space<vmem>>, vector<1x128xf32>
    %138 = arith.extf %136 : vector<16x128xbf16> to vector<16x128xf32>
    %139 = vector.broadcast %137 : vector<1x128xf32> to vector<16x128xf32>
    %140 = arith.mulf %138, %139 : vector<16x128xf32>
    %141 = arith.addf %134, %140 : vector<16x128xf32>
    %c3_96 = arith.constant 3 : index
    %c1_97 = arith.constant 1 : index
    %c0_98 = arith.constant 0 : index
    %142 = vector.load %arg9[%c3_96, %c1_97, %c0_98] : memref<18x18x128xbf16, #tpu.memory_space<vmem>>, vector<1x16x128xbf16>
    %143 = vector.shape_cast %142 : vector<1x16x128xbf16> to vector<16x128xbf16>
    %c7_99 = arith.constant 7 : index
    %c0_100 = arith.constant 0 : index
    %144 = vector.load %arg4[%c7_99, %c0_100] : memref<9x128xf32, #tpu.memory_space<vmem>>, vector<1x128xf32>
    %145 = arith.extf %143 : vector<16x128xbf16> to vector<16x128xf32>
    %146 = vector.broadcast %144 : vector<1x128xf32> to vector<16x128xf32>
    %147 = arith.mulf %145, %146 : vector<16x128xf32>
    %148 = arith.addf %141, %147 : vector<16x128xf32>
    %c3_101 = arith.constant 3 : index
    %c2_102 = arith.constant 2 : index
    %c0_103 = arith.constant 0 : index
    %149 = vector.load %arg9[%c3_101, %c2_102, %c0_103] : memref<18x18x128xbf16, #tpu.memory_space<vmem>>, vector<1x16x128xbf16>
    %150 = vector.shape_cast %149 : vector<1x16x128xbf16> to vector<16x128xbf16>
    %c8_104 = arith.constant 8 : index
    %c0_105 = arith.constant 0 : index
    %151 = vector.load %arg4[%c8_104, %c0_105] : memref<9x128xf32, #tpu.memory_space<vmem>>, vector<1x128xf32>
    %152 = arith.extf %150 : vector<16x128xbf16> to vector<16x128xf32>
    %153 = vector.broadcast %151 : vector<1x128xf32> to vector<16x128xf32>
    %154 = arith.mulf %152, %153 : vector<16x128xf32>
    %155 = arith.addf %148, %154 : vector<16x128xf32>
    %156 = vector.broadcast %19 : vector<1x128xf32> to vector<16x128xf32>
    %157 = arith.addf %155, %156 : vector<16x128xf32>
    %cst_106 = arith.constant 0.000000e+00 : f32
    %cst_107 = arith.constant 6.000000e+00 : f32
    %158 = vector.broadcast %cst_106 : f32 to vector<16x128xf32>
    %159 = arith.maximumf %158, %157 : vector<16x128xf32>
    %160 = vector.broadcast %cst_107 : f32 to vector<16x128xf32>
    %161 = arith.minimumf %160, %159 : vector<16x128xf32>
    %162 = arith.truncf %161 : vector<16x128xf32> to vector<16x128xbf16>
    %c16 = arith.constant 16 : index
    %c0_108 = arith.constant 0 : index
    %163 = vector.load %arg10[%c16, %c0_108] : memref<256x128xbf16, #tpu.memory_space<vmem>>, vector<16x128xbf16>
    tpu.vector_store %arg10[%c16, %c0_108], %162 {strides = array<i32>} : memref<256x128xbf16, #tpu.memory_space<vmem>>, vector<16x128xbf16>,
    %cst_109 = arith.constant 0.000000e+00 : f32
    %164 = vector.broadcast %cst_109 : f32 to vector<16x128xf32>
    %c2_110 = arith.constant 2 : index
    %c0_111 = arith.constant 0 : index
    %c0_112 = arith.constant 0 : index
    %165 = vector.load %arg9[%c2_110, %c0_111, %c0_112] : memref<18x18x128xbf16, #tpu.memory_space<vmem>>, vector<1x16x128xbf16>
    %166 = vector.shape_cast %165 : vector<1x16x128xbf16> to vector<16x128xbf16>
    %c0_113 = arith.constant 0 : index
    %c0_114 = arith.constant 0 : index
    %167 = vector.load %arg4[%c0_113, %c0_114] : memref<9x128xf32, #tpu.memory_space<vmem>>, vector<1x128xf32>
    %168 = arith.extf %166 : vector<16x128xbf16> to vector<16x128xf32>
    %169 = vector.broadcast %167 : vector<1x128xf32> to vector<16x128xf32>
    %170 = arith.mulf %168, %169 : vector<16x128xf32>
    %171 = arith.addf %164, %170 : vector<16x128xf32>
    %c2_115 = arith.constant 2 : index
    %c1_116 = arith.constant 1 : index
    %c0_117 = arith.constant 0 : index
    %172 = vector.load %arg9[%c2_115, %c1_116, %c0_117] : memref<18x18x128xbf16, #tpu.memory_space<vmem>>, vector<1x16x128xbf16>
    %173 = vector.shape_cast %172 : vector<1x16x128xbf16> to vector<16x128xbf16>
    %c1_118 = arith.constant 1 : index
    %c0_119 = arith.constant 0 : index
    %174 = vector.load %arg4[%c1_118, %c0_119] : memref<9x128xf32, #tpu.memory_space<vmem>>, vector<1x128xf32>
    %175 = arith.extf %173 : vector<16x128xbf16> to vector<16x128xf32>
    %176 = vector.broadcast %174 : vector<1x128xf32> to vector<16x128xf32>
    %177 = arith.mulf %175, %176 : vector<16x128xf32>
    %178 = arith.addf %171, %177 : vector<16x128xf32>
    %c2_120 = arith.constant 2 : index
    %c2_121 = arith.constant 2 : index
    %c0_122 = arith.constant 0 : index
    %179 = vector.load %arg9[%c2_120, %c2_121, %c0_122] : memref<18x18x128xbf16, #tpu.memory_space<vmem>>, vector<1x16x128xbf16>
    %180 = vector.shape_cast %179 : vector<1x16x128xbf16> to vector<16x128xbf16>
    %c2_123 = arith.constant 2 : index
    %c0_124 = arith.constant 0 : index
    %181 = vector.load %arg4[%c2_123, %c0_124] : memref<9x128xf32, #tpu.memory_space<vmem>>, vector<1x128xf32>
    %182 = arith.extf %180 : vector<16x128xbf16> to vector<16x128xf32>
    %183 = vector.broadcast %181 : vector<1x128xf32> to vector<16x128xf32>
    %184 = arith.mulf %182, %183 : vector<16x128xf32>
    %185 = arith.addf %178, %184 : vector<16x128xf32>
    %c3_125 = arith.constant 3 : index
    %c0_126 = arith.constant 0 : index
    %c0_127 = arith.constant 0 : index
    %186 = vector.load %arg9[%c3_125, %c0_126, %c0_127] : memref<18x18x128xbf16, #tpu.memory_space<vmem>>, vector<1x16x128xbf16>
    %187 = vector.shape_cast %186 : vector<1x16x128xbf16> to vector<16x128xbf16>
    %c3_128 = arith.constant 3 : index
    %c0_129 = arith.constant 0 : index
    %188 = vector.load %arg4[%c3_128, %c0_129] : memref<9x128xf32, #tpu.memory_space<vmem>>, vector<1x128xf32>
    %189 = arith.extf %187 : vector<16x128xbf16> to vector<16x128xf32>
    %190 = vector.broadcast %188 : vector<1x128xf32> to vector<16x128xf32>
    %191 = arith.mulf %189, %190 : vector<16x128xf32>
    %192 = arith.addf %185, %191 : vector<16x128xf32>
    %c3_130 = arith.constant 3 : index
    %c1_131 = arith.constant 1 : index
    %c0_132 = arith.constant 0 : index
    %193 = vector.load %arg9[%c3_130, %c1_131, %c0_132] : memref<18x18x128xbf16, #tpu.memory_space<vmem>>, vector<1x16x128xbf16>
    %194 = vector.shape_cast %193 : vector<1x16x128xbf16> to vector<16x128xbf16>
    %c4_133 = arith.constant 4 : index
    %c0_134 = arith.constant 0 : index
    %195 = vector.load %arg4[%c4_133, %c0_134] : memref<9x128xf32, #tpu.memory_space<vmem>>, vector<1x128xf32>
    %196 = arith.extf %194 : vector<16x128xbf16> to vector<16x128xf32>
    %197 = vector.broadcast %195 : vector<1x128xf32> to vector<16x128xf32>
    %198 = arith.mulf %196, %197 : vector<16x128xf32>
    %199 = arith.addf %192, %198 : vector<16x128xf32>
    %c3_135 = arith.constant 3 : index
    %c2_136 = arith.constant 2 : index
    %c0_137 = arith.constant 0 : index
    %200 = vector.load %arg9[%c3_135, %c2_136, %c0_137] : memref<18x18x128xbf16, #tpu.memory_space<vmem>>, vector<1x16x128xbf16>
    %201 = vector.shape_cast %200 : vector<1x16x128xbf16> to vector<16x128xbf16>
    %c5_138 = arith.constant 5 : index
    %c0_139 = arith.constant 0 : index
    %202 = vector.load %arg4[%c5_138, %c0_139] : memref<9x128xf32, #tpu.memory_space<vmem>>, vector<1x128xf32>
    %203 = arith.extf %201 : vector<16x128xbf16> to vector<16x128xf32>
    %204 = vector.broadcast %202 : vector<1x128xf32> to vector<16x128xf32>
    %205 = arith.mulf %203, %204 : vector<16x128xf32>
    %206 = arith.addf %199, %205 : vector<16x128xf32>
    %c4_140 = arith.constant 4 : index
    %c0_141 = arith.constant 0 : index
    %c0_142 = arith.constant 0 : index
    %207 = vector.load %arg9[%c4_140, %c0_141, %c0_142] : memref<18x18x128xbf16, #tpu.memory_space<vmem>>, vector<1x16x128xbf16>
    %208 = vector.shape_cast %207 : vector<1x16x128xbf16> to vector<16x128xbf16>
    %c6_143 = arith.constant 6 : index
    %c0_144 = arith.constant 0 : index
    %209 = vector.load %arg4[%c6_143, %c0_144] : memref<9x128xf32, #tpu.memory_space<vmem>>, vector<1x128xf32>
    %210 = arith.extf %208 : vector<16x128xbf16> to vector<16x128xf32>
    %211 = vector.broadcast %209 : vector<1x128xf32> to vector<16x128xf32>
    %212 = arith.mulf %210, %211 : vector<16x128xf32>
    %213 = arith.addf %206, %212 : vector<16x128xf32>
    %c4_145 = arith.constant 4 : index
    %c1_146 = arith.constant 1 : index
    %c0_147 = arith.constant 0 : index
    %214 = vector.load %arg9[%c4_145, %c1_146, %c0_147] : memref<18x18x128xbf16, #tpu.memory_space<vmem>>, vector<1x16x128xbf16>
    %215 = vector.shape_cast %214 : vector<1x16x128xbf16> to vector<16x128xbf16>
    %c7_148 = arith.constant 7 : index
    %c0_149 = arith.constant 0 : index
    %216 = vector.load %arg4[%c7_148, %c0_149] : memref<9x128xf32, #tpu.memory_space<vmem>>, vector<1x128xf32>
    %217 = arith.extf %215 : vector<16x128xbf16> to vector<16x128xf32>
    %218 = vector.broadcast %216 : vector<1x128xf32> to vector<16x128xf32>
    %219 = arith.mulf %217, %218 : vector<16x128xf32>
    %220 = arith.addf %213, %219 : vector<16x128xf32>
    %c4_150 = arith.constant 4 : index
    %c2_151 = arith.constant 2 : index
    %c0_152 = arith.constant 0 : index
    %221 = vector.load %arg9[%c4_150, %c2_151, %c0_152] : memref<18x18x128xbf16, #tpu.memory_space<vmem>>, vector<1x16x128xbf16>
    %222 = vector.shape_cast %221 : vector<1x16x128xbf16> to vector<16x128xbf16>
    %c8_153 = arith.constant 8 : index
    %c0_154 = arith.constant 0 : index
    %223 = vector.load %arg4[%c8_153, %c0_154] : memref<9x128xf32, #tpu.memory_space<vmem>>, vector<1x128xf32>
    %224 = arith.extf %222 : vector<16x128xbf16> to vector<16x128xf32>
    %225 = vector.broadcast %223 : vector<1x128xf32> to vector<16x128xf32>
    %226 = arith.mulf %224, %225 : vector<16x128xf32>
    %227 = arith.addf %220, %226 : vector<16x128xf32>
    %228 = vector.broadcast %19 : vector<1x128xf32> to vector<16x128xf32>
    %229 = arith.addf %227, %228 : vector<16x128xf32>
    %cst_155 = arith.constant 0.000000e+00 : f32
    %cst_156 = arith.constant 6.000000e+00 : f32
    %230 = vector.broadcast %cst_155 : f32 to vector<16x128xf32>
    %231 = arith.maximumf %230, %229 : vector<16x128xf32>
    %232 = vector.broadcast %cst_156 : f32 to vector<16x128xf32>
    %233 = arith.minimumf %232, %231 : vector<16x128xf32>
    %234 = arith.truncf %233 : vector<16x128xf32> to vector<16x128xbf16>
    %c32 = arith.constant 32 : index
    %c0_157 = arith.constant 0 : index
    %235 = vector.load %arg10[%c32, %c0_157] : memref<256x128xbf16, #tpu.memory_space<vmem>>, vector<16x128xbf16>
    tpu.vector_store %arg10[%c32, %c0_157], %234 {strides = array<i32>} : memref<256x128xbf16, #tpu.memory_space<vmem>>, vector<16x128xbf16>,
    %cst_158 = arith.constant 0.000000e+00 : f32
    %236 = vector.broadcast %cst_158 : f32 to vector<16x128xf32>
    %c3_159 = arith.constant 3 : index
    %c0_160 = arith.constant 0 : index
    %c0_161 = arith.constant 0 : index
    %237 = vector.load %arg9[%c3_159, %c0_160, %c0_161] : memref<18x18x128xbf16, #tpu.memory_space<vmem>>, vector<1x16x128xbf16>
    %238 = vector.shape_cast %237 : vector<1x16x128xbf16> to vector<16x128xbf16>
    %c0_162 = arith.constant 0 : index
    %c0_163 = arith.constant 0 : index
    %239 = vector.load %arg4[%c0_162, %c0_163] : memref<9x128xf32, #tpu.memory_space<vmem>>, vector<1x128xf32>
    %240 = arith.extf %238 : vector<16x128xbf16> to vector<16x128xf32>
    %241 = vector.broadcast %239 : vector<1x128xf32> to vector<16x128xf32>
    %242 = arith.mulf %240, %241 : vector<16x128xf32>
    %243 = arith.addf %236, %242 : vector<16x128xf32>
    %c3_164 = arith.constant 3 : index
    %c1_165 = arith.constant 1 : index
    %c0_166 = arith.constant 0 : index
    %244 = vector.load %arg9[%c3_164, %c1_165, %c0_166] : memref<18x18x128xbf16, #tpu.memory_space<vmem>>, vector<1x16x128xbf16>
    %245 = vector.shape_cast %244 : vector<1x16x128xbf16> to vector<16x128xbf16>
    %c1_167 = arith.constant 1 : index
    %c0_168 = arith.constant 0 : index
    %246 = vector.load %arg4[%c1_167, %c0_168] : memref<9x128xf32, #tpu.memory_space<vmem>>, vector<1x128xf32>
    %247 = arith.extf %245 : vector<16x128xbf16> to vector<16x128xf32>
    %248 = vector.broadcast %246 : vector<1x128xf32> to vector<16x128xf32>
    %249 = arith.mulf %247, %248 : vector<16x128xf32>
    %250 = arith.addf %243, %249 : vector<16x128xf32>
    %c3_169 = arith.constant 3 : index
    %c2_170 = arith.constant 2 : index
    %c0_171 = arith.constant 0 : index
    %251 = vector.load %arg9[%c3_169, %c2_170, %c0_171] : memref<18x18x128xbf16, #tpu.memory_space<vmem>>, vector<1x16x128xbf16>
    %252 = vector.shape_cast %251 : vector<1x16x128xbf16> to vector<16x128xbf16>
    %c2_172 = arith.constant 2 : index
    %c0_173 = arith.constant 0 : index
    %253 = vector.load %arg4[%c2_172, %c0_173] : memref<9x128xf32, #tpu.memory_space<vmem>>, vector<1x128xf32>
    %254 = arith.extf %252 : vector<16x128xbf16> to vector<16x128xf32>
    %255 = vector.broadcast %253 : vector<1x128xf32> to vector<16x128xf32>
    %256 = arith.mulf %254, %255 : vector<16x128xf32>
    %257 = arith.addf %250, %256 : vector<16x128xf32>
    %c4_174 = arith.constant 4 : index
    %c0_175 = arith.constant 0 : index
    %c0_176 = arith.constant 0 : index
    %258 = vector.load %arg9[%c4_174, %c0_175, %c0_176] : memref<18x18x128xbf16, #tpu.memory_space<vmem>>, vector<1x16x128xbf16>
    %259 = vector.shape_cast %258 : vector<1x16x128xbf16> to vector<16x128xbf16>
    %c3_177 = arith.constant 3 : index
    %c0_178 = arith.constant 0 : index
    %260 = vector.load %arg4[%c3_177, %c0_178] : memref<9x128xf32, #tpu.memory_space<vmem>>, vector<1x128xf32>
    %261 = arith.extf %259 : vector<16x128xbf16> to vector<16x128xf32>
    %262 = vector.broadcast %260 : vector<1x128xf32> to vector<16x128xf32>
    %263 = arith.mulf %261, %262 : vector<16x128xf32>
    %264 = arith.addf %257, %263 : vector<16x128xf32>
    %c4_179 = arith.constant 4 : index
    %c1_180 = arith.constant 1 : index
    %c0_181 = arith.constant 0 : index
    %265 = vector.load %arg9[%c4_179, %c1_180, %c0_181] : memref<18x18x128xbf16, #tpu.memory_space<vmem>>, vector<1x16x128xbf16>
    %266 = vector.shape_cast %265 : vector<1x16x128xbf16> to vector<16x128xbf16>
    %c4_182 = arith.constant 4 : index
    %c0_183 = arith.constant 0 : index
    %267 = vector.load %arg4[%c4_182, %c0_183] : memref<9x128xf32, #tpu.memory_space<vmem>>, vector<1x128xf32>
    %268 = arith.extf %266 : vector<16x128xbf16> to vector<16x128xf32>
    %269 = vector.broadcast %267 : vector<1x128xf32> to vector<16x128xf32>
    %270 = arith.mulf %268, %269 : vector<16x128xf32>
    %271 = arith.addf %264, %270 : vector<16x128xf32>
    %c4_184 = arith.constant 4 : index
    %c2_185 = arith.constant 2 : index
    %c0_186 = arith.constant 0 : index
    %272 = vector.load %arg9[%c4_184, %c2_185, %c0_186] : memref<18x18x128xbf16, #tpu.memory_space<vmem>>, vector<1x16x128xbf16>
    %273 = vector.shape_cast %272 : vector<1x16x128xbf16> to vector<16x128xbf16>
    %c5_187 = arith.constant 5 : index
    %c0_188 = arith.constant 0 : index
    %274 = vector.load %arg4[%c5_187, %c0_188] : memref<9x128xf32, #tpu.memory_space<vmem>>, vector<1x128xf32>
    %275 = arith.extf %273 : vector<16x128xbf16> to vector<16x128xf32>
    %276 = vector.broadcast %274 : vector<1x128xf32> to vector<16x128xf32>
    %277 = arith.mulf %275, %276 : vector<16x128xf32>
    %278 = arith.addf %271, %277 : vector<16x128xf32>
    %c5_189 = arith.constant 5 : index
    %c0_190 = arith.constant 0 : index
    %c0_191 = arith.constant 0 : index
    %279 = vector.load %arg9[%c5_189, %c0_190, %c0_191] : memref<18x18x128xbf16, #tpu.memory_space<vmem>>, vector<1x16x128xbf16>
    %280 = vector.shape_cast %279 : vector<1x16x128xbf16> to vector<16x128xbf16>
    %c6_192 = arith.constant 6 : index
    %c0_193 = arith.constant 0 : index
    %281 = vector.load %arg4[%c6_192, %c0_193] : memref<9x128xf32, #tpu.memory_space<vmem>>, vector<1x128xf32>
    %282 = arith.extf %280 : vector<16x128xbf16> to vector<16x128xf32>
    %283 = vector.broadcast %281 : vector<1x128xf32> to vector<16x128xf32>
    %284 = arith.mulf %282, %283 : vector<16x128xf32>
    %285 = arith.addf %278, %284 : vector<16x128xf32>
    %c5_194 = arith.constant 5 : index
    %c1_195 = arith.constant 1 : index
    %c0_196 = arith.constant 0 : index
    %286 = vector.load %arg9[%c5_194, %c1_195, %c0_196] : memref<18x18x128xbf16, #tpu.memory_space<vmem>>, vector<1x16x128xbf16>
    %287 = vector.shape_cast %286 : vector<1x16x128xbf16> to vector<16x128xbf16>
    %c7_197 = arith.constant 7 : index
    %c0_198 = arith.constant 0 : index
    %288 = vector.load %arg4[%c7_197, %c0_198] : memref<9x128xf32, #tpu.memory_space<vmem>>, vector<1x128xf32>
    %289 = arith.extf %287 : vector<16x128xbf16> to vector<16x128xf32>
    %290 = vector.broadcast %288 : vector<1x128xf32> to vector<16x128xf32>
    %291 = arith.mulf %289, %290 : vector<16x128xf32>
    %292 = arith.addf %285, %291 : vector<16x128xf32>
    %c5_199 = arith.constant 5 : index
    %c2_200 = arith.constant 2 : index
    %c0_201 = arith.constant 0 : index
    %293 = vector.load %arg9[%c5_199, %c2_200, %c0_201] : memref<18x18x128xbf16, #tpu.memory_space<vmem>>, vector<1x16x128xbf16>
    %294 = vector.shape_cast %293 : vector<1x16x128xbf16> to vector<16x128xbf16>
    %c8_202 = arith.constant 8 : index
    %c0_203 = arith.constant 0 : index
    %295 = vector.load %arg4[%c8_202, %c0_203] : memref<9x128xf32, #tpu.memory_space<vmem>>, vector<1x128xf32>
    %296 = arith.extf %294 : vector<16x128xbf16> to vector<16x128xf32>
    %297 = vector.broadcast %295 : vector<1x128xf32> to vector<16x128xf32>
    %298 = arith.mulf %296, %297 : vector<16x128xf32>
    %299 = arith.addf %292, %298 : vector<16x128xf32>
    %300 = vector.broadcast %19 : vector<1x128xf32> to vector<16x128xf32>
    %301 = arith.addf %299, %300 : vector<16x128xf32>
    %cst_204 = arith.constant 0.000000e+00 : f32
    %cst_205 = arith.constant 6.000000e+00 : f32
    %302 = vector.broadcast %cst_204 : f32 to vector<16x128xf32>
    %303 = arith.maximumf %302, %301 : vector<16x128xf32>
    %304 = vector.broadcast %cst_205 : f32 to vector<16x128xf32>
    %305 = arith.minimumf %304, %303 : vector<16x128xf32>
    %306 = arith.truncf %305 : vector<16x128xf32> to vector<16x128xbf16>
    %c48 = arith.constant 48 : index
    %c0_206 = arith.constant 0 : index
    %307 = vector.load %arg10[%c48, %c0_206] : memref<256x128xbf16, #tpu.memory_space<vmem>>, vector<16x128xbf16>
    tpu.vector_store %arg10[%c48, %c0_206], %306 {strides = array<i32>} : memref<256x128xbf16, #tpu.memory_space<vmem>>, vector<16x128xbf16>,
    %cst_207 = arith.constant 0.000000e+00 : f32
    %308 = vector.broadcast %cst_207 : f32 to vector<16x128xf32>
    %c4_208 = arith.constant 4 : index
    %c0_209 = arith.constant 0 : index
    %c0_210 = arith.constant 0 : index
    %309 = vector.load %arg9[%c4_208, %c0_209, %c0_210] : memref<18x18x128xbf16, #tpu.memory_space<vmem>>, vector<1x16x128xbf16>
    %310 = vector.shape_cast %309 : vector<1x16x128xbf16> to vector<16x128xbf16>
    %c0_211 = arith.constant 0 : index
    %c0_212 = arith.constant 0 : index
    %311 = vector.load %arg4[%c0_211, %c0_212] : memref<9x128xf32, #tpu.memory_space<vmem>>, vector<1x128xf32>
    %312 = arith.extf %310 : vector<16x128xbf16> to vector<16x128xf32>
    %313 = vector.broadcast %311 : vector<1x128xf32> to vector<16x128xf32>
    %314 = arith.mulf %312, %313 : vector<16x128xf32>
    %315 = arith.addf %308, %314 : vector<16x128xf32>
    %c4_213 = arith.constant 4 : index
    %c1_214 = arith.constant 1 : index
    %c0_215 = arith.constant 0 : index
    %316 = vector.load %arg9[%c4_213, %c1_214, %c0_215] : memref<18x18x128xbf16, #tpu.memory_space<vmem>>, vector<1x16x128xbf16>
    %317 = vector.shape_cast %316 : vector<1x16x128xbf16> to vector<16x128xbf16>
    %c1_216 = arith.constant 1 : index
    %c0_217 = arith.constant 0 : index
    %318 = vector.load %arg4[%c1_216, %c0_217] : memref<9x128xf32, #tpu.memory_space<vmem>>, vector<1x128xf32>
    %319 = arith.extf %317 : vector<16x128xbf16> to vector<16x128xf32>
    %320 = vector.broadcast %318 : vector<1x128xf32> to vector<16x128xf32>
    %321 = arith.mulf %319, %320 : vector<16x128xf32>
    %322 = arith.addf %315, %321 : vector<16x128xf32>
    %c4_218 = arith.constant 4 : index
    %c2_219 = arith.constant 2 : index
    %c0_220 = arith.constant 0 : index
    %323 = vector.load %arg9[%c4_218, %c2_219, %c0_220] : memref<18x18x128xbf16, #tpu.memory_space<vmem>>, vector<1x16x128xbf16>
    %324 = vector.shape_cast %323 : vector<1x16x128xbf16> to vector<16x128xbf16>
    %c2_221 = arith.constant 2 : index
    %c0_222 = arith.constant 0 : index
    %325 = vector.load %arg4[%c2_221, %c0_222] : memref<9x128xf32, #tpu.memory_space<vmem>>, vector<1x128xf32>
    %326 = arith.extf %324 : vector<16x128xbf16> to vector<16x128xf32>
    %327 = vector.broadcast %325 : vector<1x128xf32> to vector<16x128xf32>
    %328 = arith.mulf %326, %327 : vector<16x128xf32>
    %329 = arith.addf %322, %328 : vector<16x128xf32>
    %c5_223 = arith.constant 5 : index
    %c0_224 = arith.constant 0 : index
    %c0_225 = arith.constant 0 : index
    %330 = vector.load %arg9[%c5_223, %c0_224, %c0_225] : memref<18x18x128xbf16, #tpu.memory_space<vmem>>, vector<1x16x128xbf16>
    %331 = vector.shape_cast %330 : vector<1x16x128xbf16> to vector<16x128xbf16>
    %c3_226 = arith.constant 3 : index
    %c0_227 = arith.constant 0 : index
    %332 = vector.load %arg4[%c3_226, %c0_227] : memref<9x128xf32, #tpu.memory_space<vmem>>, vector<1x128xf32>
    %333 = arith.extf %331 : vector<16x128xbf16> to vector<16x128xf32>
    %334 = vector.broadcast %332 : vector<1x128xf32> to vector<16x128xf32>
    %335 = arith.mulf %333, %334 : vector<16x128xf32>
    %336 = arith.addf %329, %335 : vector<16x128xf32>
    %c5_228 = arith.constant 5 : index
    %c1_229 = arith.constant 1 : index
    %c0_230 = arith.constant 0 : index
    %337 = vector.load %arg9[%c5_228, %c1_229, %c0_230] : memref<18x18x128xbf16, #tpu.memory_space<vmem>>, vector<1x16x128xbf16>
    %338 = vector.shape_cast %337 : vector<1x16x128xbf16> to vector<16x128xbf16>
    %c4_231 = arith.constant 4 : index
    %c0_232 = arith.constant 0 : index
    %339 = vector.load %arg4[%c4_231, %c0_232] : memref<9x128xf32, #tpu.memory_space<vmem>>, vector<1x128xf32>
    %340 = arith.extf %338 : vector<16x128xbf16> to vector<16x128xf32>
    %341 = vector.broadcast %339 : vector<1x128xf32> to vector<16x128xf32>
    %342 = arith.mulf %340, %341 : vector<16x128xf32>
    %343 = arith.addf %336, %342 : vector<16x128xf32>
    %c5_233 = arith.constant 5 : index
    %c2_234 = arith.constant 2 : index
    %c0_235 = arith.constant 0 : index
    %344 = vector.load %arg9[%c5_233, %c2_234, %c0_235] : memref<18x18x128xbf16, #tpu.memory_space<vmem>>, vector<1x16x128xbf16>
    %345 = vector.shape_cast %344 : vector<1x16x128xbf16> to vector<16x128xbf16>
    %c5_236 = arith.constant 5 : index
    %c0_237 = arith.constant 0 : index
    %346 = vector.load %arg4[%c5_236, %c0_237] : memref<9x128xf32, #tpu.memory_space<vmem>>, vector<1x128xf32>
    %347 = arith.extf %345 : vector<16x128xbf16> to vector<16x128xf32>
    %348 = vector.broadcast %346 : vector<1x128xf32> to vector<16x128xf32>
    %349 = arith.mulf %347, %348 : vector<16x128xf32>
    %350 = arith.addf %343, %349 : vector<16x128xf32>
    %c6_238 = arith.constant 6 : index
    %c0_239 = arith.constant 0 : index
    %c0_240 = arith.constant 0 : index
    %351 = vector.load %arg9[%c6_238, %c0_239, %c0_240] : memref<18x18x128xbf16, #tpu.memory_space<vmem>>, vector<1x16x128xbf16>
    %352 = vector.shape_cast %351 : vector<1x16x128xbf16> to vector<16x128xbf16>
    %c6_241 = arith.constant 6 : index
    %c0_242 = arith.constant 0 : index
    %353 = vector.load %arg4[%c6_241, %c0_242] : memref<9x128xf32, #tpu.memory_space<vmem>>, vector<1x128xf32>
    %354 = arith.extf %352 : vector<16x128xbf16> to vector<16x128xf32>
    %355 = vector.broadcast %353 : vector<1x128xf32> to vector<16x128xf32>
    %356 = arith.mulf %354, %355 : vector<16x128xf32>
    %357 = arith.addf %350, %356 : vector<16x128xf32>
    %c6_243 = arith.constant 6 : index
    %c1_244 = arith.constant 1 : index
    %c0_245 = arith.constant 0 : index
    %358 = vector.load %arg9[%c6_243, %c1_244, %c0_245] : memref<18x18x128xbf16, #tpu.memory_space<vmem>>, vector<1x16x128xbf16>
    %359 = vector.shape_cast %358 : vector<1x16x128xbf16> to vector<16x128xbf16>
    %c7_246 = arith.constant 7 : index
    %c0_247 = arith.constant 0 : index
    %360 = vector.load %arg4[%c7_246, %c0_247] : memref<9x128xf32, #tpu.memory_space<vmem>>, vector<1x128xf32>
    %361 = arith.extf %359 : vector<16x128xbf16> to vector<16x128xf32>
    %362 = vector.broadcast %360 : vector<1x128xf32> to vector<16x128xf32>
    %363 = arith.mulf %361, %362 : vector<16x128xf32>
    %364 = arith.addf %357, %363 : vector<16x128xf32>
    %c6_248 = arith.constant 6 : index
    %c2_249 = arith.constant 2 : index
    %c0_250 = arith.constant 0 : index
    %365 = vector.load %arg9[%c6_248, %c2_249, %c0_250] : memref<18x18x128xbf16, #tpu.memory_space<vmem>>, vector<1x16x128xbf16>
    %366 = vector.shape_cast %365 : vector<1x16x128xbf16> to vector<16x128xbf16>
    %c8_251 = arith.constant 8 : index
    %c0_252 = arith.constant 0 : index
    %367 = vector.load %arg4[%c8_251, %c0_252] : memref<9x128xf32, #tpu.memory_space<vmem>>, vector<1x128xf32>
    %368 = arith.extf %366 : vector<16x128xbf16> to vector<16x128xf32>
    %369 = vector.broadcast %367 : vector<1x128xf32> to vector<16x128xf32>
    %370 = arith.mulf %368, %369 : vector<16x128xf32>
    %371 = arith.addf %364, %370 : vector<16x128xf32>
    %372 = vector.broadcast %19 : vector<1x128xf32> to vector<16x128xf32>
    %373 = arith.addf %371, %372 : vector<16x128xf32>
    %cst_253 = arith.constant 0.000000e+00 : f32
    %cst_254 = arith.constant 6.000000e+00 : f32
    %374 = vector.broadcast %cst_253 : f32 to vector<16x128xf32>
    %375 = arith.maximumf %374, %373 : vector<16x128xf32>
    %376 = vector.broadcast %cst_254 : f32 to vector<16x128xf32>
    %377 = arith.minimumf %376, %375 : vector<16x128xf32>
    %378 = arith.truncf %377 : vector<16x128xf32> to vector<16x128xbf16>
    %c64 = arith.constant 64 : index
    %c0_255 = arith.constant 0 : index
    %379 = vector.load %arg10[%c64, %c0_255] : memref<256x128xbf16, #tpu.memory_space<vmem>>, vector<16x128xbf16>
    tpu.vector_store %arg10[%c64, %c0_255], %378 {strides = array<i32>} : memref<256x128xbf16, #tpu.memory_space<vmem>>, vector<16x128xbf16>,
    %cst_256 = arith.constant 0.000000e+00 : f32
    %380 = vector.broadcast %cst_256 : f32 to vector<16x128xf32>
    %c5_257 = arith.constant 5 : index
    %c0_258 = arith.constant 0 : index
    %c0_259 = arith.constant 0 : index
    %381 = vector.load %arg9[%c5_257, %c0_258, %c0_259] : memref<18x18x128xbf16, #tpu.memory_space<vmem>>, vector<1x16x128xbf16>
    %382 = vector.shape_cast %381 : vector<1x16x128xbf16> to vector<16x128xbf16>
    %c0_260 = arith.constant 0 : index
    %c0_261 = arith.constant 0 : index
    %383 = vector.load %arg4[%c0_260, %c0_261] : memref<9x128xf32, #tpu.memory_space<vmem>>, vector<1x128xf32>
    %384 = arith.extf %382 : vector<16x128xbf16> to vector<16x128xf32>
    %385 = vector.broadcast %383 : vector<1x128xf32> to vector<16x128xf32>
    %386 = arith.mulf %384, %385 : vector<16x128xf32>
    %387 = arith.addf %380, %386 : vector<16x128xf32>
    %c5_262 = arith.constant 5 : index
    %c1_263 = arith.constant 1 : index
    %c0_264 = arith.constant 0 : index
    %388 = vector.load %arg9[%c5_262, %c1_263, %c0_264] : memref<18x18x128xbf16, #tpu.memory_space<vmem>>, vector<1x16x128xbf16>
    %389 = vector.shape_cast %388 : vector<1x16x128xbf16> to vector<16x128xbf16>
    %c1_265 = arith.constant 1 : index
    %c0_266 = arith.constant 0 : index
    %390 = vector.load %arg4[%c1_265, %c0_266] : memref<9x128xf32, #tpu.memory_space<vmem>>, vector<1x128xf32>
    %391 = arith.extf %389 : vector<16x128xbf16> to vector<16x128xf32>
    %392 = vector.broadcast %390 : vector<1x128xf32> to vector<16x128xf32>
    %393 = arith.mulf %391, %392 : vector<16x128xf32>
    %394 = arith.addf %387, %393 : vector<16x128xf32>
    %c5_267 = arith.constant 5 : index
    %c2_268 = arith.constant 2 : index
    %c0_269 = arith.constant 0 : index
    %395 = vector.load %arg9[%c5_267, %c2_268, %c0_269] : memref<18x18x128xbf16, #tpu.memory_space<vmem>>, vector<1x16x128xbf16>
    %396 = vector.shape_cast %395 : vector<1x16x128xbf16> to vector<16x128xbf16>
    %c2_270 = arith.constant 2 : index
    %c0_271 = arith.constant 0 : index
    %397 = vector.load %arg4[%c2_270, %c0_271] : memref<9x128xf32, #tpu.memory_space<vmem>>, vector<1x128xf32>
    %398 = arith.extf %396 : vector<16x128xbf16> to vector<16x128xf32>
    %399 = vector.broadcast %397 : vector<1x128xf32> to vector<16x128xf32>
    %400 = arith.mulf %398, %399 : vector<16x128xf32>
    %401 = arith.addf %394, %400 : vector<16x128xf32>
    %c6_272 = arith.constant 6 : index
    %c0_273 = arith.constant 0 : index
    %c0_274 = arith.constant 0 : index
    %402 = vector.load %arg9[%c6_272, %c0_273, %c0_274] : memref<18x18x128xbf16, #tpu.memory_space<vmem>>, vector<1x16x128xbf16>
    %403 = vector.shape_cast %402 : vector<1x16x128xbf16> to vector<16x128xbf16>
    %c3_275 = arith.constant 3 : index
    %c0_276 = arith.constant 0 : index
    %404 = vector.load %arg4[%c3_275, %c0_276] : memref<9x128xf32, #tpu.memory_space<vmem>>, vector<1x128xf32>
    %405 = arith.extf %403 : vector<16x128xbf16> to vector<16x128xf32>
    %406 = vector.broadcast %404 : vector<1x128xf32> to vector<16x128xf32>
    %407 = arith.mulf %405, %406 : vector<16x128xf32>
    %408 = arith.addf %401, %407 : vector<16x128xf32>
    %c6_277 = arith.constant 6 : index
    %c1_278 = arith.constant 1 : index
    %c0_279 = arith.constant 0 : index
    %409 = vector.load %arg9[%c6_277, %c1_278, %c0_279] : memref<18x18x128xbf16, #tpu.memory_space<vmem>>, vector<1x16x128xbf16>
    %410 = vector.shape_cast %409 : vector<1x16x128xbf16> to vector<16x128xbf16>
    %c4_280 = arith.constant 4 : index
    %c0_281 = arith.constant 0 : index
    %411 = vector.load %arg4[%c4_280, %c0_281] : memref<9x128xf32, #tpu.memory_space<vmem>>, vector<1x128xf32>
    %412 = arith.extf %410 : vector<16x128xbf16> to vector<16x128xf32>
    %413 = vector.broadcast %411 : vector<1x128xf32> to vector<16x128xf32>
    %414 = arith.mulf %412, %413 : vector<16x128xf32>
    %415 = arith.addf %408, %414 : vector<16x128xf32>
    %c6_282 = arith.constant 6 : index
    %c2_283 = arith.constant 2 : index
    %c0_284 = arith.constant 0 : index
    %416 = vector.load %arg9[%c6_282, %c2_283, %c0_284] : memref<18x18x128xbf16, #tpu.memory_space<vmem>>, vector<1x16x128xbf16>
    %417 = vector.shape_cast %416 : vector<1x16x128xbf16> to vector<16x128xbf16>
    %c5_285 = arith.constant 5 : index
    %c0_286 = arith.constant 0 : index
    %418 = vector.load %arg4[%c5_285, %c0_286] : memref<9x128xf32, #tpu.memory_space<vmem>>, vector<1x128xf32>
    %419 = arith.extf %417 : vector<16x128xbf16> to vector<16x128xf32>
    %420 = vector.broadcast %418 : vector<1x128xf32> to vector<16x128xf32>
    %421 = arith.mulf %419, %420 : vector<16x128xf32>
    %422 = arith.addf %415, %421 : vector<16x128xf32>
    %c7_287 = arith.constant 7 : index
    %c0_288 = arith.constant 0 : index
    %c0_289 = arith.constant 0 : index
    %423 = vector.load %arg9[%c7_287, %c0_288, %c0_289] : memref<18x18x128xbf16, #tpu.memory_space<vmem>>, vector<1x16x128xbf16>
    %424 = vector.shape_cast %423 : vector<1x16x128xbf16> to vector<16x128xbf16>
    %c6_290 = arith.constant 6 : index
    %c0_291 = arith.constant 0 : index
    %425 = vector.load %arg4[%c6_290, %c0_291] : memref<9x128xf32, #tpu.memory_space<vmem>>, vector<1x128xf32>
    %426 = arith.extf %424 : vector<16x128xbf16> to vector<16x128xf32>
    %427 = vector.broadcast %425 : vector<1x128xf32> to vector<16x128xf32>
    %428 = arith.mulf %426, %427 : vector<16x128xf32>
    %429 = arith.addf %422, %428 : vector<16x128xf32>
    %c7_292 = arith.constant 7 : index
    %c1_293 = arith.constant 1 : index
    %c0_294 = arith.constant 0 : index
    %430 = vector.load %arg9[%c7_292, %c1_293, %c0_294] : memref<18x18x128xbf16, #tpu.memory_space<vmem>>, vector<1x16x128xbf16>
    %431 = vector.shape_cast %430 : vector<1x16x128xbf16> to vector<16x128xbf16>
    %c7_295 = arith.constant 7 : index
    %c0_296 = arith.constant 0 : index
    %432 = vector.load %arg4[%c7_295, %c0_296] : memref<9x128xf32, #tpu.memory_space<vmem>>, vector<1x128xf32>
    %433 = arith.extf %431 : vector<16x128xbf16> to vector<16x128xf32>
    %434 = vector.broadcast %432 : vector<1x128xf32> to vector<16x128xf32>
    %435 = arith.mulf %433, %434 : vector<16x128xf32>
    %436 = arith.addf %429, %435 : vector<16x128xf32>
    %c7_297 = arith.constant 7 : index
    %c2_298 = arith.constant 2 : index
    %c0_299 = arith.constant 0 : index
    %437 = vector.load %arg9[%c7_297, %c2_298, %c0_299] : memref<18x18x128xbf16, #tpu.memory_space<vmem>>, vector<1x16x128xbf16>
    %438 = vector.shape_cast %437 : vector<1x16x128xbf16> to vector<16x128xbf16>
    %c8_300 = arith.constant 8 : index
    %c0_301 = arith.constant 0 : index
    %439 = vector.load %arg4[%c8_300, %c0_301] : memref<9x128xf32, #tpu.memory_space<vmem>>, vector<1x128xf32>
    %440 = arith.extf %438 : vector<16x128xbf16> to vector<16x128xf32>
    %441 = vector.broadcast %439 : vector<1x128xf32> to vector<16x128xf32>
    %442 = arith.mulf %440, %441 : vector<16x128xf32>
    %443 = arith.addf %436, %442 : vector<16x128xf32>
    %444 = vector.broadcast %19 : vector<1x128xf32> to vector<16x128xf32>
    %445 = arith.addf %443, %444 : vector<16x128xf32>
    %cst_302 = arith.constant 0.000000e+00 : f32
    %cst_303 = arith.constant 6.000000e+00 : f32
    %446 = vector.broadcast %cst_302 : f32 to vector<16x128xf32>
    %447 = arith.maximumf %446, %445 : vector<16x128xf32>
    %448 = vector.broadcast %cst_303 : f32 to vector<16x128xf32>
    %449 = arith.minimumf %448, %447 : vector<16x128xf32>
    %450 = arith.truncf %449 : vector<16x128xf32> to vector<16x128xbf16>
    %c80 = arith.constant 80 : index
    %c0_304 = arith.constant 0 : index
    %451 = vector.load %arg10[%c80, %c0_304] : memref<256x128xbf16, #tpu.memory_space<vmem>>, vector<16x128xbf16>
    tpu.vector_store %arg10[%c80, %c0_304], %450 {strides = array<i32>} : memref<256x128xbf16, #tpu.memory_space<vmem>>, vector<16x128xbf16>,
    %cst_305 = arith.constant 0.000000e+00 : f32
    %452 = vector.broadcast %cst_305 : f32 to vector<16x128xf32>
    %c6_306 = arith.constant 6 : index
    %c0_307 = arith.constant 0 : index
    %c0_308 = arith.constant 0 : index
    %453 = vector.load %arg9[%c6_306, %c0_307, %c0_308] : memref<18x18x128xbf16, #tpu.memory_space<vmem>>, vector<1x16x128xbf16>
    %454 = vector.shape_cast %453 : vector<1x16x128xbf16> to vector<16x128xbf16>
    %c0_309 = arith.constant 0 : index
    %c0_310 = arith.constant 0 : index
    %455 = vector.load %arg4[%c0_309, %c0_310] : memref<9x128xf32, #tpu.memory_space<vmem>>, vector<1x128xf32>
    %456 = arith.extf %454 : vector<16x128xbf16> to vector<16x128xf32>
    %457 = vector.broadcast %455 : vector<1x128xf32> to vector<16x128xf32>
    %458 = arith.mulf %456, %457 : vector<16x128xf32>
    %459 = arith.addf %452, %458 : vector<16x128xf32>
    %c6_311 = arith.constant 6 : index
    %c1_312 = arith.constant 1 : index
    %c0_313 = arith.constant 0 : index
    %460 = vector.load %arg9[%c6_311, %c1_312, %c0_313] : memref<18x18x128xbf16, #tpu.memory_space<vmem>>, vector<1x16x128xbf16>
    %461 = vector.shape_cast %460 : vector<1x16x128xbf16> to vector<16x128xbf16>
    %c1_314 = arith.constant 1 : index
    %c0_315 = arith.constant 0 : index
    %462 = vector.load %arg4[%c1_314, %c0_315] : memref<9x128xf32, #tpu.memory_space<vmem>>, vector<1x128xf32>
    %463 = arith.extf %461 : vector<16x128xbf16> to vector<16x128xf32>
    %464 = vector.broadcast %462 : vector<1x128xf32> to vector<16x128xf32>
    %465 = arith.mulf %463, %464 : vector<16x128xf32>
    %466 = arith.addf %459, %465 : vector<16x128xf32>
    %c6_316 = arith.constant 6 : index
    %c2_317 = arith.constant 2 : index
    %c0_318 = arith.constant 0 : index
    %467 = vector.load %arg9[%c6_316, %c2_317, %c0_318] : memref<18x18x128xbf16, #tpu.memory_space<vmem>>, vector<1x16x128xbf16>
    %468 = vector.shape_cast %467 : vector<1x16x128xbf16> to vector<16x128xbf16>
    %c2_319 = arith.constant 2 : index
    %c0_320 = arith.constant 0 : index
    %469 = vector.load %arg4[%c2_319, %c0_320] : memref<9x128xf32, #tpu.memory_space<vmem>>, vector<1x128xf32>
    %470 = arith.extf %468 : vector<16x128xbf16> to vector<16x128xf32>
    %471 = vector.broadcast %469 : vector<1x128xf32> to vector<16x128xf32>
    %472 = arith.mulf %470, %471 : vector<16x128xf32>
    %473 = arith.addf %466, %472 : vector<16x128xf32>
    %c7_321 = arith.constant 7 : index
    %c0_322 = arith.constant 0 : index
    %c0_323 = arith.constant 0 : index
    %474 = vector.load %arg9[%c7_321, %c0_322, %c0_323] : memref<18x18x128xbf16, #tpu.memory_space<vmem>>, vector<1x16x128xbf16>
    %475 = vector.shape_cast %474 : vector<1x16x128xbf16> to vector<16x128xbf16>
    %c3_324 = arith.constant 3 : index
    %c0_325 = arith.constant 0 : index
    %476 = vector.load %arg4[%c3_324, %c0_325] : memref<9x128xf32, #tpu.memory_space<vmem>>, vector<1x128xf32>
    %477 = arith.extf %475 : vector<16x128xbf16> to vector<16x128xf32>
    %478 = vector.broadcast %476 : vector<1x128xf32> to vector<16x128xf32>
    %479 = arith.mulf %477, %478 : vector<16x128xf32>
    %480 = arith.addf %473, %479 : vector<16x128xf32>
    %c7_326 = arith.constant 7 : index
    %c1_327 = arith.constant 1 : index
    %c0_328 = arith.constant 0 : index
    %481 = vector.load %arg9[%c7_326, %c1_327, %c0_328] : memref<18x18x128xbf16, #tpu.memory_space<vmem>>, vector<1x16x128xbf16>
    %482 = vector.shape_cast %481 : vector<1x16x128xbf16> to vector<16x128xbf16>
    %c4_329 = arith.constant 4 : index
    %c0_330 = arith.constant 0 : index
    %483 = vector.load %arg4[%c4_329, %c0_330] : memref<9x128xf32, #tpu.memory_space<vmem>>, vector<1x128xf32>
    %484 = arith.extf %482 : vector<16x128xbf16> to vector<16x128xf32>
    %485 = vector.broadcast %483 : vector<1x128xf32> to vector<16x128xf32>
    %486 = arith.mulf %484, %485 : vector<16x128xf32>
    %487 = arith.addf %480, %486 : vector<16x128xf32>
    %c7_331 = arith.constant 7 : index
    %c2_332 = arith.constant 2 : index
    %c0_333 = arith.constant 0 : index
    %488 = vector.load %arg9[%c7_331, %c2_332, %c0_333] : memref<18x18x128xbf16, #tpu.memory_space<vmem>>, vector<1x16x128xbf16>
    %489 = vector.shape_cast %488 : vector<1x16x128xbf16> to vector<16x128xbf16>
    %c5_334 = arith.constant 5 : index
    %c0_335 = arith.constant 0 : index
    %490 = vector.load %arg4[%c5_334, %c0_335] : memref<9x128xf32, #tpu.memory_space<vmem>>, vector<1x128xf32>
    %491 = arith.extf %489 : vector<16x128xbf16> to vector<16x128xf32>
    %492 = vector.broadcast %490 : vector<1x128xf32> to vector<16x128xf32>
    %493 = arith.mulf %491, %492 : vector<16x128xf32>
    %494 = arith.addf %487, %493 : vector<16x128xf32>
    %c8_336 = arith.constant 8 : index
    %c0_337 = arith.constant 0 : index
    %c0_338 = arith.constant 0 : index
    %495 = vector.load %arg9[%c8_336, %c0_337, %c0_338] : memref<18x18x128xbf16, #tpu.memory_space<vmem>>, vector<1x16x128xbf16>
    %496 = vector.shape_cast %495 : vector<1x16x128xbf16> to vector<16x128xbf16>
    %c6_339 = arith.constant 6 : index
    %c0_340 = arith.constant 0 : index
    %497 = vector.load %arg4[%c6_339, %c0_340] : memref<9x128xf32, #tpu.memory_space<vmem>>, vector<1x128xf32>
    %498 = arith.extf %496 : vector<16x128xbf16> to vector<16x128xf32>
    %499 = vector.broadcast %497 : vector<1x128xf32> to vector<16x128xf32>
    %500 = arith.mulf %498, %499 : vector<16x128xf32>
    %501 = arith.addf %494, %500 : vector<16x128xf32>
    %c8_341 = arith.constant 8 : index
    %c1_342 = arith.constant 1 : index
    %c0_343 = arith.constant 0 : index
    %502 = vector.load %arg9[%c8_341, %c1_342, %c0_343] : memref<18x18x128xbf16, #tpu.memory_space<vmem>>, vector<1x16x128xbf16>
    %503 = vector.shape_cast %502 : vector<1x16x128xbf16> to vector<16x128xbf16>
    %c7_344 = arith.constant 7 : index
    %c0_345 = arith.constant 0 : index
    %504 = vector.load %arg4[%c7_344, %c0_345] : memref<9x128xf32, #tpu.memory_space<vmem>>, vector<1x128xf32>
    %505 = arith.extf %503 : vector<16x128xbf16> to vector<16x128xf32>
    %506 = vector.broadcast %504 : vector<1x128xf32> to vector<16x128xf32>
    %507 = arith.mulf %505, %506 : vector<16x128xf32>
    %508 = arith.addf %501, %507 : vector<16x128xf32>
    %c8_346 = arith.constant 8 : index
    %c2_347 = arith.constant 2 : index
    %c0_348 = arith.constant 0 : index
    %509 = vector.load %arg9[%c8_346, %c2_347, %c0_348] : memref<18x18x128xbf16, #tpu.memory_space<vmem>>, vector<1x16x128xbf16>
    %510 = vector.shape_cast %509 : vector<1x16x128xbf16> to vector<16x128xbf16>
    %c8_349 = arith.constant 8 : index
    %c0_350 = arith.constant 0 : index
    %511 = vector.load %arg4[%c8_349, %c0_350] : memref<9x128xf32, #tpu.memory_space<vmem>>, vector<1x128xf32>
    %512 = arith.extf %510 : vector<16x128xbf16> to vector<16x128xf32>
    %513 = vector.broadcast %511 : vector<1x128xf32> to vector<16x128xf32>
    %514 = arith.mulf %512, %513 : vector<16x128xf32>
    %515 = arith.addf %508, %514 : vector<16x128xf32>
    %516 = vector.broadcast %19 : vector<1x128xf32> to vector<16x128xf32>
    %517 = arith.addf %515, %516 : vector<16x128xf32>
    %cst_351 = arith.constant 0.000000e+00 : f32
    %cst_352 = arith.constant 6.000000e+00 : f32
    %518 = vector.broadcast %cst_351 : f32 to vector<16x128xf32>
    %519 = arith.maximumf %518, %517 : vector<16x128xf32>
    %520 = vector.broadcast %cst_352 : f32 to vector<16x128xf32>
    %521 = arith.minimumf %520, %519 : vector<16x128xf32>
    %522 = arith.truncf %521 : vector<16x128xf32> to vector<16x128xbf16>
    %c96 = arith.constant 96 : index
    %c0_353 = arith.constant 0 : index
    %523 = vector.load %arg10[%c96, %c0_353] : memref<256x128xbf16, #tpu.memory_space<vmem>>, vector<16x128xbf16>
    tpu.vector_store %arg10[%c96, %c0_353], %522 {strides = array<i32>} : memref<256x128xbf16, #tpu.memory_space<vmem>>, vector<16x128xbf16>,
    %cst_354 = arith.constant 0.000000e+00 : f32
    %524 = vector.broadcast %cst_354 : f32 to vector<16x128xf32>
    %c7_355 = arith.constant 7 : index
    %c0_356 = arith.constant 0 : index
    %c0_357 = arith.constant 0 : index
    %525 = vector.load %arg9[%c7_355, %c0_356, %c0_357] : memref<18x18x128xbf16, #tpu.memory_space<vmem>>, vector<1x16x128xbf16>
    %526 = vector.shape_cast %525 : vector<1x16x128xbf16> to vector<16x128xbf16>
    %c0_358 = arith.constant 0 : index
    %c0_359 = arith.constant 0 : index
    %527 = vector.load %arg4[%c0_358, %c0_359] : memref<9x128xf32, #tpu.memory_space<vmem>>, vector<1x128xf32>
    %528 = arith.extf %526 : vector<16x128xbf16> to vector<16x128xf32>
    %529 = vector.broadcast %527 : vector<1x128xf32> to vector<16x128xf32>
    %530 = arith.mulf %528, %529 : vector<16x128xf32>
    %531 = arith.addf %524, %530 : vector<16x128xf32>
    %c7_360 = arith.constant 7 : index
    %c1_361 = arith.constant 1 : index
    %c0_362 = arith.constant 0 : index
    %532 = vector.load %arg9[%c7_360, %c1_361, %c0_362] : memref<18x18x128xbf16, #tpu.memory_space<vmem>>, vector<1x16x128xbf16>
    %533 = vector.shape_cast %532 : vector<1x16x128xbf16> to vector<16x128xbf16>
    %c1_363 = arith.constant 1 : index
    %c0_364 = arith.constant 0 : index
    %534 = vector.load %arg4[%c1_363, %c0_364] : memref<9x128xf32, #tpu.memory_space<vmem>>, vector<1x128xf32>
    %535 = arith.extf %533 : vector<16x128xbf16> to vector<16x128xf32>
    %536 = vector.broadcast %534 : vector<1x128xf32> to vector<16x128xf32>
    %537 = arith.mulf %535, %536 : vector<16x128xf32>
    %538 = arith.addf %531, %537 : vector<16x128xf32>
    %c7_365 = arith.constant 7 : index
    %c2_366 = arith.constant 2 : index
    %c0_367 = arith.constant 0 : index
    %539 = vector.load %arg9[%c7_365, %c2_366, %c0_367] : memref<18x18x128xbf16, #tpu.memory_space<vmem>>, vector<1x16x128xbf16>
    %540 = vector.shape_cast %539 : vector<1x16x128xbf16> to vector<16x128xbf16>
    %c2_368 = arith.constant 2 : index
    %c0_369 = arith.constant 0 : index
    %541 = vector.load %arg4[%c2_368, %c0_369] : memref<9x128xf32, #tpu.memory_space<vmem>>, vector<1x128xf32>
    %542 = arith.extf %540 : vector<16x128xbf16> to vector<16x128xf32>
    %543 = vector.broadcast %541 : vector<1x128xf32> to vector<16x128xf32>
    %544 = arith.mulf %542, %543 : vector<16x128xf32>
    %545 = arith.addf %538, %544 : vector<16x128xf32>
    %c8_370 = arith.constant 8 : index
    %c0_371 = arith.constant 0 : index
    %c0_372 = arith.constant 0 : index
    %546 = vector.load %arg9[%c8_370, %c0_371, %c0_372] : memref<18x18x128xbf16, #tpu.memory_space<vmem>>, vector<1x16x128xbf16>
    %547 = vector.shape_cast %546 : vector<1x16x128xbf16> to vector<16x128xbf16>
    %c3_373 = arith.constant 3 : index
    %c0_374 = arith.constant 0 : index
    %548 = vector.load %arg4[%c3_373, %c0_374] : memref<9x128xf32, #tpu.memory_space<vmem>>, vector<1x128xf32>
    %549 = arith.extf %547 : vector<16x128xbf16> to vector<16x128xf32>
    %550 = vector.broadcast %548 : vector<1x128xf32> to vector<16x128xf32>
    %551 = arith.mulf %549, %550 : vector<16x128xf32>
    %552 = arith.addf %545, %551 : vector<16x128xf32>
    %c8_375 = arith.constant 8 : index
    %c1_376 = arith.constant 1 : index
    %c0_377 = arith.constant 0 : index
    %553 = vector.load %arg9[%c8_375, %c1_376, %c0_377] : memref<18x18x128xbf16, #tpu.memory_space<vmem>>, vector<1x16x128xbf16>
    %554 = vector.shape_cast %553 : vector<1x16x128xbf16> to vector<16x128xbf16>
    %c4_378 = arith.constant 4 : index
    %c0_379 = arith.constant 0 : index
    %555 = vector.load %arg4[%c4_378, %c0_379] : memref<9x128xf32, #tpu.memory_space<vmem>>, vector<1x128xf32>
    %556 = arith.extf %554 : vector<16x128xbf16> to vector<16x128xf32>
    %557 = vector.broadcast %555 : vector<1x128xf32> to vector<16x128xf32>
    %558 = arith.mulf %556, %557 : vector<16x128xf32>
    %559 = arith.addf %552, %558 : vector<16x128xf32>
    %c8_380 = arith.constant 8 : index
    %c2_381 = arith.constant 2 : index
    %c0_382 = arith.constant 0 : index
    %560 = vector.load %arg9[%c8_380, %c2_381, %c0_382] : memref<18x18x128xbf16, #tpu.memory_space<vmem>>, vector<1x16x128xbf16>
    %561 = vector.shape_cast %560 : vector<1x16x128xbf16> to vector<16x128xbf16>
    %c5_383 = arith.constant 5 : index
    %c0_384 = arith.constant 0 : index
    %562 = vector.load %arg4[%c5_383, %c0_384] : memref<9x128xf32, #tpu.memory_space<vmem>>, vector<1x128xf32>
    %563 = arith.extf %561 : vector<16x128xbf16> to vector<16x128xf32>
    %564 = vector.broadcast %562 : vector<1x128xf32> to vector<16x128xf32>
    %565 = arith.mulf %563, %564 : vector<16x128xf32>
    %566 = arith.addf %559, %565 : vector<16x128xf32>
    %c9 = arith.constant 9 : index
    %c0_385 = arith.constant 0 : index
    %c0_386 = arith.constant 0 : index
    %567 = vector.load %arg9[%c9, %c0_385, %c0_386] : memref<18x18x128xbf16, #tpu.memory_space<vmem>>, vector<1x16x128xbf16>
    %568 = vector.shape_cast %567 : vector<1x16x128xbf16> to vector<16x128xbf16>
    %c6_387 = arith.constant 6 : index
    %c0_388 = arith.constant 0 : index
    %569 = vector.load %arg4[%c6_387, %c0_388] : memref<9x128xf32, #tpu.memory_space<vmem>>, vector<1x128xf32>
    %570 = arith.extf %568 : vector<16x128xbf16> to vector<16x128xf32>
    %571 = vector.broadcast %569 : vector<1x128xf32> to vector<16x128xf32>
    %572 = arith.mulf %570, %571 : vector<16x128xf32>
    %573 = arith.addf %566, %572 : vector<16x128xf32>
    %c9_389 = arith.constant 9 : index
    %c1_390 = arith.constant 1 : index
    %c0_391 = arith.constant 0 : index
    %574 = vector.load %arg9[%c9_389, %c1_390, %c0_391] : memref<18x18x128xbf16, #tpu.memory_space<vmem>>, vector<1x16x128xbf16>
    %575 = vector.shape_cast %574 : vector<1x16x128xbf16> to vector<16x128xbf16>
    %c7_392 = arith.constant 7 : index
    %c0_393 = arith.constant 0 : index
    %576 = vector.load %arg4[%c7_392, %c0_393] : memref<9x128xf32, #tpu.memory_space<vmem>>, vector<1x128xf32>
    %577 = arith.extf %575 : vector<16x128xbf16> to vector<16x128xf32>
    %578 = vector.broadcast %576 : vector<1x128xf32> to vector<16x128xf32>
    %579 = arith.mulf %577, %578 : vector<16x128xf32>
    %580 = arith.addf %573, %579 : vector<16x128xf32>
    %c9_394 = arith.constant 9 : index
    %c2_395 = arith.constant 2 : index
    %c0_396 = arith.constant 0 : index
    %581 = vector.load %arg9[%c9_394, %c2_395, %c0_396] : memref<18x18x128xbf16, #tpu.memory_space<vmem>>, vector<1x16x128xbf16>
    %582 = vector.shape_cast %581 : vector<1x16x128xbf16> to vector<16x128xbf16>
    %c8_397 = arith.constant 8 : index
    %c0_398 = arith.constant 0 : index
    %583 = vector.load %arg4[%c8_397, %c0_398] : memref<9x128xf32, #tpu.memory_space<vmem>>, vector<1x128xf32>
    %584 = arith.extf %582 : vector<16x128xbf16> to vector<16x128xf32>
    %585 = vector.broadcast %583 : vector<1x128xf32> to vector<16x128xf32>
    %586 = arith.mulf %584, %585 : vector<16x128xf32>
    %587 = arith.addf %580, %586 : vector<16x128xf32>
    %588 = vector.broadcast %19 : vector<1x128xf32> to vector<16x128xf32>
    %589 = arith.addf %587, %588 : vector<16x128xf32>
    %cst_399 = arith.constant 0.000000e+00 : f32
    %cst_400 = arith.constant 6.000000e+00 : f32
    %590 = vector.broadcast %cst_399 : f32 to vector<16x128xf32>
    %591 = arith.maximumf %590, %589 : vector<16x128xf32>
    %592 = vector.broadcast %cst_400 : f32 to vector<16x128xf32>
    %593 = arith.minimumf %592, %591 : vector<16x128xf32>
    %594 = arith.truncf %593 : vector<16x128xf32> to vector<16x128xbf16>
    %c112 = arith.constant 112 : index
    %c0_401 = arith.constant 0 : index
    %595 = vector.load %arg10[%c112, %c0_401] : memref<256x128xbf16, #tpu.memory_space<vmem>>, vector<16x128xbf16>
    tpu.vector_store %arg10[%c112, %c0_401], %594 {strides = array<i32>} : memref<256x128xbf16, #tpu.memory_space<vmem>>, vector<16x128xbf16>,
    %cst_402 = arith.constant 0.000000e+00 : f32
    %596 = vector.broadcast %cst_402 : f32 to vector<16x128xf32>
    %c8_403 = arith.constant 8 : index
    %c0_404 = arith.constant 0 : index
    %c0_405 = arith.constant 0 : index
    %597 = vector.load %arg9[%c8_403, %c0_404, %c0_405] : memref<18x18x128xbf16, #tpu.memory_space<vmem>>, vector<1x16x128xbf16>
    %598 = vector.shape_cast %597 : vector<1x16x128xbf16> to vector<16x128xbf16>
    %c0_406 = arith.constant 0 : index
    %c0_407 = arith.constant 0 : index
    %599 = vector.load %arg4[%c0_406, %c0_407] : memref<9x128xf32, #tpu.memory_space<vmem>>, vector<1x128xf32>
    %600 = arith.extf %598 : vector<16x128xbf16> to vector<16x128xf32>
    %601 = vector.broadcast %599 : vector<1x128xf32> to vector<16x128xf32>
    %602 = arith.mulf %600, %601 : vector<16x128xf32>
    %603 = arith.addf %596, %602 : vector<16x128xf32>
    %c8_408 = arith.constant 8 : index
    %c1_409 = arith.constant 1 : index
    %c0_410 = arith.constant 0 : index
    %604 = vector.load %arg9[%c8_408, %c1_409, %c0_410] : memref<18x18x128xbf16, #tpu.memory_space<vmem>>, vector<1x16x128xbf16>
    %605 = vector.shape_cast %604 : vector<1x16x128xbf16> to vector<16x128xbf16>
    %c1_411 = arith.constant 1 : index
    %c0_412 = arith.constant 0 : index
    %606 = vector.load %arg4[%c1_411, %c0_412] : memref<9x128xf32, #tpu.memory_space<vmem>>, vector<1x128xf32>
    %607 = arith.extf %605 : vector<16x128xbf16> to vector<16x128xf32>
    %608 = vector.broadcast %606 : vector<1x128xf32> to vector<16x128xf32>
    %609 = arith.mulf %607, %608 : vector<16x128xf32>
    %610 = arith.addf %603, %609 : vector<16x128xf32>
    %c8_413 = arith.constant 8 : index
    %c2_414 = arith.constant 2 : index
    %c0_415 = arith.constant 0 : index
    %611 = vector.load %arg9[%c8_413, %c2_414, %c0_415] : memref<18x18x128xbf16, #tpu.memory_space<vmem>>, vector<1x16x128xbf16>
    %612 = vector.shape_cast %611 : vector<1x16x128xbf16> to vector<16x128xbf16>
    %c2_416 = arith.constant 2 : index
    %c0_417 = arith.constant 0 : index
    %613 = vector.load %arg4[%c2_416, %c0_417] : memref<9x128xf32, #tpu.memory_space<vmem>>, vector<1x128xf32>
    %614 = arith.extf %612 : vector<16x128xbf16> to vector<16x128xf32>
    %615 = vector.broadcast %613 : vector<1x128xf32> to vector<16x128xf32>
    %616 = arith.mulf %614, %615 : vector<16x128xf32>
    %617 = arith.addf %610, %616 : vector<16x128xf32>
    %c9_418 = arith.constant 9 : index
    %c0_419 = arith.constant 0 : index
    %c0_420 = arith.constant 0 : index
    %618 = vector.load %arg9[%c9_418, %c0_419, %c0_420] : memref<18x18x128xbf16, #tpu.memory_space<vmem>>, vector<1x16x128xbf16>
    %619 = vector.shape_cast %618 : vector<1x16x128xbf16> to vector<16x128xbf16>
    %c3_421 = arith.constant 3 : index
    %c0_422 = arith.constant 0 : index
    %620 = vector.load %arg4[%c3_421, %c0_422] : memref<9x128xf32, #tpu.memory_space<vmem>>, vector<1x128xf32>
    %621 = arith.extf %619 : vector<16x128xbf16> to vector<16x128xf32>
    %622 = vector.broadcast %620 : vector<1x128xf32> to vector<16x128xf32>
    %623 = arith.mulf %621, %622 : vector<16x128xf32>
    %624 = arith.addf %617, %623 : vector<16x128xf32>
    %c9_423 = arith.constant 9 : index
    %c1_424 = arith.constant 1 : index
    %c0_425 = arith.constant 0 : index
    %625 = vector.load %arg9[%c9_423, %c1_424, %c0_425] : memref<18x18x128xbf16, #tpu.memory_space<vmem>>, vector<1x16x128xbf16>
    %626 = vector.shape_cast %625 : vector<1x16x128xbf16> to vector<16x128xbf16>
    %c4_426 = arith.constant 4 : index
    %c0_427 = arith.constant 0 : index
    %627 = vector.load %arg4[%c4_426, %c0_427] : memref<9x128xf32, #tpu.memory_space<vmem>>, vector<1x128xf32>
    %628 = arith.extf %626 : vector<16x128xbf16> to vector<16x128xf32>
    %629 = vector.broadcast %627 : vector<1x128xf32> to vector<16x128xf32>
    %630 = arith.mulf %628, %629 : vector<16x128xf32>
    %631 = arith.addf %624, %630 : vector<16x128xf32>
    %c9_428 = arith.constant 9 : index
    %c2_429 = arith.constant 2 : index
    %c0_430 = arith.constant 0 : index
    %632 = vector.load %arg9[%c9_428, %c2_429, %c0_430] : memref<18x18x128xbf16, #tpu.memory_space<vmem>>, vector<1x16x128xbf16>
    %633 = vector.shape_cast %632 : vector<1x16x128xbf16> to vector<16x128xbf16>
    %c5_431 = arith.constant 5 : index
    %c0_432 = arith.constant 0 : index
    %634 = vector.load %arg4[%c5_431, %c0_432] : memref<9x128xf32, #tpu.memory_space<vmem>>, vector<1x128xf32>
    %635 = arith.extf %633 : vector<16x128xbf16> to vector<16x128xf32>
    %636 = vector.broadcast %634 : vector<1x128xf32> to vector<16x128xf32>
    %637 = arith.mulf %635, %636 : vector<16x128xf32>
    %638 = arith.addf %631, %637 : vector<16x128xf32>
    %c10 = arith.constant 10 : index
    %c0_433 = arith.constant 0 : index
    %c0_434 = arith.constant 0 : index
    %639 = vector.load %arg9[%c10, %c0_433, %c0_434] : memref<18x18x128xbf16, #tpu.memory_space<vmem>>, vector<1x16x128xbf16>
    %640 = vector.shape_cast %639 : vector<1x16x128xbf16> to vector<16x128xbf16>
    %c6_435 = arith.constant 6 : index
    %c0_436 = arith.constant 0 : index
    %641 = vector.load %arg4[%c6_435, %c0_436] : memref<9x128xf32, #tpu.memory_space<vmem>>, vector<1x128xf32>
    %642 = arith.extf %640 : vector<16x128xbf16> to vector<16x128xf32>
    %643 = vector.broadcast %641 : vector<1x128xf32> to vector<16x128xf32>
    %644 = arith.mulf %642, %643 : vector<16x128xf32>
    %645 = arith.addf %638, %644 : vector<16x128xf32>
    %c10_437 = arith.constant 10 : index
    %c1_438 = arith.constant 1 : index
    %c0_439 = arith.constant 0 : index
    %646 = vector.load %arg9[%c10_437, %c1_438, %c0_439] : memref<18x18x128xbf16, #tpu.memory_space<vmem>>, vector<1x16x128xbf16>
    %647 = vector.shape_cast %646 : vector<1x16x128xbf16> to vector<16x128xbf16>
    %c7_440 = arith.constant 7 : index
    %c0_441 = arith.constant 0 : index
    %648 = vector.load %arg4[%c7_440, %c0_441] : memref<9x128xf32, #tpu.memory_space<vmem>>, vector<1x128xf32>
    %649 = arith.extf %647 : vector<16x128xbf16> to vector<16x128xf32>
    %650 = vector.broadcast %648 : vector<1x128xf32> to vector<16x128xf32>
    %651 = arith.mulf %649, %650 : vector<16x128xf32>
    %652 = arith.addf %645, %651 : vector<16x128xf32>
    %c10_442 = arith.constant 10 : index
    %c2_443 = arith.constant 2 : index
    %c0_444 = arith.constant 0 : index
    %653 = vector.load %arg9[%c10_442, %c2_443, %c0_444] : memref<18x18x128xbf16, #tpu.memory_space<vmem>>, vector<1x16x128xbf16>
    %654 = vector.shape_cast %653 : vector<1x16x128xbf16> to vector<16x128xbf16>
    %c8_445 = arith.constant 8 : index
    %c0_446 = arith.constant 0 : index
    %655 = vector.load %arg4[%c8_445, %c0_446] : memref<9x128xf32, #tpu.memory_space<vmem>>, vector<1x128xf32>
    %656 = arith.extf %654 : vector<16x128xbf16> to vector<16x128xf32>
    %657 = vector.broadcast %655 : vector<1x128xf32> to vector<16x128xf32>
    %658 = arith.mulf %656, %657 : vector<16x128xf32>
    %659 = arith.addf %652, %658 : vector<16x128xf32>
    %660 = vector.broadcast %19 : vector<1x128xf32> to vector<16x128xf32>
    %661 = arith.addf %659, %660 : vector<16x128xf32>
    %cst_447 = arith.constant 0.000000e+00 : f32
    %cst_448 = arith.constant 6.000000e+00 : f32
    %662 = vector.broadcast %cst_447 : f32 to vector<16x128xf32>
    %663 = arith.maximumf %662, %661 : vector<16x128xf32>
    %664 = vector.broadcast %cst_448 : f32 to vector<16x128xf32>
    %665 = arith.minimumf %664, %663 : vector<16x128xf32>
    %666 = arith.truncf %665 : vector<16x128xf32> to vector<16x128xbf16>
    %c128 = arith.constant 128 : index
    %c0_449 = arith.constant 0 : index
    %667 = vector.load %arg10[%c128, %c0_449] : memref<256x128xbf16, #tpu.memory_space<vmem>>, vector<16x128xbf16>
    tpu.vector_store %arg10[%c128, %c0_449], %666 {strides = array<i32>} : memref<256x128xbf16, #tpu.memory_space<vmem>>, vector<16x128xbf16>,
    %cst_450 = arith.constant 0.000000e+00 : f32
    %668 = vector.broadcast %cst_450 : f32 to vector<16x128xf32>
    %c9_451 = arith.constant 9 : index
    %c0_452 = arith.constant 0 : index
    %c0_453 = arith.constant 0 : index
    %669 = vector.load %arg9[%c9_451, %c0_452, %c0_453] : memref<18x18x128xbf16, #tpu.memory_space<vmem>>, vector<1x16x128xbf16>
    %670 = vector.shape_cast %669 : vector<1x16x128xbf16> to vector<16x128xbf16>
    %c0_454 = arith.constant 0 : index
    %c0_455 = arith.constant 0 : index
    %671 = vector.load %arg4[%c0_454, %c0_455] : memref<9x128xf32, #tpu.memory_space<vmem>>, vector<1x128xf32>
    %672 = arith.extf %670 : vector<16x128xbf16> to vector<16x128xf32>
    %673 = vector.broadcast %671 : vector<1x128xf32> to vector<16x128xf32>
    %674 = arith.mulf %672, %673 : vector<16x128xf32>
    %675 = arith.addf %668, %674 : vector<16x128xf32>
    %c9_456 = arith.constant 9 : index
    %c1_457 = arith.constant 1 : index
    %c0_458 = arith.constant 0 : index
    %676 = vector.load %arg9[%c9_456, %c1_457, %c0_458] : memref<18x18x128xbf16, #tpu.memory_space<vmem>>, vector<1x16x128xbf16>
    %677 = vector.shape_cast %676 : vector<1x16x128xbf16> to vector<16x128xbf16>
    %c1_459 = arith.constant 1 : index
    %c0_460 = arith.constant 0 : index
    %678 = vector.load %arg4[%c1_459, %c0_460] : memref<9x128xf32, #tpu.memory_space<vmem>>, vector<1x128xf32>
    %679 = arith.extf %677 : vector<16x128xbf16> to vector<16x128xf32>
    %680 = vector.broadcast %678 : vector<1x128xf32> to vector<16x128xf32>
    %681 = arith.mulf %679, %680 : vector<16x128xf32>
    %682 = arith.addf %675, %681 : vector<16x128xf32>
    %c9_461 = arith.constant 9 : index
    %c2_462 = arith.constant 2 : index
    %c0_463 = arith.constant 0 : index
    %683 = vector.load %arg9[%c9_461, %c2_462, %c0_463] : memref<18x18x128xbf16, #tpu.memory_space<vmem>>, vector<1x16x128xbf16>
    %684 = vector.shape_cast %683 : vector<1x16x128xbf16> to vector<16x128xbf16>
    %c2_464 = arith.constant 2 : index
    %c0_465 = arith.constant 0 : index
    %685 = vector.load %arg4[%c2_464, %c0_465] : memref<9x128xf32, #tpu.memory_space<vmem>>, vector<1x128xf32>
    %686 = arith.extf %684 : vector<16x128xbf16> to vector<16x128xf32>
    %687 = vector.broadcast %685 : vector<1x128xf32> to vector<16x128xf32>
    %688 = arith.mulf %686, %687 : vector<16x128xf32>
    %689 = arith.addf %682, %688 : vector<16x128xf32>
    %c10_466 = arith.constant 10 : index
    %c0_467 = arith.constant 0 : index
    %c0_468 = arith.constant 0 : index
    %690 = vector.load %arg9[%c10_466, %c0_467, %c0_468] : memref<18x18x128xbf16, #tpu.memory_space<vmem>>, vector<1x16x128xbf16>
    %691 = vector.shape_cast %690 : vector<1x16x128xbf16> to vector<16x128xbf16>
    %c3_469 = arith.constant 3 : index
    %c0_470 = arith.constant 0 : index
    %692 = vector.load %arg4[%c3_469, %c0_470] : memref<9x128xf32, #tpu.memory_space<vmem>>, vector<1x128xf32>
    %693 = arith.extf %691 : vector<16x128xbf16> to vector<16x128xf32>
    %694 = vector.broadcast %692 : vector<1x128xf32> to vector<16x128xf32>
    %695 = arith.mulf %693, %694 : vector<16x128xf32>
    %696 = arith.addf %689, %695 : vector<16x128xf32>
    %c10_471 = arith.constant 10 : index
    %c1_472 = arith.constant 1 : index
    %c0_473 = arith.constant 0 : index
    %697 = vector.load %arg9[%c10_471, %c1_472, %c0_473] : memref<18x18x128xbf16, #tpu.memory_space<vmem>>, vector<1x16x128xbf16>
    %698 = vector.shape_cast %697 : vector<1x16x128xbf16> to vector<16x128xbf16>
    %c4_474 = arith.constant 4 : index
    %c0_475 = arith.constant 0 : index
    %699 = vector.load %arg4[%c4_474, %c0_475] : memref<9x128xf32, #tpu.memory_space<vmem>>, vector<1x128xf32>
    %700 = arith.extf %698 : vector<16x128xbf16> to vector<16x128xf32>
    %701 = vector.broadcast %699 : vector<1x128xf32> to vector<16x128xf32>
    %702 = arith.mulf %700, %701 : vector<16x128xf32>
    %703 = arith.addf %696, %702 : vector<16x128xf32>
    %c10_476 = arith.constant 10 : index
    %c2_477 = arith.constant 2 : index
    %c0_478 = arith.constant 0 : index
    %704 = vector.load %arg9[%c10_476, %c2_477, %c0_478] : memref<18x18x128xbf16, #tpu.memory_space<vmem>>, vector<1x16x128xbf16>
    %705 = vector.shape_cast %704 : vector<1x16x128xbf16> to vector<16x128xbf16>
    %c5_479 = arith.constant 5 : index
    %c0_480 = arith.constant 0 : index
    %706 = vector.load %arg4[%c5_479, %c0_480] : memref<9x128xf32, #tpu.memory_space<vmem>>, vector<1x128xf32>
    %707 = arith.extf %705 : vector<16x128xbf16> to vector<16x128xf32>
    %708 = vector.broadcast %706 : vector<1x128xf32> to vector<16x128xf32>
    %709 = arith.mulf %707, %708 : vector<16x128xf32>
    %710 = arith.addf %703, %709 : vector<16x128xf32>
    %c11 = arith.constant 11 : index
    %c0_481 = arith.constant 0 : index
    %c0_482 = arith.constant 0 : index
    %711 = vector.load %arg9[%c11, %c0_481, %c0_482] : memref<18x18x128xbf16, #tpu.memory_space<vmem>>, vector<1x16x128xbf16>
    %712 = vector.shape_cast %711 : vector<1x16x128xbf16> to vector<16x128xbf16>
    %c6_483 = arith.constant 6 : index
    %c0_484 = arith.constant 0 : index
    %713 = vector.load %arg4[%c6_483, %c0_484] : memref<9x128xf32, #tpu.memory_space<vmem>>, vector<1x128xf32>
    %714 = arith.extf %712 : vector<16x128xbf16> to vector<16x128xf32>
    %715 = vector.broadcast %713 : vector<1x128xf32> to vector<16x128xf32>
    %716 = arith.mulf %714, %715 : vector<16x128xf32>
    %717 = arith.addf %710, %716 : vector<16x128xf32>
    %c11_485 = arith.constant 11 : index
    %c1_486 = arith.constant 1 : index
    %c0_487 = arith.constant 0 : index
    %718 = vector.load %arg9[%c11_485, %c1_486, %c0_487] : memref<18x18x128xbf16, #tpu.memory_space<vmem>>, vector<1x16x128xbf16>
    %719 = vector.shape_cast %718 : vector<1x16x128xbf16> to vector<16x128xbf16>
    %c7_488 = arith.constant 7 : index
    %c0_489 = arith.constant 0 : index
    %720 = vector.load %arg4[%c7_488, %c0_489] : memref<9x128xf32, #tpu.memory_space<vmem>>, vector<1x128xf32>
    %721 = arith.extf %719 : vector<16x128xbf16> to vector<16x128xf32>
    %722 = vector.broadcast %720 : vector<1x128xf32> to vector<16x128xf32>
    %723 = arith.mulf %721, %722 : vector<16x128xf32>
    %724 = arith.addf %717, %723 : vector<16x128xf32>
    %c11_490 = arith.constant 11 : index
    %c2_491 = arith.constant 2 : index
    %c0_492 = arith.constant 0 : index
    %725 = vector.load %arg9[%c11_490, %c2_491, %c0_492] : memref<18x18x128xbf16, #tpu.memory_space<vmem>>, vector<1x16x128xbf16>
    %726 = vector.shape_cast %725 : vector<1x16x128xbf16> to vector<16x128xbf16>
    %c8_493 = arith.constant 8 : index
    %c0_494 = arith.constant 0 : index
    %727 = vector.load %arg4[%c8_493, %c0_494] : memref<9x128xf32, #tpu.memory_space<vmem>>, vector<1x128xf32>
    %728 = arith.extf %726 : vector<16x128xbf16> to vector<16x128xf32>
    %729 = vector.broadcast %727 : vector<1x128xf32> to vector<16x128xf32>
    %730 = arith.mulf %728, %729 : vector<16x128xf32>
    %731 = arith.addf %724, %730 : vector<16x128xf32>
    %732 = vector.broadcast %19 : vector<1x128xf32> to vector<16x128xf32>
    %733 = arith.addf %731, %732 : vector<16x128xf32>
    %cst_495 = arith.constant 0.000000e+00 : f32
    %cst_496 = arith.constant 6.000000e+00 : f32
    %734 = vector.broadcast %cst_495 : f32 to vector<16x128xf32>
    %735 = arith.maximumf %734, %733 : vector<16x128xf32>
    %736 = vector.broadcast %cst_496 : f32 to vector<16x128xf32>
    %737 = arith.minimumf %736, %735 : vector<16x128xf32>
    %738 = arith.truncf %737 : vector<16x128xf32> to vector<16x128xbf16>
    %c144 = arith.constant 144 : index
    %c0_497 = arith.constant 0 : index
    %739 = vector.load %arg10[%c144, %c0_497] : memref<256x128xbf16, #tpu.memory_space<vmem>>, vector<16x128xbf16>
    tpu.vector_store %arg10[%c144, %c0_497], %738 {strides = array<i32>} : memref<256x128xbf16, #tpu.memory_space<vmem>>, vector<16x128xbf16>,
    %cst_498 = arith.constant 0.000000e+00 : f32
    %740 = vector.broadcast %cst_498 : f32 to vector<16x128xf32>
    %c10_499 = arith.constant 10 : index
    %c0_500 = arith.constant 0 : index
    %c0_501 = arith.constant 0 : index
    %741 = vector.load %arg9[%c10_499, %c0_500, %c0_501] : memref<18x18x128xbf16, #tpu.memory_space<vmem>>, vector<1x16x128xbf16>
    %742 = vector.shape_cast %741 : vector<1x16x128xbf16> to vector<16x128xbf16>
    %c0_502 = arith.constant 0 : index
    %c0_503 = arith.constant 0 : index
    %743 = vector.load %arg4[%c0_502, %c0_503] : memref<9x128xf32, #tpu.memory_space<vmem>>, vector<1x128xf32>
    %744 = arith.extf %742 : vector<16x128xbf16> to vector<16x128xf32>
    %745 = vector.broadcast %743 : vector<1x128xf32> to vector<16x128xf32>
    %746 = arith.mulf %744, %745 : vector<16x128xf32>
    %747 = arith.addf %740, %746 : vector<16x128xf32>
    %c10_504 = arith.constant 10 : index
    %c1_505 = arith.constant 1 : index
    %c0_506 = arith.constant 0 : index
    %748 = vector.load %arg9[%c10_504, %c1_505, %c0_506] : memref<18x18x128xbf16, #tpu.memory_space<vmem>>, vector<1x16x128xbf16>
    %749 = vector.shape_cast %748 : vector<1x16x128xbf16> to vector<16x128xbf16>
    %c1_507 = arith.constant 1 : index
    %c0_508 = arith.constant 0 : index
    %750 = vector.load %arg4[%c1_507, %c0_508] : memref<9x128xf32, #tpu.memory_space<vmem>>, vector<1x128xf32>
    %751 = arith.extf %749 : vector<16x128xbf16> to vector<16x128xf32>
    %752 = vector.broadcast %750 : vector<1x128xf32> to vector<16x128xf32>
    %753 = arith.mulf %751, %752 : vector<16x128xf32>
    %754 = arith.addf %747, %753 : vector<16x128xf32>
    %c10_509 = arith.constant 10 : index
    %c2_510 = arith.constant 2 : index
    %c0_511 = arith.constant 0 : index
    %755 = vector.load %arg9[%c10_509, %c2_510, %c0_511] : memref<18x18x128xbf16, #tpu.memory_space<vmem>>, vector<1x16x128xbf16>
    %756 = vector.shape_cast %755 : vector<1x16x128xbf16> to vector<16x128xbf16>
    %c2_512 = arith.constant 2 : index
    %c0_513 = arith.constant 0 : index
    %757 = vector.load %arg4[%c2_512, %c0_513] : memref<9x128xf32, #tpu.memory_space<vmem>>, vector<1x128xf32>
    %758 = arith.extf %756 : vector<16x128xbf16> to vector<16x128xf32>
    %759 = vector.broadcast %757 : vector<1x128xf32> to vector<16x128xf32>
    %760 = arith.mulf %758, %759 : vector<16x128xf32>
    %761 = arith.addf %754, %760 : vector<16x128xf32>
    %c11_514 = arith.constant 11 : index
    %c0_515 = arith.constant 0 : index
    %c0_516 = arith.constant 0 : index
    %762 = vector.load %arg9[%c11_514, %c0_515, %c0_516] : memref<18x18x128xbf16, #tpu.memory_space<vmem>>, vector<1x16x128xbf16>
    %763 = vector.shape_cast %762 : vector<1x16x128xbf16> to vector<16x128xbf16>
    %c3_517 = arith.constant 3 : index
    %c0_518 = arith.constant 0 : index
    %764 = vector.load %arg4[%c3_517, %c0_518] : memref<9x128xf32, #tpu.memory_space<vmem>>, vector<1x128xf32>
    %765 = arith.extf %763 : vector<16x128xbf16> to vector<16x128xf32>
    %766 = vector.broadcast %764 : vector<1x128xf32> to vector<16x128xf32>
    %767 = arith.mulf %765, %766 : vector<16x128xf32>
    %768 = arith.addf %761, %767 : vector<16x128xf32>
    %c11_519 = arith.constant 11 : index
    %c1_520 = arith.constant 1 : index
    %c0_521 = arith.constant 0 : index
    %769 = vector.load %arg9[%c11_519, %c1_520, %c0_521] : memref<18x18x128xbf16, #tpu.memory_space<vmem>>, vector<1x16x128xbf16>
    %770 = vector.shape_cast %769 : vector<1x16x128xbf16> to vector<16x128xbf16>
    %c4_522 = arith.constant 4 : index
    %c0_523 = arith.constant 0 : index
    %771 = vector.load %arg4[%c4_522, %c0_523] : memref<9x128xf32, #tpu.memory_space<vmem>>, vector<1x128xf32>
    %772 = arith.extf %770 : vector<16x128xbf16> to vector<16x128xf32>
    %773 = vector.broadcast %771 : vector<1x128xf32> to vector<16x128xf32>
    %774 = arith.mulf %772, %773 : vector<16x128xf32>
    %775 = arith.addf %768, %774 : vector<16x128xf32>
    %c11_524 = arith.constant 11 : index
    %c2_525 = arith.constant 2 : index
    %c0_526 = arith.constant 0 : index
    %776 = vector.load %arg9[%c11_524, %c2_525, %c0_526] : memref<18x18x128xbf16, #tpu.memory_space<vmem>>, vector<1x16x128xbf16>
    %777 = vector.shape_cast %776 : vector<1x16x128xbf16> to vector<16x128xbf16>
    %c5_527 = arith.constant 5 : index
    %c0_528 = arith.constant 0 : index
    %778 = vector.load %arg4[%c5_527, %c0_528] : memref<9x128xf32, #tpu.memory_space<vmem>>, vector<1x128xf32>
    %779 = arith.extf %777 : vector<16x128xbf16> to vector<16x128xf32>
    %780 = vector.broadcast %778 : vector<1x128xf32> to vector<16x128xf32>
    %781 = arith.mulf %779, %780 : vector<16x128xf32>
    %782 = arith.addf %775, %781 : vector<16x128xf32>
    %c12 = arith.constant 12 : index
    %c0_529 = arith.constant 0 : index
    %c0_530 = arith.constant 0 : index
    %783 = vector.load %arg9[%c12, %c0_529, %c0_530] : memref<18x18x128xbf16, #tpu.memory_space<vmem>>, vector<1x16x128xbf16>
    %784 = vector.shape_cast %783 : vector<1x16x128xbf16> to vector<16x128xbf16>
    %c6_531 = arith.constant 6 : index
    %c0_532 = arith.constant 0 : index
    %785 = vector.load %arg4[%c6_531, %c0_532] : memref<9x128xf32, #tpu.memory_space<vmem>>, vector<1x128xf32>
    %786 = arith.extf %784 : vector<16x128xbf16> to vector<16x128xf32>
    %787 = vector.broadcast %785 : vector<1x128xf32> to vector<16x128xf32>
    %788 = arith.mulf %786, %787 : vector<16x128xf32>
    %789 = arith.addf %782, %788 : vector<16x128xf32>
    %c12_533 = arith.constant 12 : index
    %c1_534 = arith.constant 1 : index
    %c0_535 = arith.constant 0 : index
    %790 = vector.load %arg9[%c12_533, %c1_534, %c0_535] : memref<18x18x128xbf16, #tpu.memory_space<vmem>>, vector<1x16x128xbf16>
    %791 = vector.shape_cast %790 : vector<1x16x128xbf16> to vector<16x128xbf16>
    %c7_536 = arith.constant 7 : index
    %c0_537 = arith.constant 0 : index
    %792 = vector.load %arg4[%c7_536, %c0_537] : memref<9x128xf32, #tpu.memory_space<vmem>>, vector<1x128xf32>
    %793 = arith.extf %791 : vector<16x128xbf16> to vector<16x128xf32>
    %794 = vector.broadcast %792 : vector<1x128xf32> to vector<16x128xf32>
    %795 = arith.mulf %793, %794 : vector<16x128xf32>
    %796 = arith.addf %789, %795 : vector<16x128xf32>
    %c12_538 = arith.constant 12 : index
    %c2_539 = arith.constant 2 : index
    %c0_540 = arith.constant 0 : index
    %797 = vector.load %arg9[%c12_538, %c2_539, %c0_540] : memref<18x18x128xbf16, #tpu.memory_space<vmem>>, vector<1x16x128xbf16>
    %798 = vector.shape_cast %797 : vector<1x16x128xbf16> to vector<16x128xbf16>
    %c8_541 = arith.constant 8 : index
    %c0_542 = arith.constant 0 : index
    %799 = vector.load %arg4[%c8_541, %c0_542] : memref<9x128xf32, #tpu.memory_space<vmem>>, vector<1x128xf32>
    %800 = arith.extf %798 : vector<16x128xbf16> to vector<16x128xf32>
    %801 = vector.broadcast %799 : vector<1x128xf32> to vector<16x128xf32>
    %802 = arith.mulf %800, %801 : vector<16x128xf32>
    %803 = arith.addf %796, %802 : vector<16x128xf32>
    %804 = vector.broadcast %19 : vector<1x128xf32> to vector<16x128xf32>
    %805 = arith.addf %803, %804 : vector<16x128xf32>
    %cst_543 = arith.constant 0.000000e+00 : f32
    %cst_544 = arith.constant 6.000000e+00 : f32
    %806 = vector.broadcast %cst_543 : f32 to vector<16x128xf32>
    %807 = arith.maximumf %806, %805 : vector<16x128xf32>
    %808 = vector.broadcast %cst_544 : f32 to vector<16x128xf32>
    %809 = arith.minimumf %808, %807 : vector<16x128xf32>
    %810 = arith.truncf %809 : vector<16x128xf32> to vector<16x128xbf16>
    %c160 = arith.constant 160 : index
    %c0_545 = arith.constant 0 : index
    %811 = vector.load %arg10[%c160, %c0_545] : memref<256x128xbf16, #tpu.memory_space<vmem>>, vector<16x128xbf16>
    tpu.vector_store %arg10[%c160, %c0_545], %810 {strides = array<i32>} : memref<256x128xbf16, #tpu.memory_space<vmem>>, vector<16x128xbf16>,
    %cst_546 = arith.constant 0.000000e+00 : f32
    %812 = vector.broadcast %cst_546 : f32 to vector<16x128xf32>
    %c11_547 = arith.constant 11 : index
    %c0_548 = arith.constant 0 : index
    %c0_549 = arith.constant 0 : index
    %813 = vector.load %arg9[%c11_547, %c0_548, %c0_549] : memref<18x18x128xbf16, #tpu.memory_space<vmem>>, vector<1x16x128xbf16>
    %814 = vector.shape_cast %813 : vector<1x16x128xbf16> to vector<16x128xbf16>
    %c0_550 = arith.constant 0 : index
    %c0_551 = arith.constant 0 : index
    %815 = vector.load %arg4[%c0_550, %c0_551] : memref<9x128xf32, #tpu.memory_space<vmem>>, vector<1x128xf32>
    %816 = arith.extf %814 : vector<16x128xbf16> to vector<16x128xf32>
    %817 = vector.broadcast %815 : vector<1x128xf32> to vector<16x128xf32>
    %818 = arith.mulf %816, %817 : vector<16x128xf32>
    %819 = arith.addf %812, %818 : vector<16x128xf32>
    %c11_552 = arith.constant 11 : index
    %c1_553 = arith.constant 1 : index
    %c0_554 = arith.constant 0 : index
    %820 = vector.load %arg9[%c11_552, %c1_553, %c0_554] : memref<18x18x128xbf16, #tpu.memory_space<vmem>>, vector<1x16x128xbf16>
    %821 = vector.shape_cast %820 : vector<1x16x128xbf16> to vector<16x128xbf16>
    %c1_555 = arith.constant 1 : index
    %c0_556 = arith.constant 0 : index
    %822 = vector.load %arg4[%c1_555, %c0_556] : memref<9x128xf32, #tpu.memory_space<vmem>>, vector<1x128xf32>
    %823 = arith.extf %821 : vector<16x128xbf16> to vector<16x128xf32>
    %824 = vector.broadcast %822 : vector<1x128xf32> to vector<16x128xf32>
    %825 = arith.mulf %823, %824 : vector<16x128xf32>
    %826 = arith.addf %819, %825 : vector<16x128xf32>
    %c11_557 = arith.constant 11 : index
    %c2_558 = arith.constant 2 : index
    %c0_559 = arith.constant 0 : index
    %827 = vector.load %arg9[%c11_557, %c2_558, %c0_559] : memref<18x18x128xbf16, #tpu.memory_space<vmem>>, vector<1x16x128xbf16>
    %828 = vector.shape_cast %827 : vector<1x16x128xbf16> to vector<16x128xbf16>
    %c2_560 = arith.constant 2 : index
    %c0_561 = arith.constant 0 : index
    %829 = vector.load %arg4[%c2_560, %c0_561] : memref<9x128xf32, #tpu.memory_space<vmem>>, vector<1x128xf32>
    %830 = arith.extf %828 : vector<16x128xbf16> to vector<16x128xf32>
    %831 = vector.broadcast %829 : vector<1x128xf32> to vector<16x128xf32>
    %832 = arith.mulf %830, %831 : vector<16x128xf32>
    %833 = arith.addf %826, %832 : vector<16x128xf32>
    %c12_562 = arith.constant 12 : index
    %c0_563 = arith.constant 0 : index
    %c0_564 = arith.constant 0 : index
    %834 = vector.load %arg9[%c12_562, %c0_563, %c0_564] : memref<18x18x128xbf16, #tpu.memory_space<vmem>>, vector<1x16x128xbf16>
    %835 = vector.shape_cast %834 : vector<1x16x128xbf16> to vector<16x128xbf16>
    %c3_565 = arith.constant 3 : index
    %c0_566 = arith.constant 0 : index
    %836 = vector.load %arg4[%c3_565, %c0_566] : memref<9x128xf32, #tpu.memory_space<vmem>>, vector<1x128xf32>
    %837 = arith.extf %835 : vector<16x128xbf16> to vector<16x128xf32>
    %838 = vector.broadcast %836 : vector<1x128xf32> to vector<16x128xf32>
    %839 = arith.mulf %837, %838 : vector<16x128xf32>
    %840 = arith.addf %833, %839 : vector<16x128xf32>
    %c12_567 = arith.constant 12 : index
    %c1_568 = arith.constant 1 : index
    %c0_569 = arith.constant 0 : index
    %841 = vector.load %arg9[%c12_567, %c1_568, %c0_569] : memref<18x18x128xbf16, #tpu.memory_space<vmem>>, vector<1x16x128xbf16>
    %842 = vector.shape_cast %841 : vector<1x16x128xbf16> to vector<16x128xbf16>
    %c4_570 = arith.constant 4 : index
    %c0_571 = arith.constant 0 : index
    %843 = vector.load %arg4[%c4_570, %c0_571] : memref<9x128xf32, #tpu.memory_space<vmem>>, vector<1x128xf32>
    %844 = arith.extf %842 : vector<16x128xbf16> to vector<16x128xf32>
    %845 = vector.broadcast %843 : vector<1x128xf32> to vector<16x128xf32>
    %846 = arith.mulf %844, %845 : vector<16x128xf32>
    %847 = arith.addf %840, %846 : vector<16x128xf32>
    %c12_572 = arith.constant 12 : index
    %c2_573 = arith.constant 2 : index
    %c0_574 = arith.constant 0 : index
    %848 = vector.load %arg9[%c12_572, %c2_573, %c0_574] : memref<18x18x128xbf16, #tpu.memory_space<vmem>>, vector<1x16x128xbf16>
    %849 = vector.shape_cast %848 : vector<1x16x128xbf16> to vector<16x128xbf16>
    %c5_575 = arith.constant 5 : index
    %c0_576 = arith.constant 0 : index
    %850 = vector.load %arg4[%c5_575, %c0_576] : memref<9x128xf32, #tpu.memory_space<vmem>>, vector<1x128xf32>
    %851 = arith.extf %849 : vector<16x128xbf16> to vector<16x128xf32>
    %852 = vector.broadcast %850 : vector<1x128xf32> to vector<16x128xf32>
    %853 = arith.mulf %851, %852 : vector<16x128xf32>
    %854 = arith.addf %847, %853 : vector<16x128xf32>
    %c13 = arith.constant 13 : index
    %c0_577 = arith.constant 0 : index
    %c0_578 = arith.constant 0 : index
    %855 = vector.load %arg9[%c13, %c0_577, %c0_578] : memref<18x18x128xbf16, #tpu.memory_space<vmem>>, vector<1x16x128xbf16>
    %856 = vector.shape_cast %855 : vector<1x16x128xbf16> to vector<16x128xbf16>
    %c6_579 = arith.constant 6 : index
    %c0_580 = arith.constant 0 : index
    %857 = vector.load %arg4[%c6_579, %c0_580] : memref<9x128xf32, #tpu.memory_space<vmem>>, vector<1x128xf32>
    %858 = arith.extf %856 : vector<16x128xbf16> to vector<16x128xf32>
    %859 = vector.broadcast %857 : vector<1x128xf32> to vector<16x128xf32>
    %860 = arith.mulf %858, %859 : vector<16x128xf32>
    %861 = arith.addf %854, %860 : vector<16x128xf32>
    %c13_581 = arith.constant 13 : index
    %c1_582 = arith.constant 1 : index
    %c0_583 = arith.constant 0 : index
    %862 = vector.load %arg9[%c13_581, %c1_582, %c0_583] : memref<18x18x128xbf16, #tpu.memory_space<vmem>>, vector<1x16x128xbf16>
    %863 = vector.shape_cast %862 : vector<1x16x128xbf16> to vector<16x128xbf16>
    %c7_584 = arith.constant 7 : index
    %c0_585 = arith.constant 0 : index
    %864 = vector.load %arg4[%c7_584, %c0_585] : memref<9x128xf32, #tpu.memory_space<vmem>>, vector<1x128xf32>
    %865 = arith.extf %863 : vector<16x128xbf16> to vector<16x128xf32>
    %866 = vector.broadcast %864 : vector<1x128xf32> to vector<16x128xf32>
    %867 = arith.mulf %865, %866 : vector<16x128xf32>
    %868 = arith.addf %861, %867 : vector<16x128xf32>
    %c13_586 = arith.constant 13 : index
    %c2_587 = arith.constant 2 : index
    %c0_588 = arith.constant 0 : index
    %869 = vector.load %arg9[%c13_586, %c2_587, %c0_588] : memref<18x18x128xbf16, #tpu.memory_space<vmem>>, vector<1x16x128xbf16>
    %870 = vector.shape_cast %869 : vector<1x16x128xbf16> to vector<16x128xbf16>
    %c8_589 = arith.constant 8 : index
    %c0_590 = arith.constant 0 : index
    %871 = vector.load %arg4[%c8_589, %c0_590] : memref<9x128xf32, #tpu.memory_space<vmem>>, vector<1x128xf32>
    %872 = arith.extf %870 : vector<16x128xbf16> to vector<16x128xf32>
    %873 = vector.broadcast %871 : vector<1x128xf32> to vector<16x128xf32>
    %874 = arith.mulf %872, %873 : vector<16x128xf32>
    %875 = arith.addf %868, %874 : vector<16x128xf32>
    %876 = vector.broadcast %19 : vector<1x128xf32> to vector<16x128xf32>
    %877 = arith.addf %875, %876 : vector<16x128xf32>
    %cst_591 = arith.constant 0.000000e+00 : f32
    %cst_592 = arith.constant 6.000000e+00 : f32
    %878 = vector.broadcast %cst_591 : f32 to vector<16x128xf32>
    %879 = arith.maximumf %878, %877 : vector<16x128xf32>
    %880 = vector.broadcast %cst_592 : f32 to vector<16x128xf32>
    %881 = arith.minimumf %880, %879 : vector<16x128xf32>
    %882 = arith.truncf %881 : vector<16x128xf32> to vector<16x128xbf16>
    %c176 = arith.constant 176 : index
    %c0_593 = arith.constant 0 : index
    %883 = vector.load %arg10[%c176, %c0_593] : memref<256x128xbf16, #tpu.memory_space<vmem>>, vector<16x128xbf16>
    tpu.vector_store %arg10[%c176, %c0_593], %882 {strides = array<i32>} : memref<256x128xbf16, #tpu.memory_space<vmem>>, vector<16x128xbf16>,
    %cst_594 = arith.constant 0.000000e+00 : f32
    %884 = vector.broadcast %cst_594 : f32 to vector<16x128xf32>
    %c12_595 = arith.constant 12 : index
    %c0_596 = arith.constant 0 : index
    %c0_597 = arith.constant 0 : index
    %885 = vector.load %arg9[%c12_595, %c0_596, %c0_597] : memref<18x18x128xbf16, #tpu.memory_space<vmem>>, vector<1x16x128xbf16>
    %886 = vector.shape_cast %885 : vector<1x16x128xbf16> to vector<16x128xbf16>
    %c0_598 = arith.constant 0 : index
    %c0_599 = arith.constant 0 : index
    %887 = vector.load %arg4[%c0_598, %c0_599] : memref<9x128xf32, #tpu.memory_space<vmem>>, vector<1x128xf32>
    %888 = arith.extf %886 : vector<16x128xbf16> to vector<16x128xf32>
    %889 = vector.broadcast %887 : vector<1x128xf32> to vector<16x128xf32>
    %890 = arith.mulf %888, %889 : vector<16x128xf32>
    %891 = arith.addf %884, %890 : vector<16x128xf32>
    %c12_600 = arith.constant 12 : index
    %c1_601 = arith.constant 1 : index
    %c0_602 = arith.constant 0 : index
    %892 = vector.load %arg9[%c12_600, %c1_601, %c0_602] : memref<18x18x128xbf16, #tpu.memory_space<vmem>>, vector<1x16x128xbf16>
    %893 = vector.shape_cast %892 : vector<1x16x128xbf16> to vector<16x128xbf16>
    %c1_603 = arith.constant 1 : index
    %c0_604 = arith.constant 0 : index
    %894 = vector.load %arg4[%c1_603, %c0_604] : memref<9x128xf32, #tpu.memory_space<vmem>>, vector<1x128xf32>
    %895 = arith.extf %893 : vector<16x128xbf16> to vector<16x128xf32>
    %896 = vector.broadcast %894 : vector<1x128xf32> to vector<16x128xf32>
    %897 = arith.mulf %895, %896 : vector<16x128xf32>
    %898 = arith.addf %891, %897 : vector<16x128xf32>
    %c12_605 = arith.constant 12 : index
    %c2_606 = arith.constant 2 : index
    %c0_607 = arith.constant 0 : index
    %899 = vector.load %arg9[%c12_605, %c2_606, %c0_607] : memref<18x18x128xbf16, #tpu.memory_space<vmem>>, vector<1x16x128xbf16>
    %900 = vector.shape_cast %899 : vector<1x16x128xbf16> to vector<16x128xbf16>
    %c2_608 = arith.constant 2 : index
    %c0_609 = arith.constant 0 : index
    %901 = vector.load %arg4[%c2_608, %c0_609] : memref<9x128xf32, #tpu.memory_space<vmem>>, vector<1x128xf32>
    %902 = arith.extf %900 : vector<16x128xbf16> to vector<16x128xf32>
    %903 = vector.broadcast %901 : vector<1x128xf32> to vector<16x128xf32>
    %904 = arith.mulf %902, %903 : vector<16x128xf32>
    %905 = arith.addf %898, %904 : vector<16x128xf32>
    %c13_610 = arith.constant 13 : index
    %c0_611 = arith.constant 0 : index
    %c0_612 = arith.constant 0 : index
    %906 = vector.load %arg9[%c13_610, %c0_611, %c0_612] : memref<18x18x128xbf16, #tpu.memory_space<vmem>>, vector<1x16x128xbf16>
    %907 = vector.shape_cast %906 : vector<1x16x128xbf16> to vector<16x128xbf16>
    %c3_613 = arith.constant 3 : index
    %c0_614 = arith.constant 0 : index
    %908 = vector.load %arg4[%c3_613, %c0_614] : memref<9x128xf32, #tpu.memory_space<vmem>>, vector<1x128xf32>
    %909 = arith.extf %907 : vector<16x128xbf16> to vector<16x128xf32>
    %910 = vector.broadcast %908 : vector<1x128xf32> to vector<16x128xf32>
    %911 = arith.mulf %909, %910 : vector<16x128xf32>
    %912 = arith.addf %905, %911 : vector<16x128xf32>
    %c13_615 = arith.constant 13 : index
    %c1_616 = arith.constant 1 : index
    %c0_617 = arith.constant 0 : index
    %913 = vector.load %arg9[%c13_615, %c1_616, %c0_617] : memref<18x18x128xbf16, #tpu.memory_space<vmem>>, vector<1x16x128xbf16>
    %914 = vector.shape_cast %913 : vector<1x16x128xbf16> to vector<16x128xbf16>
    %c4_618 = arith.constant 4 : index
    %c0_619 = arith.constant 0 : index
    %915 = vector.load %arg4[%c4_618, %c0_619] : memref<9x128xf32, #tpu.memory_space<vmem>>, vector<1x128xf32>
    %916 = arith.extf %914 : vector<16x128xbf16> to vector<16x128xf32>
    %917 = vector.broadcast %915 : vector<1x128xf32> to vector<16x128xf32>
    %918 = arith.mulf %916, %917 : vector<16x128xf32>
    %919 = arith.addf %912, %918 : vector<16x128xf32>
    %c13_620 = arith.constant 13 : index
    %c2_621 = arith.constant 2 : index
    %c0_622 = arith.constant 0 : index
    %920 = vector.load %arg9[%c13_620, %c2_621, %c0_622] : memref<18x18x128xbf16, #tpu.memory_space<vmem>>, vector<1x16x128xbf16>
    %921 = vector.shape_cast %920 : vector<1x16x128xbf16> to vector<16x128xbf16>
    %c5_623 = arith.constant 5 : index
    %c0_624 = arith.constant 0 : index
    %922 = vector.load %arg4[%c5_623, %c0_624] : memref<9x128xf32, #tpu.memory_space<vmem>>, vector<1x128xf32>
    %923 = arith.extf %921 : vector<16x128xbf16> to vector<16x128xf32>
    %924 = vector.broadcast %922 : vector<1x128xf32> to vector<16x128xf32>
    %925 = arith.mulf %923, %924 : vector<16x128xf32>
    %926 = arith.addf %919, %925 : vector<16x128xf32>
    %c14 = arith.constant 14 : index
    %c0_625 = arith.constant 0 : index
    %c0_626 = arith.constant 0 : index
    %927 = vector.load %arg9[%c14, %c0_625, %c0_626] : memref<18x18x128xbf16, #tpu.memory_space<vmem>>, vector<1x16x128xbf16>
    %928 = vector.shape_cast %927 : vector<1x16x128xbf16> to vector<16x128xbf16>
    %c6_627 = arith.constant 6 : index
    %c0_628 = arith.constant 0 : index
    %929 = vector.load %arg4[%c6_627, %c0_628] : memref<9x128xf32, #tpu.memory_space<vmem>>, vector<1x128xf32>
    %930 = arith.extf %928 : vector<16x128xbf16> to vector<16x128xf32>
    %931 = vector.broadcast %929 : vector<1x128xf32> to vector<16x128xf32>
    %932 = arith.mulf %930, %931 : vector<16x128xf32>
    %933 = arith.addf %926, %932 : vector<16x128xf32>
    %c14_629 = arith.constant 14 : index
    %c1_630 = arith.constant 1 : index
    %c0_631 = arith.constant 0 : index
    %934 = vector.load %arg9[%c14_629, %c1_630, %c0_631] : memref<18x18x128xbf16, #tpu.memory_space<vmem>>, vector<1x16x128xbf16>
    %935 = vector.shape_cast %934 : vector<1x16x128xbf16> to vector<16x128xbf16>
    %c7_632 = arith.constant 7 : index
    %c0_633 = arith.constant 0 : index
    %936 = vector.load %arg4[%c7_632, %c0_633] : memref<9x128xf32, #tpu.memory_space<vmem>>, vector<1x128xf32>
    %937 = arith.extf %935 : vector<16x128xbf16> to vector<16x128xf32>
    %938 = vector.broadcast %936 : vector<1x128xf32> to vector<16x128xf32>
    %939 = arith.mulf %937, %938 : vector<16x128xf32>
    %940 = arith.addf %933, %939 : vector<16x128xf32>
    %c14_634 = arith.constant 14 : index
    %c2_635 = arith.constant 2 : index
    %c0_636 = arith.constant 0 : index
    %941 = vector.load %arg9[%c14_634, %c2_635, %c0_636] : memref<18x18x128xbf16, #tpu.memory_space<vmem>>, vector<1x16x128xbf16>
    %942 = vector.shape_cast %941 : vector<1x16x128xbf16> to vector<16x128xbf16>
    %c8_637 = arith.constant 8 : index
    %c0_638 = arith.constant 0 : index
    %943 = vector.load %arg4[%c8_637, %c0_638] : memref<9x128xf32, #tpu.memory_space<vmem>>, vector<1x128xf32>
    %944 = arith.extf %942 : vector<16x128xbf16> to vector<16x128xf32>
    %945 = vector.broadcast %943 : vector<1x128xf32> to vector<16x128xf32>
    %946 = arith.mulf %944, %945 : vector<16x128xf32>
    %947 = arith.addf %940, %946 : vector<16x128xf32>
    %948 = vector.broadcast %19 : vector<1x128xf32> to vector<16x128xf32>
    %949 = arith.addf %947, %948 : vector<16x128xf32>
    %cst_639 = arith.constant 0.000000e+00 : f32
    %cst_640 = arith.constant 6.000000e+00 : f32
    %950 = vector.broadcast %cst_639 : f32 to vector<16x128xf32>
    %951 = arith.maximumf %950, %949 : vector<16x128xf32>
    %952 = vector.broadcast %cst_640 : f32 to vector<16x128xf32>
    %953 = arith.minimumf %952, %951 : vector<16x128xf32>
    %954 = arith.truncf %953 : vector<16x128xf32> to vector<16x128xbf16>
    %c192 = arith.constant 192 : index
    %c0_641 = arith.constant 0 : index
    %955 = vector.load %arg10[%c192, %c0_641] : memref<256x128xbf16, #tpu.memory_space<vmem>>, vector<16x128xbf16>
    tpu.vector_store %arg10[%c192, %c0_641], %954 {strides = array<i32>} : memref<256x128xbf16, #tpu.memory_space<vmem>>, vector<16x128xbf16>,
    %cst_642 = arith.constant 0.000000e+00 : f32
    %956 = vector.broadcast %cst_642 : f32 to vector<16x128xf32>
    %c13_643 = arith.constant 13 : index
    %c0_644 = arith.constant 0 : index
    %c0_645 = arith.constant 0 : index
    %957 = vector.load %arg9[%c13_643, %c0_644, %c0_645] : memref<18x18x128xbf16, #tpu.memory_space<vmem>>, vector<1x16x128xbf16>
    %958 = vector.shape_cast %957 : vector<1x16x128xbf16> to vector<16x128xbf16>
    %c0_646 = arith.constant 0 : index
    %c0_647 = arith.constant 0 : index
    %959 = vector.load %arg4[%c0_646, %c0_647] : memref<9x128xf32, #tpu.memory_space<vmem>>, vector<1x128xf32>
    %960 = arith.extf %958 : vector<16x128xbf16> to vector<16x128xf32>
    %961 = vector.broadcast %959 : vector<1x128xf32> to vector<16x128xf32>
    %962 = arith.mulf %960, %961 : vector<16x128xf32>
    %963 = arith.addf %956, %962 : vector<16x128xf32>
    %c13_648 = arith.constant 13 : index
    %c1_649 = arith.constant 1 : index
    %c0_650 = arith.constant 0 : index
    %964 = vector.load %arg9[%c13_648, %c1_649, %c0_650] : memref<18x18x128xbf16, #tpu.memory_space<vmem>>, vector<1x16x128xbf16>
    %965 = vector.shape_cast %964 : vector<1x16x128xbf16> to vector<16x128xbf16>
    %c1_651 = arith.constant 1 : index
    %c0_652 = arith.constant 0 : index
    %966 = vector.load %arg4[%c1_651, %c0_652] : memref<9x128xf32, #tpu.memory_space<vmem>>, vector<1x128xf32>
    %967 = arith.extf %965 : vector<16x128xbf16> to vector<16x128xf32>
    %968 = vector.broadcast %966 : vector<1x128xf32> to vector<16x128xf32>
    %969 = arith.mulf %967, %968 : vector<16x128xf32>
    %970 = arith.addf %963, %969 : vector<16x128xf32>
    %c13_653 = arith.constant 13 : index
    %c2_654 = arith.constant 2 : index
    %c0_655 = arith.constant 0 : index
    %971 = vector.load %arg9[%c13_653, %c2_654, %c0_655] : memref<18x18x128xbf16, #tpu.memory_space<vmem>>, vector<1x16x128xbf16>
    %972 = vector.shape_cast %971 : vector<1x16x128xbf16> to vector<16x128xbf16>
    %c2_656 = arith.constant 2 : index
    %c0_657 = arith.constant 0 : index
    %973 = vector.load %arg4[%c2_656, %c0_657] : memref<9x128xf32, #tpu.memory_space<vmem>>, vector<1x128xf32>
    %974 = arith.extf %972 : vector<16x128xbf16> to vector<16x128xf32>
    %975 = vector.broadcast %973 : vector<1x128xf32> to vector<16x128xf32>
    %976 = arith.mulf %974, %975 : vector<16x128xf32>
    %977 = arith.addf %970, %976 : vector<16x128xf32>
    %c14_658 = arith.constant 14 : index
    %c0_659 = arith.constant 0 : index
    %c0_660 = arith.constant 0 : index
    %978 = vector.load %arg9[%c14_658, %c0_659, %c0_660] : memref<18x18x128xbf16, #tpu.memory_space<vmem>>, vector<1x16x128xbf16>
    %979 = vector.shape_cast %978 : vector<1x16x128xbf16> to vector<16x128xbf16>
    %c3_661 = arith.constant 3 : index
    %c0_662 = arith.constant 0 : index
    %980 = vector.load %arg4[%c3_661, %c0_662] : memref<9x128xf32, #tpu.memory_space<vmem>>, vector<1x128xf32>
    %981 = arith.extf %979 : vector<16x128xbf16> to vector<16x128xf32>
    %982 = vector.broadcast %980 : vector<1x128xf32> to vector<16x128xf32>
    %983 = arith.mulf %981, %982 : vector<16x128xf32>
    %984 = arith.addf %977, %983 : vector<16x128xf32>
    %c14_663 = arith.constant 14 : index
    %c1_664 = arith.constant 1 : index
    %c0_665 = arith.constant 0 : index
    %985 = vector.load %arg9[%c14_663, %c1_664, %c0_665] : memref<18x18x128xbf16, #tpu.memory_space<vmem>>, vector<1x16x128xbf16>
    %986 = vector.shape_cast %985 : vector<1x16x128xbf16> to vector<16x128xbf16>
    %c4_666 = arith.constant 4 : index
    %c0_667 = arith.constant 0 : index
    %987 = vector.load %arg4[%c4_666, %c0_667] : memref<9x128xf32, #tpu.memory_space<vmem>>, vector<1x128xf32>
    %988 = arith.extf %986 : vector<16x128xbf16> to vector<16x128xf32>
    %989 = vector.broadcast %987 : vector<1x128xf32> to vector<16x128xf32>
    %990 = arith.mulf %988, %989 : vector<16x128xf32>
    %991 = arith.addf %984, %990 : vector<16x128xf32>
    %c14_668 = arith.constant 14 : index
    %c2_669 = arith.constant 2 : index
    %c0_670 = arith.constant 0 : index
    %992 = vector.load %arg9[%c14_668, %c2_669, %c0_670] : memref<18x18x128xbf16, #tpu.memory_space<vmem>>, vector<1x16x128xbf16>
    %993 = vector.shape_cast %992 : vector<1x16x128xbf16> to vector<16x128xbf16>
    %c5_671 = arith.constant 5 : index
    %c0_672 = arith.constant 0 : index
    %994 = vector.load %arg4[%c5_671, %c0_672] : memref<9x128xf32, #tpu.memory_space<vmem>>, vector<1x128xf32>
    %995 = arith.extf %993 : vector<16x128xbf16> to vector<16x128xf32>
    %996 = vector.broadcast %994 : vector<1x128xf32> to vector<16x128xf32>
    %997 = arith.mulf %995, %996 : vector<16x128xf32>
    %998 = arith.addf %991, %997 : vector<16x128xf32>
    %c15 = arith.constant 15 : index
    %c0_673 = arith.constant 0 : index
    %c0_674 = arith.constant 0 : index
    %999 = vector.load %arg9[%c15, %c0_673, %c0_674] : memref<18x18x128xbf16, #tpu.memory_space<vmem>>, vector<1x16x128xbf16>
    %1000 = vector.shape_cast %999 : vector<1x16x128xbf16> to vector<16x128xbf16>
    %c6_675 = arith.constant 6 : index
    %c0_676 = arith.constant 0 : index
    %1001 = vector.load %arg4[%c6_675, %c0_676] : memref<9x128xf32, #tpu.memory_space<vmem>>, vector<1x128xf32>
    %1002 = arith.extf %1000 : vector<16x128xbf16> to vector<16x128xf32>
    %1003 = vector.broadcast %1001 : vector<1x128xf32> to vector<16x128xf32>
    %1004 = arith.mulf %1002, %1003 : vector<16x128xf32>
    %1005 = arith.addf %998, %1004 : vector<16x128xf32>
    %c15_677 = arith.constant 15 : index
    %c1_678 = arith.constant 1 : index
    %c0_679 = arith.constant 0 : index
    %1006 = vector.load %arg9[%c15_677, %c1_678, %c0_679] : memref<18x18x128xbf16, #tpu.memory_space<vmem>>, vector<1x16x128xbf16>
    %1007 = vector.shape_cast %1006 : vector<1x16x128xbf16> to vector<16x128xbf16>
    %c7_680 = arith.constant 7 : index
    %c0_681 = arith.constant 0 : index
    %1008 = vector.load %arg4[%c7_680, %c0_681] : memref<9x128xf32, #tpu.memory_space<vmem>>, vector<1x128xf32>
    %1009 = arith.extf %1007 : vector<16x128xbf16> to vector<16x128xf32>
    %1010 = vector.broadcast %1008 : vector<1x128xf32> to vector<16x128xf32>
    %1011 = arith.mulf %1009, %1010 : vector<16x128xf32>
    %1012 = arith.addf %1005, %1011 : vector<16x128xf32>
    %c15_682 = arith.constant 15 : index
    %c2_683 = arith.constant 2 : index
    %c0_684 = arith.constant 0 : index
    %1013 = vector.load %arg9[%c15_682, %c2_683, %c0_684] : memref<18x18x128xbf16, #tpu.memory_space<vmem>>, vector<1x16x128xbf16>
    %1014 = vector.shape_cast %1013 : vector<1x16x128xbf16> to vector<16x128xbf16>
    %c8_685 = arith.constant 8 : index
    %c0_686 = arith.constant 0 : index
    %1015 = vector.load %arg4[%c8_685, %c0_686] : memref<9x128xf32, #tpu.memory_space<vmem>>, vector<1x128xf32>
    %1016 = arith.extf %1014 : vector<16x128xbf16> to vector<16x128xf32>
    %1017 = vector.broadcast %1015 : vector<1x128xf32> to vector<16x128xf32>
    %1018 = arith.mulf %1016, %1017 : vector<16x128xf32>
    %1019 = arith.addf %1012, %1018 : vector<16x128xf32>
    %1020 = vector.broadcast %19 : vector<1x128xf32> to vector<16x128xf32>
    %1021 = arith.addf %1019, %1020 : vector<16x128xf32>
    %cst_687 = arith.constant 0.000000e+00 : f32
    %cst_688 = arith.constant 6.000000e+00 : f32
    %1022 = vector.broadcast %cst_687 : f32 to vector<16x128xf32>
    %1023 = arith.maximumf %1022, %1021 : vector<16x128xf32>
    %1024 = vector.broadcast %cst_688 : f32 to vector<16x128xf32>
    %1025 = arith.minimumf %1024, %1023 : vector<16x128xf32>
    %1026 = arith.truncf %1025 : vector<16x128xf32> to vector<16x128xbf16>
    %c208 = arith.constant 208 : index
    %c0_689 = arith.constant 0 : index
    %1027 = vector.load %arg10[%c208, %c0_689] : memref<256x128xbf16, #tpu.memory_space<vmem>>, vector<16x128xbf16>
    tpu.vector_store %arg10[%c208, %c0_689], %1026 {strides = array<i32>} : memref<256x128xbf16, #tpu.memory_space<vmem>>, vector<16x128xbf16>,
    %cst_690 = arith.constant 0.000000e+00 : f32
    %1028 = vector.broadcast %cst_690 : f32 to vector<16x128xf32>
    %c14_691 = arith.constant 14 : index
    %c0_692 = arith.constant 0 : index
    %c0_693 = arith.constant 0 : index
    %1029 = vector.load %arg9[%c14_691, %c0_692, %c0_693] : memref<18x18x128xbf16, #tpu.memory_space<vmem>>, vector<1x16x128xbf16>
    %1030 = vector.shape_cast %1029 : vector<1x16x128xbf16> to vector<16x128xbf16>
    %c0_694 = arith.constant 0 : index
    %c0_695 = arith.constant 0 : index
    %1031 = vector.load %arg4[%c0_694, %c0_695] : memref<9x128xf32, #tpu.memory_space<vmem>>, vector<1x128xf32>
    %1032 = arith.extf %1030 : vector<16x128xbf16> to vector<16x128xf32>
    %1033 = vector.broadcast %1031 : vector<1x128xf32> to vector<16x128xf32>
    %1034 = arith.mulf %1032, %1033 : vector<16x128xf32>
    %1035 = arith.addf %1028, %1034 : vector<16x128xf32>
    %c14_696 = arith.constant 14 : index
    %c1_697 = arith.constant 1 : index
    %c0_698 = arith.constant 0 : index
    %1036 = vector.load %arg9[%c14_696, %c1_697, %c0_698] : memref<18x18x128xbf16, #tpu.memory_space<vmem>>, vector<1x16x128xbf16>
    %1037 = vector.shape_cast %1036 : vector<1x16x128xbf16> to vector<16x128xbf16>
    %c1_699 = arith.constant 1 : index
    %c0_700 = arith.constant 0 : index
    %1038 = vector.load %arg4[%c1_699, %c0_700] : memref<9x128xf32, #tpu.memory_space<vmem>>, vector<1x128xf32>
    %1039 = arith.extf %1037 : vector<16x128xbf16> to vector<16x128xf32>
    %1040 = vector.broadcast %1038 : vector<1x128xf32> to vector<16x128xf32>
    %1041 = arith.mulf %1039, %1040 : vector<16x128xf32>
    %1042 = arith.addf %1035, %1041 : vector<16x128xf32>
    %c14_701 = arith.constant 14 : index
    %c2_702 = arith.constant 2 : index
    %c0_703 = arith.constant 0 : index
    %1043 = vector.load %arg9[%c14_701, %c2_702, %c0_703] : memref<18x18x128xbf16, #tpu.memory_space<vmem>>, vector<1x16x128xbf16>
    %1044 = vector.shape_cast %1043 : vector<1x16x128xbf16> to vector<16x128xbf16>
    %c2_704 = arith.constant 2 : index
    %c0_705 = arith.constant 0 : index
    %1045 = vector.load %arg4[%c2_704, %c0_705] : memref<9x128xf32, #tpu.memory_space<vmem>>, vector<1x128xf32>
    %1046 = arith.extf %1044 : vector<16x128xbf16> to vector<16x128xf32>
    %1047 = vector.broadcast %1045 : vector<1x128xf32> to vector<16x128xf32>
    %1048 = arith.mulf %1046, %1047 : vector<16x128xf32>
    %1049 = arith.addf %1042, %1048 : vector<16x128xf32>
    %c15_706 = arith.constant 15 : index
    %c0_707 = arith.constant 0 : index
    %c0_708 = arith.constant 0 : index
    %1050 = vector.load %arg9[%c15_706, %c0_707, %c0_708] : memref<18x18x128xbf16, #tpu.memory_space<vmem>>, vector<1x16x128xbf16>
    %1051 = vector.shape_cast %1050 : vector<1x16x128xbf16> to vector<16x128xbf16>
    %c3_709 = arith.constant 3 : index
    %c0_710 = arith.constant 0 : index
    %1052 = vector.load %arg4[%c3_709, %c0_710] : memref<9x128xf32, #tpu.memory_space<vmem>>, vector<1x128xf32>
    %1053 = arith.extf %1051 : vector<16x128xbf16> to vector<16x128xf32>
    %1054 = vector.broadcast %1052 : vector<1x128xf32> to vector<16x128xf32>
    %1055 = arith.mulf %1053, %1054 : vector<16x128xf32>
    %1056 = arith.addf %1049, %1055 : vector<16x128xf32>
    %c15_711 = arith.constant 15 : index
    %c1_712 = arith.constant 1 : index
    %c0_713 = arith.constant 0 : index
    %1057 = vector.load %arg9[%c15_711, %c1_712, %c0_713] : memref<18x18x128xbf16, #tpu.memory_space<vmem>>, vector<1x16x128xbf16>
    %1058 = vector.shape_cast %1057 : vector<1x16x128xbf16> to vector<16x128xbf16>
    %c4_714 = arith.constant 4 : index
    %c0_715 = arith.constant 0 : index
    %1059 = vector.load %arg4[%c4_714, %c0_715] : memref<9x128xf32, #tpu.memory_space<vmem>>, vector<1x128xf32>
    %1060 = arith.extf %1058 : vector<16x128xbf16> to vector<16x128xf32>
    %1061 = vector.broadcast %1059 : vector<1x128xf32> to vector<16x128xf32>
    %1062 = arith.mulf %1060, %1061 : vector<16x128xf32>
    %1063 = arith.addf %1056, %1062 : vector<16x128xf32>
    %c15_716 = arith.constant 15 : index
    %c2_717 = arith.constant 2 : index
    %c0_718 = arith.constant 0 : index
    %1064 = vector.load %arg9[%c15_716, %c2_717, %c0_718] : memref<18x18x128xbf16, #tpu.memory_space<vmem>>, vector<1x16x128xbf16>
    %1065 = vector.shape_cast %1064 : vector<1x16x128xbf16> to vector<16x128xbf16>
    %c5_719 = arith.constant 5 : index
    %c0_720 = arith.constant 0 : index
    %1066 = vector.load %arg4[%c5_719, %c0_720] : memref<9x128xf32, #tpu.memory_space<vmem>>, vector<1x128xf32>
    %1067 = arith.extf %1065 : vector<16x128xbf16> to vector<16x128xf32>
    %1068 = vector.broadcast %1066 : vector<1x128xf32> to vector<16x128xf32>
    %1069 = arith.mulf %1067, %1068 : vector<16x128xf32>
    %1070 = arith.addf %1063, %1069 : vector<16x128xf32>
    %c16_721 = arith.constant 16 : index
    %c0_722 = arith.constant 0 : index
    %c0_723 = arith.constant 0 : index
    %1071 = vector.load %arg9[%c16_721, %c0_722, %c0_723] : memref<18x18x128xbf16, #tpu.memory_space<vmem>>, vector<1x16x128xbf16>
    %1072 = vector.shape_cast %1071 : vector<1x16x128xbf16> to vector<16x128xbf16>
    %c6_724 = arith.constant 6 : index
    %c0_725 = arith.constant 0 : index
    %1073 = vector.load %arg4[%c6_724, %c0_725] : memref<9x128xf32, #tpu.memory_space<vmem>>, vector<1x128xf32>
    %1074 = arith.extf %1072 : vector<16x128xbf16> to vector<16x128xf32>
    %1075 = vector.broadcast %1073 : vector<1x128xf32> to vector<16x128xf32>
    %1076 = arith.mulf %1074, %1075 : vector<16x128xf32>
    %1077 = arith.addf %1070, %1076 : vector<16x128xf32>
    %c16_726 = arith.constant 16 : index
    %c1_727 = arith.constant 1 : index
    %c0_728 = arith.constant 0 : index
    %1078 = vector.load %arg9[%c16_726, %c1_727, %c0_728] : memref<18x18x128xbf16, #tpu.memory_space<vmem>>, vector<1x16x128xbf16>
    %1079 = vector.shape_cast %1078 : vector<1x16x128xbf16> to vector<16x128xbf16>
    %c7_729 = arith.constant 7 : index
    %c0_730 = arith.constant 0 : index
    %1080 = vector.load %arg4[%c7_729, %c0_730] : memref<9x128xf32, #tpu.memory_space<vmem>>, vector<1x128xf32>
    %1081 = arith.extf %1079 : vector<16x128xbf16> to vector<16x128xf32>
    %1082 = vector.broadcast %1080 : vector<1x128xf32> to vector<16x128xf32>
    %1083 = arith.mulf %1081, %1082 : vector<16x128xf32>
    %1084 = arith.addf %1077, %1083 : vector<16x128xf32>
    %c16_731 = arith.constant 16 : index
    %c2_732 = arith.constant 2 : index
    %c0_733 = arith.constant 0 : index
    %1085 = vector.load %arg9[%c16_731, %c2_732, %c0_733] : memref<18x18x128xbf16, #tpu.memory_space<vmem>>, vector<1x16x128xbf16>
    %1086 = vector.shape_cast %1085 : vector<1x16x128xbf16> to vector<16x128xbf16>
    %c8_734 = arith.constant 8 : index
    %c0_735 = arith.constant 0 : index
    %1087 = vector.load %arg4[%c8_734, %c0_735] : memref<9x128xf32, #tpu.memory_space<vmem>>, vector<1x128xf32>
    %1088 = arith.extf %1086 : vector<16x128xbf16> to vector<16x128xf32>
    %1089 = vector.broadcast %1087 : vector<1x128xf32> to vector<16x128xf32>
    %1090 = arith.mulf %1088, %1089 : vector<16x128xf32>
    %1091 = arith.addf %1084, %1090 : vector<16x128xf32>
    %1092 = vector.broadcast %19 : vector<1x128xf32> to vector<16x128xf32>
    %1093 = arith.addf %1091, %1092 : vector<16x128xf32>
    %cst_736 = arith.constant 0.000000e+00 : f32
    %cst_737 = arith.constant 6.000000e+00 : f32
    %1094 = vector.broadcast %cst_736 : f32 to vector<16x128xf32>
    %1095 = arith.maximumf %1094, %1093 : vector<16x128xf32>
    %1096 = vector.broadcast %cst_737 : f32 to vector<16x128xf32>
    %1097 = arith.minimumf %1096, %1095 : vector<16x128xf32>
    %1098 = arith.truncf %1097 : vector<16x128xf32> to vector<16x128xbf16>
    %c224 = arith.constant 224 : index
    %c0_738 = arith.constant 0 : index
    %1099 = vector.load %arg10[%c224, %c0_738] : memref<256x128xbf16, #tpu.memory_space<vmem>>, vector<16x128xbf16>
    tpu.vector_store %arg10[%c224, %c0_738], %1098 {strides = array<i32>} : memref<256x128xbf16, #tpu.memory_space<vmem>>, vector<16x128xbf16>,
    %cst_739 = arith.constant 0.000000e+00 : f32
    %1100 = vector.broadcast %cst_739 : f32 to vector<16x128xf32>
    %c15_740 = arith.constant 15 : index
    %c0_741 = arith.constant 0 : index
    %c0_742 = arith.constant 0 : index
    %1101 = vector.load %arg9[%c15_740, %c0_741, %c0_742] : memref<18x18x128xbf16, #tpu.memory_space<vmem>>, vector<1x16x128xbf16>
    %1102 = vector.shape_cast %1101 : vector<1x16x128xbf16> to vector<16x128xbf16>
    %c0_743 = arith.constant 0 : index
    %c0_744 = arith.constant 0 : index
    %1103 = vector.load %arg4[%c0_743, %c0_744] : memref<9x128xf32, #tpu.memory_space<vmem>>, vector<1x128xf32>
    %1104 = arith.extf %1102 : vector<16x128xbf16> to vector<16x128xf32>
    %1105 = vector.broadcast %1103 : vector<1x128xf32> to vector<16x128xf32>
    %1106 = arith.mulf %1104, %1105 : vector<16x128xf32>
    %1107 = arith.addf %1100, %1106 : vector<16x128xf32>
    %c15_745 = arith.constant 15 : index
    %c1_746 = arith.constant 1 : index
    %c0_747 = arith.constant 0 : index
    %1108 = vector.load %arg9[%c15_745, %c1_746, %c0_747] : memref<18x18x128xbf16, #tpu.memory_space<vmem>>, vector<1x16x128xbf16>
    %1109 = vector.shape_cast %1108 : vector<1x16x128xbf16> to vector<16x128xbf16>
    %c1_748 = arith.constant 1 : index
    %c0_749 = arith.constant 0 : index
    %1110 = vector.load %arg4[%c1_748, %c0_749] : memref<9x128xf32, #tpu.memory_space<vmem>>, vector<1x128xf32>
    %1111 = arith.extf %1109 : vector<16x128xbf16> to vector<16x128xf32>
    %1112 = vector.broadcast %1110 : vector<1x128xf32> to vector<16x128xf32>
    %1113 = arith.mulf %1111, %1112 : vector<16x128xf32>
    %1114 = arith.addf %1107, %1113 : vector<16x128xf32>
    %c15_750 = arith.constant 15 : index
    %c2_751 = arith.constant 2 : index
    %c0_752 = arith.constant 0 : index
    %1115 = vector.load %arg9[%c15_750, %c2_751, %c0_752] : memref<18x18x128xbf16, #tpu.memory_space<vmem>>, vector<1x16x128xbf16>
    %1116 = vector.shape_cast %1115 : vector<1x16x128xbf16> to vector<16x128xbf16>
    %c2_753 = arith.constant 2 : index
    %c0_754 = arith.constant 0 : index
    %1117 = vector.load %arg4[%c2_753, %c0_754] : memref<9x128xf32, #tpu.memory_space<vmem>>, vector<1x128xf32>
    %1118 = arith.extf %1116 : vector<16x128xbf16> to vector<16x128xf32>
    %1119 = vector.broadcast %1117 : vector<1x128xf32> to vector<16x128xf32>
    %1120 = arith.mulf %1118, %1119 : vector<16x128xf32>
    %1121 = arith.addf %1114, %1120 : vector<16x128xf32>
    %c16_755 = arith.constant 16 : index
    %c0_756 = arith.constant 0 : index
    %c0_757 = arith.constant 0 : index
    %1122 = vector.load %arg9[%c16_755, %c0_756, %c0_757] : memref<18x18x128xbf16, #tpu.memory_space<vmem>>, vector<1x16x128xbf16>
    %1123 = vector.shape_cast %1122 : vector<1x16x128xbf16> to vector<16x128xbf16>
    %c3_758 = arith.constant 3 : index
    %c0_759 = arith.constant 0 : index
    %1124 = vector.load %arg4[%c3_758, %c0_759] : memref<9x128xf32, #tpu.memory_space<vmem>>, vector<1x128xf32>
    %1125 = arith.extf %1123 : vector<16x128xbf16> to vector<16x128xf32>
    %1126 = vector.broadcast %1124 : vector<1x128xf32> to vector<16x128xf32>
    %1127 = arith.mulf %1125, %1126 : vector<16x128xf32>
    %1128 = arith.addf %1121, %1127 : vector<16x128xf32>
    %c16_760 = arith.constant 16 : index
    %c1_761 = arith.constant 1 : index
    %c0_762 = arith.constant 0 : index
    %1129 = vector.load %arg9[%c16_760, %c1_761, %c0_762] : memref<18x18x128xbf16, #tpu.memory_space<vmem>>, vector<1x16x128xbf16>
    %1130 = vector.shape_cast %1129 : vector<1x16x128xbf16> to vector<16x128xbf16>
    %c4_763 = arith.constant 4 : index
    %c0_764 = arith.constant 0 : index
    %1131 = vector.load %arg4[%c4_763, %c0_764] : memref<9x128xf32, #tpu.memory_space<vmem>>, vector<1x128xf32>
    %1132 = arith.extf %1130 : vector<16x128xbf16> to vector<16x128xf32>
    %1133 = vector.broadcast %1131 : vector<1x128xf32> to vector<16x128xf32>
    %1134 = arith.mulf %1132, %1133 : vector<16x128xf32>
    %1135 = arith.addf %1128, %1134 : vector<16x128xf32>
    %c16_765 = arith.constant 16 : index
    %c2_766 = arith.constant 2 : index
    %c0_767 = arith.constant 0 : index
    %1136 = vector.load %arg9[%c16_765, %c2_766, %c0_767] : memref<18x18x128xbf16, #tpu.memory_space<vmem>>, vector<1x16x128xbf16>
    %1137 = vector.shape_cast %1136 : vector<1x16x128xbf16> to vector<16x128xbf16>
    %c5_768 = arith.constant 5 : index
    %c0_769 = arith.constant 0 : index
    %1138 = vector.load %arg4[%c5_768, %c0_769] : memref<9x128xf32, #tpu.memory_space<vmem>>, vector<1x128xf32>
    %1139 = arith.extf %1137 : vector<16x128xbf16> to vector<16x128xf32>
    %1140 = vector.broadcast %1138 : vector<1x128xf32> to vector<16x128xf32>
    %1141 = arith.mulf %1139, %1140 : vector<16x128xf32>
    %1142 = arith.addf %1135, %1141 : vector<16x128xf32>
    %c17 = arith.constant 17 : index
    %c0_770 = arith.constant 0 : index
    %c0_771 = arith.constant 0 : index
    %1143 = vector.load %arg9[%c17, %c0_770, %c0_771] : memref<18x18x128xbf16, #tpu.memory_space<vmem>>, vector<1x16x128xbf16>
    %1144 = vector.shape_cast %1143 : vector<1x16x128xbf16> to vector<16x128xbf16>
    %c6_772 = arith.constant 6 : index
    %c0_773 = arith.constant 0 : index
    %1145 = vector.load %arg4[%c6_772, %c0_773] : memref<9x128xf32, #tpu.memory_space<vmem>>, vector<1x128xf32>
    %1146 = arith.extf %1144 : vector<16x128xbf16> to vector<16x128xf32>
    %1147 = vector.broadcast %1145 : vector<1x128xf32> to vector<16x128xf32>
    %1148 = arith.mulf %1146, %1147 : vector<16x128xf32>
    %1149 = arith.addf %1142, %1148 : vector<16x128xf32>
    %c17_774 = arith.constant 17 : index
    %c1_775 = arith.constant 1 : index
    %c0_776 = arith.constant 0 : index
    %1150 = vector.load %arg9[%c17_774, %c1_775, %c0_776] : memref<18x18x128xbf16, #tpu.memory_space<vmem>>, vector<1x16x128xbf16>
    %1151 = vector.shape_cast %1150 : vector<1x16x128xbf16> to vector<16x128xbf16>
    %c7_777 = arith.constant 7 : index
    %c0_778 = arith.constant 0 : index
    %1152 = vector.load %arg4[%c7_777, %c0_778] : memref<9x128xf32, #tpu.memory_space<vmem>>, vector<1x128xf32>
    %1153 = arith.extf %1151 : vector<16x128xbf16> to vector<16x128xf32>
    %1154 = vector.broadcast %1152 : vector<1x128xf32> to vector<16x128xf32>
    %1155 = arith.mulf %1153, %1154 : vector<16x128xf32>
    %1156 = arith.addf %1149, %1155 : vector<16x128xf32>
    %c17_779 = arith.constant 17 : index
    %c2_780 = arith.constant 2 : index
    %c0_781 = arith.constant 0 : index
    %1157 = vector.load %arg9[%c17_779, %c2_780, %c0_781] : memref<18x18x128xbf16, #tpu.memory_space<vmem>>, vector<1x16x128xbf16>
    %1158 = vector.shape_cast %1157 : vector<1x16x128xbf16> to vector<16x128xbf16>
    %c8_782 = arith.constant 8 : index
    %c0_783 = arith.constant 0 : index
    %1159 = vector.load %arg4[%c8_782, %c0_783] : memref<9x128xf32, #tpu.memory_space<vmem>>, vector<1x128xf32>
    %1160 = arith.extf %1158 : vector<16x128xbf16> to vector<16x128xf32>
    %1161 = vector.broadcast %1159 : vector<1x128xf32> to vector<16x128xf32>
    %1162 = arith.mulf %1160, %1161 : vector<16x128xf32>
    %1163 = arith.addf %1156, %1162 : vector<16x128xf32>
    %1164 = vector.broadcast %19 : vector<1x128xf32> to vector<16x128xf32>
    %1165 = arith.addf %1163, %1164 : vector<16x128xf32>
    %cst_784 = arith.constant 0.000000e+00 : f32
    %cst_785 = arith.constant 6.000000e+00 : f32
    %1166 = vector.broadcast %cst_784 : f32 to vector<16x128xf32>
    %1167 = arith.maximumf %1166, %1165 : vector<16x128xf32>
    %1168 = vector.broadcast %cst_785 : f32 to vector<16x128xf32>
    %1169 = arith.minimumf %1168, %1167 : vector<16x128xf32>
    %1170 = arith.truncf %1169 : vector<16x128xf32> to vector<16x128xbf16>
    %c240 = arith.constant 240 : index
    %c0_786 = arith.constant 0 : index
    %1171 = vector.load %arg10[%c240, %c0_786] : memref<256x128xbf16, #tpu.memory_space<vmem>>, vector<16x128xbf16>
    tpu.vector_store %arg10[%c240, %c0_786], %1170 {strides = array<i32>} : memref<256x128xbf16, #tpu.memory_space<vmem>>, vector<16x128xbf16>,
    %c0_787 = arith.constant 0 : index
    %c0_788 = arith.constant 0 : index
    %1172 = vector.load %arg10[%c0_787, %c0_788] : memref<256x128xbf16, #tpu.memory_space<vmem>>, vector<256x128xbf16>
    %c0_789 = arith.constant 0 : index
    %c0_790 = arith.constant 0 : index
    %1173 = vector.load %arg6[%c0_789, %c0_790] : memref<128x128xbf16, #tpu.memory_space<vmem>>, vector<128x128xbf16>
    %cst_791 = arith.constant dense<0.000000e+00> : vector<256x128xf32>
    %1174 = tpu.matmul %1172, %1173, %cst_791 {dimension_numbers = #tpu.dot_dimension_numbers<[1], [0], [0], [1], [0, 0, 1, 1], [], []>} : vector<256x128xbf16>, vector<128x128xbf16>, vector<256x128xf32> -> vector<256x128xf32>
    %1175 = vector.extract_strided_slice %1174 {offsets = [0, 0], sizes = [256, 4], strides = [1, 1]} : vector<256x128xf32> to vector<256x4xf32>
    %c0_792 = arith.constant 0 : index
    %c0_793 = arith.constant 0 : index
    %1176 = vector.load %arg7[%c0_792, %c0_793] : memref<1x4xf32, #tpu.memory_space<vmem>>, vector<1x4xf32>
    %1177 = vector.broadcast %1176 : vector<1x4xf32> to vector<256x4xf32>
    %1178 = arith.addf %1175, %1177 : vector<256x4xf32>
    %1179 = arith.extf %4 : vector<256x4xbf16> to vector<256x4xf32>
    %1180 = arith.addf %1178, %1179 : vector<256x4xf32>
    %c0_794 = arith.constant 0 : index
    %c0_795 = arith.constant 0 : index
    %c0_796 = arith.constant 0 : index
    %1181 = vector.load %arg8[%c0_794, %c0_795, %c0_796] : memref<1x256x4xf32, #tpu.memory_space<vmem>>, vector<1x256x4xf32>
    %1182 = vector.shape_cast %1181 : vector<1x256x4xf32> to vector<256x4xf32>
    %1183 = vector.shape_cast %1180 : vector<256x4xf32> to vector<1x256x4xf32>
    tpu.vector_store %arg8[%c0_794, %c0_795, %c0_796], %1183 {strides = array<i32>} : memref<1x256x4xf32, #tpu.memory_space<vmem>>, vector<1x256x4xf32>,
    return
  }
  func.func @transform_0(%arg0: i32) -> (i32, i32, i32) {
    %c0_i32 = arith.constant 0 : i32
    %c0_i32_0 = arith.constant 0 : i32
    %c0_i32_1 = arith.constant 0 : i32
    return %arg0, %c0_i32, %c0_i32_0 : i32, i32, i32
  }
  func.func @transform_1(%arg0: i32) -> (i32, i32) {
    %c0_i32 = arith.constant 0 : i32
    %c0_i32_0 = arith.constant 0 : i32
    %c0_i32_1 = arith.constant 0 : i32
    return %c0_i32, %c0_i32_0 : i32, i32
  }
  func.func @transform_2(%arg0: i32) -> (i32, i32) {
    %c0_i32 = arith.constant 0 : i32
    %c0_i32_0 = arith.constant 0 : i32
    %c0_i32_1 = arith.constant 0 : i32
    return %c0_i32, %c0_i32_0 : i32, i32
  }
  func.func @transform_3(%arg0: i32) -> (i32, i32) {
    %c0_i32 = arith.constant 0 : i32
    %c0_i32_0 = arith.constant 0 : i32
    %c0_i32_1 = arith.constant 0 : i32
    return %c0_i32, %c0_i32_0 : i32, i32
  }
  func.func @transform_4(%arg0: i32) -> (i32, i32) {
    %c0_i32 = arith.constant 0 : i32
    %c0_i32_0 = arith.constant 0 : i32
    %c0_i32_1 = arith.constant 0 : i32
    return %c0_i32, %c0_i32_0 : i32, i32
  }
  func.func @transform_5(%arg0: i32) -> (i32, i32) {
    %c0_i32 = arith.constant 0 : i32
    %c0_i32_0 = arith.constant 0 : i32
    %c0_i32_1 = arith.constant 0 : i32
    return %c0_i32, %c0_i32_0 : i32, i32
  }
  func.func @transform_6(%arg0: i32) -> (i32, i32) {
    %c0_i32 = arith.constant 0 : i32
    %c0_i32_0 = arith.constant 0 : i32
    %c0_i32_1 = arith.constant 0 : i32
    return %c0_i32, %c0_i32_0 : i32, i32
  }
  func.func @transform_7(%arg0: i32) -> (i32, i32, i32) {
    %c0_i32 = arith.constant 0 : i32
    %c0_i32_0 = arith.constant 0 : i32
    %c0_i32_1 = arith.constant 0 : i32
    return %arg0, %c0_i32, %c0_i32_0 : i32, i32, i32
  }
}

</mosaic_0001>

<llo_original>
// kernel: inverted_residual.1
$region0: #{inverted_residual.1}
  #allocation0 [shape = 'u32[]', space=smem, size = 0x4, offset = 0x4, fixed_abs, tag = 'smem constant byte address 0x4 - core index']
  #allocation1 [shape = 'u32[144,128]{1,0:T(1,128)}', space=vmem, size = 0x12000, scoped, tag = 'internal scratch']
  #allocation2 [shape = 'bf16[18,18,128]{2,1,0:T(8,128)(2,1)}', space=vmem, size = 0x1b000, scoped, tag = 'scratch operand']
  #allocation3 [shape = 'bf16[256,128]{1,0:T(8,128)(2,1)}', space=vmem, size = 0x10000, scoped, tag = 'scratch operand']
  #allocation4 [shape = 'bf16[256,128]{1,0:T(8,128)(2,1)}', space=vmem, size = 0x10000, scoped, tag = 'scratch operand']
  %s0 = inlined_call_operand.vmem [shape: bf16[2,256,4], index: 0, kind: input, shape index: {}]
  %s1 = inlined_call_operand.vmem [shape: bf16[128,128], index: 1, kind: input, shape index: {}]
  %s2 = inlined_call_operand.vmem [shape: f32[1,128], index: 2, kind: input, shape index: {}]
  %s3 = inlined_call_operand.vmem [shape: f32[9,128], index: 3, kind: input, shape index: {}]
  %s4 = inlined_call_operand.vmem [shape: f32[1,128], index: 4, kind: input, shape index: {}]
  %s5 = inlined_call_operand.vmem [shape: bf16[128,128], index: 5, kind: input, shape index: {}]
  %s6 = inlined_call_operand.vmem [shape: f32[1,4], index: 6, kind: input, shape index: {}]
  %s7 = inlined_call_operand.vmem [shape: f32[2,256,4], index: 7, kind: output, shape index: {}]
  %s8 = sld [smem:[#allocation0]]
  $region65: #{inverted_residual.1} parent=0
    _
  %s10 = ssub.s32 1, %s8
  %s11 = scalar_select 0, %s10, %s8
  loop: start=0, step=1, limit=4
  $region2: #{inverted_residual.1} parent=0 // loop_pre_header
    _
  $region3: #{inverted_residual.1} parent=0 // loop_header
    %s13 = sphi 0, %s17
    %p14 = scmp.ge.s32.totalorder %s13, 4
    %s23 = sphi 0, %s25
    %s26 = sphi 0, %s23
    %s27 = sphi 0, %s26
    %s43 = sphi 0, %s27
    %s47 = sphi 0, %s47
    %s49 = sphi 0, %s47
    %s50 = sphi 0, %s49
    %s64 = sphi 0, %s50
    %s68 = sphi 0, %s68
    %s70 = sphi 0, %s68
    %s71 = sphi 0, %s70
    %s85 = sphi 0, %s71
    %s89 = sphi 0, %s89
    %s91 = sphi 0, %s89
    %s92 = sphi 0, %s91
    %s106 = sphi 0, %s92
    %s110 = sphi 0, %s110
    %s112 = sphi 0, %s110
    %s113 = sphi 0, %s112
    %s127 = sphi 0, %s113
    %s131 = sphi 0, %s131
    %s133 = sphi 0, %s131
    %s134 = sphi 0, %s133
    %s148 = sphi 0, %s134
    %s152 = sphi 0, %s152
    %s154 = sphi 0, %s152
    %s155 = sphi 0, %s154
    %s169 = sphi 0, %s155
    %s175 = sphi 0, %s177
    %s178 = sphi 0, %s175
    %s179 = sphi 0, %s178
    %s195 = sphi 0, %s179
  $region4: #{inverted_residual.1} parent=0 // loop_header_branch
    %16 = sbr.rel (%p14) target = $region8
  $region5: #{inverted_residual.1} parent=0 // loop_body
    %s18 = ssub.s32 %s13, 1
    %s19 = ssub.s32 %s13, 2
    %s20 = sadd.s32 %s13, 1
    %s21 = ssub.s32 %s13, %s20
    %p22 = scmp.eq.s32.totalorder %s21, 0
    %s24 = sadd.s32 %s23, 1
    %s25 = scalar_select %p22, %s23, %s24
    %p28 = pneg %p22
    %p29 = scmp.eq.s32.totalorder %s13, 1
    %p30 = por %p28, %p29
    %p31 = scmp.ne.s32.totalorder %s23, %s26
    %p32 = scmp.eq.s32.totalorder %s13, 0
    %p33 = por %p31, %p32
    %p34 = scmp.ne.s32.totalorder %s23, %s26
    %p35 = scmp.eq.s32.totalorder %s18, 1
    %p36 = por %p34, %p35
    %p37 = scmp.ne.s32.totalorder %s26, %s27
    %p38 = scmp.eq.s32.totalorder %s18, 0
    %p39 = por %p37, %p38
    %p40 = scmp.ne.s32.totalorder %s26, %s27
    %p41 = scmp.eq.s32.totalorder %s19, 1
    %p42 = por %p40, %p41
    %p44 = scmp.ne.s32.totalorder %s27, %s43
    %p45 = scmp.eq.s32.totalorder %s19, 0
    %p46 = por %p44, %p45
    %s48 = sadd.s32 %s47, 1
    %p51 = scmp.eq.s32.totalorder %s13, 1
    %p52 = scmp.ne.s32.totalorder %s47, %s49
    %p53 = scmp.eq.s32.totalorder %s13, 0
    %p54 = por %p52, %p53
    %p55 = scmp.ne.s32.totalorder %s47, %s49
    %p56 = scmp.eq.s32.totalorder %s18, 1
    %p57 = por %p55, %p56
    %p58 = scmp.ne.s32.totalorder %s49, %s50
    %p59 = scmp.eq.s32.totalorder %s18, 0
    %p60 = por %p58, %p59
    %p61 = scmp.ne.s32.totalorder %s49, %s50
    %p62 = scmp.eq.s32.totalorder %s19, 1
    %p63 = por %p61, %p62
    %p65 = scmp.ne.s32.totalorder %s50, %s64
    %p66 = scmp.eq.s32.totalorder %s19, 0
    %p67 = por %p65, %p66
    %s69 = sadd.s32 %s68, 1
    %p72 = scmp.eq.s32.totalorder %s13, 1
    %p73 = scmp.ne.s32.totalorder %s68, %s70
    %p74 = scmp.eq.s32.totalorder %s13, 0
    %p75 = por %p73, %p74
    %p76 = scmp.ne.s32.totalorder %s68, %s70
    %p77 = scmp.eq.s32.totalorder %s18, 1
    %p78 = por %p76, %p77
    %p79 = scmp.ne.s32.totalorder %s70, %s71
    %p80 = scmp.eq.s32.totalorder %s18, 0
    %p81 = por %p79, %p80
    %p82 = scmp.ne.s32.totalorder %s70, %s71
    %p83 = scmp.eq.s32.totalorder %s19, 1
    %p84 = por %p82, %p83
    %p86 = scmp.ne.s32.totalorder %s71, %s85
    %p87 = scmp.eq.s32.totalorder %s19, 0
    %p88 = por %p86, %p87
    %s90 = sadd.s32 %s89, 1
    %p93 = scmp.eq.s32.totalorder %s13, 1
    %p94 = scmp.ne.s32.totalorder %s89, %s91
    %p95 = scmp.eq.s32.totalorder %s13, 0
    %p96 = por %p94, %p95
    %p97 = scmp.ne.s32.totalorder %s89, %s91
    %p98 = scmp.eq.s32.totalorder %s18, 1
    %p99 = por %p97, %p98
    %p100 = scmp.ne.s32.totalorder %s91, %s92
    %p101 = scmp.eq.s32.totalorder %s18, 0
    %p102 = por %p100, %p101
    %p103 = scmp.ne.s32.totalorder %s91, %s92
    %p104 = scmp.eq.s32.totalorder %s19, 1
    %p105 = por %p103, %p104
    %p107 = scmp.ne.s32.totalorder %s92, %s106
    %p108 = scmp.eq.s32.totalorder %s19, 0
    %p109 = por %p107, %p108
    %s111 = sadd.s32 %s110, 1
    %p114 = scmp.eq.s32.totalorder %s13, 1
    %p115 = scmp.ne.s32.totalorder %s110, %s112
    %p116 = scmp.eq.s32.totalorder %s13, 0
    %p117 = por %p115, %p116
    %p118 = scmp.ne.s32.totalorder %s110, %s112
    %p119 = scmp.eq.s32.totalorder %s18, 1
    %p120 = por %p118, %p119
    %p121 = scmp.ne.s32.totalorder %s112, %s113
    %p122 = scmp.eq.s32.totalorder %s18, 0
    %p123 = por %p121, %p122
    %p124 = scmp.ne.s32.totalorder %s112, %s113
    %p125 = scmp.eq.s32.totalorder %s19, 1
    %p126 = por %p124, %p125
    %p128 = scmp.ne.s32.totalorder %s113, %s127
    %p129 = scmp.eq.s32.totalorder %s19, 0
    %p130 = por %p128, %p129
    %s132 = sadd.s32 %s131, 1
    %p135 = scmp.eq.s32.totalorder %s13, 1
    %p136 = scmp.ne.s32.totalorder %s131, %s133
    %p137 = scmp.eq.s32.totalorder %s13, 0
    %p138 = por %p136, %p137
    %p139 = scmp.ne.s32.totalorder %s131, %s133
    %p140 = scmp.eq.s32.totalorder %s18, 1
    %p141 = por %p139, %p140
    %p142 = scmp.ne.s32.totalorder %s133, %s134
    %p143 = scmp.eq.s32.totalorder %s18, 0
    %p144 = por %p142, %p143
    %p145 = scmp.ne.s32.totalorder %s133, %s134
    %p146 = scmp.eq.s32.totalorder %s19, 1
    %p147 = por %p145, %p146
    %p149 = scmp.ne.s32.totalorder %s134, %s148
    %p150 = scmp.eq.s32.totalorder %s19, 0
    %p151 = por %p149, %p150
    %s153 = sadd.s32 %s152, 1
    %p156 = scmp.eq.s32.totalorder %s13, 1
    %p157 = scmp.ne.s32.totalorder %s152, %s154
    %p158 = scmp.eq.s32.totalorder %s13, 0
    %p159 = por %p157, %p158
    %p160 = scmp.ne.s32.totalorder %s152, %s154
    %p161 = scmp.eq.s32.totalorder %s18, 1
    %p162 = por %p160, %p161
    %p163 = scmp.ne.s32.totalorder %s154, %s155
    %p164 = scmp.eq.s32.totalorder %s18, 0
    %p165 = por %p163, %p164
    %p166 = scmp.ne.s32.totalorder %s154, %s155
    %p167 = scmp.eq.s32.totalorder %s19, 1
    %p168 = por %p166, %p167
    %p170 = scmp.ne.s32.totalorder %s155, %s169
    %p171 = scmp.eq.s32.totalorder %s19, 0
    %p172 = por %p170, %p171
    %s173 = ssub.s32 %s13, %s20
    %p174 = scmp.eq.s32.totalorder %s173, 0
    %s176 = sadd.s32 %s175, 1
    %s177 = scalar_select %p174, %s175, %s176
    %p180 = pneg %p174
    %p181 = scmp.eq.s32.totalorder %s13, 1
    %p182 = por %p180, %p181
    %p183 = scmp.ne.s32.totalorder %s175, %s178
    %p184 = scmp.eq.s32.totalorder %s13, 0
    %p185 = por %p183, %p184
    %p186 = scmp.ne.s32.totalorder %s175, %s178
    %p187 = scmp.eq.s32.totalorder %s18, 1
    %p188 = por %p186, %p187
    %p189 = scmp.ne.s32.totalorder %s178, %s179
    %p190 = scmp.eq.s32.totalorder %s18, 0
    %p191 = por %p189, %p190
    %p192 = scmp.ne.s32.totalorder %s178, %s179
    %p193 = scmp.eq.s32.totalorder %s19, 1
    %p194 = por %p192, %p193
    %p196 = scmp.ne.s32.totalorder %s179, %s195
    %p197 = scmp.eq.s32.totalorder %s19, 0
    %p198 = por %p196, %p197
    %p199 = scmp.le.s32.totalorder 1, %s13
    %p200 = scmp.lt.s32.totalorder %s13, 3
    %p201 = pnand %p199, %p200
    %p202 = pneg %p201
    // Predicated region
    $region9: #{inverted_residual.1} parent=5 // pred_check
      _
    $region10: #{inverted_residual.1} parent=5 // pred_check_branch
      %204 = sbr.rel (%p201) target = $region12
    $region11: #{inverted_residual.1} parent=5 // pred_region
      %s205 = ssub.s32 %s13, 1
      // Predicated region
      $region13: #{inverted_residual.1} parent=11 // pred_check
        %p206 = pneg %p60
      $region14: #{inverted_residual.1} parent=11 // pred_check_branch
        %208 = sbr.rel (%p206) target = $region16
      $region15: #{inverted_residual.1} parent=11 // pred_region
        _
      $region16: #{inverted_residual.1} parent=11 // pred_fallthru
        _
      // Predicated region
      $region17: #{inverted_residual.1} parent=11 // pred_check
        %p209 = pneg %p81
      $region18: #{inverted_residual.1} parent=11 // pred_check_branch
        %211 = sbr.rel (%p209) target = $region20
      $region19: #{inverted_residual.1} parent=11 // pred_region
        _
      $region20: #{inverted_residual.1} parent=11 // pred_fallthru
        _
      // Predicated region
      $region21: #{inverted_residual.1} parent=11 // pred_check
        %p212 = pneg %p102
      $region22: #{inverted_residual.1} parent=11 // pred_check_branch
        %214 = sbr.rel (%p212) target = $region24
      $region23: #{inverted_residual.1} parent=11 // pred_region
        _
      $region24: #{inverted_residual.1} parent=11 // pred_fallthru
        _
      // Predicated region
      $region25: #{inverted_residual.1} parent=11 // pred_check
        %p215 = pneg %p123
      $region26: #{inverted_residual.1} parent=11 // pred_check_branch
        %217 = sbr.rel (%p215) target = $region28
      $region27: #{inverted_residual.1} parent=11 // pred_region
        _
      $region28: #{inverted_residual.1} parent=11 // pred_fallthru
        _
      // Predicated region
      $region29: #{inverted_residual.1} parent=11 // pred_check
        %p218 = pneg %p144
      $region30: #{inverted_residual.1} parent=11 // pred_check_branch
        %220 = sbr.rel (%p218) target = $region32
      $region31: #{inverted_residual.1} parent=11 // pred_region
        _
      $region32: #{inverted_residual.1} parent=11 // pred_fallthru
        _
      // Predicated region
      $region33: #{inverted_residual.1} parent=11 // pred_check
        %p221 = pneg %p165
      $region34: #{inverted_residual.1} parent=11 // pred_check_branch
        %223 = sbr.rel (%p221) target = $region36
      $region35: #{inverted_residual.1} parent=11 // pred_region
        _
      $region36: #{inverted_residual.1} parent=11 // pred_fallthru
        _
    $region12: #{inverted_residual.1} parent=5 // pred_fallthru
      _
    %p224 = scmp.lt.s32.totalorder %s13, 2
    // Predicated region
    $region37: #{inverted_residual.1} parent=5 // pred_check
      %p225 = pneg %p224
    $region38: #{inverted_residual.1} parent=5 // pred_check_branch
      %227 = sbr.rel (%p225) target = $region40
    $region39: #{inverted_residual.1} parent=5 // pred_region
      // Predicated region
      $region41: #{inverted_residual.1} parent=39 // pred_check
        %p228 = pneg %p33
      $region42: #{inverted_residual.1} parent=39 // pred_check_branch
        %230 = sbr.rel (%p228) target = $region44
      $region43: #{inverted_residual.1} parent=39 // pred_region
        %p231 = scmp.lt.s32.totalorder %s13, 1
        %s232 = scalar_select %p231, %s13, 1
        %s233 = smul.addr %s232, 32
        %s234 = smul.addr %s233, 4
        %s235 = scalar_lea.vmem %s0, %s234
      $region44: #{inverted_residual.1} parent=39 // pred_fallthru
        _
    $region40: #{inverted_residual.1} parent=5 // pred_fallthru
      _
    %p236 = scmp.le.s32.totalorder 1, %s13
    %p237 = scmp.lt.s32.totalorder %s13, 3
    %p238 = pnand %p236, %p237
    %p239 = pneg %p238
    // Predicated region
    $region45: #{inverted_residual.1} parent=5 // pred_check
      _
    $region46: #{inverted_residual.1} parent=5 // pred_check_branch
      %241 = sbr.rel (%p238) target = $region48
    $region47: #{inverted_residual.1} parent=5 // pred_region
      %s242 = ssub.s32 %s13, 1
      %p243 = scmp.lt.s32.totalorder %s18, 1
      %s244 = scalar_select %p243, %s18, 1
      %s245 = smul.addr %s244, 32
      %s246 = smul.addr %s245, 4
      %s247 = scalar_lea.vmem %s0, %s246
      %p248 = pneg %p39
      %p249 = pneg %p36
      %p250 = pneg %p60
      %p251 = pneg %p57
      %p252 = pneg %p81
      %p253 = pneg %p78
      %p254 = pneg %p102
      %p255 = pneg %p99
      %p256 = pneg %p123
      %p257 = pneg %p120
      %p258 = pneg %p144
      %p259 = pneg %p141
      %p260 = pneg %p165
      %p261 = pneg %p162
      %p262 = pneg %p191
      %p263 = pneg %p188
      %p264 = scmp.lt.s32.totalorder %s18, 1
      %s265 = scalar_select %p264, %s18, 1
      %s266 = smul.addr %s265, 32
      %s267 = smul.addr %s266, 8
      %s268 = scalar_lea.vmem %s7, %s267
      %p269 = scmp.lt.s32.totalorder %s18, 1
      %s270 = scalar_select %p269, %s18, 1
      %s271 = smul.addr %s270, 32
      %s272 = smul.addr %s271, 4
      %s273 = scalar_lea.vmem %s0, %s272
      %p274 = scmp.lt.s32.totalorder %s18, 1
      %s275 = scalar_select %p274, %s18, 1
      %s276 = smul.addr %s275, 32
      %s277 = smul.addr %s276, 8
      %s278 = scalar_lea.vmem %s7, %s277
      %p280 = scmp.eq.s32.totalorder %s18, 0
      // Predicated region
      $region49: #{inverted_residual.1} parent=47 // pred_check
        %p281 = pneg %p280
      $region50: #{inverted_residual.1} parent=47 // pred_check_branch
        %283 = sbr.rel (%p281) target = $region52
      $region51: #{inverted_residual.1} parent=47 // pred_region
        %284 = vst [vmem:[#allocation2] sm:$0xf] 0
        %285 = vst [vmem:[#allocation2 + $0x4] sm:$0xf] 0
        %286 = vst [vmem:[#allocation2 + $0x8] sm:$0x1] 0
        %287 = vst [vmem:[#allocation2 + $0xc] sm:$0xf] 0
        %288 = vst [vmem:[#allocation2 + $0x10] sm:$0xf] 0
        %289 = vst [vmem:[#allocation2 + $0x14] sm:$0x1] 0
        %290 = vst [vmem:[#allocation2 + $0x18] sm:$0xf] 0
        %291 = vst [vmem:[#allocation2 + $0x1c] sm:$0xf] 0
        %292 = vst [vmem:[#allocation2 + $0x20] sm:$0x1] 0
        %293 = vst [vmem:[#allocation2 + $0x24] sm:$0xf] 0
        %294 = vst [vmem:[#allocation2 + $0x28] sm:$0xf] 0
        %295 = vst [vmem:[#allocation2 + $0x2c] sm:$0x1] 0
        %296 = vst [vmem:[#allocation2 + $0x30] sm:$0xf] 0
        %297 = vst [vmem:[#allocation2 + $0x34] sm:$0xf] 0
        %298 = vst [vmem:[#allocation2 + $0x38] sm:$0x1] 0
        %299 = vst [vmem:[#allocation2 + $0x3c] sm:$0xf] 0
        %300 = vst [vmem:[#allocation2 + $0x40] sm:$0xf] 0
        %301 = vst [vmem:[#allocation2 + $0x44] sm:$0x1] 0
        %302 = vst [vmem:[#allocation2 + $0x48] sm:$0xf] 0
        %303 = vst [vmem:[#allocation2 + $0x4c] sm:$0xf] 0
        %304 = vst [vmem:[#allocation2 + $0x50] sm:$0x1] 0
        %305 = vst [vmem:[#allocation2 + $0x54] sm:$0xf] 0
        %306 = vst [vmem:[#allocation2 + $0x58] sm:$0xf] 0
        %307 = vst [vmem:[#allocation2 + $0x5c] sm:$0x1] 0
        %308 = vst [vmem:[#allocation2 + $0x60] sm:$0xf] 0
        %309 = vst [vmem:[#allocation2 + $0x64] sm:$0xf] 0
        %310 = vst [vmem:[#allocation2 + $0x68] sm:$0x1] 0
        %311 = vst [vmem:[#allocation2 + $0x6c] sm:$0xf] 0
        %312 = vst [vmem:[#allocation2 + $0x70] sm:$0xf] 0
        %313 = vst [vmem:[#allocation2 + $0x74] sm:$0x1] 0
        %314 = vst [vmem:[#allocation2 + $0x78] sm:$0xf] 0
        %315 = vst [vmem:[#allocation2 + $0x7c] sm:$0xf] 0
        %316 = vst [vmem:[#allocation2 + $0x80] sm:$0x1] 0
        %317 = vst [vmem:[#allocation2 + $0x84] sm:$0xf] 0
        %318 = vst [vmem:[#allocation2 + $0x88] sm:$0xf] 0
        %319 = vst [vmem:[#allocation2 + $0x8c] sm:$0x1] 0
        %320 = vst [vmem:[#allocation2 + $0x90] sm:$0xf] 0
        %321 = vst [vmem:[#allocation2 + $0x94] sm:$0xf] 0
        %322 = vst [vmem:[#allocation2 + $0x98] sm:$0x1] 0
        %323 = vst [vmem:[#allocation2 + $0x9c] sm:$0xf] 0
        %324 = vst [vmem:[#allocation2 + $0xa0] sm:$0xf] 0
        %325 = vst [vmem:[#allocation2 + $0xa4] sm:$0x1] 0
        %326 = vst [vmem:[#allocation2 + $0xa8] sm:$0xf] 0
        %327 = vst [vmem:[#allocation2 + $0xac] sm:$0xf] 0
        %328 = vst [vmem:[#allocation2 + $0xb0] sm:$0x1] 0
        %329 = vst [vmem:[#allocation2 + $0xb4] sm:$0xf] 0
        %330 = vst [vmem:[#allocation2 + $0xb8] sm:$0xf] 0
        %331 = vst [vmem:[#allocation2 + $0xbc] sm:$0x1] 0
        %332 = vst [vmem:[#allocation2 + $0xc0] sm:$0xf] 0
        %333 = vst [vmem:[#allocation2 + $0xc4] sm:$0xf] 0
        %334 = vst [vmem:[#allocation2 + $0xc8] sm:$0x1] 0
        %335 = vst [vmem:[#allocation2 + $0xcc] sm:$0xf] 0
        %336 = vst [vmem:[#allocation2 + $0xd0] sm:$0xf] 0
        %337 = vst [vmem:[#allocation2 + $0xd4] sm:$0x1] 0
        %338 = vst [vmem:[#allocation4] sm:$0xf] 0
        %339 = vst [vmem:[#allocation4 + $0x4] sm:$0xf] 0
        %340 = vst [vmem:[#allocation4 + $0x8] sm:$0xf] 0
        %341 = vst [vmem:[#allocation4 + $0xc] sm:$0xf] 0
        %342 = vst [vmem:[#allocation4 + $0x10] sm:$0xf] 0
        %343 = vst [vmem:[#allocation4 + $0x14] sm:$0xf] 0
        %344 = vst [vmem:[#allocation4 + $0x18] sm:$0xf] 0
        %345 = vst [vmem:[#allocation4 + $0x1c] sm:$0xf] 0
        %346 = vst [vmem:[#allocation4 + $0x20] sm:$0xf] 0
        %347 = vst [vmem:[#allocation4 + $0x24] sm:$0xf] 0
        %348 = vst [vmem:[#allocation4 + $0x28] sm:$0xf] 0
        %349 = vst [vmem:[#allocation4 + $0x2c] sm:$0xf] 0
        %350 = vst [vmem:[#allocation4 + $0x30] sm:$0xf] 0
        %351 = vst [vmem:[#allocation4 + $0x34] sm:$0xf] 0
        %352 = vst [vmem:[#allocation4 + $0x38] sm:$0xf] 0
        %353 = vst [vmem:[#allocation4 + $0x3c] sm:$0xf] 0
        %354 = vst [vmem:[#allocation4 + $0x40] sm:$0xf] 0
        %355 = vst [vmem:[#allocation4 + $0x44] sm:$0xf] 0
        %356 = vst [vmem:[#allocation4 + $0x48] sm:$0xf] 0
        %357 = vst [vmem:[#allocation4 + $0x4c] sm:$0xf] 0
        %358 = vst [vmem:[#allocation4 + $0x50] sm:$0xf] 0
        %359 = vst [vmem:[#allocation4 + $0x54] sm:$0xf] 0
        %360 = vst [vmem:[#allocation4 + $0x58] sm:$0xf] 0
        %361 = vst [vmem:[#allocation4 + $0x5c] sm:$0xf] 0
        %362 = vst [vmem:[#allocation4 + $0x60] sm:$0xf] 0
        %363 = vst [vmem:[#allocation4 + $0x64] sm:$0xf] 0
        %364 = vst [vmem:[#allocation4 + $0x68] sm:$0xf] 0
        %365 = vst [vmem:[#allocation4 + $0x6c] sm:$0xf] 0
        %366 = vst [vmem:[#allocation4 + $0x70] sm:$0xf] 0
        %367 = vst [vmem:[#allocation4 + $0x74] sm:$0xf] 0
        %368 = vst [vmem:[#allocation4 + $0x78] sm:$0xf] 0
        %369 = vst [vmem:[#allocation4 + $0x7c] sm:$0xf] 0
      $region52: #{inverted_residual.1} parent=47 // pred_fallthru
        _
      %v370 = vld [vmem:[%s273] sm:$0xf]
      %v371 = vld [vmem:[%s273 + $0x4] sm:$0xf]
      %v372 = vld [vmem:[%s273 + $0x8] sm:$0xf]
      %v373 = vld [vmem:[%s273 + $0xc] sm:$0xf]
      %v374 = vld [vmem:[%s273 + $0x10] sm:$0xf]
      %v375 = vld [vmem:[%s273 + $0x14] sm:$0xf]
      %v376 = vld [vmem:[%s273 + $0x18] sm:$0xf]
      %v377 = vld [vmem:[%s273 + $0x1c] sm:$0xf]
      %v378 = vld [vmem:[%s273 + $0x20] sm:$0xf]
      %v379 = vld [vmem:[%s273 + $0x24] sm:$0xf]
      %v380 = vld [vmem:[%s273 + $0x28] sm:$0xf]
      %v381 = vld [vmem:[%s273 + $0x2c] sm:$0xf]
      %v382 = vld [vmem:[%s273 + $0x30] sm:$0xf]
      %v383 = vld [vmem:[%s273 + $0x34] sm:$0xf]
      %v384 = vld [vmem:[%s273 + $0x38] sm:$0xf]
      %v385 = vld [vmem:[%s273 + $0x3c] sm:$0xf]
      %v386 = vld [vmem:[%s273 + $0x40] sm:$0xf]
      %v387 = vld [vmem:[%s273 + $0x44] sm:$0xf]
      %v388 = vld [vmem:[%s273 + $0x48] sm:$0xf]
      %v389 = vld [vmem:[%s273 + $0x4c] sm:$0xf]
      %v390 = vld [vmem:[%s273 + $0x50] sm:$0xf]
      %v391 = vld [vmem:[%s273 + $0x54] sm:$0xf]
      %v392 = vld [vmem:[%s273 + $0x58] sm:$0xf]
      %v393 = vld [vmem:[%s273 + $0x5c] sm:$0xf]
      %v394 = vld [vmem:[%s273 + $0x60] sm:$0xf]
      %v395 = vld [vmem:[%s273 + $0x64] sm:$0xf]
      %v396 = vld [vmem:[%s273 + $0x68] sm:$0xf]
      %v397 = vld [vmem:[%s273 + $0x6c] sm:$0xf]
      %v398 = vld [vmem:[%s273 + $0x70] sm:$0xf]
      %v399 = vld [vmem:[%s273 + $0x74] sm:$0xf]
      %v400 = vld [vmem:[%s273 + $0x78] sm:$0xf]
      %v401 = vld [vmem:[%s273 + $0x7c] sm:$0xf]
      %vm402 = vcmask 27648
      %403 = vst.msk [vmem:[#allocation4] sm:$0xf] %vm402, %v370
      %404 = vst.msk [vmem:[#allocation4 + $0x4] sm:$0xf] %vm402, %v371
      %405 = vst.msk [vmem:[#allocation4 + $0x8] sm:$0xf] %vm402, %v372
      %406 = vst.msk [vmem:[#allocation4 + $0xc] sm:$0xf] %vm402, %v373
      %407 = vst.msk [vmem:[#allocation4 + $0x10] sm:$0xf] %vm402, %v374
      %408 = vst.msk [vmem:[#allocation4 + $0x14] sm:$0xf] %vm402, %v375
      %409 = vst.msk [vmem:[#allocation4 + $0x18] sm:$0xf] %vm402, %v376
      %410 = vst.msk [vmem:[#allocation4 + $0x1c] sm:$0xf] %vm402, %v377
      %411 = vst.msk [vmem:[#allocation4 + $0x20] sm:$0xf] %vm402, %v378
      %412 = vst.msk [vmem:[#allocation4 + $0x24] sm:$0xf] %vm402, %v379
      %413 = vst.msk [vmem:[#allocation4 + $0x28] sm:$0xf] %vm402, %v380
      %414 = vst.msk [vmem:[#allocation4 + $0x2c] sm:$0xf] %vm402, %v381
      %415 = vst.msk [vmem:[#allocation4 + $0x30] sm:$0xf] %vm402, %v382
      %416 = vst.msk [vmem:[#allocation4 + $0x34] sm:$0xf] %vm402, %v383
      %417 = vst.msk [vmem:[#allocation4 + $0x38] sm:$0xf] %vm402, %v384
      %418 = vst.msk [vmem:[#allocation4 + $0x3c] sm:$0xf] %vm402, %v385
      %419 = vst.msk [vmem:[#allocation4 + $0x40] sm:$0xf] %vm402, %v386
      %420 = vst.msk [vmem:[#allocation4 + $0x44] sm:$0xf] %vm402, %v387
      %421 = vst.msk [vmem:[#allocation4 + $0x48] sm:$0xf] %vm402, %v388
      %422 = vst.msk [vmem:[#allocation4 + $0x4c] sm:$0xf] %vm402, %v389
      %423 = vst.msk [vmem:[#allocation4 + $0x50] sm:$0xf] %vm402, %v390
      %424 = vst.msk [vmem:[#allocation4 + $0x54] sm:$0xf] %vm402, %v391
      %425 = vst.msk [vmem:[#allocation4 + $0x58] sm:$0xf] %vm402, %v392
      %426 = vst.msk [vmem:[#allocation4 + $0x5c] sm:$0xf] %vm402, %v393
      %427 = vst.msk [vmem:[#allocation4 + $0x60] sm:$0xf] %vm402, %v394
      %428 = vst.msk [vmem:[#allocation4 + $0x64] sm:$0xf] %vm402, %v395
      %429 = vst.msk [vmem:[#allocation4 + $0x68] sm:$0xf] %vm402, %v396
      %430 = vst.msk [vmem:[#allocation4 + $0x6c] sm:$0xf] %vm402, %v397
      %431 = vst.msk [vmem:[#allocation4 + $0x70] sm:$0xf] %vm402, %v398
      %432 = vst.msk [vmem:[#allocation4 + $0x74] sm:$0xf] %vm402, %v399
      %433 = vst.msk [vmem:[#allocation4 + $0x78] sm:$0xf] %vm402, %v400
      %434 = vst.msk [vmem:[#allocation4 + $0x7c] sm:$0xf] %vm402, %v401
      %v435 = vld [vmem:[#allocation4] sm:$0xf]
      %v436 = vld [vmem:[#allocation4 + $0x4] sm:$0xf]
      %v437 = vld [vmem:[#allocation4 + $0x8] sm:$0xf]
      %v438 = vld [vmem:[#allocation4 + $0xc] sm:$0xf]
      %v439 = vld [vmem:[#allocation4 + $0x10] sm:$0xf]
      %v440 = vld [vmem:[#allocation4 + $0x14] sm:$0xf]
      %v441 = vld [vmem:[#allocation4 + $0x18] sm:$0xf]
      %v442 = vld [vmem:[#allocation4 + $0x1c] sm:$0xf]
      %v443 = vld [vmem:[#allocation4 + $0x20] sm:$0xf]
      %v444 = vld [vmem:[#allocation4 + $0x24] sm:$0xf]
      %v445 = vld [vmem:[#allocation4 + $0x28] sm:$0xf]
      %v446 = vld [vmem:[#allocation4 + $0x2c] sm:$0xf]
      %v447 = vld [vmem:[#allocation4 + $0x30] sm:$0xf]
      %v448 = vld [vmem:[#allocation4 + $0x34] sm:$0xf]
      %v449 = vld [vmem:[#allocation4 + $0x38] sm:$0xf]
      %v450 = vld [vmem:[#allocation4 + $0x3c] sm:$0xf]
      %v451 = vld [vmem:[#allocation4 + $0x40] sm:$0xf]
      %v452 = vld [vmem:[#allocation4 + $0x44] sm:$0xf]
      %v453 = vld [vmem:[#allocation4 + $0x48] sm:$0xf]
      %v454 = vld [vmem:[#allocation4 + $0x4c] sm:$0xf]
      %v455 = vld [vmem:[#allocation4 + $0x50] sm:$0xf]
      %v456 = vld [vmem:[#allocation4 + $0x54] sm:$0xf]
      %v457 = vld [vmem:[#allocation4 + $0x58] sm:$0xf]
      %v458 = vld [vmem:[#allocation4 + $0x5c] sm:$0xf]
      %v459 = vld [vmem:[#allocation4 + $0x60] sm:$0xf]
      %v460 = vld [vmem:[#allocation4 + $0x64] sm:$0xf]
      %v461 = vld [vmem:[#allocation4 + $0x68] sm:$0xf]
      %v462 = vld [vmem:[#allocation4 + $0x6c] sm:$0xf]
      %v463 = vld [vmem:[#allocation4 + $0x70] sm:$0xf]
      %v464 = vld [vmem:[#allocation4 + $0x74] sm:$0xf]
      %v465 = vld [vmem:[#allocation4 + $0x78] sm:$0xf]
      %v466 = vld [vmem:[#allocation4 + $0x7c] sm:$0xf]
      %v467 = vld [vmem:[%s1] sm:$0xf]
      %v468 = vld [vmem:[%s1 + $0x4] sm:$0xf]
      %v469 = vld [vmem:[%s1 + $0x8] sm:$0xf]
      %v470 = vld [vmem:[%s1 + $0xc] sm:$0xf]
      %v471 = vld [vmem:[%s1 + $0x10] sm:$0xf]
      %v472 = vld [vmem:[%s1 + $0x14] sm:$0xf]
      %v473 = vld [vmem:[%s1 + $0x18] sm:$0xf]
      %v474 = vld [vmem:[%s1 + $0x1c] sm:$0xf]
      %v475 = vld [vmem:[%s1 + $0x20] sm:$0xf]
      %v476 = vld [vmem:[%s1 + $0x24] sm:$0xf]
      %v477 = vld [vmem:[%s1 + $0x28] sm:$0xf]
      %v478 = vld [vmem:[%s1 + $0x2c] sm:$0xf]
      %v479 = vld [vmem:[%s1 + $0x30] sm:$0xf]
      %v480 = vld [vmem:[%s1 + $0x34] sm:$0xf]
      %v481 = vld [vmem:[%s1 + $0x38] sm:$0xf]
      %v482 = vld [vmem:[%s1 + $0x3c] sm:$0xf]
      %v483 = vld [vmem:[%s2] sm:$0x1]
      %v485 = vlaneseq
      %v486 = vshrl.u32 %v485, 7
      %v487 = vsub.s32 0, %v486
      %v488 = vrot.slane %v483, %v487
      %v522 = vunpack.c.l.b16 %v435
      %v523 = vunpack.c.l.b16 %v436
      %v524 = vunpack.c.l.b16 %v437
      %v525 = vunpack.c.l.b16 %v438
      %v526 = vunpack.c.l.b16 %v439
      %v527 = vunpack.c.l.b16 %v440
      %v528 = vunpack.c.l.b16 %v441
      %v529 = vunpack.c.l.b16 %v442
      %v530 = vunpack.c.l.b16 %v443
      %v531 = vunpack.c.l.b16 %v444
      %v532 = vunpack.c.l.b16 %v445
      %v533 = vunpack.c.l.b16 %v446
      %v534 = vunpack.c.l.b16 %v447
      %v535 = vunpack.c.l.b16 %v448
      %v536 = vunpack.c.l.b16 %v449
      %v537 = vunpack.c.l.b16 %v450
      %v538 = vunpack.c.l.b16 %v451
      %v539 = vunpack.c.l.b16 %v452
      %v540 = vunpack.c.l.b16 %v453
      %v541 = vunpack.c.l.b16 %v454
      %v542 = vunpack.c.l.b16 %v455
      %v543 = vunpack.c.l.b16 %v456
      %v544 = vunpack.c.l.b16 %v457
      %v545 = vunpack.c.l.b16 %v458
      %v546 = vunpack.c.l.b16 %v459
      %v547 = vunpack.c.l.b16 %v460
      %v548 = vunpack.c.l.b16 %v461
      %v549 = vunpack.c.l.b16 %v462
      %v550 = vunpack.c.l.b16 %v463
      %v551 = vunpack.c.l.b16 %v464
      %v552 = vunpack.c.l.b16 %v465
      %v553 = vunpack.c.l.b16 %v466
      %v554 = vpack.c.b16 %v523, %v522
      %v555 = vpack.c.b16 %v525, %v524
      %v556 = vpack.c.b16 %v527, %v526
      %v557 = vpack.c.b16 %v529, %v528
      %v558 = vpack.c.b16 %v531, %v530
      %v559 = vpack.c.b16 %v533, %v532
      %v560 = vpack.c.b16 %v535, %v534
      %v561 = vpack.c.b16 %v537, %v536
      %v562 = vpack.c.b16 %v539, %v538
      %v563 = vpack.c.b16 %v541, %v540
      %v564 = vpack.c.b16 %v543, %v542
      %v565 = vpack.c.b16 %v545, %v544
      %v566 = vpack.c.b16 %v547, %v546
      %v567 = vpack.c.b16 %v549, %v548
      %v568 = vpack.c.b16 %v551, %v550
      %v569 = vpack.c.b16 %v553, %v552
      %v602 = vunpack.c.l.b16 %v467
      %v603 = vunpack.c.l.b16 %v468
      %v604 = vunpack.c.l.b16 %v469
      %v605 = vunpack.c.l.b16 %v470
      %v606 = vunpack.c.l.b16 %v471
      %v607 = vunpack.c.l.b16 %v472
      %v608 = vunpack.c.l.b16 %v473
      %v609 = vunpack.c.l.b16 %v474
      %v610 = vunpack.c.l.b16 %v475
      %v611 = vunpack.c.l.b16 %v476
      %v612 = vunpack.c.l.b16 %v477
      %v613 = vunpack.c.l.b16 %v478
      %v614 = vunpack.c.l.b16 %v479
      %v615 = vunpack.c.l.b16 %v480
      %v616 = vunpack.c.l.b16 %v481
      %v617 = vunpack.c.l.b16 %v482
      %v618 = vpack.c.b16 %v603, %v602
      %v619 = vpack.c.b16 %v605, %v604
      %v620 = vpack.c.b16 %v607, %v606
      %v621 = vpack.c.b16 %v609, %v608
      %v622 = vpack.c.b16 %v611, %v610
      %v623 = vpack.c.b16 %v613, %v612
      %v624 = vpack.c.b16 %v615, %v614
      %v625 = vpack.c.b16 %v617, %v616
      %634 = vmatprep.subr.bf16.mxu0 0
      %635 = vmatpush1.bf16.msra.mxu0 %v625
      %636 = vmatprep.subr.bf16.mxu0 0
      %637 = vmatpush1.bf16.msra.mxu0 %v624
      %638 = vmatprep.subr.bf16.mxu0 0
      %639 = vmatpush1.bf16.msra.mxu0 %v623
      %640 = vmatprep.subr.bf16.mxu0 0
      %641 = vmatpush1.bf16.msra.mxu0 %v622
      %642 = vmatprep.subr.bf16.mxu0 0
      %643 = vmatpush1.bf16.msra.mxu0 %v621
      %644 = vmatprep.subr.bf16.mxu0 0
      %645 = vmatpush1.bf16.msra.mxu0 %v620
      %646 = vmatprep.subr.bf16.mxu0 0
      %647 = vmatpush1.bf16.msra.mxu0 %v619
      %648 = vmatprep.subr.bf16.mxu0 0
      %649 = vmatpush1.bf16.msra.mxu0 %v618
      %650 = vmatprep.subr.bf16.mxu0 0
      %651 = vmatpush2.bf16.msra.mxu0 0
      %652 = vmatprep.subr.bf16.mxu0 0
      %653 = vmatpush2.bf16.msra.mxu0 0
      %654 = vmatprep.subr.bf16.mxu0 0
      %655 = vmatpush2.bf16.msra.mxu0 0
      %656 = vmatprep.subr.bf16.mxu0 0
      %657 = vmatpush2.bf16.msra.mxu0 0
      %658 = vmatprep.subr.bf16.mxu0 0
      %659 = vmatpush2.bf16.msra.mxu0 0
      %660 = vmatprep.subr.bf16.mxu0 0
      %661 = vmatpush2.bf16.msra.mxu0 0
      %662 = vmatprep.subr.bf16.mxu0 0
      %663 = vmatpush2.bf16.msra.mxu0 0
      %664 = vmatprep.subr.bf16.mxu0 0
      %665 = vmatpush2.bf16.msra.mxu0 0
      %666 = vmatprep.mubr.bf16.mxu0 0
      %667 = vmatmul.mubr.bf16.gmra.mxu0 %v554
      %v668 = vpop.f32.mrf.mxu0
      %v669 = vadd.f32 %v488, %v668
      %v670 = vpop.f32.mrf.mxu0
      %v671 = vpop.f32.mrf.mxu0
      %v672 = vadd.f32 %v488, %v671
      %v673 = vpop.f32.mrf.mxu0
      %674 = vmatprep.mubr.bf16.mxu0 0
      %675 = vmatmul.mubr.bf16.gmra.mxu0 %v555
      %v676 = vpop.f32.mrf.mxu0
      %v677 = vadd.f32 %v488, %v676
      %v678 = vpop.f32.mrf.mxu0
      %v679 = vpop.f32.mrf.mxu0
      %v680 = vadd.f32 %v488, %v679
      %v681 = vpop.f32.mrf.mxu0
      %682 = vmatprep.mubr.bf16.mxu0 0
      %683 = vmatmul.mubr.bf16.gmra.mxu0 %v556
      %v684 = vpop.f32.mrf.mxu0
      %v685 = vadd.f32 %v488, %v684
      %v686 = vpop.f32.mrf.mxu0
      %v687 = vpop.f32.mrf.mxu0
      %v688 = vadd.f32 %v488, %v687
      %v689 = vpop.f32.mrf.mxu0
      %690 = vmatprep.mubr.bf16.mxu0 0
      %691 = vmatmul.mubr.bf16.gmra.mxu0 %v557
      %v692 = vpop.f32.mrf.mxu0
      %v693 = vadd.f32 %v488, %v692
      %v694 = vpop.f32.mrf.mxu0
      %v695 = vpop.f32.mrf.mxu0
      %v696 = vadd.f32 %v488, %v695
      %v697 = vpop.f32.mrf.mxu0
      %698 = vmatprep.mubr.bf16.mxu0 0
      %699 = vmatmul.mubr.bf16.gmra.mxu0 %v558
      %v700 = vpop.f32.mrf.mxu0
      %v701 = vadd.f32 %v488, %v700
      %v702 = vpop.f32.mrf.mxu0
      %v703 = vpop.f32.mrf.mxu0
      %v704 = vadd.f32 %v488, %v703
      %v705 = vpop.f32.mrf.mxu0
      %706 = vmatprep.mubr.bf16.mxu0 0
      %707 = vmatmul.mubr.bf16.gmra.mxu0 %v559
      %v708 = vpop.f32.mrf.mxu0
      %v709 = vadd.f32 %v488, %v708
      %v710 = vpop.f32.mrf.mxu0
      %v711 = vpop.f32.mrf.mxu0
      %v712 = vadd.f32 %v488, %v711
      %v713 = vpop.f32.mrf.mxu0
      %714 = vmatprep.mubr.bf16.mxu0 0
      %715 = vmatmul.mubr.bf16.gmra.mxu0 %v560
      %v716 = vpop.f32.mrf.mxu0
      %v717 = vadd.f32 %v488, %v716
      %v718 = vpop.f32.mrf.mxu0
      %v719 = vpop.f32.mrf.mxu0
      %v720 = vadd.f32 %v488, %v719
      %v721 = vpop.f32.mrf.mxu0
      %722 = vmatprep.mubr.bf16.mxu0 0
      %723 = vmatmul.mubr.bf16.gmra.mxu0 %v561
      %v724 = vpop.f32.mrf.mxu0
      %v725 = vadd.f32 %v488, %v724
      %v726 = vpop.f32.mrf.mxu0
      %v727 = vpop.f32.mrf.mxu0
      %v728 = vadd.f32 %v488, %v727
      %v729 = vpop.f32.mrf.mxu0
      %730 = vmatprep.mubr.bf16.mxu0 0
      %731 = vmatmul.mubr.bf16.gmra.mxu0 %v562
      %v732 = vpop.f32.mrf.mxu0
      %v733 = vadd.f32 %v488, %v732
      %v734 = vpop.f32.mrf.mxu0
      %v735 = vpop.f32.mrf.mxu0
      %v736 = vadd.f32 %v488, %v735
      %v737 = vpop.f32.mrf.mxu0
      %738 = vmatprep.mubr.bf16.mxu0 0
      %739 = vmatmul.mubr.bf16.gmra.mxu0 %v563
      %v740 = vpop.f32.mrf.mxu0
      %v741 = vadd.f32 %v488, %v740
      %v742 = vpop.f32.mrf.mxu0
      %v743 = vpop.f32.mrf.mxu0
      %v744 = vadd.f32 %v488, %v743
      %v745 = vpop.f32.mrf.mxu0
      %746 = vmatprep.mubr.bf16.mxu0 0
      %747 = vmatmul.mubr.bf16.gmra.mxu0 %v564
      %v748 = vpop.f32.mrf.mxu0
      %v749 = vadd.f32 %v488, %v748
      %v750 = vpop.f32.mrf.mxu0
      %v751 = vpop.f32.mrf.mxu0
      %v752 = vadd.f32 %v488, %v751
      %v753 = vpop.f32.mrf.mxu0
      %754 = vmatprep.mubr.bf16.mxu0 0
      %755 = vmatmul.mubr.bf16.gmra.mxu0 %v565
      %v756 = vpop.f32.mrf.mxu0
      %v757 = vadd.f32 %v488, %v756
      %v758 = vpop.f32.mrf.mxu0
      %v759 = vpop.f32.mrf.mxu0
      %v760 = vadd.f32 %v488, %v759
      %v761 = vpop.f32.mrf.mxu0
      %762 = vmatprep.mubr.bf16.mxu0 0
      %763 = vmatmul.mubr.bf16.gmra.mxu0 %v566
      %v764 = vpop.f32.mrf.mxu0
      %v765 = vadd.f32 %v488, %v764
      %v766 = vpop.f32.mrf.mxu0
      %v767 = vpop.f32.mrf.mxu0
      %v768 = vadd.f32 %v488, %v767
      %v769 = vpop.f32.mrf.mxu0
      %770 = vmatprep.mubr.bf16.mxu0 0
      %771 = vmatmul.mubr.bf16.gmra.mxu0 %v567
      %v772 = vpop.f32.mrf.mxu0
      %v773 = vadd.f32 %v488, %v772
      %v774 = vpop.f32.mrf.mxu0
      %v775 = vpop.f32.mrf.mxu0
      %v776 = vadd.f32 %v488, %v775
      %v777 = vpop.f32.mrf.mxu0
      %778 = vmatprep.mubr.bf16.mxu0 0
      %779 = vmatmul.mubr.bf16.gmra.mxu0 %v568
      %v780 = vpop.f32.mrf.mxu0
      %v781 = vadd.f32 %v488, %v780
      %v782 = vpop.f32.mrf.mxu0
      %v783 = vpop.f32.mrf.mxu0
      %v784 = vadd.f32 %v488, %v783
      %v785 = vpop.f32.mrf.mxu0
      %786 = vmatprep.mubr.bf16.mxu0 0
      %787 = vmatmul.mubr.bf16.gmra.mxu0 %v569
      %v788 = vpop.f32.mrf.mxu0
      %v789 = vadd.f32 %v488, %v788
      %v790 = vpop.f32.mrf.mxu0
      %v791 = vpop.f32.mrf.mxu0
      %v792 = vadd.f32 %v488, %v791
      %v793 = vpop.f32.mrf.mxu0
      %794 = vdwg.mxu0
      %v795 = vmax.f32 %v669, 0.0
      %v796 = vmax.f32 %v672, 0.0
      %v797 = vmax.f32 %v677, 0.0
      %v798 = vmax.f32 %v680, 0.0
      %v799 = vmax.f32 %v685, 0.0
      %v800 = vmax.f32 %v688, 0.0
      %v801 = vmax.f32 %v693, 0.0
      %v802 = vmax.f32 %v696, 0.0
      %v803 = vmax.f32 %v701, 0.0
      %v804 = vmax.f32 %v704, 0.0
      %v805 = vmax.f32 %v709, 0.0
      %v806 = vmax.f32 %v712, 0.0
      %v807 = vmax.f32 %v717, 0.0
      %v808 = vmax.f32 %v720, 0.0
      %v809 = vmax.f32 %v725, 0.0
      %v810 = vmax.f32 %v728, 0.0
      %v811 = vmax.f32 %v733, 0.0
      %v812 = vmax.f32 %v736, 0.0
      %v813 = vmax.f32 %v741, 0.0
      %v814 = vmax.f32 %v744, 0.0
      %v815 = vmax.f32 %v749, 0.0
      %v816 = vmax.f32 %v752, 0.0
      %v817 = vmax.f32 %v757, 0.0
      %v818 = vmax.f32 %v760, 0.0
      %v819 = vmax.f32 %v765, 0.0
      %v820 = vmax.f32 %v768, 0.0
      %v821 = vmax.f32 %v773, 0.0
      %v822 = vmax.f32 %v776, 0.0
      %v823 = vmax.f32 %v781, 0.0
      %v824 = vmax.f32 %v784, 0.0
      %v825 = vmax.f32 %v789, 0.0
      %v826 = vmax.f32 %v792, 0.0
      %v827 = vmin.f32 %v795, 6.0
      %v828 = vmin.f32 %v796, 6.0
      %v829 = vmin.f32 %v797, 6.0
      %v830 = vmin.f32 %v798, 6.0
      %v831 = vmin.f32 %v799, 6.0
      %v832 = vmin.f32 %v800, 6.0
      %v833 = vmin.f32 %v801, 6.0
      %v834 = vmin.f32 %v802, 6.0
      %v835 = vmin.f32 %v803, 6.0
      %v836 = vmin.f32 %v804, 6.0
      %v837 = vmin.f32 %v805, 6.0
      %v838 = vmin.f32 %v806, 6.0
      %v839 = vmin.f32 %v807, 6.0
      %v840 = vmin.f32 %v808, 6.0
      %v841 = vmin.f32 %v809, 6.0
      %v842 = vmin.f32 %v810, 6.0
      %v843 = vmin.f32 %v811, 6.0
      %v844 = vmin.f32 %v812, 6.0
      %v845 = vmin.f32 %v813, 6.0
      %v846 = vmin.f32 %v814, 6.0
      %v847 = vmin.f32 %v815, 6.0
      %v848 = vmin.f32 %v816, 6.0
      %v849 = vmin.f32 %v817, 6.0
      %v850 = vmin.f32 %v818, 6.0
      %v851 = vmin.f32 %v819, 6.0
      %v852 = vmin.f32 %v820, 6.0
      %v853 = vmin.f32 %v821, 6.0
      %v854 = vmin.f32 %v822, 6.0
      %v855 = vmin.f32 %v823, 6.0
      %v856 = vmin.f32 %v824, 6.0
      %v857 = vmin.f32 %v825, 6.0
      %v858 = vmin.f32 %v826, 6.0
      %v859 = vpack.c.bf16 %v828, %v827
      %v860 = vpack.c.bf16 %v830, %v829
      %v861 = vpack.c.bf16 %v832, %v831
      %v862 = vpack.c.bf16 %v834, %v833
      %v863 = vpack.c.bf16 %v836, %v835
      %v864 = vpack.c.bf16 %v838, %v837
      %v865 = vpack.c.bf16 %v840, %v839
      %v866 = vpack.c.bf16 %v842, %v841
      %v867 = vpack.c.bf16 %v844, %v843
      %v868 = vpack.c.bf16 %v846, %v845
      %v869 = vpack.c.bf16 %v848, %v847
      %v870 = vpack.c.bf16 %v850, %v849
      %v871 = vpack.c.bf16 %v852, %v851
      %v872 = vpack.c.bf16 %v854, %v853
      %v873 = vpack.c.bf16 %v856, %v855
      %v874 = vpack.c.bf16 %v858, %v857
      %v891 = vunpack.c.l.b16 %v859
      %v892 = vunpack.c.h.b16 %v859
      %v893 = vunpack.c.l.b16 %v860
      %v894 = vunpack.c.h.b16 %v860
      %v895 = vunpack.c.l.b16 %v861
      %v896 = vunpack.c.h.b16 %v861
      %v897 = vunpack.c.l.b16 %v862
      %v898 = vunpack.c.h.b16 %v862
      %v899 = vunpack.c.l.b16 %v863
      %v900 = vunpack.c.h.b16 %v863
      %v901 = vunpack.c.l.b16 %v864
      %v902 = vunpack.c.h.b16 %v864
      %v903 = vunpack.c.l.b16 %v865
      %v904 = vunpack.c.h.b16 %v865
      %v905 = vunpack.c.l.b16 %v866
      %v906 = vunpack.c.h.b16 %v866
      %v907 = vunpack.c.l.b16 %v867
      %v908 = vunpack.c.h.b16 %v867
      %v909 = vunpack.c.l.b16 %v868
      %v910 = vunpack.c.h.b16 %v868
      %v911 = vunpack.c.l.b16 %v869
      %v912 = vunpack.c.h.b16 %v869
      %v913 = vunpack.c.l.b16 %v870
      %v914 = vunpack.c.h.b16 %v870
      %v915 = vunpack.c.l.b16 %v871
      %v916 = vunpack.c.h.b16 %v871
      %v917 = vunpack.c.l.b16 %v872
      %v918 = vunpack.c.h.b16 %v872
      %v919 = vunpack.c.l.b16 %v873
      %v920 = vunpack.c.h.b16 %v873
      %v921 = vunpack.c.l.b16 %v874
      %v922 = vunpack.c.h.b16 %v874
      %v923 = vpack.c.b16 %v891, %v891
      %v924 = vpack.c.b16 %v892, %v892
      %v925 = vpack.c.b16 %v893, %v893
      %v926 = vpack.c.b16 %v894, %v894
      %v927 = vpack.c.b16 %v895, %v895
      %v928 = vpack.c.b16 %v896, %v896
      %v929 = vpack.c.b16 %v897, %v897
      %v930 = vpack.c.b16 %v898, %v898
      %v931 = vpack.c.b16 %v899, %v899
      %v932 = vpack.c.b16 %v900, %v900
      %v933 = vpack.c.b16 %v901, %v901
      %v934 = vpack.c.b16 %v902, %v902
      %v935 = vpack.c.b16 %v903, %v903
      %v936 = vpack.c.b16 %v904, %v904
      %v937 = vpack.c.b16 %v905, %v905
      %v938 = vpack.c.b16 %v906, %v906
      %v939 = vpack.c.b16 %v907, %v907
      %v940 = vpack.c.b16 %v908, %v908
      %v941 = vpack.c.b16 %v909, %v909
      %v942 = vpack.c.b16 %v910, %v910
      %v943 = vpack.c.b16 %v911, %v911
      %v944 = vpack.c.b16 %v912, %v912
      %v945 = vpack.c.b16 %v913, %v913
      %v946 = vpack.c.b16 %v914, %v914
      %v947 = vpack.c.b16 %v915, %v915
      %v948 = vpack.c.b16 %v916, %v916
      %v949 = vpack.c.b16 %v917, %v917
      %v950 = vpack.c.b16 %v918, %v918
      %v951 = vpack.c.b16 %v919, %v919
      %v952 = vpack.c.b16 %v920, %v920
      %v953 = vpack.c.b16 %v921, %v921
      %v954 = vpack.c.b16 %v922, %v922
      %vm955 = vsmask.f32 256
      %vm956 = vsmask.f32 4368
      %vm957 = vmor %vm955, %vm956
      %v959 = vshrl.u32 %v923, 16
      %v961 = vrot.slane %v959, 7
      %v962 = vshll.u32 %v923, 16
      %v964 = vor.u32 %v961, %v962
      %v965 = vrot.slane %v961, 4
      %v967 = vshrl.u32 %v924, 16
      %v969 = vrot.slane %v967, 7
      %v970 = vshll.u32 %v924, 16
      %v972 = vor.u32 %v969, %v970
      %v973 = vsel %vm957, %v965, %v972
      %v974 = vrot.slane %v969, 4
      %v976 = vshrl.u32 %v925, 16
      %v978 = vrot.slane %v976, 7
      %v979 = vshll.u32 %v925, 16
      %v981 = vor.u32 %v978, %v979
      %v982 = vrot.slane %v978, 4
      %v984 = vshrl.u32 %v926, 16
      %v986 = vrot.slane %v984, 7
      %v987 = vshll.u32 %v926, 16
      %v989 = vor.u32 %v986, %v987
      %v990 = vsel %vm957, %v982, %v989
      %v991 = vrot.slane %v986, 4
      %v993 = vshrl.u32 %v927, 16
      %v995 = vrot.slane %v993, 7
      %v996 = vshll.u32 %v927, 16
      %v998 = vor.u32 %v995, %v996
      %v999 = vrot.slane %v995, 4
      %v1001 = vshrl.u32 %v928, 16
      %v1003 = vrot.slane %v1001, 7
      %v1004 = vshll.u32 %v928, 16
      %v1006 = vor.u32 %v1003, %v1004
      %v1007 = vsel %vm957, %v999, %v1006
      %v1008 = vrot.slane %v1003, 4
      %v1010 = vshrl.u32 %v929, 16
      %v1012 = vrot.slane %v1010, 7
      %v1013 = vshll.u32 %v929, 16
      %v1015 = vor.u32 %v1012, %v1013
      %v1016 = vrot.slane %v1012, 4
      %v1018 = vshrl.u32 %v930, 16
      %v1020 = vrot.slane %v1018, 7
      %v1021 = vshll.u32 %v930, 16
      %v1023 = vor.u32 %v1020, %v1021
      %v1024 = vsel %vm957, %v1016, %v1023
      %v1025 = vrot.slane %v1020, 4
      %v1027 = vshrl.u32 %v931, 16
      %v1029 = vrot.slane %v1027, 7
      %v1030 = vshll.u32 %v931, 16
      %v1032 = vor.u32 %v1029, %v1030
      %v1033 = vrot.slane %v1029, 4
      %v1035 = vshrl.u32 %v932, 16
      %v1037 = vrot.slane %v1035, 7
      %v1038 = vshll.u32 %v932, 16
      %v1040 = vor.u32 %v1037, %v1038
      %v1041 = vsel %vm957, %v1033, %v1040
      %v1042 = vrot.slane %v1037, 4
      %v1044 = vshrl.u32 %v933, 16
      %v1046 = vrot.slane %v1044, 7
      %v1047 = vshll.u32 %v933, 16
      %v1049 = vor.u32 %v1046, %v1047
      %v1050 = vrot.slane %v1046, 4
      %v1052 = vshrl.u32 %v934, 16
      %v1054 = vrot.slane %v1052, 7
      %v1055 = vshll.u32 %v934, 16
      %v1057 = vor.u32 %v1054, %v1055
      %v1058 = vsel %vm957, %v1050, %v1057
      %v1059 = vrot.slane %v1054, 4
      %v1061 = vshrl.u32 %v935, 16
      %v1063 = vrot.slane %v1061, 7
      %v1064 = vshll.u32 %v935, 16
      %v1066 = vor.u32 %v1063, %v1064
      %v1067 = vrot.slane %v1063, 4
      %v1069 = vshrl.u32 %v936, 16
      %v1071 = vrot.slane %v1069, 7
      %v1072 = vshll.u32 %v936, 16
      %v1074 = vor.u32 %v1071, %v1072
      %v1075 = vsel %vm957, %v1067, %v1074
      %v1076 = vrot.slane %v1071, 4
      %v1078 = vshrl.u32 %v937, 16
      %v1080 = vrot.slane %v1078, 7
      %v1081 = vshll.u32 %v937, 16
      %v1083 = vor.u32 %v1080, %v1081
      %v1084 = vrot.slane %v1080, 4
      %v1086 = vshrl.u32 %v938, 16
      %v1088 = vrot.slane %v1086, 7
      %v1089 = vshll.u32 %v938, 16
      %v1091 = vor.u32 %v1088, %v1089
      %v1092 = vsel %vm957, %v1084, %v1091
      %v1093 = vrot.slane %v1088, 4
      %v1095 = vshrl.u32 %v939, 16
      %v1097 = vrot.slane %v1095, 7
      %v1098 = vshll.u32 %v939, 16
      %v1100 = vor.u32 %v1097, %v1098
      %v1101 = vrot.slane %v1097, 4
      %v1103 = vshrl.u32 %v940, 16
      %v1105 = vrot.slane %v1103, 7
      %v1106 = vshll.u32 %v940, 16
      %v1108 = vor.u32 %v1105, %v1106
      %v1109 = vsel %vm957, %v1101, %v1108
      %v1110 = vrot.slane %v1105, 4
      %v1112 = vshrl.u32 %v941, 16
      %v1114 = vrot.slane %v1112, 7
      %v1115 = vshll.u32 %v941, 16
      %v1117 = vor.u32 %v1114, %v1115
      %v1118 = vrot.slane %v1114, 4
      %v1120 = vshrl.u32 %v942, 16
      %v1122 = vrot.slane %v1120, 7
      %v1123 = vshll.u32 %v942, 16
      %v1125 = vor.u32 %v1122, %v1123
      %v1126 = vsel %vm957, %v1118, %v1125
      %v1127 = vrot.slane %v1122, 4
      %v1129 = vshrl.u32 %v943, 16
      %v1131 = vrot.slane %v1129, 7
      %v1132 = vshll.u32 %v943, 16
      %v1134 = vor.u32 %v1131, %v1132
      %v1135 = vrot.slane %v1131, 4
      %v1137 = vshrl.u32 %v944, 16
      %v1139 = vrot.slane %v1137, 7
      %v1140 = vshll.u32 %v944, 16
      %v1142 = vor.u32 %v1139, %v1140
      %v1143 = vsel %vm957, %v1135, %v1142
      %v1144 = vrot.slane %v1139, 4
      %v1146 = vshrl.u32 %v945, 16
      %v1148 = vrot.slane %v1146, 7
      %v1149 = vshll.u32 %v945, 16
      %v1151 = vor.u32 %v1148, %v1149
      %v1152 = vrot.slane %v1148, 4
      %v1154 = vshrl.u32 %v946, 16
      %v1156 = vrot.slane %v1154, 7
      %v1157 = vshll.u32 %v946, 16
      %v1159 = vor.u32 %v1156, %v1157
      %v1160 = vsel %vm957, %v1152, %v1159
      %v1161 = vrot.slane %v1156, 4
      %v1163 = vshrl.u32 %v947, 16
      %v1165 = vrot.slane %v1163, 7
      %v1166 = vshll.u32 %v947, 16
      %v1168 = vor.u32 %v1165, %v1166
      %v1169 = vrot.slane %v1165, 4
      %v1171 = vshrl.u32 %v948, 16
      %v1173 = vrot.slane %v1171, 7
      %v1174 = vshll.u32 %v948, 16
      %v1176 = vor.u32 %v1173, %v1174
      %v1177 = vsel %vm957, %v1169, %v1176
      %v1178 = vrot.slane %v1173, 4
      %v1180 = vshrl.u32 %v949, 16
      %v1182 = vrot.slane %v1180, 7
      %v1183 = vshll.u32 %v949, 16
      %v1185 = vor.u32 %v1182, %v1183
      %v1186 = vrot.slane %v1182, 4
      %v1188 = vshrl.u32 %v950, 16
      %v1190 = vrot.slane %v1188, 7
      %v1191 = vshll.u32 %v950, 16
      %v1193 = vor.u32 %v1190, %v1191
      %v1194 = vsel %vm957, %v1186, %v1193
      %v1195 = vrot.slane %v1190, 4
      %v1197 = vshrl.u32 %v951, 16
      %v1199 = vrot.slane %v1197, 7
      %v1200 = vshll.u32 %v951, 16
      %v1202 = vor.u32 %v1199, %v1200
      %v1203 = vrot.slane %v1199, 4
      %v1205 = vshrl.u32 %v952, 16
      %v1207 = vrot.slane %v1205, 7
      %v1208 = vshll.u32 %v952, 16
      %v1210 = vor.u32 %v1207, %v1208
      %v1211 = vsel %vm957, %v1203, %v1210
      %v1212 = vrot.slane %v1207, 4
      %v1214 = vshrl.u32 %v953, 16
      %v1216 = vrot.slane %v1214, 7
      %v1217 = vshll.u32 %v953, 16
      %v1219 = vor.u32 %v1216, %v1217
      %v1220 = vrot.slane %v1216, 4
      %v1222 = vshrl.u32 %v954, 16
      %v1224 = vrot.slane %v1222, 7
      %v1225 = vshll.u32 %v954, 16
      %v1227 = vor.u32 %v1224, %v1225
      %v1228 = vsel %vm957, %v1220, %v1227
      %v1229 = vrot.slane %v1224, 4
      %s1278 = scalar_lea.vmem [#allocation2], 12
      %vm1279 = vcmask 1043456
      %vm1280 = vsmask.f32 7938
      %vm1281 = vmand %vm1279, %vm1280
      %v1282 = vld [vmem:[%s1278] sm:$0xf]
      %v1283 = vsel %vm1281, %v964, %v1282
      %1284 = vst [vmem:[%s1278] sm:$0xf] %v1283
      %1285 = vst [vmem:[%s1278 + $0x4] sm:$0xf] %v973
      %vm1286 = vcmask 1040384
      %vm1287 = vmand %vm1286, %vm955
      %v1288 = vld [vmem:[%s1278 + $0x8] sm:$0x1]
      %v1289 = vsel %vm1287, %v974, %v1288
      %1290 = vst [vmem:[%s1278 + $0x8] sm:$0x1] %v1289
      %v1291 = vld [vmem:[%s1278 + $0xc] sm:$0xf]
      %v1292 = vsel %vm1281, %v981, %v1291
      %1293 = vst [vmem:[%s1278 + $0xc] sm:$0xf] %v1292
      %1294 = vst [vmem:[%s1278 + $0x10] sm:$0xf] %v990
      %v1295 = vld [vmem:[%s1278 + $0x14] sm:$0x1]
      %v1296 = vsel %vm1287, %v991, %v1295
      %1297 = vst [vmem:[%s1278 + $0x14] sm:$0x1] %v1296
      %v1298 = vld [vmem:[%s1278 + $0x18] sm:$0xf]
      %v1299 = vsel %vm1281, %v998, %v1298
      %1300 = vst [vmem:[%s1278 + $0x18] sm:$0xf] %v1299
      %1301 = vst [vmem:[%s1278 + $0x1c] sm:$0xf] %v1007
      %v1302 = vld [vmem:[%s1278 + $0x20] sm:$0x1]
      %v1303 = vsel %vm1287, %v1008, %v1302
      %1304 = vst [vmem:[%s1278 + $0x20] sm:$0x1] %v1303
      %v1305 = vld [vmem:[%s1278 + $0x24] sm:$0xf]
      %v1306 = vsel %vm1281, %v1015, %v1305
      %1307 = vst [vmem:[%s1278 + $0x24] sm:$0xf] %v1306
      %1308 = vst [vmem:[%s1278 + $0x28] sm:$0xf] %v1024
      %v1309 = vld [vmem:[%s1278 + $0x2c] sm:$0x1]
      %v1310 = vsel %vm1287, %v1025, %v1309
      %1311 = vst [vmem:[%s1278 + $0x2c] sm:$0x1] %v1310
      %v1312 = vld [vmem:[%s1278 + $0x30] sm:$0xf]
      %v1313 = vsel %vm1281, %v1032, %v1312
      %1314 = vst [vmem:[%s1278 + $0x30] sm:$0xf] %v1313
      %1315 = vst [vmem:[%s1278 + $0x34] sm:$0xf] %v1041
      %v1316 = vld [vmem:[%s1278 + $0x38] sm:$0x1]
      %v1317 = vsel %vm1287, %v1042, %v1316
      %1318 = vst [vmem:[%s1278 + $0x38] sm:$0x1] %v1317
      %v1319 = vld [vmem:[%s1278 + $0x3c] sm:$0xf]
      %v1320 = vsel %vm1281, %v1049, %v1319
      %1321 = vst [vmem:[%s1278 + $0x3c] sm:$0xf] %v1320
      %1322 = vst [vmem:[%s1278 + $0x40] sm:$0xf] %v1058
      %v1323 = vld [vmem:[%s1278 + $0x44] sm:$0x1]
      %v1324 = vsel %vm1287, %v1059, %v1323
      %1325 = vst [vmem:[%s1278 + $0x44] sm:$0x1] %v1324
      %v1326 = vld [vmem:[%s1278 + $0x48] sm:$0xf]
      %v1327 = vsel %vm1281, %v1066, %v1326
      %1328 = vst [vmem:[%s1278 + $0x48] sm:$0xf] %v1327
      %1329 = vst [vmem:[%s1278 + $0x4c] sm:$0xf] %v1075
      %v1330 = vld [vmem:[%s1278 + $0x50] sm:$0x1]
      %v1331 = vsel %vm1287, %v1076, %v1330
      %1332 = vst [vmem:[%s1278 + $0x50] sm:$0x1] %v1331
      %v1333 = vld [vmem:[%s1278 + $0x54] sm:$0xf]
      %v1334 = vsel %vm1281, %v1083, %v1333
      %1335 = vst [vmem:[%s1278 + $0x54] sm:$0xf] %v1334
      %1336 = vst [vmem:[%s1278 + $0x58] sm:$0xf] %v1092
      %v1337 = vld [vmem:[%s1278 + $0x5c] sm:$0x1]
      %v1338 = vsel %vm1287, %v1093, %v1337
      %1339 = vst [vmem:[%s1278 + $0x5c] sm:$0x1] %v1338
      %v1340 = vld [vmem:[%s1278 + $0x60] sm:$0xf]
      %v1341 = vsel %vm1281, %v1100, %v1340
      %1342 = vst [vmem:[%s1278 + $0x60] sm:$0xf] %v1341
      %1343 = vst [vmem:[%s1278 + $0x64] sm:$0xf] %v1109
      %v1344 = vld [vmem:[%s1278 + $0x68] sm:$0x1]
      %v1345 = vsel %vm1287, %v1110, %v1344
      %1346 = vst [vmem:[%s1278 + $0x68] sm:$0x1] %v1345
      %v1347 = vld [vmem:[%s1278 + $0x6c] sm:$0xf]
      %v1348 = vsel %vm1281, %v1117, %v1347
      %1349 = vst [vmem:[%s1278 + $0x6c] sm:$0xf] %v1348
      %1350 = vst [vmem:[%s1278 + $0x70] sm:$0xf] %v1126
      %v1351 = vld [vmem:[%s1278 + $0x74] sm:$0x1]
      %v1352 = vsel %vm1287, %v1127, %v1351
      %1353 = vst [vmem:[%s1278 + $0x74] sm:$0x1] %v1352
      %v1354 = vld [vmem:[%s1278 + $0x78] sm:$0xf]
      %v1355 = vsel %vm1281, %v1134, %v1354
      %1356 = vst [vmem:[%s1278 + $0x78] sm:$0xf] %v1355
      %1357 = vst [vmem:[%s1278 + $0x7c] sm:$0xf] %v1143
      %v1358 = vld [vmem:[%s1278 + $0x80] sm:$0x1]
      %v1359 = vsel %vm1287, %v1144, %v1358
      %1360 = vst [vmem:[%s1278 + $0x80] sm:$0x1] %v1359
      %v1361 = vld [vmem:[%s1278 + $0x84] sm:$0xf]
      %v1362 = vsel %vm1281, %v1151, %v1361
      %1363 = vst [vmem:[%s1278 + $0x84] sm:$0xf] %v1362
      %1364 = vst [vmem:[%s1278 + $0x88] sm:$0xf] %v1160
      %v1365 = vld [vmem:[%s1278 + $0x8c] sm:$0x1]
      %v1366 = vsel %vm1287, %v1161, %v1365
      %1367 = vst [vmem:[%s1278 + $0x8c] sm:$0x1] %v1366
      %v1368 = vld [vmem:[%s1278 + $0x90] sm:$0xf]
      %v1369 = vsel %vm1281, %v1168, %v1368
      %1370 = vst [vmem:[%s1278 + $0x90] sm:$0xf] %v1369
      %1371 = vst [vmem:[%s1278 + $0x94] sm:$0xf] %v1177
      %v1372 = vld [vmem:[%s1278 + $0x98] sm:$0x1]
      %v1373 = vsel %vm1287, %v1178, %v1372
      %1374 = vst [vmem:[%s1278 + $0x98] sm:$0x1] %v1373
      %v1375 = vld [vmem:[%s1278 + $0x9c] sm:$0xf]
      %v1376 = vsel %vm1281, %v1185, %v1375
      %1377 = vst [vmem:[%s1278 + $0x9c] sm:$0xf] %v1376
      %1378 = vst [vmem:[%s1278 + $0xa0] sm:$0xf] %v1194
      %v1379 = vld [vmem:[%s1278 + $0xa4] sm:$0x1]
      %v1380 = vsel %vm1287, %v1195, %v1379
      %1381 = vst [vmem:[%s1278 + $0xa4] sm:$0x1] %v1380
      %v1382 = vld [vmem:[%s1278 + $0xa8] sm:$0xf]
      %v1383 = vsel %vm1281, %v1202, %v1382
      %1384 = vst [vmem:[%s1278 + $0xa8] sm:$0xf] %v1383
      %1385 = vst [vmem:[%s1278 + $0xac] sm:$0xf] %v1211
      %v1386 = vld [vmem:[%s1278 + $0xb0] sm:$0x1]
      %v1387 = vsel %vm1287, %v1212, %v1386
      %1388 = vst [vmem:[%s1278 + $0xb0] sm:$0x1] %v1387
      %v1389 = vld [vmem:[%s1278 + $0xb4] sm:$0xf]
      %v1390 = vsel %vm1281, %v1219, %v1389
      %1391 = vst [vmem:[%s1278 + $0xb4] sm:$0xf] %v1390
      %1392 = vst [vmem:[%s1278 + $0xb8] sm:$0xf] %v1228
      %v1393 = vld [vmem:[%s1278 + $0xbc] sm:$0x1]
      %v1394 = vsel %vm1287, %v1229, %v1393
      %1395 = vst [vmem:[%s1278 + $0xbc] sm:$0x1] %v1394
      %v1396 = vld [vmem:[%s4] sm:$0x1]
      %v1397 = vld [vmem:[#allocation2] sm:$0xf]
      %v1398 = vld [vmem:[#allocation2 + $0x4] sm:$0xf]
      %v1399 = vld [vmem:[%s3] sm:$0x1]
      %v1400 = vunpack.c.l.bf16 %v1397
      %v1401 = vunpack.c.l.bf16 %v1398
      %v1402 = vlaneseq
      %v1403 = vshrl.u32 %v1402, 7
      %v1404 = vsub.s32 0, %v1403
      %v1405 = vrot.slane %v1399, %v1404
      %v1406 = vmul.f32 %v1400, %v1405
      %v1407 = vmul.f32 %v1401, %v1405
      %v1408 = vadd.f32 %v1406, 0.0
      %v1409 = vadd.f32 %v1407, 0.0
      %v1410 = vld [vmem:[#allocation2 + $0x8] sm:$0x1]
      %v1411 = vld [vmem:[%s3 + $0x1] sm:$0x1]
      %v1412 = vunpack.c.l.bf16 %v1410
      %v1413 = vlaneseq
      %v1414 = vshrl.u32 %v1413, 7
      %v1415 = vsub.s32 0, %v1414
      %v1416 = vrot.slane %v1411, %v1415
      %v1417 = vmul.f32 %v1400, %v1416
      %v1418 = vmul.f32 %v1401, %v1416
      %v1419 = vmul.f32 %v1412, %v1416
      %vm1423 = vcmask 1046528
      %v1424 = vrot.slane %v1417, 1
      %v1425 = vrot.slane %v1418, 1
      %v1426 = vsel %vm1423, %v1424, %v1425
      %v1427 = vrot.slane %v1419, 1
      %v1428 = vsel %vm1423, %v1425, %v1427
      %v1431 = vadd.f32 %v1408, %v1426
      %v1432 = vadd.f32 %v1409, %v1428
      %v1433 = vld [vmem:[#allocation2] sm:$0xe]
      %v1434 = vld [vmem:[%s3 + $0x2] sm:$0x1]
      %v1435 = vunpack.c.l.bf16 %v1433
      %v1436 = vlaneseq
      %v1437 = vshrl.u32 %v1436, 7
      %v1438 = vsub.s32 0, %v1437
      %v1439 = vrot.slane %v1434, %v1438
      %v1440 = vmul.f32 %v1435, %v1439
      %v1441 = vmul.f32 %v1401, %v1439
      %v1442 = vmul.f32 %v1412, %v1439
      %vm1446 = vcmask 1045504
      %v1447 = vrot.slane %v1440, 2
      %v1448 = vrot.slane %v1441, 2
      %v1449 = vsel %vm1446, %v1447, %v1448
      %v1450 = vrot.slane %v1442, 2
      %v1451 = vsel %vm1446, %v1448, %v1450
      %v1454 = vadd.f32 %v1431, %v1449
      %v1455 = vadd.f32 %v1432, %v1451
      %v1456 = vld [vmem:[%s1278] sm:$0xf]
      %v1457 = vld [vmem:[%s1278 + $0x4] sm:$0xf]
      %v1458 = vld [vmem:[%s3 + $0x3] sm:$0x1]
      %v1459 = vunpack.c.l.bf16 %v1456
      %v1460 = vunpack.c.l.bf16 %v1457
      %v1461 = vlaneseq
      %v1462 = vshrl.u32 %v1461, 7
      %v1463 = vsub.s32 0, %v1462
      %v1464 = vrot.slane %v1458, %v1463
      %v1465 = vmul.f32 %v1459, %v1464
      %v1466 = vmul.f32 %v1460, %v1464
      %v1467 = vadd.f32 %v1454, %v1465
      %v1468 = vadd.f32 %v1455, %v1466
      %v1469 = vld [vmem:[%s1278 + $0x8] sm:$0x1]
      %v1470 = vld [vmem:[%s3 + $0x4] sm:$0x1]
      %v1471 = vunpack.c.l.bf16 %v1469
      %v1472 = vlaneseq
      %v1473 = vshrl.u32 %v1472, 7
      %v1474 = vsub.s32 0, %v1473
      %v1475 = vrot.slane %v1470, %v1474
      %v1476 = vmul.f32 %v1459, %v1475
      %v1477 = vmul.f32 %v1460, %v1475
      %v1478 = vmul.f32 %v1471, %v1475
      %v1482 = vrot.slane %v1476, 1
      %v1483 = vrot.slane %v1477, 1
      %v1484 = vsel %vm1423, %v1482, %v1483
      %v1485 = vrot.slane %v1478, 1
      %v1486 = vsel %vm1423, %v1483, %v1485
      %v1489 = vadd.f32 %v1467, %v1484
      %v1490 = vadd.f32 %v1468, %v1486
      %v1491 = vld [vmem:[%s1278] sm:$0xe]
      %v1492 = vld [vmem:[%s3 + $0x5] sm:$0x1]
      %v1493 = vunpack.c.l.bf16 %v1491
      %v1494 = vlaneseq
      %v1495 = vshrl.u32 %v1494, 7
      %v1496 = vsub.s32 0, %v1495
      %v1497 = vrot.slane %v1492, %v1496
      %v1498 = vmul.f32 %v1493, %v1497
      %v1499 = vmul.f32 %v1460, %v1497
      %v1500 = vmul.f32 %v1471, %v1497
      %v1504 = vrot.slane %v1498, 2
      %v1505 = vrot.slane %v1499, 2
      %v1506 = vsel %vm1446, %v1504, %v1505
      %v1507 = vrot.slane %v1500, 2
      %v1508 = vsel %vm1446, %v1505, %v1507
      %v1511 = vadd.f32 %v1489, %v1506
      %v1512 = vadd.f32 %v1490, %v1508
      %s1513 = scalar_lea.vmem [#allocation2], 24
      %v1514 = vld [vmem:[%s1513] sm:$0xf]
      %v1515 = vld [vmem:[%s1513 + $0x4] sm:$0xf]
      %v1516 = vld [vmem:[%s3 + $0x6] sm:$0x1]
      %v1517 = vunpack.c.l.bf16 %v1514
      %v1518 = vunpack.c.l.bf16 %v1515
      %v1519 = vlaneseq
      %v1520 = vshrl.u32 %v1519, 7
      %v1521 = vsub.s32 0, %v1520
      %v1522 = vrot.slane %v1516, %v1521
      %v1523 = vmul.f32 %v1517, %v1522
      %v1524 = vmul.f32 %v1518, %v1522
      %v1525 = vadd.f32 %v1511, %v1523
      %v1526 = vadd.f32 %v1512, %v1524
      %v1527 = vld [vmem:[%s1513 + $0x8] sm:$0x1]
      %v1528 = vld [vmem:[%s3 + $0x7] sm:$0x1]
      %v1529 = vunpack.c.l.bf16 %v1527
      %v1530 = vlaneseq
      %v1531 = vshrl.u32 %v1530, 7
      %v1532 = vsub.s32 0, %v1531
      %v1533 = vrot.slane %v1528, %v1532
      %v1534 = vmul.f32 %v1517, %v1533
      %v1535 = vmul.f32 %v1518, %v1533
      %v1536 = vmul.f32 %v1529, %v1533
      %v1540 = vrot.slane %v1534, 1
      %v1541 = vrot.slane %v1535, 1
      %v1542 = vsel %vm1423, %v1540, %v1541
      %v1543 = vrot.slane %v1536, 1
      %v1544 = vsel %vm1423, %v1541, %v1543
      %v1547 = vadd.f32 %v1525, %v1542
      %v1548 = vadd.f32 %v1526, %v1544
      %v1549 = vld [vmem:[%s1513] sm:$0xe]
      %v1550 = vld [vmem:[%s3 + $0x8] sm:$0x1]
      %v1551 = vunpack.c.l.bf16 %v1549
      %v1552 = vlaneseq
      %v1553 = vshrl.u32 %v1552, 7
      %v1554 = vsub.s32 0, %v1553
      %v1555 = vrot.slane %v1550, %v1554
      %v1556 = vmul.f32 %v1551, %v1555
      %v1557 = vmul.f32 %v1518, %v1555
      %v1558 = vmul.f32 %v1529, %v1555
      %v1562 = vrot.slane %v1556, 2
      %v1563 = vrot.slane %v1557, 2
      %v1564 = vsel %vm1446, %v1562, %v1563
      %v1565 = vrot.slane %v1558, 2
      %v1566 = vsel %vm1446, %v1563, %v1565
      %v1569 = vadd.f32 %v1547, %v1564
      %v1570 = vadd.f32 %v1548, %v1566
      %v1572 = vlaneseq
      %v1573 = vshrl.u32 %v1572, 7
      %v1574 = vsub.s32 0, %v1573
      %v1575 = vrot.slane %v1396, %v1574
      %v1577 = vadd.f32 %v1569, %v1575
      %v1578 = vadd.f32 %v1570, %v1575
      %v1579 = vmax.f32 %v1577, 0.0
      %v1580 = vmax.f32 %v1578, 0.0
      %v1581 = vmin.f32 %v1579, 6.0
      %v1582 = vmin.f32 %v1580, 6.0
      %v1583 = vpack.c.bf16 %v1582, %v1581
      %v1585 = vunpack.c.l.b16 %v1583
      %v1586 = vunpack.c.h.b16 %v1583
      %v1587 = vpack.c.b16 %v1585, %v1585
      %v1588 = vpack.c.b16 %v1586, %v1586
      %1591 = vst [vmem:[#allocation3] sm:$0xf] %v1587
      %1592 = vst [vmem:[#allocation3 + $0x4] sm:$0xf] %v1588
      %v1593 = vld [vmem:[%s1278] sm:$0xf]
      %v1594 = vld [vmem:[%s1278 + $0x4] sm:$0xf]
      %v1595 = vld [vmem:[%s3] sm:$0x1]
      %v1596 = vunpack.c.l.bf16 %v1593
      %v1597 = vunpack.c.l.bf16 %v1594
      %v1598 = vlaneseq
      %v1599 = vshrl.u32 %v1598, 7
      %v1600 = vsub.s32 0, %v1599
      %v1601 = vrot.slane %v1595, %v1600
      %v1602 = vmul.f32 %v1596, %v1601
      %v1603 = vmul.f32 %v1597, %v1601
      %v1604 = vadd.f32 %v1602, 0.0
      %v1605 = vadd.f32 %v1603, 0.0
      %v1606 = vld [vmem:[%s1278 + $0x8] sm:$0x1]
      %v1607 = vld [vmem:[%s3 + $0x1] sm:$0x1]
      %v1608 = vunpack.c.l.bf16 %v1606
      %v1609 = vlaneseq
      %v1610 = vshrl.u32 %v1609, 7
      %v1611 = vsub.s32 0, %v1610
      %v1612 = vrot.slane %v1607, %v1611
      %v1613 = vmul.f32 %v1596, %v1612
      %v1614 = vmul.f32 %v1597, %v1612
      %v1615 = vmul.f32 %v1608, %v1612
      %v1619 = vrot.slane %v1613, 1
      %v1620 = vrot.slane %v1614, 1
      %v1621 = vsel %vm1423, %v1619, %v1620
      %v1622 = vrot.slane %v1615, 1
      %v1623 = vsel %vm1423, %v1620, %v1622
      %v1626 = vadd.f32 %v1604, %v1621
      %v1627 = vadd.f32 %v1605, %v1623
      %v1628 = vld [vmem:[%s1278] sm:$0xe]
      %v1629 = vld [vmem:[%s3 + $0x2] sm:$0x1]
      %v1630 = vunpack.c.l.bf16 %v1628
      %v1631 = vlaneseq
      %v1632 = vshrl.u32 %v1631, 7
      %v1633 = vsub.s32 0, %v1632
      %v1634 = vrot.slane %v1629, %v1633
      %v1635 = vmul.f32 %v1630, %v1634
      %v1636 = vmul.f32 %v1597, %v1634
      %v1637 = vmul.f32 %v1608, %v1634
      %v1641 = vrot.slane %v1635, 2
      %v1642 = vrot.slane %v1636, 2
      %v1643 = vsel %vm1446, %v1641, %v1642
      %v1644 = vrot.slane %v1637, 2
      %v1645 = vsel %vm1446, %v1642, %v1644
      %v1648 = vadd.f32 %v1626, %v1643
      %v1649 = vadd.f32 %v1627, %v1645
      %v1650 = vld [vmem:[%s1513] sm:$0xf]
      %v1651 = vld [vmem:[%s1513 + $0x4] sm:$0xf]
      %v1652 = vld [vmem:[%s3 + $0x3] sm:$0x1]
      %v1653 = vunpack.c.l.bf16 %v1650
      %v1654 = vunpack.c.l.bf16 %v1651
      %v1655 = vlaneseq
      %v1656 = vshrl.u32 %v1655, 7
      %v1657 = vsub.s32 0, %v1656
      %v1658 = vrot.slane %v1652, %v1657
      %v1659 = vmul.f32 %v1653, %v1658
      %v1660 = vmul.f32 %v1654, %v1658
      %v1661 = vadd.f32 %v1648, %v1659
      %v1662 = vadd.f32 %v1649, %v1660
      %v1663 = vld [vmem:[%s1513 + $0x8] sm:$0x1]
      %v1664 = vld [vmem:[%s3 + $0x4] sm:$0x1]
      %v1665 = vunpack.c.l.bf16 %v1663
      %v1666 = vlaneseq
      %v1667 = vshrl.u32 %v1666, 7
      %v1668 = vsub.s32 0, %v1667
      %v1669 = vrot.slane %v1664, %v1668
      %v1670 = vmul.f32 %v1653, %v1669
      %v1671 = vmul.f32 %v1654, %v1669
      %v1672 = vmul.f32 %v1665, %v1669
      %v1676 = vrot.slane %v1670, 1
      %v1677 = vrot.slane %v1671, 1
      %v1678 = vsel %vm1423, %v1676, %v1677
      %v1679 = vrot.slane %v1672, 1
      %v1680 = vsel %vm1423, %v1677, %v1679
      %v1683 = vadd.f32 %v1661, %v1678
      %v1684 = vadd.f32 %v1662, %v1680
      %v1685 = vld [vmem:[%s1513] sm:$0xe]
      %v1686 = vld [vmem:[%s3 + $0x5] sm:$0x1]
      %v1687 = vunpack.c.l.bf16 %v1685
      %v1688 = vlaneseq
      %v1689 = vshrl.u32 %v1688, 7
      %v1690 = vsub.s32 0, %v1689
      %v1691 = vrot.slane %v1686, %v1690
      %v1692 = vmul.f32 %v1687, %v1691
      %v1693 = vmul.f32 %v1654, %v1691
      %v1694 = vmul.f32 %v1665, %v1691
      %v1698 = vrot.slane %v1692, 2
      %v1699 = vrot.slane %v1693, 2
      %v1700 = vsel %vm1446, %v1698, %v1699
      %v1701 = vrot.slane %v1694, 2
      %v1702 = vsel %vm1446, %v1699, %v1701
      %v1705 = vadd.f32 %v1683, %v1700
      %v1706 = vadd.f32 %v1684, %v1702
      %s1707 = scalar_lea.vmem [#allocation2], 36
      %v1708 = vld [vmem:[%s1707] sm:$0xf]
      %v1709 = vld [vmem:[%s1707 + $0x4] sm:$0xf]
      %v1710 = vld [vmem:[%s3 + $0x6] sm:$0x1]
      %v1711 = vunpack.c.l.bf16 %v1708
      %v1712 = vunpack.c.l.bf16 %v1709
      %v1713 = vlaneseq
      %v1714 = vshrl.u32 %v1713, 7
      %v1715 = vsub.s32 0, %v1714
      %v1716 = vrot.slane %v1710, %v1715
      %v1717 = vmul.f32 %v1711, %v1716
      %v1718 = vmul.f32 %v1712, %v1716
      %v1719 = vadd.f32 %v1705, %v1717
      %v1720 = vadd.f32 %v1706, %v1718
      %v1721 = vld [vmem:[%s1707 + $0x8] sm:$0x1]
      %v1722 = vld [vmem:[%s3 + $0x7] sm:$0x1]
      %v1723 = vunpack.c.l.bf16 %v1721
      %v1724 = vlaneseq
      %v1725 = vshrl.u32 %v1724, 7
      %v1726 = vsub.s32 0, %v1725
      %v1727 = vrot.slane %v1722, %v1726
      %v1728 = vmul.f32 %v1711, %v1727
      %v1729 = vmul.f32 %v1712, %v1727
      %v1730 = vmul.f32 %v1723, %v1727
      %v1734 = vrot.slane %v1728, 1
      %v1735 = vrot.slane %v1729, 1
      %v1736 = vsel %vm1423, %v1734, %v1735
      %v1737 = vrot.slane %v1730, 1
      %v1738 = vsel %vm1423, %v1735, %v1737
      %v1741 = vadd.f32 %v1719, %v1736
      %v1742 = vadd.f32 %v1720, %v1738
      %v1743 = vld [vmem:[%s1707] sm:$0xe]
      %v1744 = vld [vmem:[%s3 + $0x8] sm:$0x1]
      %v1745 = vunpack.c.l.bf16 %v1743
      %v1746 = vlaneseq
      %v1747 = vshrl.u32 %v1746, 7
      %v1748 = vsub.s32 0, %v1747
      %v1749 = vrot.slane %v1744, %v1748
      %v1750 = vmul.f32 %v1745, %v1749
      %v1751 = vmul.f32 %v1712, %v1749
      %v1752 = vmul.f32 %v1723, %v1749
      %v1756 = vrot.slane %v1750, 2
      %v1757 = vrot.slane %v1751, 2
      %v1758 = vsel %vm1446, %v1756, %v1757
      %v1759 = vrot.slane %v1752, 2
      %v1760 = vsel %vm1446, %v1757, %v1759
      %v1763 = vadd.f32 %v1741, %v1758
      %v1764 = vadd.f32 %v1742, %v1760
      %v1765 = vadd.f32 %v1763, %v1575
      %v1766 = vadd.f32 %v1764, %v1575
      %v1767 = vmax.f32 %v1765, 0.0
      %v1768 = vmax.f32 %v1766, 0.0
      %v1769 = vmin.f32 %v1767, 6.0
      %v1770 = vmin.f32 %v1768, 6.0
      %v1771 = vpack.c.bf16 %v1770, %v1769
      %v1773 = vunpack.c.l.b16 %v1771
      %v1774 = vunpack.c.h.b16 %v1771
      %v1775 = vpack.c.b16 %v1773, %v1773
      %v1776 = vpack.c.b16 %v1774, %v1774
      %1779 = vst [vmem:[#allocation3 + $0x8] sm:$0xf] %v1775
      %1780 = vst [vmem:[#allocation3 + $0xc] sm:$0xf] %v1776
      %v1781 = vld [vmem:[%s1513] sm:$0xf]
      %v1782 = vld [vmem:[%s1513 + $0x4] sm:$0xf]
      %v1783 = vld [vmem:[%s3] sm:$0x1]
      %v1784 = vunpack.c.l.bf16 %v1781
      %v1785 = vunpack.c.l.bf16 %v1782
      %v1786 = vlaneseq
      %v1787 = vshrl.u32 %v1786, 7
      %v1788 = vsub.s32 0, %v1787
      %v1789 = vrot.slane %v1783, %v1788
      %v1790 = vmul.f32 %v1784, %v1789
      %v1791 = vmul.f32 %v1785, %v1789
      %v1792 = vadd.f32 %v1790, 0.0
      %v1793 = vadd.f32 %v1791, 0.0
      %v1794 = vld [vmem:[%s1513 + $0x8] sm:$0x1]
      %v1795 = vld [vmem:[%s3 + $0x1] sm:$0x1]
      %v1796 = vunpack.c.l.bf16 %v1794
      %v1797 = vlaneseq
      %v1798 = vshrl.u32 %v1797, 7
      %v1799 = vsub.s32 0, %v1798
      %v1800 = vrot.slane %v1795, %v1799
      %v1801 = vmul.f32 %v1784, %v1800
      %v1802 = vmul.f32 %v1785, %v1800
      %v1803 = vmul.f32 %v1796, %v1800
      %v1807 = vrot.slane %v1801, 1
      %v1808 = vrot.slane %v1802, 1
      %v1809 = vsel %vm1423, %v1807, %v1808
      %v1810 = vrot.slane %v1803, 1
      %v1811 = vsel %vm1423, %v1808, %v1810
      %v1814 = vadd.f32 %v1792, %v1809
      %v1815 = vadd.f32 %v1793, %v1811
      %v1816 = vld [vmem:[%s1513] sm:$0xe]
      %v1817 = vld [vmem:[%s3 + $0x2] sm:$0x1]
      %v1818 = vunpack.c.l.bf16 %v1816
      %v1819 = vlaneseq
      %v1820 = vshrl.u32 %v1819, 7
      %v1821 = vsub.s32 0, %v1820
      %v1822 = vrot.slane %v1817, %v1821
      %v1823 = vmul.f32 %v1818, %v1822
      %v1824 = vmul.f32 %v1785, %v1822
      %v1825 = vmul.f32 %v1796, %v1822
      %v1829 = vrot.slane %v1823, 2
      %v1830 = vrot.slane %v1824, 2
      %v1831 = vsel %vm1446, %v1829, %v1830
      %v1832 = vrot.slane %v1825, 2
      %v1833 = vsel %vm1446, %v1830, %v1832
      %v1836 = vadd.f32 %v1814, %v1831
      %v1837 = vadd.f32 %v1815, %v1833
      %v1838 = vld [vmem:[%s1707] sm:$0xf]
      %v1839 = vld [vmem:[%s1707 + $0x4] sm:$0xf]
      %v1840 = vld [vmem:[%s3 + $0x3] sm:$0x1]
      %v1841 = vunpack.c.l.bf16 %v1838
      %v1842 = vunpack.c.l.bf16 %v1839
      %v1843 = vlaneseq
      %v1844 = vshrl.u32 %v1843, 7
      %v1845 = vsub.s32 0, %v1844
      %v1846 = vrot.slane %v1840, %v1845
      %v1847 = vmul.f32 %v1841, %v1846
      %v1848 = vmul.f32 %v1842, %v1846
      %v1849 = vadd.f32 %v1836, %v1847
      %v1850 = vadd.f32 %v1837, %v1848
      %v1851 = vld [vmem:[%s1707 + $0x8] sm:$0x1]
      %v1852 = vld [vmem:[%s3 + $0x4] sm:$0x1]
      %v1853 = vunpack.c.l.bf16 %v1851
      %v1854 = vlaneseq
      %v1855 = vshrl.u32 %v1854, 7
      %v1856 = vsub.s32 0, %v1855
      %v1857 = vrot.slane %v1852, %v1856
      %v1858 = vmul.f32 %v1841, %v1857
      %v1859 = vmul.f32 %v1842, %v1857
      %v1860 = vmul.f32 %v1853, %v1857
      %v1864 = vrot.slane %v1858, 1
      %v1865 = vrot.slane %v1859, 1
      %v1866 = vsel %vm1423, %v1864, %v1865
      %v1867 = vrot.slane %v1860, 1
      %v1868 = vsel %vm1423, %v1865, %v1867
      %v1871 = vadd.f32 %v1849, %v1866
      %v1872 = vadd.f32 %v1850, %v1868
      %v1873 = vld [vmem:[%s1707] sm:$0xe]
      %v1874 = vld [vmem:[%s3 + $0x5] sm:$0x1]
      %v1875 = vunpack.c.l.bf16 %v1873
      %v1876 = vlaneseq
      %v1877 = vshrl.u32 %v1876, 7
      %v1878 = vsub.s32 0, %v1877
      %v1879 = vrot.slane %v1874, %v1878
      %v1880 = vmul.f32 %v1875, %v1879
      %v1881 = vmul.f32 %v1842, %v1879
      %v1882 = vmul.f32 %v1853, %v1879
      %v1886 = vrot.slane %v1880, 2
      %v1887 = vrot.slane %v1881, 2
      %v1888 = vsel %vm1446, %v1886, %v1887
      %v1889 = vrot.slane %v1882, 2
      %v1890 = vsel %vm1446, %v1887, %v1889
      %v1893 = vadd.f32 %v1871, %v1888
      %v1894 = vadd.f32 %v1872, %v1890
      %s1895 = scalar_lea.vmem [#allocation2], 48
      %v1896 = vld [vmem:[%s1895] sm:$0xf]
      %v1897 = vld [vmem:[%s1895 + $0x4] sm:$0xf]
      %v1898 = vld [vmem:[%s3 + $0x6] sm:$0x1]
      %v1899 = vunpack.c.l.bf16 %v1896
      %v1900 = vunpack.c.l.bf16 %v1897
      %v1901 = vlaneseq
      %v1902 = vshrl.u32 %v1901, 7
      %v1903 = vsub.s32 0, %v1902
      %v1904 = vrot.slane %v1898, %v1903
      %v1905 = vmul.f32 %v1899, %v1904
      %v1906 = vmul.f32 %v1900, %v1904
      %v1907 = vadd.f32 %v1893, %v1905
      %v1908 = vadd.f32 %v1894, %v1906
      %v1909 = vld [vmem:[%s1895 + $0x8] sm:$0x1]
      %v1910 = vld [vmem:[%s3 + $0x7] sm:$0x1]
      %v1911 = vunpack.c.l.bf16 %v1909
      %v1912 = vlaneseq
      %v1913 = vshrl.u32 %v1912, 7
      %v1914 = vsub.s32 0, %v1913
      %v1915 = vrot.slane %v1910, %v1914
      %v1916 = vmul.f32 %v1899, %v1915
      %v1917 = vmul.f32 %v1900, %v1915
      %v1918 = vmul.f32 %v1911, %v1915
      %v1922 = vrot.slane %v1916, 1
      %v1923 = vrot.slane %v1917, 1
      %v1924 = vsel %vm1423, %v1922, %v1923
      %v1925 = vrot.slane %v1918, 1
      %v1926 = vsel %vm1423, %v1923, %v1925
      %v1929 = vadd.f32 %v1907, %v1924
      %v1930 = vadd.f32 %v1908, %v1926
      %v1931 = vld [vmem:[%s1895] sm:$0xe]
      %v1932 = vld [vmem:[%s3 + $0x8] sm:$0x1]
      %v1933 = vunpack.c.l.bf16 %v1931
      %v1934 = vlaneseq
      %v1935 = vshrl.u32 %v1934, 7
      %v1936 = vsub.s32 0, %v1935
      %v1937 = vrot.slane %v1932, %v1936
      %v1938 = vmul.f32 %v1933, %v1937
      %v1939 = vmul.f32 %v1900, %v1937
      %v1940 = vmul.f32 %v1911, %v1937
      %v1944 = vrot.slane %v1938, 2
      %v1945 = vrot.slane %v1939, 2
      %v1946 = vsel %vm1446, %v1944, %v1945
      %v1947 = vrot.slane %v1940, 2
      %v1948 = vsel %vm1446, %v1945, %v1947
      %v1951 = vadd.f32 %v1929, %v1946
      %v1952 = vadd.f32 %v1930, %v1948
      %v1953 = vadd.f32 %v1951, %v1575
      %v1954 = vadd.f32 %v1952, %v1575
      %v1955 = vmax.f32 %v1953, 0.0
      %v1956 = vmax.f32 %v1954, 0.0
      %v1957 = vmin.f32 %v1955, 6.0
      %v1958 = vmin.f32 %v1956, 6.0
      %v1959 = vpack.c.bf16 %v1958, %v1957
      %v1961 = vunpack.c.l.b16 %v1959
      %v1962 = vunpack.c.h.b16 %v1959
      %v1963 = vpack.c.b16 %v1961, %v1961
      %v1964 = vpack.c.b16 %v1962, %v1962
      %1967 = vst [vmem:[#allocation3 + $0x10] sm:$0xf] %v1963
      %1968 = vst [vmem:[#allocation3 + $0x14] sm:$0xf] %v1964
      %v1969 = vld [vmem:[%s1707] sm:$0xf]
      %v1970 = vld [vmem:[%s1707 + $0x4] sm:$0xf]
      %v1971 = vld [vmem:[%s3] sm:$0x1]
      %v1972 = vunpack.c.l.bf16 %v1969
      %v1973 = vunpack.c.l.bf16 %v1970
      %v1974 = vlaneseq
      %v1975 = vshrl.u32 %v1974, 7
      %v1976 = vsub.s32 0, %v1975
      %v1977 = vrot.slane %v1971, %v1976
      %v1978 = vmul.f32 %v1972, %v1977
      %v1979 = vmul.f32 %v1973, %v1977
      %v1980 = vadd.f32 %v1978, 0.0
      %v1981 = vadd.f32 %v1979, 0.0
      %v1982 = vld [vmem:[%s1707 + $0x8] sm:$0x1]
      %v1983 = vld [vmem:[%s3 + $0x1] sm:$0x1]
      %v1984 = vunpack.c.l.bf16 %v1982
      %v1985 = vlaneseq
      %v1986 = vshrl.u32 %v1985, 7
      %v1987 = vsub.s32 0, %v1986
      %v1988 = vrot.slane %v1983, %v1987
      %v1989 = vmul.f32 %v1972, %v1988
      %v1990 = vmul.f32 %v1973, %v1988
      %v1991 = vmul.f32 %v1984, %v1988
      %v1995 = vrot.slane %v1989, 1
      %v1996 = vrot.slane %v1990, 1
      %v1997 = vsel %vm1423, %v1995, %v1996
      %v1998 = vrot.slane %v1991, 1
      %v1999 = vsel %vm1423, %v1996, %v1998
      %v2002 = vadd.f32 %v1980, %v1997
      %v2003 = vadd.f32 %v1981, %v1999
      %v2004 = vld [vmem:[%s1707] sm:$0xe]
      %v2005 = vld [vmem:[%s3 + $0x2] sm:$0x1]
      %v2006 = vunpack.c.l.bf16 %v2004
      %v2007 = vlaneseq
      %v2008 = vshrl.u32 %v2007, 7
      %v2009 = vsub.s32 0, %v2008
      %v2010 = vrot.slane %v2005, %v2009
      %v2011 = vmul.f32 %v2006, %v2010
      %v2012 = vmul.f32 %v1973, %v2010
      %v2013 = vmul.f32 %v1984, %v2010
      %v2017 = vrot.slane %v2011, 2
      %v2018 = vrot.slane %v2012, 2
      %v2019 = vsel %vm1446, %v2017, %v2018
      %v2020 = vrot.slane %v2013, 2
      %v2021 = vsel %vm1446, %v2018, %v2020
      %v2024 = vadd.f32 %v2002, %v2019
      %v2025 = vadd.f32 %v2003, %v2021
      %v2026 = vld [vmem:[%s1895] sm:$0xf]
      %v2027 = vld [vmem:[%s1895 + $0x4] sm:$0xf]
      %v2028 = vld [vmem:[%s3 + $0x3] sm:$0x1]
      %v2029 = vunpack.c.l.bf16 %v2026
      %v2030 = vunpack.c.l.bf16 %v2027
      %v2031 = vlaneseq
      %v2032 = vshrl.u32 %v2031, 7
      %v2033 = vsub.s32 0, %v2032
      %v2034 = vrot.slane %v2028, %v2033
      %v2035 = vmul.f32 %v2029, %v2034
      %v2036 = vmul.f32 %v2030, %v2034
      %v2037 = vadd.f32 %v2024, %v2035
      %v2038 = vadd.f32 %v2025, %v2036
      %v2039 = vld [vmem:[%s1895 + $0x8] sm:$0x1]
      %v2040 = vld [vmem:[%s3 + $0x4] sm:$0x1]
      %v2041 = vunpack.c.l.bf16 %v2039
      %v2042 = vlaneseq
      %v2043 = vshrl.u32 %v2042, 7
      %v2044 = vsub.s32 0, %v2043
      %v2045 = vrot.slane %v2040, %v2044
      %v2046 = vmul.f32 %v2029, %v2045
      %v2047 = vmul.f32 %v2030, %v2045
      %v2048 = vmul.f32 %v2041, %v2045
      %v2052 = vrot.slane %v2046, 1
      %v2053 = vrot.slane %v2047, 1
      %v2054 = vsel %vm1423, %v2052, %v2053
      %v2055 = vrot.slane %v2048, 1
      %v2056 = vsel %vm1423, %v2053, %v2055
      %v2059 = vadd.f32 %v2037, %v2054
      %v2060 = vadd.f32 %v2038, %v2056
      %v2061 = vld [vmem:[%s1895] sm:$0xe]
      %v2062 = vld [vmem:[%s3 + $0x5] sm:$0x1]
      %v2063 = vunpack.c.l.bf16 %v2061
      %v2064 = vlaneseq
      %v2065 = vshrl.u32 %v2064, 7
      %v2066 = vsub.s32 0, %v2065
      %v2067 = vrot.slane %v2062, %v2066
      %v2068 = vmul.f32 %v2063, %v2067
      %v2069 = vmul.f32 %v2030, %v2067
      %v2070 = vmul.f32 %v2041, %v2067
      %v2074 = vrot.slane %v2068, 2
      %v2075 = vrot.slane %v2069, 2
      %v2076 = vsel %vm1446, %v2074, %v2075
      %v2077 = vrot.slane %v2070, 2
      %v2078 = vsel %vm1446, %v2075, %v2077
      %v2081 = vadd.f32 %v2059, %v2076
      %v2082 = vadd.f32 %v2060, %v2078
      %s2083 = scalar_lea.vmem [#allocation2], 60
      %v2084 = vld [vmem:[%s2083] sm:$0xf]
      %v2085 = vld [vmem:[%s2083 + $0x4] sm:$0xf]
      %v2086 = vld [vmem:[%s3 + $0x6] sm:$0x1]
      %v2087 = vunpack.c.l.bf16 %v2084
      %v2088 = vunpack.c.l.bf16 %v2085
      %v2089 = vlaneseq
      %v2090 = vshrl.u32 %v2089, 7
      %v2091 = vsub.s32 0, %v2090
      %v2092 = vrot.slane %v2086, %v2091
      %v2093 = vmul.f32 %v2087, %v2092
      %v2094 = vmul.f32 %v2088, %v2092
      %v2095 = vadd.f32 %v2081, %v2093
      %v2096 = vadd.f32 %v2082, %v2094
      %v2097 = vld [vmem:[%s2083 + $0x8] sm:$0x1]
      %v2098 = vld [vmem:[%s3 + $0x7] sm:$0x1]
      %v2099 = vunpack.c.l.bf16 %v2097
      %v2100 = vlaneseq
      %v2101 = vshrl.u32 %v2100, 7
      %v2102 = vsub.s32 0, %v2101
      %v2103 = vrot.slane %v2098, %v2102
      %v2104 = vmul.f32 %v2087, %v2103
      %v2105 = vmul.f32 %v2088, %v2103
      %v2106 = vmul.f32 %v2099, %v2103
      %v2110 = vrot.slane %v2104, 1
      %v2111 = vrot.slane %v2105, 1
      %v2112 = vsel %vm1423, %v2110, %v2111
      %v2113 = vrot.slane %v2106, 1
      %v2114 = vsel %vm1423, %v2111, %v2113
      %v2117 = vadd.f32 %v2095, %v2112
      %v2118 = vadd.f32 %v2096, %v2114
      %v2119 = vld [vmem:[%s2083] sm:$0xe]
      %v2120 = vld [vmem:[%s3 + $0x8] sm:$0x1]
      %v2121 = vunpack.c.l.bf16 %v2119
      %v2122 = vlaneseq
      %v2123 = vshrl.u32 %v2122, 7
      %v2124 = vsub.s32 0, %v2123
      %v2125 = vrot.slane %v2120, %v2124
      %v2126 = vmul.f32 %v2121, %v2125
      %v2127 = vmul.f32 %v2088, %v2125
      %v2128 = vmul.f32 %v2099, %v2125
      %v2132 = vrot.slane %v2126, 2
      %v2133 = vrot.slane %v2127, 2
      %v2134 = vsel %vm1446, %v2132, %v2133
      %v2135 = vrot.slane %v2128, 2
      %v2136 = vsel %vm1446, %v2133, %v2135
      %v2139 = vadd.f32 %v2117, %v2134
      %v2140 = vadd.f32 %v2118, %v2136
      %v2141 = vadd.f32 %v2139, %v1575
      %v2142 = vadd.f32 %v2140, %v1575
      %v2143 = vmax.f32 %v2141, 0.0
      %v2144 = vmax.f32 %v2142, 0.0
      %v2145 = vmin.f32 %v2143, 6.0
      %v2146 = vmin.f32 %v2144, 6.0
      %v2147 = vpack.c.bf16 %v2146, %v2145
      %v2149 = vunpack.c.l.b16 %v2147
      %v2150 = vunpack.c.h.b16 %v2147
      %v2151 = vpack.c.b16 %v2149, %v2149
      %v2152 = vpack.c.b16 %v2150, %v2150
      %2155 = vst [vmem:[#allocation3 + $0x18] sm:$0xf] %v2151
      %2156 = vst [vmem:[#allocation3 + $0x1c] sm:$0xf] %v2152
      %v2157 = vld [vmem:[%s1895] sm:$0xf]
      %v2158 = vld [vmem:[%s1895 + $0x4] sm:$0xf]
      %v2159 = vld [vmem:[%s3] sm:$0x1]
      %v2160 = vunpack.c.l.bf16 %v2157
      %v2161 = vunpack.c.l.bf16 %v2158
      %v2162 = vlaneseq
      %v2163 = vshrl.u32 %v2162, 7
      %v2164 = vsub.s32 0, %v2163
      %v2165 = vrot.slane %v2159, %v2164
      %v2166 = vmul.f32 %v2160, %v2165
      %v2167 = vmul.f32 %v2161, %v2165
      %v2168 = vadd.f32 %v2166, 0.0
      %v2169 = vadd.f32 %v2167, 0.0
      %v2170 = vld [vmem:[%s1895 + $0x8] sm:$0x1]
      %v2171 = vld [vmem:[%s3 + $0x1] sm:$0x1]
      %v2172 = vunpack.c.l.bf16 %v2170
      %v2173 = vlaneseq
      %v2174 = vshrl.u32 %v2173, 7
      %v2175 = vsub.s32 0, %v2174
      %v2176 = vrot.slane %v2171, %v2175
      %v2177 = vmul.f32 %v2160, %v2176
      %v2178 = vmul.f32 %v2161, %v2176
      %v2179 = vmul.f32 %v2172, %v2176
      %v2183 = vrot.slane %v2177, 1
      %v2184 = vrot.slane %v2178, 1
      %v2185 = vsel %vm1423, %v2183, %v2184
      %v2186 = vrot.slane %v2179, 1
      %v2187 = vsel %vm1423, %v2184, %v2186
      %v2190 = vadd.f32 %v2168, %v2185
      %v2191 = vadd.f32 %v2169, %v2187
      %v2192 = vld [vmem:[%s1895] sm:$0xe]
      %v2193 = vld [vmem:[%s3 + $0x2] sm:$0x1]
      %v2194 = vunpack.c.l.bf16 %v2192
      %v2195 = vlaneseq
      %v2196 = vshrl.u32 %v2195, 7
      %v2197 = vsub.s32 0, %v2196
      %v2198 = vrot.slane %v2193, %v2197
      %v2199 = vmul.f32 %v2194, %v2198
      %v2200 = vmul.f32 %v2161, %v2198
      %v2201 = vmul.f32 %v2172, %v2198
      %v2205 = vrot.slane %v2199, 2
      %v2206 = vrot.slane %v2200, 2
      %v2207 = vsel %vm1446, %v2205, %v2206
      %v2208 = vrot.slane %v2201, 2
      %v2209 = vsel %vm1446, %v2206, %v2208
      %v2212 = vadd.f32 %v2190, %v2207
      %v2213 = vadd.f32 %v2191, %v2209
      %v2214 = vld [vmem:[%s2083] sm:$0xf]
      %v2215 = vld [vmem:[%s2083 + $0x4] sm:$0xf]
      %v2216 = vld [vmem:[%s3 + $0x3] sm:$0x1]
      %v2217 = vunpack.c.l.bf16 %v2214
      %v2218 = vunpack.c.l.bf16 %v2215
      %v2219 = vlaneseq
      %v2220 = vshrl.u32 %v2219, 7
      %v2221 = vsub.s32 0, %v2220
      %v2222 = vrot.slane %v2216, %v2221
      %v2223 = vmul.f32 %v2217, %v2222
      %v2224 = vmul.f32 %v2218, %v2222
      %v2225 = vadd.f32 %v2212, %v2223
      %v2226 = vadd.f32 %v2213, %v2224
      %v2227 = vld [vmem:[%s2083 + $0x8] sm:$0x1]
      %v2228 = vld [vmem:[%s3 + $0x4] sm:$0x1]
      %v2229 = vunpack.c.l.bf16 %v2227
      %v2230 = vlaneseq
      %v2231 = vshrl.u32 %v2230, 7
      %v2232 = vsub.s32 0, %v2231
      %v2233 = vrot.slane %v2228, %v2232
      %v2234 = vmul.f32 %v2217, %v2233
      %v2235 = vmul.f32 %v2218, %v2233
      %v2236 = vmul.f32 %v2229, %v2233
      %v2240 = vrot.slane %v2234, 1
      %v2241 = vrot.slane %v2235, 1
      %v2242 = vsel %vm1423, %v2240, %v2241
      %v2243 = vrot.slane %v2236, 1
      %v2244 = vsel %vm1423, %v2241, %v2243
      %v2247 = vadd.f32 %v2225, %v2242
      %v2248 = vadd.f32 %v2226, %v2244
      %v2249 = vld [vmem:[%s2083] sm:$0xe]
      %v2250 = vld [vmem:[%s3 + $0x5] sm:$0x1]
      %v2251 = vunpack.c.l.bf16 %v2249
      %v2252 = vlaneseq
      %v2253 = vshrl.u32 %v2252, 7
      %v2254 = vsub.s32 0, %v2253
      %v2255 = vrot.slane %v2250, %v2254
      %v2256 = vmul.f32 %v2251, %v2255
      %v2257 = vmul.f32 %v2218, %v2255
      %v2258 = vmul.f32 %v2229, %v2255
      %v2262 = vrot.slane %v2256, 2
      %v2263 = vrot.slane %v2257, 2
      %v2264 = vsel %vm1446, %v2262, %v2263
      %v2265 = vrot.slane %v2258, 2
      %v2266 = vsel %vm1446, %v2263, %v2265
      %v2269 = vadd.f32 %v2247, %v2264
      %v2270 = vadd.f32 %v2248, %v2266
      %s2271 = scalar_lea.vmem [#allocation2], 72
      %v2272 = vld [vmem:[%s2271] sm:$0xf]
      %v2273 = vld [vmem:[%s2271 + $0x4] sm:$0xf]
      %v2274 = vld [vmem:[%s3 + $0x6] sm:$0x1]
      %v2275 = vunpack.c.l.bf16 %v2272
      %v2276 = vunpack.c.l.bf16 %v2273
      %v2277 = vlaneseq
      %v2278 = vshrl.u32 %v2277, 7
      %v2279 = vsub.s32 0, %v2278
      %v2280 = vrot.slane %v2274, %v2279
      %v2281 = vmul.f32 %v2275, %v2280
      %v2282 = vmul.f32 %v2276, %v2280
      %v2283 = vadd.f32 %v2269, %v2281
      %v2284 = vadd.f32 %v2270, %v2282
      %v2285 = vld [vmem:[%s2271 + $0x8] sm:$0x1]
      %v2286 = vld [vmem:[%s3 + $0x7] sm:$0x1]
      %v2287 = vunpack.c.l.bf16 %v2285
      %v2288 = vlaneseq
      %v2289 = vshrl.u32 %v2288, 7
      %v2290 = vsub.s32 0, %v2289
      %v2291 = vrot.slane %v2286, %v2290
      %v2292 = vmul.f32 %v2275, %v2291
      %v2293 = vmul.f32 %v2276, %v2291
      %v2294 = vmul.f32 %v2287, %v2291
      %v2298 = vrot.slane %v2292, 1
      %v2299 = vrot.slane %v2293, 1
      %v2300 = vsel %vm1423, %v2298, %v2299
      %v2301 = vrot.slane %v2294, 1
      %v2302 = vsel %vm1423, %v2299, %v2301
      %v2305 = vadd.f32 %v2283, %v2300
      %v2306 = vadd.f32 %v2284, %v2302
      %v2307 = vld [vmem:[%s2271] sm:$0xe]
      %v2308 = vld [vmem:[%s3 + $0x8] sm:$0x1]
      %v2309 = vunpack.c.l.bf16 %v2307
      %v2310 = vlaneseq
      %v2311 = vshrl.u32 %v2310, 7
      %v2312 = vsub.s32 0, %v2311
      %v2313 = vrot.slane %v2308, %v2312
      %v2314 = vmul.f32 %v2309, %v2313
      %v2315 = vmul.f32 %v2276, %v2313
      %v2316 = vmul.f32 %v2287, %v2313
      %v2320 = vrot.slane %v2314, 2
      %v2321 = vrot.slane %v2315, 2
      %v2322 = vsel %vm1446, %v2320, %v2321
      %v2323 = vrot.slane %v2316, 2
      %v2324 = vsel %vm1446, %v2321, %v2323
      %v2327 = vadd.f32 %v2305, %v2322
      %v2328 = vadd.f32 %v2306, %v2324
      %v2329 = vadd.f32 %v2327, %v1575
      %v2330 = vadd.f32 %v2328, %v1575
      %v2331 = vmax.f32 %v2329, 0.0
      %v2332 = vmax.f32 %v2330, 0.0
      %v2333 = vmin.f32 %v2331, 6.0
      %v2334 = vmin.f32 %v2332, 6.0
      %v2335 = vpack.c.bf16 %v2334, %v2333
      %v2337 = vunpack.c.l.b16 %v2335
      %v2338 = vunpack.c.h.b16 %v2335
      %v2339 = vpack.c.b16 %v2337, %v2337
      %v2340 = vpack.c.b16 %v2338, %v2338
      %2343 = vst [vmem:[#allocation3 + $0x20] sm:$0xf] %v2339
      %2344 = vst [vmem:[#allocation3 + $0x24] sm:$0xf] %v2340
      %v2345 = vld [vmem:[%s2083] sm:$0xf]
      %v2346 = vld [vmem:[%s2083 + $0x4] sm:$0xf]
      %v2347 = vld [vmem:[%s3] sm:$0x1]
      %v2348 = vunpack.c.l.bf16 %v2345
      %v2349 = vunpack.c.l.bf16 %v2346
      %v2350 = vlaneseq
      %v2351 = vshrl.u32 %v2350, 7
      %v2352 = vsub.s32 0, %v2351
      %v2353 = vrot.slane %v2347, %v2352
      %v2354 = vmul.f32 %v2348, %v2353
      %v2355 = vmul.f32 %v2349, %v2353
      %v2356 = vadd.f32 %v2354, 0.0
      %v2357 = vadd.f32 %v2355, 0.0
      %v2358 = vld [vmem:[%s2083 + $0x8] sm:$0x1]
      %v2359 = vld [vmem:[%s3 + $0x1] sm:$0x1]
      %v2360 = vunpack.c.l.bf16 %v2358
      %v2361 = vlaneseq
      %v2362 = vshrl.u32 %v2361, 7
      %v2363 = vsub.s32 0, %v2362
      %v2364 = vrot.slane %v2359, %v2363
      %v2365 = vmul.f32 %v2348, %v2364
      %v2366 = vmul.f32 %v2349, %v2364
      %v2367 = vmul.f32 %v2360, %v2364
      %v2371 = vrot.slane %v2365, 1
      %v2372 = vrot.slane %v2366, 1
      %v2373 = vsel %vm1423, %v2371, %v2372
      %v2374 = vrot.slane %v2367, 1
      %v2375 = vsel %vm1423, %v2372, %v2374
      %v2378 = vadd.f32 %v2356, %v2373
      %v2379 = vadd.f32 %v2357, %v2375
      %v2380 = vld [vmem:[%s2083] sm:$0xe]
      %v2381 = vld [vmem:[%s3 + $0x2] sm:$0x1]
      %v2382 = vunpack.c.l.bf16 %v2380
      %v2383 = vlaneseq
      %v2384 = vshrl.u32 %v2383, 7
      %v2385 = vsub.s32 0, %v2384
      %v2386 = vrot.slane %v2381, %v2385
      %v2387 = vmul.f32 %v2382, %v2386
      %v2388 = vmul.f32 %v2349, %v2386
      %v2389 = vmul.f32 %v2360, %v2386
      %v2393 = vrot.slane %v2387, 2
      %v2394 = vrot.slane %v2388, 2
      %v2395 = vsel %vm1446, %v2393, %v2394
      %v2396 = vrot.slane %v2389, 2
      %v2397 = vsel %vm1446, %v2394, %v2396
      %v2400 = vadd.f32 %v2378, %v2395
      %v2401 = vadd.f32 %v2379, %v2397
      %v2402 = vld [vmem:[%s2271] sm:$0xf]
      %v2403 = vld [vmem:[%s2271 + $0x4] sm:$0xf]
      %v2404 = vld [vmem:[%s3 + $0x3] sm:$0x1]
      %v2405 = vunpack.c.l.bf16 %v2402
      %v2406 = vunpack.c.l.bf16 %v2403
      %v2407 = vlaneseq
      %v2408 = vshrl.u32 %v2407, 7
      %v2409 = vsub.s32 0, %v2408
      %v2410 = vrot.slane %v2404, %v2409
      %v2411 = vmul.f32 %v2405, %v2410
      %v2412 = vmul.f32 %v2406, %v2410
      %v2413 = vadd.f32 %v2400, %v2411
      %v2414 = vadd.f32 %v2401, %v2412
      %v2415 = vld [vmem:[%s2271 + $0x8] sm:$0x1]
      %v2416 = vld [vmem:[%s3 + $0x4] sm:$0x1]
      %v2417 = vunpack.c.l.bf16 %v2415
      %v2418 = vlaneseq
      %v2419 = vshrl.u32 %v2418, 7
      %v2420 = vsub.s32 0, %v2419
      %v2421 = vrot.slane %v2416, %v2420
      %v2422 = vmul.f32 %v2405, %v2421
      %v2423 = vmul.f32 %v2406, %v2421
      %v2424 = vmul.f32 %v2417, %v2421
      %v2428 = vrot.slane %v2422, 1
      %v2429 = vrot.slane %v2423, 1
      %v2430 = vsel %vm1423, %v2428, %v2429
      %v2431 = vrot.slane %v2424, 1
      %v2432 = vsel %vm1423, %v2429, %v2431
      %v2435 = vadd.f32 %v2413, %v2430
      %v2436 = vadd.f32 %v2414, %v2432
      %v2437 = vld [vmem:[%s2271] sm:$0xe]
      %v2438 = vld [vmem:[%s3 + $0x5] sm:$0x1]
      %v2439 = vunpack.c.l.bf16 %v2437
      %v2440 = vlaneseq
      %v2441 = vshrl.u32 %v2440, 7
      %v2442 = vsub.s32 0, %v2441
      %v2443 = vrot.slane %v2438, %v2442
      %v2444 = vmul.f32 %v2439, %v2443
      %v2445 = vmul.f32 %v2406, %v2443
      %v2446 = vmul.f32 %v2417, %v2443
      %v2450 = vrot.slane %v2444, 2
      %v2451 = vrot.slane %v2445, 2
      %v2452 = vsel %vm1446, %v2450, %v2451
      %v2453 = vrot.slane %v2446, 2
      %v2454 = vsel %vm1446, %v2451, %v2453
      %v2457 = vadd.f32 %v2435, %v2452
      %v2458 = vadd.f32 %v2436, %v2454
      %s2459 = scalar_lea.vmem [#allocation2], 84
      %v2460 = vld [vmem:[%s2459] sm:$0xf]
      %v2461 = vld [vmem:[%s2459 + $0x4] sm:$0xf]
      %v2462 = vld [vmem:[%s3 + $0x6] sm:$0x1]
      %v2463 = vunpack.c.l.bf16 %v2460
      %v2464 = vunpack.c.l.bf16 %v2461
      %v2465 = vlaneseq
      %v2466 = vshrl.u32 %v2465, 7
      %v2467 = vsub.s32 0, %v2466
      %v2468 = vrot.slane %v2462, %v2467
      %v2469 = vmul.f32 %v2463, %v2468
      %v2470 = vmul.f32 %v2464, %v2468
      %v2471 = vadd.f32 %v2457, %v2469
      %v2472 = vadd.f32 %v2458, %v2470
      %v2473 = vld [vmem:[%s2459 + $0x8] sm:$0x1]
      %v2474 = vld [vmem:[%s3 + $0x7] sm:$0x1]
      %v2475 = vunpack.c.l.bf16 %v2473
      %v2476 = vlaneseq
      %v2477 = vshrl.u32 %v2476, 7
      %v2478 = vsub.s32 0, %v2477
      %v2479 = vrot.slane %v2474, %v2478
      %v2480 = vmul.f32 %v2463, %v2479
      %v2481 = vmul.f32 %v2464, %v2479
      %v2482 = vmul.f32 %v2475, %v2479
      %v2486 = vrot.slane %v2480, 1
      %v2487 = vrot.slane %v2481, 1
      %v2488 = vsel %vm1423, %v2486, %v2487
      %v2489 = vrot.slane %v2482, 1
      %v2490 = vsel %vm1423, %v2487, %v2489
      %v2493 = vadd.f32 %v2471, %v2488
      %v2494 = vadd.f32 %v2472, %v2490
      %v2495 = vld [vmem:[%s2459] sm:$0xe]
      %v2496 = vld [vmem:[%s3 + $0x8] sm:$0x1]
      %v2497 = vunpack.c.l.bf16 %v2495
      %v2498 = vlaneseq
      %v2499 = vshrl.u32 %v2498, 7
      %v2500 = vsub.s32 0, %v2499
      %v2501 = vrot.slane %v2496, %v2500
      %v2502 = vmul.f32 %v2497, %v2501
      %v2503 = vmul.f32 %v2464, %v2501
      %v2504 = vmul.f32 %v2475, %v2501
      %v2508 = vrot.slane %v2502, 2
      %v2509 = vrot.slane %v2503, 2
      %v2510 = vsel %vm1446, %v2508, %v2509
      %v2511 = vrot.slane %v2504, 2
      %v2512 = vsel %vm1446, %v2509, %v2511
      %v2515 = vadd.f32 %v2493, %v2510
      %v2516 = vadd.f32 %v2494, %v2512
      %v2517 = vadd.f32 %v2515, %v1575
      %v2518 = vadd.f32 %v2516, %v1575
      %v2519 = vmax.f32 %v2517, 0.0
      %v2520 = vmax.f32 %v2518, 0.0
      %v2521 = vmin.f32 %v2519, 6.0
      %v2522 = vmin.f32 %v2520, 6.0
      %v2523 = vpack.c.bf16 %v2522, %v2521
      %v2525 = vunpack.c.l.b16 %v2523
      %v2526 = vunpack.c.h.b16 %v2523
      %v2527 = vpack.c.b16 %v2525, %v2525
      %v2528 = vpack.c.b16 %v2526, %v2526
      %2531 = vst [vmem:[#allocation3 + $0x28] sm:$0xf] %v2527
      %2532 = vst [vmem:[#allocation3 + $0x2c] sm:$0xf] %v2528
      %v2533 = vld [vmem:[%s2271] sm:$0xf]
      %v2534 = vld [vmem:[%s2271 + $0x4] sm:$0xf]
      %v2535 = vld [vmem:[%s3] sm:$0x1]
      %v2536 = vunpack.c.l.bf16 %v2533
      %v2537 = vunpack.c.l.bf16 %v2534
      %v2538 = vlaneseq
      %v2539 = vshrl.u32 %v2538, 7
      %v2540 = vsub.s32 0, %v2539
      %v2541 = vrot.slane %v2535, %v2540
      %v2542 = vmul.f32 %v2536, %v2541
      %v2543 = vmul.f32 %v2537, %v2541
      %v2544 = vadd.f32 %v2542, 0.0
      %v2545 = vadd.f32 %v2543, 0.0
      %v2546 = vld [vmem:[%s2271 + $0x8] sm:$0x1]
      %v2547 = vld [vmem:[%s3 + $0x1] sm:$0x1]
      %v2548 = vunpack.c.l.bf16 %v2546
      %v2549 = vlaneseq
      %v2550 = vshrl.u32 %v2549, 7
      %v2551 = vsub.s32 0, %v2550
      %v2552 = vrot.slane %v2547, %v2551
      %v2553 = vmul.f32 %v2536, %v2552
      %v2554 = vmul.f32 %v2537, %v2552
      %v2555 = vmul.f32 %v2548, %v2552
      %v2559 = vrot.slane %v2553, 1
      %v2560 = vrot.slane %v2554, 1
      %v2561 = vsel %vm1423, %v2559, %v2560
      %v2562 = vrot.slane %v2555, 1
      %v2563 = vsel %vm1423, %v2560, %v2562
      %v2566 = vadd.f32 %v2544, %v2561
      %v2567 = vadd.f32 %v2545, %v2563
      %v2568 = vld [vmem:[%s2271] sm:$0xe]
      %v2569 = vld [vmem:[%s3 + $0x2] sm:$0x1]
      %v2570 = vunpack.c.l.bf16 %v2568
      %v2571 = vlaneseq
      %v2572 = vshrl.u32 %v2571, 7
      %v2573 = vsub.s32 0, %v2572
      %v2574 = vrot.slane %v2569, %v2573
      %v2575 = vmul.f32 %v2570, %v2574
      %v2576 = vmul.f32 %v2537, %v2574
      %v2577 = vmul.f32 %v2548, %v2574
      %v2581 = vrot.slane %v2575, 2
      %v2582 = vrot.slane %v2576, 2
      %v2583 = vsel %vm1446, %v2581, %v2582
      %v2584 = vrot.slane %v2577, 2
      %v2585 = vsel %vm1446, %v2582, %v2584
      %v2588 = vadd.f32 %v2566, %v2583
      %v2589 = vadd.f32 %v2567, %v2585
      %v2590 = vld [vmem:[%s2459] sm:$0xf]
      %v2591 = vld [vmem:[%s2459 + $0x4] sm:$0xf]
      %v2592 = vld [vmem:[%s3 + $0x3] sm:$0x1]
      %v2593 = vunpack.c.l.bf16 %v2590
      %v2594 = vunpack.c.l.bf16 %v2591
      %v2595 = vlaneseq
      %v2596 = vshrl.u32 %v2595, 7
      %v2597 = vsub.s32 0, %v2596
      %v2598 = vrot.slane %v2592, %v2597
      %v2599 = vmul.f32 %v2593, %v2598
      %v2600 = vmul.f32 %v2594, %v2598
      %v2601 = vadd.f32 %v2588, %v2599
      %v2602 = vadd.f32 %v2589, %v2600
      %v2603 = vld [vmem:[%s2459 + $0x8] sm:$0x1]
      %v2604 = vld [vmem:[%s3 + $0x4] sm:$0x1]
      %v2605 = vunpack.c.l.bf16 %v2603
      %v2606 = vlaneseq
      %v2607 = vshrl.u32 %v2606, 7
      %v2608 = vsub.s32 0, %v2607
      %v2609 = vrot.slane %v2604, %v2608
      %v2610 = vmul.f32 %v2593, %v2609
      %v2611 = vmul.f32 %v2594, %v2609
      %v2612 = vmul.f32 %v2605, %v2609
      %v2616 = vrot.slane %v2610, 1
      %v2617 = vrot.slane %v2611, 1
      %v2618 = vsel %vm1423, %v2616, %v2617
      %v2619 = vrot.slane %v2612, 1
      %v2620 = vsel %vm1423, %v2617, %v2619
      %v2623 = vadd.f32 %v2601, %v2618
      %v2624 = vadd.f32 %v2602, %v2620
      %v2625 = vld [vmem:[%s2459] sm:$0xe]
      %v2626 = vld [vmem:[%s3 + $0x5] sm:$0x1]
      %v2627 = vunpack.c.l.bf16 %v2625
      %v2628 = vlaneseq
      %v2629 = vshrl.u32 %v2628, 7
      %v2630 = vsub.s32 0, %v2629
      %v2631 = vrot.slane %v2626, %v2630
      %v2632 = vmul.f32 %v2627, %v2631
      %v2633 = vmul.f32 %v2594, %v2631
      %v2634 = vmul.f32 %v2605, %v2631
      %v2638 = vrot.slane %v2632, 2
      %v2639 = vrot.slane %v2633, 2
      %v2640 = vsel %vm1446, %v2638, %v2639
      %v2641 = vrot.slane %v2634, 2
      %v2642 = vsel %vm1446, %v2639, %v2641
      %v2645 = vadd.f32 %v2623, %v2640
      %v2646 = vadd.f32 %v2624, %v2642
      %s2647 = scalar_lea.vmem [#allocation2], 96
      %v2648 = vld [vmem:[%s2647] sm:$0xf]
      %v2649 = vld [vmem:[%s2647 + $0x4] sm:$0xf]
      %v2650 = vld [vmem:[%s3 + $0x6] sm:$0x1]
      %v2651 = vunpack.c.l.bf16 %v2648
      %v2652 = vunpack.c.l.bf16 %v2649
      %v2653 = vlaneseq
      %v2654 = vshrl.u32 %v2653, 7
      %v2655 = vsub.s32 0, %v2654
      %v2656 = vrot.slane %v2650, %v2655
      %v2657 = vmul.f32 %v2651, %v2656
      %v2658 = vmul.f32 %v2652, %v2656
      %v2659 = vadd.f32 %v2645, %v2657
      %v2660 = vadd.f32 %v2646, %v2658
      %v2661 = vld [vmem:[%s2647 + $0x8] sm:$0x1]
      %v2662 = vld [vmem:[%s3 + $0x7] sm:$0x1]
      %v2663 = vunpack.c.l.bf16 %v2661
      %v2664 = vlaneseq
      %v2665 = vshrl.u32 %v2664, 7
      %v2666 = vsub.s32 0, %v2665
      %v2667 = vrot.slane %v2662, %v2666
      %v2668 = vmul.f32 %v2651, %v2667
      %v2669 = vmul.f32 %v2652, %v2667
      %v2670 = vmul.f32 %v2663, %v2667
      %v2674 = vrot.slane %v2668, 1
      %v2675 = vrot.slane %v2669, 1
      %v2676 = vsel %vm1423, %v2674, %v2675
      %v2677 = vrot.slane %v2670, 1
      %v2678 = vsel %vm1423, %v2675, %v2677
      %v2681 = vadd.f32 %v2659, %v2676
      %v2682 = vadd.f32 %v2660, %v2678
      %v2683 = vld [vmem:[%s2647] sm:$0xe]
      %v2684 = vld [vmem:[%s3 + $0x8] sm:$0x1]
      %v2685 = vunpack.c.l.bf16 %v2683
      %v2686 = vlaneseq
      %v2687 = vshrl.u32 %v2686, 7
      %v2688 = vsub.s32 0, %v2687
      %v2689 = vrot.slane %v2684, %v2688
      %v2690 = vmul.f32 %v2685, %v2689
      %v2691 = vmul.f32 %v2652, %v2689
      %v2692 = vmul.f32 %v2663, %v2689
      %v2696 = vrot.slane %v2690, 2
      %v2697 = vrot.slane %v2691, 2
      %v2698 = vsel %vm1446, %v2696, %v2697
      %v2699 = vrot.slane %v2692, 2
      %v2700 = vsel %vm1446, %v2697, %v2699
      %v2703 = vadd.f32 %v2681, %v2698
      %v2704 = vadd.f32 %v2682, %v2700
      %v2705 = vadd.f32 %v2703, %v1575
      %v2706 = vadd.f32 %v2704, %v1575
      %v2707 = vmax.f32 %v2705, 0.0
      %v2708 = vmax.f32 %v2706, 0.0
      %v2709 = vmin.f32 %v2707, 6.0
      %v2710 = vmin.f32 %v2708, 6.0
      %v2711 = vpack.c.bf16 %v2710, %v2709
      %v2713 = vunpack.c.l.b16 %v2711
      %v2714 = vunpack.c.h.b16 %v2711
      %v2715 = vpack.c.b16 %v2713, %v2713
      %v2716 = vpack.c.b16 %v2714, %v2714
      %2719 = vst [vmem:[#allocation3 + $0x30] sm:$0xf] %v2715
      %2720 = vst [vmem:[#allocation3 + $0x34] sm:$0xf] %v2716
      %v2721 = vld [vmem:[%s2459] sm:$0xf]
      %v2722 = vld [vmem:[%s2459 + $0x4] sm:$0xf]
      %v2723 = vld [vmem:[%s3] sm:$0x1]
      %v2724 = vunpack.c.l.bf16 %v2721
      %v2725 = vunpack.c.l.bf16 %v2722
      %v2726 = vlaneseq
      %v2727 = vshrl.u32 %v2726, 7
      %v2728 = vsub.s32 0, %v2727
      %v2729 = vrot.slane %v2723, %v2728
      %v2730 = vmul.f32 %v2724, %v2729
      %v2731 = vmul.f32 %v2725, %v2729
      %v2732 = vadd.f32 %v2730, 0.0
      %v2733 = vadd.f32 %v2731, 0.0
      %v2734 = vld [vmem:[%s2459 + $0x8] sm:$0x1]
      %v2735 = vld [vmem:[%s3 + $0x1] sm:$0x1]
      %v2736 = vunpack.c.l.bf16 %v2734
      %v2737 = vlaneseq
      %v2738 = vshrl.u32 %v2737, 7
      %v2739 = vsub.s32 0, %v2738
      %v2740 = vrot.slane %v2735, %v2739
      %v2741 = vmul.f32 %v2724, %v2740
      %v2742 = vmul.f32 %v2725, %v2740
      %v2743 = vmul.f32 %v2736, %v2740
      %v2747 = vrot.slane %v2741, 1
      %v2748 = vrot.slane %v2742, 1
      %v2749 = vsel %vm1423, %v2747, %v2748
      %v2750 = vrot.slane %v2743, 1
      %v2751 = vsel %vm1423, %v2748, %v2750
      %v2754 = vadd.f32 %v2732, %v2749
      %v2755 = vadd.f32 %v2733, %v2751
      %v2756 = vld [vmem:[%s2459] sm:$0xe]
      %v2757 = vld [vmem:[%s3 + $0x2] sm:$0x1]
      %v2758 = vunpack.c.l.bf16 %v2756
      %v2759 = vlaneseq
      %v2760 = vshrl.u32 %v2759, 7
      %v2761 = vsub.s32 0, %v2760
      %v2762 = vrot.slane %v2757, %v2761
      %v2763 = vmul.f32 %v2758, %v2762
      %v2764 = vmul.f32 %v2725, %v2762
      %v2765 = vmul.f32 %v2736, %v2762
      %v2769 = vrot.slane %v2763, 2
      %v2770 = vrot.slane %v2764, 2
      %v2771 = vsel %vm1446, %v2769, %v2770
      %v2772 = vrot.slane %v2765, 2
      %v2773 = vsel %vm1446, %v2770, %v2772
      %v2776 = vadd.f32 %v2754, %v2771
      %v2777 = vadd.f32 %v2755, %v2773
      %v2778 = vld [vmem:[%s2647] sm:$0xf]
      %v2779 = vld [vmem:[%s2647 + $0x4] sm:$0xf]
      %v2780 = vld [vmem:[%s3 + $0x3] sm:$0x1]
      %v2781 = vunpack.c.l.bf16 %v2778
      %v2782 = vunpack.c.l.bf16 %v2779
      %v2783 = vlaneseq
      %v2784 = vshrl.u32 %v2783, 7
      %v2785 = vsub.s32 0, %v2784
      %v2786 = vrot.slane %v2780, %v2785
      %v2787 = vmul.f32 %v2781, %v2786
      %v2788 = vmul.f32 %v2782, %v2786
      %v2789 = vadd.f32 %v2776, %v2787
      %v2790 = vadd.f32 %v2777, %v2788
      %v2791 = vld [vmem:[%s2647 + $0x8] sm:$0x1]
      %v2792 = vld [vmem:[%s3 + $0x4] sm:$0x1]
      %v2793 = vunpack.c.l.bf16 %v2791
      %v2794 = vlaneseq
      %v2795 = vshrl.u32 %v2794, 7
      %v2796 = vsub.s32 0, %v2795
      %v2797 = vrot.slane %v2792, %v2796
      %v2798 = vmul.f32 %v2781, %v2797
      %v2799 = vmul.f32 %v2782, %v2797
      %v2800 = vmul.f32 %v2793, %v2797
      %v2804 = vrot.slane %v2798, 1
      %v2805 = vrot.slane %v2799, 1
      %v2806 = vsel %vm1423, %v2804, %v2805
      %v2807 = vrot.slane %v2800, 1
      %v2808 = vsel %vm1423, %v2805, %v2807
      %v2811 = vadd.f32 %v2789, %v2806
      %v2812 = vadd.f32 %v2790, %v2808
      %v2813 = vld [vmem:[%s2647] sm:$0xe]
      %v2814 = vld [vmem:[%s3 + $0x5] sm:$0x1]
      %v2815 = vunpack.c.l.bf16 %v2813
      %v2816 = vlaneseq
      %v2817 = vshrl.u32 %v2816, 7
      %v2818 = vsub.s32 0, %v2817
      %v2819 = vrot.slane %v2814, %v2818
      %v2820 = vmul.f32 %v2815, %v2819
      %v2821 = vmul.f32 %v2782, %v2819
      %v2822 = vmul.f32 %v2793, %v2819
      %v2826 = vrot.slane %v2820, 2
      %v2827 = vrot.slane %v2821, 2
      %v2828 = vsel %vm1446, %v2826, %v2827
      %v2829 = vrot.slane %v2822, 2
      %v2830 = vsel %vm1446, %v2827, %v2829
      %v2833 = vadd.f32 %v2811, %v2828
      %v2834 = vadd.f32 %v2812, %v2830
      %s2835 = scalar_lea.vmem [#allocation2], 108
      %v2836 = vld [vmem:[%s2835] sm:$0xf]
      %v2837 = vld [vmem:[%s2835 + $0x4] sm:$0xf]
      %v2838 = vld [vmem:[%s3 + $0x6] sm:$0x1]
      %v2839 = vunpack.c.l.bf16 %v2836
      %v2840 = vunpack.c.l.bf16 %v2837
      %v2841 = vlaneseq
      %v2842 = vshrl.u32 %v2841, 7
      %v2843 = vsub.s32 0, %v2842
      %v2844 = vrot.slane %v2838, %v2843
      %v2845 = vmul.f32 %v2839, %v2844
      %v2846 = vmul.f32 %v2840, %v2844
      %v2847 = vadd.f32 %v2833, %v2845
      %v2848 = vadd.f32 %v2834, %v2846
      %v2849 = vld [vmem:[%s2835 + $0x8] sm:$0x1]
      %v2850 = vld [vmem:[%s3 + $0x7] sm:$0x1]
      %v2851 = vunpack.c.l.bf16 %v2849
      %v2852 = vlaneseq
      %v2853 = vshrl.u32 %v2852, 7
      %v2854 = vsub.s32 0, %v2853
      %v2855 = vrot.slane %v2850, %v2854
      %v2856 = vmul.f32 %v2839, %v2855
      %v2857 = vmul.f32 %v2840, %v2855
      %v2858 = vmul.f32 %v2851, %v2855
      %v2862 = vrot.slane %v2856, 1
      %v2863 = vrot.slane %v2857, 1
      %v2864 = vsel %vm1423, %v2862, %v2863
      %v2865 = vrot.slane %v2858, 1
      %v2866 = vsel %vm1423, %v2863, %v2865
      %v2869 = vadd.f32 %v2847, %v2864
      %v2870 = vadd.f32 %v2848, %v2866
      %v2871 = vld [vmem:[%s2835] sm:$0xe]
      %v2872 = vld [vmem:[%s3 + $0x8] sm:$0x1]
      %v2873 = vunpack.c.l.bf16 %v2871
      %v2874 = vlaneseq
      %v2875 = vshrl.u32 %v2874, 7
      %v2876 = vsub.s32 0, %v2875
      %v2877 = vrot.slane %v2872, %v2876
      %v2878 = vmul.f32 %v2873, %v2877
      %v2879 = vmul.f32 %v2840, %v2877
      %v2880 = vmul.f32 %v2851, %v2877
      %v2884 = vrot.slane %v2878, 2
      %v2885 = vrot.slane %v2879, 2
      %v2886 = vsel %vm1446, %v2884, %v2885
      %v2887 = vrot.slane %v2880, 2
      %v2888 = vsel %vm1446, %v2885, %v2887
      %v2891 = vadd.f32 %v2869, %v2886
      %v2892 = vadd.f32 %v2870, %v2888
      %v2893 = vadd.f32 %v2891, %v1575
      %v2894 = vadd.f32 %v2892, %v1575
      %v2895 = vmax.f32 %v2893, 0.0
      %v2896 = vmax.f32 %v2894, 0.0
      %v2897 = vmin.f32 %v2895, 6.0
      %v2898 = vmin.f32 %v2896, 6.0
      %v2899 = vpack.c.bf16 %v2898, %v2897
      %v2901 = vunpack.c.l.b16 %v2899
      %v2902 = vunpack.c.h.b16 %v2899
      %v2903 = vpack.c.b16 %v2901, %v2901
      %v2904 = vpack.c.b16 %v2902, %v2902
      %2907 = vst [vmem:[#allocation3 + $0x38] sm:$0xf] %v2903
      %2908 = vst [vmem:[#allocation3 + $0x3c] sm:$0xf] %v2904
      %v2909 = vld [vmem:[%s2647] sm:$0xf]
      %v2910 = vld [vmem:[%s2647 + $0x4] sm:$0xf]
      %v2911 = vld [vmem:[%s3] sm:$0x1]
      %v2912 = vunpack.c.l.bf16 %v2909
      %v2913 = vunpack.c.l.bf16 %v2910
      %v2914 = vlaneseq
      %v2915 = vshrl.u32 %v2914, 7
      %v2916 = vsub.s32 0, %v2915
      %v2917 = vrot.slane %v2911, %v2916
      %v2918 = vmul.f32 %v2912, %v2917
      %v2919 = vmul.f32 %v2913, %v2917
      %v2920 = vadd.f32 %v2918, 0.0
      %v2921 = vadd.f32 %v2919, 0.0
      %v2922 = vld [vmem:[%s2647 + $0x8] sm:$0x1]
      %v2923 = vld [vmem:[%s3 + $0x1] sm:$0x1]
      %v2924 = vunpack.c.l.bf16 %v2922
      %v2925 = vlaneseq
      %v2926 = vshrl.u32 %v2925, 7
      %v2927 = vsub.s32 0, %v2926
      %v2928 = vrot.slane %v2923, %v2927
      %v2929 = vmul.f32 %v2912, %v2928
      %v2930 = vmul.f32 %v2913, %v2928
      %v2931 = vmul.f32 %v2924, %v2928
      %v2935 = vrot.slane %v2929, 1
      %v2936 = vrot.slane %v2930, 1
      %v2937 = vsel %vm1423, %v2935, %v2936
      %v2938 = vrot.slane %v2931, 1
      %v2939 = vsel %vm1423, %v2936, %v2938
      %v2942 = vadd.f32 %v2920, %v2937
      %v2943 = vadd.f32 %v2921, %v2939
      %v2944 = vld [vmem:[%s2647] sm:$0xe]
      %v2945 = vld [vmem:[%s3 + $0x2] sm:$0x1]
      %v2946 = vunpack.c.l.bf16 %v2944
      %v2947 = vlaneseq
      %v2948 = vshrl.u32 %v2947, 7
      %v2949 = vsub.s32 0, %v2948
      %v2950 = vrot.slane %v2945, %v2949
      %v2951 = vmul.f32 %v2946, %v2950
      %v2952 = vmul.f32 %v2913, %v2950
      %v2953 = vmul.f32 %v2924, %v2950
      %v2957 = vrot.slane %v2951, 2
      %v2958 = vrot.slane %v2952, 2
      %v2959 = vsel %vm1446, %v2957, %v2958
      %v2960 = vrot.slane %v2953, 2
      %v2961 = vsel %vm1446, %v2958, %v2960
      %v2964 = vadd.f32 %v2942, %v2959
      %v2965 = vadd.f32 %v2943, %v2961
      %v2966 = vld [vmem:[%s2835] sm:$0xf]
      %v2967 = vld [vmem:[%s2835 + $0x4] sm:$0xf]
      %v2968 = vld [vmem:[%s3 + $0x3] sm:$0x1]
      %v2969 = vunpack.c.l.bf16 %v2966
      %v2970 = vunpack.c.l.bf16 %v2967
      %v2971 = vlaneseq
      %v2972 = vshrl.u32 %v2971, 7
      %v2973 = vsub.s32 0, %v2972
      %v2974 = vrot.slane %v2968, %v2973
      %v2975 = vmul.f32 %v2969, %v2974
      %v2976 = vmul.f32 %v2970, %v2974
      %v2977 = vadd.f32 %v2964, %v2975
      %v2978 = vadd.f32 %v2965, %v2976
      %v2979 = vld [vmem:[%s2835 + $0x8] sm:$0x1]
      %v2980 = vld [vmem:[%s3 + $0x4] sm:$0x1]
      %v2981 = vunpack.c.l.bf16 %v2979
      %v2982 = vlaneseq
      %v2983 = vshrl.u32 %v2982, 7
      %v2984 = vsub.s32 0, %v2983
      %v2985 = vrot.slane %v2980, %v2984
      %v2986 = vmul.f32 %v2969, %v2985
      %v2987 = vmul.f32 %v2970, %v2985
      %v2988 = vmul.f32 %v2981, %v2985
      %v2992 = vrot.slane %v2986, 1
      %v2993 = vrot.slane %v2987, 1
      %v2994 = vsel %vm1423, %v2992, %v2993
      %v2995 = vrot.slane %v2988, 1
      %v2996 = vsel %vm1423, %v2993, %v2995
      %v2999 = vadd.f32 %v2977, %v2994
      %v3000 = vadd.f32 %v2978, %v2996
      %v3001 = vld [vmem:[%s2835] sm:$0xe]
      %v3002 = vld [vmem:[%s3 + $0x5] sm:$0x1]
      %v3003 = vunpack.c.l.bf16 %v3001
      %v3004 = vlaneseq
      %v3005 = vshrl.u32 %v3004, 7
      %v3006 = vsub.s32 0, %v3005
      %v3007 = vrot.slane %v3002, %v3006
      %v3008 = vmul.f32 %v3003, %v3007
      %v3009 = vmul.f32 %v2970, %v3007
      %v3010 = vmul.f32 %v2981, %v3007
      %v3014 = vrot.slane %v3008, 2
      %v3015 = vrot.slane %v3009, 2
      %v3016 = vsel %vm1446, %v3014, %v3015
      %v3017 = vrot.slane %v3010, 2
      %v3018 = vsel %vm1446, %v3015, %v3017
      %v3021 = vadd.f32 %v2999, %v3016
      %v3022 = vadd.f32 %v3000, %v3018
      %s3023 = scalar_lea.vmem [#allocation2], 120
      %v3024 = vld [vmem:[%s3023] sm:$0xf]
      %v3025 = vld [vmem:[%s3023 + $0x4] sm:$0xf]
      %v3026 = vld [vmem:[%s3 + $0x6] sm:$0x1]
      %v3027 = vunpack.c.l.bf16 %v3024
      %v3028 = vunpack.c.l.bf16 %v3025
      %v3029 = vlaneseq
      %v3030 = vshrl.u32 %v3029, 7
      %v3031 = vsub.s32 0, %v3030
      %v3032 = vrot.slane %v3026, %v3031
      %v3033 = vmul.f32 %v3027, %v3032
      %v3034 = vmul.f32 %v3028, %v3032
      %v3035 = vadd.f32 %v3021, %v3033
      %v3036 = vadd.f32 %v3022, %v3034
      %v3037 = vld [vmem:[%s3023 + $0x8] sm:$0x1]
      %v3038 = vld [vmem:[%s3 + $0x7] sm:$0x1]
      %v3039 = vunpack.c.l.bf16 %v3037
      %v3040 = vlaneseq
      %v3041 = vshrl.u32 %v3040, 7
      %v3042 = vsub.s32 0, %v3041
      %v3043 = vrot.slane %v3038, %v3042
      %v3044 = vmul.f32 %v3027, %v3043
      %v3045 = vmul.f32 %v3028, %v3043
      %v3046 = vmul.f32 %v3039, %v3043
      %v3050 = vrot.slane %v3044, 1
      %v3051 = vrot.slane %v3045, 1
      %v3052 = vsel %vm1423, %v3050, %v3051
      %v3053 = vrot.slane %v3046, 1
      %v3054 = vsel %vm1423, %v3051, %v3053
      %v3057 = vadd.f32 %v3035, %v3052
      %v3058 = vadd.f32 %v3036, %v3054
      %v3059 = vld [vmem:[%s3023] sm:$0xe]
      %v3060 = vld [vmem:[%s3 + $0x8] sm:$0x1]
      %v3061 = vunpack.c.l.bf16 %v3059
      %v3062 = vlaneseq
      %v3063 = vshrl.u32 %v3062, 7
      %v3064 = vsub.s32 0, %v3063
      %v3065 = vrot.slane %v3060, %v3064
      %v3066 = vmul.f32 %v3061, %v3065
      %v3067 = vmul.f32 %v3028, %v3065
      %v3068 = vmul.f32 %v3039, %v3065
      %v3072 = vrot.slane %v3066, 2
      %v3073 = vrot.slane %v3067, 2
      %v3074 = vsel %vm1446, %v3072, %v3073
      %v3075 = vrot.slane %v3068, 2
      %v3076 = vsel %vm1446, %v3073, %v3075
      %v3079 = vadd.f32 %v3057, %v3074
      %v3080 = vadd.f32 %v3058, %v3076
      %v3081 = vadd.f32 %v3079, %v1575
      %v3082 = vadd.f32 %v3080, %v1575
      %v3083 = vmax.f32 %v3081, 0.0
      %v3084 = vmax.f32 %v3082, 0.0
      %v3085 = vmin.f32 %v3083, 6.0
      %v3086 = vmin.f32 %v3084, 6.0
      %v3087 = vpack.c.bf16 %v3086, %v3085
      %v3089 = vunpack.c.l.b16 %v3087
      %v3090 = vunpack.c.h.b16 %v3087
      %v3091 = vpack.c.b16 %v3089, %v3089
      %v3092 = vpack.c.b16 %v3090, %v3090
      %3095 = vst [vmem:[#allocation3 + $0x40] sm:$0xf] %v3091
      %3096 = vst [vmem:[#allocation3 + $0x44] sm:$0xf] %v3092
      %v3097 = vld [vmem:[%s2835] sm:$0xf]
      %v3098 = vld [vmem:[%s2835 + $0x4] sm:$0xf]
      %v3099 = vld [vmem:[%s3] sm:$0x1]
      %v3100 = vunpack.c.l.bf16 %v3097
      %v3101 = vunpack.c.l.bf16 %v3098
      %v3102 = vlaneseq
      %v3103 = vshrl.u32 %v3102, 7
      %v3104 = vsub.s32 0, %v3103
      %v3105 = vrot.slane %v3099, %v3104
      %v3106 = vmul.f32 %v3100, %v3105
      %v3107 = vmul.f32 %v3101, %v3105
      %v3108 = vadd.f32 %v3106, 0.0
      %v3109 = vadd.f32 %v3107, 0.0
      %v3110 = vld [vmem:[%s2835 + $0x8] sm:$0x1]
      %v3111 = vld [vmem:[%s3 + $0x1] sm:$0x1]
      %v3112 = vunpack.c.l.bf16 %v3110
      %v3113 = vlaneseq
      %v3114 = vshrl.u32 %v3113, 7
      %v3115 = vsub.s32 0, %v3114
      %v3116 = vrot.slane %v3111, %v3115
      %v3117 = vmul.f32 %v3100, %v3116
      %v3118 = vmul.f32 %v3101, %v3116
      %v3119 = vmul.f32 %v3112, %v3116
      %v3123 = vrot.slane %v3117, 1
      %v3124 = vrot.slane %v3118, 1
      %v3125 = vsel %vm1423, %v3123, %v3124
      %v3126 = vrot.slane %v3119, 1
      %v3127 = vsel %vm1423, %v3124, %v3126
      %v3130 = vadd.f32 %v3108, %v3125
      %v3131 = vadd.f32 %v3109, %v3127
      %v3132 = vld [vmem:[%s2835] sm:$0xe]
      %v3133 = vld [vmem:[%s3 + $0x2] sm:$0x1]
      %v3134 = vunpack.c.l.bf16 %v3132
      %v3135 = vlaneseq
      %v3136 = vshrl.u32 %v3135, 7
      %v3137 = vsub.s32 0, %v3136
      %v3138 = vrot.slane %v3133, %v3137
      %v3139 = vmul.f32 %v3134, %v3138
      %v3140 = vmul.f32 %v3101, %v3138
      %v3141 = vmul.f32 %v3112, %v3138
      %v3145 = vrot.slane %v3139, 2
      %v3146 = vrot.slane %v3140, 2
      %v3147 = vsel %vm1446, %v3145, %v3146
      %v3148 = vrot.slane %v3141, 2
      %v3149 = vsel %vm1446, %v3146, %v3148
      %v3152 = vadd.f32 %v3130, %v3147
      %v3153 = vadd.f32 %v3131, %v3149
      %v3154 = vld [vmem:[%s3023] sm:$0xf]
      %v3155 = vld [vmem:[%s3023 + $0x4] sm:$0xf]
      %v3156 = vld [vmem:[%s3 + $0x3] sm:$0x1]
      %v3157 = vunpack.c.l.bf16 %v3154
      %v3158 = vunpack.c.l.bf16 %v3155
      %v3159 = vlaneseq
      %v3160 = vshrl.u32 %v3159, 7
      %v3161 = vsub.s32 0, %v3160
      %v3162 = vrot.slane %v3156, %v3161
      %v3163 = vmul.f32 %v3157, %v3162
      %v3164 = vmul.f32 %v3158, %v3162
      %v3165 = vadd.f32 %v3152, %v3163
      %v3166 = vadd.f32 %v3153, %v3164
      %v3167 = vld [vmem:[%s3023 + $0x8] sm:$0x1]
      %v3168 = vld [vmem:[%s3 + $0x4] sm:$0x1]
      %v3169 = vunpack.c.l.bf16 %v3167
      %v3170 = vlaneseq
      %v3171 = vshrl.u32 %v3170, 7
      %v3172 = vsub.s32 0, %v3171
      %v3173 = vrot.slane %v3168, %v3172
      %v3174 = vmul.f32 %v3157, %v3173
      %v3175 = vmul.f32 %v3158, %v3173
      %v3176 = vmul.f32 %v3169, %v3173
      %v3180 = vrot.slane %v3174, 1
      %v3181 = vrot.slane %v3175, 1
      %v3182 = vsel %vm1423, %v3180, %v3181
      %v3183 = vrot.slane %v3176, 1
      %v3184 = vsel %vm1423, %v3181, %v3183
      %v3187 = vadd.f32 %v3165, %v3182
      %v3188 = vadd.f32 %v3166, %v3184
      %v3189 = vld [vmem:[%s3023] sm:$0xe]
      %v3190 = vld [vmem:[%s3 + $0x5] sm:$0x1]
      %v3191 = vunpack.c.l.bf16 %v3189
      %v3192 = vlaneseq
      %v3193 = vshrl.u32 %v3192, 7
      %v3194 = vsub.s32 0, %v3193
      %v3195 = vrot.slane %v3190, %v3194
      %v3196 = vmul.f32 %v3191, %v3195
      %v3197 = vmul.f32 %v3158, %v3195
      %v3198 = vmul.f32 %v3169, %v3195
      %v3202 = vrot.slane %v3196, 2
      %v3203 = vrot.slane %v3197, 2
      %v3204 = vsel %vm1446, %v3202, %v3203
      %v3205 = vrot.slane %v3198, 2
      %v3206 = vsel %vm1446, %v3203, %v3205
      %v3209 = vadd.f32 %v3187, %v3204
      %v3210 = vadd.f32 %v3188, %v3206
      %s3211 = scalar_lea.vmem [#allocation2], 132
      %v3212 = vld [vmem:[%s3211] sm:$0xf]
      %v3213 = vld [vmem:[%s3211 + $0x4] sm:$0xf]
      %v3214 = vld [vmem:[%s3 + $0x6] sm:$0x1]
      %v3215 = vunpack.c.l.bf16 %v3212
      %v3216 = vunpack.c.l.bf16 %v3213
      %v3217 = vlaneseq
      %v3218 = vshrl.u32 %v3217, 7
      %v3219 = vsub.s32 0, %v3218
      %v3220 = vrot.slane %v3214, %v3219
      %v3221 = vmul.f32 %v3215, %v3220
      %v3222 = vmul.f32 %v3216, %v3220
      %v3223 = vadd.f32 %v3209, %v3221
      %v3224 = vadd.f32 %v3210, %v3222
      %v3225 = vld [vmem:[%s3211 + $0x8] sm:$0x1]
      %v3226 = vld [vmem:[%s3 + $0x7] sm:$0x1]
      %v3227 = vunpack.c.l.bf16 %v3225
      %v3228 = vlaneseq
      %v3229 = vshrl.u32 %v3228, 7
      %v3230 = vsub.s32 0, %v3229
      %v3231 = vrot.slane %v3226, %v3230
      %v3232 = vmul.f32 %v3215, %v3231
      %v3233 = vmul.f32 %v3216, %v3231
      %v3234 = vmul.f32 %v3227, %v3231
      %v3238 = vrot.slane %v3232, 1
      %v3239 = vrot.slane %v3233, 1
      %v3240 = vsel %vm1423, %v3238, %v3239
      %v3241 = vrot.slane %v3234, 1
      %v3242 = vsel %vm1423, %v3239, %v3241
      %v3245 = vadd.f32 %v3223, %v3240
      %v3246 = vadd.f32 %v3224, %v3242
      %v3247 = vld [vmem:[%s3211] sm:$0xe]
      %v3248 = vld [vmem:[%s3 + $0x8] sm:$0x1]
      %v3249 = vunpack.c.l.bf16 %v3247
      %v3250 = vlaneseq
      %v3251 = vshrl.u32 %v3250, 7
      %v3252 = vsub.s32 0, %v3251
      %v3253 = vrot.slane %v3248, %v3252
      %v3254 = vmul.f32 %v3249, %v3253
      %v3255 = vmul.f32 %v3216, %v3253
      %v3256 = vmul.f32 %v3227, %v3253
      %v3260 = vrot.slane %v3254, 2
      %v3261 = vrot.slane %v3255, 2
      %v3262 = vsel %vm1446, %v3260, %v3261
      %v3263 = vrot.slane %v3256, 2
      %v3264 = vsel %vm1446, %v3261, %v3263
      %v3267 = vadd.f32 %v3245, %v3262
      %v3268 = vadd.f32 %v3246, %v3264
      %v3269 = vadd.f32 %v3267, %v1575
      %v3270 = vadd.f32 %v3268, %v1575
      %v3271 = vmax.f32 %v3269, 0.0
      %v3272 = vmax.f32 %v3270, 0.0
      %v3273 = vmin.f32 %v3271, 6.0
      %v3274 = vmin.f32 %v3272, 6.0
      %v3275 = vpack.c.bf16 %v3274, %v3273
      %v3277 = vunpack.c.l.b16 %v3275
      %v3278 = vunpack.c.h.b16 %v3275
      %v3279 = vpack.c.b16 %v3277, %v3277
      %v3280 = vpack.c.b16 %v3278, %v3278
      %3283 = vst [vmem:[#allocation3 + $0x48] sm:$0xf] %v3279
      %3284 = vst [vmem:[#allocation3 + $0x4c] sm:$0xf] %v3280
      %v3285 = vld [vmem:[%s3023] sm:$0xf]
      %v3286 = vld [vmem:[%s3023 + $0x4] sm:$0xf]
      %v3287 = vld [vmem:[%s3] sm:$0x1]
      %v3288 = vunpack.c.l.bf16 %v3285
      %v3289 = vunpack.c.l.bf16 %v3286
      %v3290 = vlaneseq
      %v3291 = vshrl.u32 %v3290, 7
      %v3292 = vsub.s32 0, %v3291
      %v3293 = vrot.slane %v3287, %v3292
      %v3294 = vmul.f32 %v3288, %v3293
      %v3295 = vmul.f32 %v3289, %v3293
      %v3296 = vadd.f32 %v3294, 0.0
      %v3297 = vadd.f32 %v3295, 0.0
      %v3298 = vld [vmem:[%s3023 + $0x8] sm:$0x1]
      %v3299 = vld [vmem:[%s3 + $0x1] sm:$0x1]
      %v3300 = vunpack.c.l.bf16 %v3298
      %v3301 = vlaneseq
      %v3302 = vshrl.u32 %v3301, 7
      %v3303 = vsub.s32 0, %v3302
      %v3304 = vrot.slane %v3299, %v3303
      %v3305 = vmul.f32 %v3288, %v3304
      %v3306 = vmul.f32 %v3289, %v3304
      %v3307 = vmul.f32 %v3300, %v3304
      %v3311 = vrot.slane %v3305, 1
      %v3312 = vrot.slane %v3306, 1
      %v3313 = vsel %vm1423, %v3311, %v3312
      %v3314 = vrot.slane %v3307, 1
      %v3315 = vsel %vm1423, %v3312, %v3314
      %v3318 = vadd.f32 %v3296, %v3313
      %v3319 = vadd.f32 %v3297, %v3315
      %v3320 = vld [vmem:[%s3023] sm:$0xe]
      %v3321 = vld [vmem:[%s3 + $0x2] sm:$0x1]
      %v3322 = vunpack.c.l.bf16 %v3320
      %v3323 = vlaneseq
      %v3324 = vshrl.u32 %v3323, 7
      %v3325 = vsub.s32 0, %v3324
      %v3326 = vrot.slane %v3321, %v3325
      %v3327 = vmul.f32 %v3322, %v3326
      %v3328 = vmul.f32 %v3289, %v3326
      %v3329 = vmul.f32 %v3300, %v3326
      %v3333 = vrot.slane %v3327, 2
      %v3334 = vrot.slane %v3328, 2
      %v3335 = vsel %vm1446, %v3333, %v3334
      %v3336 = vrot.slane %v3329, 2
      %v3337 = vsel %vm1446, %v3334, %v3336
      %v3340 = vadd.f32 %v3318, %v3335
      %v3341 = vadd.f32 %v3319, %v3337
      %v3342 = vld [vmem:[%s3211] sm:$0xf]
      %v3343 = vld [vmem:[%s3211 + $0x4] sm:$0xf]
      %v3344 = vld [vmem:[%s3 + $0x3] sm:$0x1]
      %v3345 = vunpack.c.l.bf16 %v3342
      %v3346 = vunpack.c.l.bf16 %v3343
      %v3347 = vlaneseq
      %v3348 = vshrl.u32 %v3347, 7
      %v3349 = vsub.s32 0, %v3348
      %v3350 = vrot.slane %v3344, %v3349
      %v3351 = vmul.f32 %v3345, %v3350
      %v3352 = vmul.f32 %v3346, %v3350
      %v3353 = vadd.f32 %v3340, %v3351
      %v3354 = vadd.f32 %v3341, %v3352
      %v3355 = vld [vmem:[%s3211 + $0x8] sm:$0x1]
      %v3356 = vld [vmem:[%s3 + $0x4] sm:$0x1]
      %v3357 = vunpack.c.l.bf16 %v3355
      %v3358 = vlaneseq
      %v3359 = vshrl.u32 %v3358, 7
      %v3360 = vsub.s32 0, %v3359
      %v3361 = vrot.slane %v3356, %v3360
      %v3362 = vmul.f32 %v3345, %v3361
      %v3363 = vmul.f32 %v3346, %v3361
      %v3364 = vmul.f32 %v3357, %v3361
      %v3368 = vrot.slane %v3362, 1
      %v3369 = vrot.slane %v3363, 1
      %v3370 = vsel %vm1423, %v3368, %v3369
      %v3371 = vrot.slane %v3364, 1
      %v3372 = vsel %vm1423, %v3369, %v3371
      %v3375 = vadd.f32 %v3353, %v3370
      %v3376 = vadd.f32 %v3354, %v3372
      %v3377 = vld [vmem:[%s3211] sm:$0xe]
      %v3378 = vld [vmem:[%s3 + $0x5] sm:$0x1]
      %v3379 = vunpack.c.l.bf16 %v3377
      %v3380 = vlaneseq
      %v3381 = vshrl.u32 %v3380, 7
      %v3382 = vsub.s32 0, %v3381
      %v3383 = vrot.slane %v3378, %v3382
      %v3384 = vmul.f32 %v3379, %v3383
      %v3385 = vmul.f32 %v3346, %v3383
      %v3386 = vmul.f32 %v3357, %v3383
      %v3390 = vrot.slane %v3384, 2
      %v3391 = vrot.slane %v3385, 2
      %v3392 = vsel %vm1446, %v3390, %v3391
      %v3393 = vrot.slane %v3386, 2
      %v3394 = vsel %vm1446, %v3391, %v3393
      %v3397 = vadd.f32 %v3375, %v3392
      %v3398 = vadd.f32 %v3376, %v3394
      %s3399 = scalar_lea.vmem [#allocation2], 144
      %v3400 = vld [vmem:[%s3399] sm:$0xf]
      %v3401 = vld [vmem:[%s3399 + $0x4] sm:$0xf]
      %v3402 = vld [vmem:[%s3 + $0x6] sm:$0x1]
      %v3403 = vunpack.c.l.bf16 %v3400
      %v3404 = vunpack.c.l.bf16 %v3401
      %v3405 = vlaneseq
      %v3406 = vshrl.u32 %v3405, 7
      %v3407 = vsub.s32 0, %v3406
      %v3408 = vrot.slane %v3402, %v3407
      %v3409 = vmul.f32 %v3403, %v3408
      %v3410 = vmul.f32 %v3404, %v3408
      %v3411 = vadd.f32 %v3397, %v3409
      %v3412 = vadd.f32 %v3398, %v3410
      %v3413 = vld [vmem:[%s3399 + $0x8] sm:$0x1]
      %v3414 = vld [vmem:[%s3 + $0x7] sm:$0x1]
      %v3415 = vunpack.c.l.bf16 %v3413
      %v3416 = vlaneseq
      %v3417 = vshrl.u32 %v3416, 7
      %v3418 = vsub.s32 0, %v3417
      %v3419 = vrot.slane %v3414, %v3418
      %v3420 = vmul.f32 %v3403, %v3419
      %v3421 = vmul.f32 %v3404, %v3419
      %v3422 = vmul.f32 %v3415, %v3419
      %v3426 = vrot.slane %v3420, 1
      %v3427 = vrot.slane %v3421, 1
      %v3428 = vsel %vm1423, %v3426, %v3427
      %v3429 = vrot.slane %v3422, 1
      %v3430 = vsel %vm1423, %v3427, %v3429
      %v3433 = vadd.f32 %v3411, %v3428
      %v3434 = vadd.f32 %v3412, %v3430
      %v3435 = vld [vmem:[%s3399] sm:$0xe]
      %v3436 = vld [vmem:[%s3 + $0x8] sm:$0x1]
      %v3437 = vunpack.c.l.bf16 %v3435
      %v3438 = vlaneseq
      %v3439 = vshrl.u32 %v3438, 7
      %v3440 = vsub.s32 0, %v3439
      %v3441 = vrot.slane %v3436, %v3440
      %v3442 = vmul.f32 %v3437, %v3441
      %v3443 = vmul.f32 %v3404, %v3441
      %v3444 = vmul.f32 %v3415, %v3441
      %v3448 = vrot.slane %v3442, 2
      %v3449 = vrot.slane %v3443, 2
      %v3450 = vsel %vm1446, %v3448, %v3449
      %v3451 = vrot.slane %v3444, 2
      %v3452 = vsel %vm1446, %v3449, %v3451
      %v3455 = vadd.f32 %v3433, %v3450
      %v3456 = vadd.f32 %v3434, %v3452
      %v3457 = vadd.f32 %v3455, %v1575
      %v3458 = vadd.f32 %v3456, %v1575
      %v3459 = vmax.f32 %v3457, 0.0
      %v3460 = vmax.f32 %v3458, 0.0
      %v3461 = vmin.f32 %v3459, 6.0
      %v3462 = vmin.f32 %v3460, 6.0
      %v3463 = vpack.c.bf16 %v3462, %v3461
      %v3465 = vunpack.c.l.b16 %v3463
      %v3466 = vunpack.c.h.b16 %v3463
      %v3467 = vpack.c.b16 %v3465, %v3465
      %v3468 = vpack.c.b16 %v3466, %v3466
      %3471 = vst [vmem:[#allocation3 + $0x50] sm:$0xf] %v3467
      %3472 = vst [vmem:[#allocation3 + $0x54] sm:$0xf] %v3468
      %v3473 = vld [vmem:[%s3211] sm:$0xf]
      %v3474 = vld [vmem:[%s3211 + $0x4] sm:$0xf]
      %v3475 = vld [vmem:[%s3] sm:$0x1]
      %v3476 = vunpack.c.l.bf16 %v3473
      %v3477 = vunpack.c.l.bf16 %v3474
      %v3478 = vlaneseq
      %v3479 = vshrl.u32 %v3478, 7
      %v3480 = vsub.s32 0, %v3479
      %v3481 = vrot.slane %v3475, %v3480
      %v3482 = vmul.f32 %v3476, %v3481
      %v3483 = vmul.f32 %v3477, %v3481
      %v3484 = vadd.f32 %v3482, 0.0
      %v3485 = vadd.f32 %v3483, 0.0
      %v3486 = vld [vmem:[%s3211 + $0x8] sm:$0x1]
      %v3487 = vld [vmem:[%s3 + $0x1] sm:$0x1]
      %v3488 = vunpack.c.l.bf16 %v3486
      %v3489 = vlaneseq
      %v3490 = vshrl.u32 %v3489, 7
      %v3491 = vsub.s32 0, %v3490
      %v3492 = vrot.slane %v3487, %v3491
      %v3493 = vmul.f32 %v3476, %v3492
      %v3494 = vmul.f32 %v3477, %v3492
      %v3495 = vmul.f32 %v3488, %v3492
      %v3499 = vrot.slane %v3493, 1
      %v3500 = vrot.slane %v3494, 1
      %v3501 = vsel %vm1423, %v3499, %v3500
      %v3502 = vrot.slane %v3495, 1
      %v3503 = vsel %vm1423, %v3500, %v3502
      %v3506 = vadd.f32 %v3484, %v3501
      %v3507 = vadd.f32 %v3485, %v3503
      %v3508 = vld [vmem:[%s3211] sm:$0xe]
      %v3509 = vld [vmem:[%s3 + $0x2] sm:$0x1]
      %v3510 = vunpack.c.l.bf16 %v3508
      %v3511 = vlaneseq
      %v3512 = vshrl.u32 %v3511, 7
      %v3513 = vsub.s32 0, %v3512
      %v3514 = vrot.slane %v3509, %v3513
      %v3515 = vmul.f32 %v3510, %v3514
      %v3516 = vmul.f32 %v3477, %v3514
      %v3517 = vmul.f32 %v3488, %v3514
      %v3521 = vrot.slane %v3515, 2
      %v3522 = vrot.slane %v3516, 2
      %v3523 = vsel %vm1446, %v3521, %v3522
      %v3524 = vrot.slane %v3517, 2
      %v3525 = vsel %vm1446, %v3522, %v3524
      %v3528 = vadd.f32 %v3506, %v3523
      %v3529 = vadd.f32 %v3507, %v3525
      %v3530 = vld [vmem:[%s3399] sm:$0xf]
      %v3531 = vld [vmem:[%s3399 + $0x4] sm:$0xf]
      %v3532 = vld [vmem:[%s3 + $0x3] sm:$0x1]
      %v3533 = vunpack.c.l.bf16 %v3530
      %v3534 = vunpack.c.l.bf16 %v3531
      %v3535 = vlaneseq
      %v3536 = vshrl.u32 %v3535, 7
      %v3537 = vsub.s32 0, %v3536
      %v3538 = vrot.slane %v3532, %v3537
      %v3539 = vmul.f32 %v3533, %v3538
      %v3540 = vmul.f32 %v3534, %v3538
      %v3541 = vadd.f32 %v3528, %v3539
      %v3542 = vadd.f32 %v3529, %v3540
      %v3543 = vld [vmem:[%s3399 + $0x8] sm:$0x1]
      %v3544 = vld [vmem:[%s3 + $0x4] sm:$0x1]
      %v3545 = vunpack.c.l.bf16 %v3543
      %v3546 = vlaneseq
      %v3547 = vshrl.u32 %v3546, 7
      %v3548 = vsub.s32 0, %v3547
      %v3549 = vrot.slane %v3544, %v3548
      %v3550 = vmul.f32 %v3533, %v3549
      %v3551 = vmul.f32 %v3534, %v3549
      %v3552 = vmul.f32 %v3545, %v3549
      %v3556 = vrot.slane %v3550, 1
      %v3557 = vrot.slane %v3551, 1
      %v3558 = vsel %vm1423, %v3556, %v3557
      %v3559 = vrot.slane %v3552, 1
      %v3560 = vsel %vm1423, %v3557, %v3559
      %v3563 = vadd.f32 %v3541, %v3558
      %v3564 = vadd.f32 %v3542, %v3560
      %v3565 = vld [vmem:[%s3399] sm:$0xe]
      %v3566 = vld [vmem:[%s3 + $0x5] sm:$0x1]
      %v3567 = vunpack.c.l.bf16 %v3565
      %v3568 = vlaneseq
      %v3569 = vshrl.u32 %v3568, 7
      %v3570 = vsub.s32 0, %v3569
      %v3571 = vrot.slane %v3566, %v3570
      %v3572 = vmul.f32 %v3567, %v3571
      %v3573 = vmul.f32 %v3534, %v3571
      %v3574 = vmul.f32 %v3545, %v3571
      %v3578 = vrot.slane %v3572, 2
      %v3579 = vrot.slane %v3573, 2
      %v3580 = vsel %vm1446, %v3578, %v3579
      %v3581 = vrot.slane %v3574, 2
      %v3582 = vsel %vm1446, %v3579, %v3581
      %v3585 = vadd.f32 %v3563, %v3580
      %v3586 = vadd.f32 %v3564, %v3582
      %s3587 = scalar_lea.vmem [#allocation2], 156
      %v3588 = vld [vmem:[%s3587] sm:$0xf]
      %v3589 = vld [vmem:[%s3587 + $0x4] sm:$0xf]
      %v3590 = vld [vmem:[%s3 + $0x6] sm:$0x1]
      %v3591 = vunpack.c.l.bf16 %v3588
      %v3592 = vunpack.c.l.bf16 %v3589
      %v3593 = vlaneseq
      %v3594 = vshrl.u32 %v3593, 7
      %v3595 = vsub.s32 0, %v3594
      %v3596 = vrot.slane %v3590, %v3595
      %v3597 = vmul.f32 %v3591, %v3596
      %v3598 = vmul.f32 %v3592, %v3596
      %v3599 = vadd.f32 %v3585, %v3597
      %v3600 = vadd.f32 %v3586, %v3598
      %v3601 = vld [vmem:[%s3587 + $0x8] sm:$0x1]
      %v3602 = vld [vmem:[%s3 + $0x7] sm:$0x1]
      %v3603 = vunpack.c.l.bf16 %v3601
      %v3604 = vlaneseq
      %v3605 = vshrl.u32 %v3604, 7
      %v3606 = vsub.s32 0, %v3605
      %v3607 = vrot.slane %v3602, %v3606
      %v3608 = vmul.f32 %v3591, %v3607
      %v3609 = vmul.f32 %v3592, %v3607
      %v3610 = vmul.f32 %v3603, %v3607
      %v3614 = vrot.slane %v3608, 1
      %v3615 = vrot.slane %v3609, 1
      %v3616 = vsel %vm1423, %v3614, %v3615
      %v3617 = vrot.slane %v3610, 1
      %v3618 = vsel %vm1423, %v3615, %v3617
      %v3621 = vadd.f32 %v3599, %v3616
      %v3622 = vadd.f32 %v3600, %v3618
      %v3623 = vld [vmem:[%s3587] sm:$0xe]
      %v3624 = vld [vmem:[%s3 + $0x8] sm:$0x1]
      %v3625 = vunpack.c.l.bf16 %v3623
      %v3626 = vlaneseq
      %v3627 = vshrl.u32 %v3626, 7
      %v3628 = vsub.s32 0, %v3627
      %v3629 = vrot.slane %v3624, %v3628
      %v3630 = vmul.f32 %v3625, %v3629
      %v3631 = vmul.f32 %v3592, %v3629
      %v3632 = vmul.f32 %v3603, %v3629
      %v3636 = vrot.slane %v3630, 2
      %v3637 = vrot.slane %v3631, 2
      %v3638 = vsel %vm1446, %v3636, %v3637
      %v3639 = vrot.slane %v3632, 2
      %v3640 = vsel %vm1446, %v3637, %v3639
      %v3643 = vadd.f32 %v3621, %v3638
      %v3644 = vadd.f32 %v3622, %v3640
      %v3645 = vadd.f32 %v3643, %v1575
      %v3646 = vadd.f32 %v3644, %v1575
      %v3647 = vmax.f32 %v3645, 0.0
      %v3648 = vmax.f32 %v3646, 0.0
      %v3649 = vmin.f32 %v3647, 6.0
      %v3650 = vmin.f32 %v3648, 6.0
      %v3651 = vpack.c.bf16 %v3650, %v3649
      %v3653 = vunpack.c.l.b16 %v3651
      %v3654 = vunpack.c.h.b16 %v3651
      %v3655 = vpack.c.b16 %v3653, %v3653
      %v3656 = vpack.c.b16 %v3654, %v3654
      %3659 = vst [vmem:[#allocation3 + $0x58] sm:$0xf] %v3655
      %3660 = vst [vmem:[#allocation3 + $0x5c] sm:$0xf] %v3656
      %v3661 = vld [vmem:[%s3399] sm:$0xf]
      %v3662 = vld [vmem:[%s3399 + $0x4] sm:$0xf]
      %v3663 = vld [vmem:[%s3] sm:$0x1]
      %v3664 = vunpack.c.l.bf16 %v3661
      %v3665 = vunpack.c.l.bf16 %v3662
      %v3666 = vlaneseq
      %v3667 = vshrl.u32 %v3666, 7
      %v3668 = vsub.s32 0, %v3667
      %v3669 = vrot.slane %v3663, %v3668
      %v3670 = vmul.f32 %v3664, %v3669
      %v3671 = vmul.f32 %v3665, %v3669
      %v3672 = vadd.f32 %v3670, 0.0
      %v3673 = vadd.f32 %v3671, 0.0
      %v3674 = vld [vmem:[%s3399 + $0x8] sm:$0x1]
      %v3675 = vld [vmem:[%s3 + $0x1] sm:$0x1]
      %v3676 = vunpack.c.l.bf16 %v3674
      %v3677 = vlaneseq
      %v3678 = vshrl.u32 %v3677, 7
      %v3679 = vsub.s32 0, %v3678
      %v3680 = vrot.slane %v3675, %v3679
      %v3681 = vmul.f32 %v3664, %v3680
      %v3682 = vmul.f32 %v3665, %v3680
      %v3683 = vmul.f32 %v3676, %v3680
      %v3687 = vrot.slane %v3681, 1
      %v3688 = vrot.slane %v3682, 1
      %v3689 = vsel %vm1423, %v3687, %v3688
      %v3690 = vrot.slane %v3683, 1
      %v3691 = vsel %vm1423, %v3688, %v3690
      %v3694 = vadd.f32 %v3672, %v3689
      %v3695 = vadd.f32 %v3673, %v3691
      %v3696 = vld [vmem:[%s3399] sm:$0xe]
      %v3697 = vld [vmem:[%s3 + $0x2] sm:$0x1]
      %v3698 = vunpack.c.l.bf16 %v3696
      %v3699 = vlaneseq
      %v3700 = vshrl.u32 %v3699, 7
      %v3701 = vsub.s32 0, %v3700
      %v3702 = vrot.slane %v3697, %v3701
      %v3703 = vmul.f32 %v3698, %v3702
      %v3704 = vmul.f32 %v3665, %v3702
      %v3705 = vmul.f32 %v3676, %v3702
      %v3709 = vrot.slane %v3703, 2
      %v3710 = vrot.slane %v3704, 2
      %v3711 = vsel %vm1446, %v3709, %v3710
      %v3712 = vrot.slane %v3705, 2
      %v3713 = vsel %vm1446, %v3710, %v3712
      %v3716 = vadd.f32 %v3694, %v3711
      %v3717 = vadd.f32 %v3695, %v3713
      %v3718 = vld [vmem:[%s3587] sm:$0xf]
      %v3719 = vld [vmem:[%s3587 + $0x4] sm:$0xf]
      %v3720 = vld [vmem:[%s3 + $0x3] sm:$0x1]
      %v3721 = vunpack.c.l.bf16 %v3718
      %v3722 = vunpack.c.l.bf16 %v3719
      %v3723 = vlaneseq
      %v3724 = vshrl.u32 %v3723, 7
      %v3725 = vsub.s32 0, %v3724
      %v3726 = vrot.slane %v3720, %v3725
      %v3727 = vmul.f32 %v3721, %v3726
      %v3728 = vmul.f32 %v3722, %v3726
      %v3729 = vadd.f32 %v3716, %v3727
      %v3730 = vadd.f32 %v3717, %v3728
      %v3731 = vld [vmem:[%s3587 + $0x8] sm:$0x1]
      %v3732 = vld [vmem:[%s3 + $0x4] sm:$0x1]
      %v3733 = vunpack.c.l.bf16 %v3731
      %v3734 = vlaneseq
      %v3735 = vshrl.u32 %v3734, 7
      %v3736 = vsub.s32 0, %v3735
      %v3737 = vrot.slane %v3732, %v3736
      %v3738 = vmul.f32 %v3721, %v3737
      %v3739 = vmul.f32 %v3722, %v3737
      %v3740 = vmul.f32 %v3733, %v3737
      %v3744 = vrot.slane %v3738, 1
      %v3745 = vrot.slane %v3739, 1
      %v3746 = vsel %vm1423, %v3744, %v3745
      %v3747 = vrot.slane %v3740, 1
      %v3748 = vsel %vm1423, %v3745, %v3747
      %v3751 = vadd.f32 %v3729, %v3746
      %v3752 = vadd.f32 %v3730, %v3748
      %v3753 = vld [vmem:[%s3587] sm:$0xe]
      %v3754 = vld [vmem:[%s3 + $0x5] sm:$0x1]
      %v3755 = vunpack.c.l.bf16 %v3753
      %v3756 = vlaneseq
      %v3757 = vshrl.u32 %v3756, 7
      %v3758 = vsub.s32 0, %v3757
      %v3759 = vrot.slane %v3754, %v3758
      %v3760 = vmul.f32 %v3755, %v3759
      %v3761 = vmul.f32 %v3722, %v3759
      %v3762 = vmul.f32 %v3733, %v3759
      %v3766 = vrot.slane %v3760, 2
      %v3767 = vrot.slane %v3761, 2
      %v3768 = vsel %vm1446, %v3766, %v3767
      %v3769 = vrot.slane %v3762, 2
      %v3770 = vsel %vm1446, %v3767, %v3769
      %v3773 = vadd.f32 %v3751, %v3768
      %v3774 = vadd.f32 %v3752, %v3770
      %s3775 = scalar_lea.vmem [#allocation2], 168
      %v3776 = vld [vmem:[%s3775] sm:$0xf]
      %v3777 = vld [vmem:[%s3775 + $0x4] sm:$0xf]
      %v3778 = vld [vmem:[%s3 + $0x6] sm:$0x1]
      %v3779 = vunpack.c.l.bf16 %v3776
      %v3780 = vunpack.c.l.bf16 %v3777
      %v3781 = vlaneseq
      %v3782 = vshrl.u32 %v3781, 7
      %v3783 = vsub.s32 0, %v3782
      %v3784 = vrot.slane %v3778, %v3783
      %v3785 = vmul.f32 %v3779, %v3784
      %v3786 = vmul.f32 %v3780, %v3784
      %v3787 = vadd.f32 %v3773, %v3785
      %v3788 = vadd.f32 %v3774, %v3786
      %v3789 = vld [vmem:[%s3775 + $0x8] sm:$0x1]
      %v3790 = vld [vmem:[%s3 + $0x7] sm:$0x1]
      %v3791 = vunpack.c.l.bf16 %v3789
      %v3792 = vlaneseq
      %v3793 = vshrl.u32 %v3792, 7
      %v3794 = vsub.s32 0, %v3793
      %v3795 = vrot.slane %v3790, %v3794
      %v3796 = vmul.f32 %v3779, %v3795
      %v3797 = vmul.f32 %v3780, %v3795
      %v3798 = vmul.f32 %v3791, %v3795
      %v3802 = vrot.slane %v3796, 1
      %v3803 = vrot.slane %v3797, 1
      %v3804 = vsel %vm1423, %v3802, %v3803
      %v3805 = vrot.slane %v3798, 1
      %v3806 = vsel %vm1423, %v3803, %v3805
      %v3809 = vadd.f32 %v3787, %v3804
      %v3810 = vadd.f32 %v3788, %v3806
      %v3811 = vld [vmem:[%s3775] sm:$0xe]
      %v3812 = vld [vmem:[%s3 + $0x8] sm:$0x1]
      %v3813 = vunpack.c.l.bf16 %v3811
      %v3814 = vlaneseq
      %v3815 = vshrl.u32 %v3814, 7
      %v3816 = vsub.s32 0, %v3815
      %v3817 = vrot.slane %v3812, %v3816
      %v3818 = vmul.f32 %v3813, %v3817
      %v3819 = vmul.f32 %v3780, %v3817
      %v3820 = vmul.f32 %v3791, %v3817
      %v3824 = vrot.slane %v3818, 2
      %v3825 = vrot.slane %v3819, 2
      %v3826 = vsel %vm1446, %v3824, %v3825
      %v3827 = vrot.slane %v3820, 2
      %v3828 = vsel %vm1446, %v3825, %v3827
      %v3831 = vadd.f32 %v3809, %v3826
      %v3832 = vadd.f32 %v3810, %v3828
      %v3833 = vadd.f32 %v3831, %v1575
      %v3834 = vadd.f32 %v3832, %v1575
      %v3835 = vmax.f32 %v3833, 0.0
      %v3836 = vmax.f32 %v3834, 0.0
      %v3837 = vmin.f32 %v3835, 6.0
      %v3838 = vmin.f32 %v3836, 6.0
      %v3839 = vpack.c.bf16 %v3838, %v3837
      %v3841 = vunpack.c.l.b16 %v3839
      %v3842 = vunpack.c.h.b16 %v3839
      %v3843 = vpack.c.b16 %v3841, %v3841
      %v3844 = vpack.c.b16 %v3842, %v3842
      %3847 = vst [vmem:[#allocation3 + $0x60] sm:$0xf] %v3843
      %3848 = vst [vmem:[#allocation3 + $0x64] sm:$0xf] %v3844
      %v3849 = vld [vmem:[%s3587] sm:$0xf]
      %v3850 = vld [vmem:[%s3587 + $0x4] sm:$0xf]
      %v3851 = vld [vmem:[%s3] sm:$0x1]
      %v3852 = vunpack.c.l.bf16 %v3849
      %v3853 = vunpack.c.l.bf16 %v3850
      %v3854 = vlaneseq
      %v3855 = vshrl.u32 %v3854, 7
      %v3856 = vsub.s32 0, %v3855
      %v3857 = vrot.slane %v3851, %v3856
      %v3858 = vmul.f32 %v3852, %v3857
      %v3859 = vmul.f32 %v3853, %v3857
      %v3860 = vadd.f32 %v3858, 0.0
      %v3861 = vadd.f32 %v3859, 0.0
      %v3862 = vld [vmem:[%s3587 + $0x8] sm:$0x1]
      %v3863 = vld [vmem:[%s3 + $0x1] sm:$0x1]
      %v3864 = vunpack.c.l.bf16 %v3862
      %v3865 = vlaneseq
      %v3866 = vshrl.u32 %v3865, 7
      %v3867 = vsub.s32 0, %v3866
      %v3868 = vrot.slane %v3863, %v3867
      %v3869 = vmul.f32 %v3852, %v3868
      %v3870 = vmul.f32 %v3853, %v3868
      %v3871 = vmul.f32 %v3864, %v3868
      %v3875 = vrot.slane %v3869, 1
      %v3876 = vrot.slane %v3870, 1
      %v3877 = vsel %vm1423, %v3875, %v3876
      %v3878 = vrot.slane %v3871, 1
      %v3879 = vsel %vm1423, %v3876, %v3878
      %v3882 = vadd.f32 %v3860, %v3877
      %v3883 = vadd.f32 %v3861, %v3879
      %v3884 = vld [vmem:[%s3587] sm:$0xe]
      %v3885 = vld [vmem:[%s3 + $0x2] sm:$0x1]
      %v3886 = vunpack.c.l.bf16 %v3884
      %v3887 = vlaneseq
      %v3888 = vshrl.u32 %v3887, 7
      %v3889 = vsub.s32 0, %v3888
      %v3890 = vrot.slane %v3885, %v3889
      %v3891 = vmul.f32 %v3886, %v3890
      %v3892 = vmul.f32 %v3853, %v3890
      %v3893 = vmul.f32 %v3864, %v3890
      %v3897 = vrot.slane %v3891, 2
      %v3898 = vrot.slane %v3892, 2
      %v3899 = vsel %vm1446, %v3897, %v3898
      %v3900 = vrot.slane %v3893, 2
      %v3901 = vsel %vm1446, %v3898, %v3900
      %v3904 = vadd.f32 %v3882, %v3899
      %v3905 = vadd.f32 %v3883, %v3901
      %v3906 = vld [vmem:[%s3775] sm:$0xf]
      %v3907 = vld [vmem:[%s3775 + $0x4] sm:$0xf]
      %v3908 = vld [vmem:[%s3 + $0x3] sm:$0x1]
      %v3909 = vunpack.c.l.bf16 %v3906
      %v3910 = vunpack.c.l.bf16 %v3907
      %v3911 = vlaneseq
      %v3912 = vshrl.u32 %v3911, 7
      %v3913 = vsub.s32 0, %v3912
      %v3914 = vrot.slane %v3908, %v3913
      %v3915 = vmul.f32 %v3909, %v3914
      %v3916 = vmul.f32 %v3910, %v3914
      %v3917 = vadd.f32 %v3904, %v3915
      %v3918 = vadd.f32 %v3905, %v3916
      %v3919 = vld [vmem:[%s3775 + $0x8] sm:$0x1]
      %v3920 = vld [vmem:[%s3 + $0x4] sm:$0x1]
      %v3921 = vunpack.c.l.bf16 %v3919
      %v3922 = vlaneseq
      %v3923 = vshrl.u32 %v3922, 7
      %v3924 = vsub.s32 0, %v3923
      %v3925 = vrot.slane %v3920, %v3924
      %v3926 = vmul.f32 %v3909, %v3925
      %v3927 = vmul.f32 %v3910, %v3925
      %v3928 = vmul.f32 %v3921, %v3925
      %v3932 = vrot.slane %v3926, 1
      %v3933 = vrot.slane %v3927, 1
      %v3934 = vsel %vm1423, %v3932, %v3933
      %v3935 = vrot.slane %v3928, 1
      %v3936 = vsel %vm1423, %v3933, %v3935
      %v3939 = vadd.f32 %v3917, %v3934
      %v3940 = vadd.f32 %v3918, %v3936
      %v3941 = vld [vmem:[%s3775] sm:$0xe]
      %v3942 = vld [vmem:[%s3 + $0x5] sm:$0x1]
      %v3943 = vunpack.c.l.bf16 %v3941
      %v3944 = vlaneseq
      %v3945 = vshrl.u32 %v3944, 7
      %v3946 = vsub.s32 0, %v3945
      %v3947 = vrot.slane %v3942, %v3946
      %v3948 = vmul.f32 %v3943, %v3947
      %v3949 = vmul.f32 %v3910, %v3947
      %v3950 = vmul.f32 %v3921, %v3947
      %v3954 = vrot.slane %v3948, 2
      %v3955 = vrot.slane %v3949, 2
      %v3956 = vsel %vm1446, %v3954, %v3955
      %v3957 = vrot.slane %v3950, 2
      %v3958 = vsel %vm1446, %v3955, %v3957
      %v3961 = vadd.f32 %v3939, %v3956
      %v3962 = vadd.f32 %v3940, %v3958
      %s3963 = scalar_lea.vmem [#allocation2], 180
      %v3964 = vld [vmem:[%s3963] sm:$0xf]
      %v3965 = vld [vmem:[%s3963 + $0x4] sm:$0xf]
      %v3966 = vld [vmem:[%s3 + $0x6] sm:$0x1]
      %v3967 = vunpack.c.l.bf16 %v3964
      %v3968 = vunpack.c.l.bf16 %v3965
      %v3969 = vlaneseq
      %v3970 = vshrl.u32 %v3969, 7
      %v3971 = vsub.s32 0, %v3970
      %v3972 = vrot.slane %v3966, %v3971
      %v3973 = vmul.f32 %v3967, %v3972
      %v3974 = vmul.f32 %v3968, %v3972
      %v3975 = vadd.f32 %v3961, %v3973
      %v3976 = vadd.f32 %v3962, %v3974
      %v3977 = vld [vmem:[%s3963 + $0x8] sm:$0x1]
      %v3978 = vld [vmem:[%s3 + $0x7] sm:$0x1]
      %v3979 = vunpack.c.l.bf16 %v3977
      %v3980 = vlaneseq
      %v3981 = vshrl.u32 %v3980, 7
      %v3982 = vsub.s32 0, %v3981
      %v3983 = vrot.slane %v3978, %v3982
      %v3984 = vmul.f32 %v3967, %v3983
      %v3985 = vmul.f32 %v3968, %v3983
      %v3986 = vmul.f32 %v3979, %v3983
      %v3990 = vrot.slane %v3984, 1
      %v3991 = vrot.slane %v3985, 1
      %v3992 = vsel %vm1423, %v3990, %v3991
      %v3993 = vrot.slane %v3986, 1
      %v3994 = vsel %vm1423, %v3991, %v3993
      %v3997 = vadd.f32 %v3975, %v3992
      %v3998 = vadd.f32 %v3976, %v3994
      %v3999 = vld [vmem:[%s3963] sm:$0xe]
      %v4000 = vld [vmem:[%s3 + $0x8] sm:$0x1]
      %v4001 = vunpack.c.l.bf16 %v3999
      %v4002 = vlaneseq
      %v4003 = vshrl.u32 %v4002, 7
      %v4004 = vsub.s32 0, %v4003
      %v4005 = vrot.slane %v4000, %v4004
      %v4006 = vmul.f32 %v4001, %v4005
      %v4007 = vmul.f32 %v3968, %v4005
      %v4008 = vmul.f32 %v3979, %v4005
      %v4012 = vrot.slane %v4006, 2
      %v4013 = vrot.slane %v4007, 2
      %v4014 = vsel %vm1446, %v4012, %v4013
      %v4015 = vrot.slane %v4008, 2
      %v4016 = vsel %vm1446, %v4013, %v4015
      %v4019 = vadd.f32 %v3997, %v4014
      %v4020 = vadd.f32 %v3998, %v4016
      %v4021 = vadd.f32 %v4019, %v1575
      %v4022 = vadd.f32 %v4020, %v1575
      %v4023 = vmax.f32 %v4021, 0.0
      %v4024 = vmax.f32 %v4022, 0.0
      %v4025 = vmin.f32 %v4023, 6.0
      %v4026 = vmin.f32 %v4024, 6.0
      %v4027 = vpack.c.bf16 %v4026, %v4025
      %v4029 = vunpack.c.l.b16 %v4027
      %v4030 = vunpack.c.h.b16 %v4027
      %v4031 = vpack.c.b16 %v4029, %v4029
      %v4032 = vpack.c.b16 %v4030, %v4030
      %4035 = vst [vmem:[#allocation3 + $0x68] sm:$0xf] %v4031
      %4036 = vst [vmem:[#allocation3 + $0x6c] sm:$0xf] %v4032
      %v4037 = vld [vmem:[%s3775] sm:$0xf]
      %v4038 = vld [vmem:[%s3775 + $0x4] sm:$0xf]
      %v4039 = vld [vmem:[%s3] sm:$0x1]
      %v4040 = vunpack.c.l.bf16 %v4037
      %v4041 = vunpack.c.l.bf16 %v4038
      %v4042 = vlaneseq
      %v4043 = vshrl.u32 %v4042, 7
      %v4044 = vsub.s32 0, %v4043
      %v4045 = vrot.slane %v4039, %v4044
      %v4046 = vmul.f32 %v4040, %v4045
      %v4047 = vmul.f32 %v4041, %v4045
      %v4048 = vadd.f32 %v4046, 0.0
      %v4049 = vadd.f32 %v4047, 0.0
      %v4050 = vld [vmem:[%s3775 + $0x8] sm:$0x1]
      %v4051 = vld [vmem:[%s3 + $0x1] sm:$0x1]
      %v4052 = vunpack.c.l.bf16 %v4050
      %v4053 = vlaneseq
      %v4054 = vshrl.u32 %v4053, 7
      %v4055 = vsub.s32 0, %v4054
      %v4056 = vrot.slane %v4051, %v4055
      %v4057 = vmul.f32 %v4040, %v4056
      %v4058 = vmul.f32 %v4041, %v4056
      %v4059 = vmul.f32 %v4052, %v4056
      %v4063 = vrot.slane %v4057, 1
      %v4064 = vrot.slane %v4058, 1
      %v4065 = vsel %vm1423, %v4063, %v4064
      %v4066 = vrot.slane %v4059, 1
      %v4067 = vsel %vm1423, %v4064, %v4066
      %v4070 = vadd.f32 %v4048, %v4065
      %v4071 = vadd.f32 %v4049, %v4067
      %v4072 = vld [vmem:[%s3775] sm:$0xe]
      %v4073 = vld [vmem:[%s3 + $0x2] sm:$0x1]
      %v4074 = vunpack.c.l.bf16 %v4072
      %v4075 = vlaneseq
      %v4076 = vshrl.u32 %v4075, 7
      %v4077 = vsub.s32 0, %v4076
      %v4078 = vrot.slane %v4073, %v4077
      %v4079 = vmul.f32 %v4074, %v4078
      %v4080 = vmul.f32 %v4041, %v4078
      %v4081 = vmul.f32 %v4052, %v4078
      %v4085 = vrot.slane %v4079, 2
      %v4086 = vrot.slane %v4080, 2
      %v4087 = vsel %vm1446, %v4085, %v4086
      %v4088 = vrot.slane %v4081, 2
      %v4089 = vsel %vm1446, %v4086, %v4088
      %v4092 = vadd.f32 %v4070, %v4087
      %v4093 = vadd.f32 %v4071, %v4089
      %v4094 = vld [vmem:[%s3963] sm:$0xf]
      %v4095 = vld [vmem:[%s3963 + $0x4] sm:$0xf]
      %v4096 = vld [vmem:[%s3 + $0x3] sm:$0x1]
      %v4097 = vunpack.c.l.bf16 %v4094
      %v4098 = vunpack.c.l.bf16 %v4095
      %v4099 = vlaneseq
      %v4100 = vshrl.u32 %v4099, 7
      %v4101 = vsub.s32 0, %v4100
      %v4102 = vrot.slane %v4096, %v4101
      %v4103 = vmul.f32 %v4097, %v4102
      %v4104 = vmul.f32 %v4098, %v4102
      %v4105 = vadd.f32 %v4092, %v4103
      %v4106 = vadd.f32 %v4093, %v4104
      %v4107 = vld [vmem:[%s3963 + $0x8] sm:$0x1]
      %v4108 = vld [vmem:[%s3 + $0x4] sm:$0x1]
      %v4109 = vunpack.c.l.bf16 %v4107
      %v4110 = vlaneseq
      %v4111 = vshrl.u32 %v4110, 7
      %v4112 = vsub.s32 0, %v4111
      %v4113 = vrot.slane %v4108, %v4112
      %v4114 = vmul.f32 %v4097, %v4113
      %v4115 = vmul.f32 %v4098, %v4113
      %v4116 = vmul.f32 %v4109, %v4113
      %v4120 = vrot.slane %v4114, 1
      %v4121 = vrot.slane %v4115, 1
      %v4122 = vsel %vm1423, %v4120, %v4121
      %v4123 = vrot.slane %v4116, 1
      %v4124 = vsel %vm1423, %v4121, %v4123
      %v4127 = vadd.f32 %v4105, %v4122
      %v4128 = vadd.f32 %v4106, %v4124
      %v4129 = vld [vmem:[%s3963] sm:$0xe]
      %v4130 = vld [vmem:[%s3 + $0x5] sm:$0x1]
      %v4131 = vunpack.c.l.bf16 %v4129
      %v4132 = vlaneseq
      %v4133 = vshrl.u32 %v4132, 7
      %v4134 = vsub.s32 0, %v4133
      %v4135 = vrot.slane %v4130, %v4134
      %v4136 = vmul.f32 %v4131, %v4135
      %v4137 = vmul.f32 %v4098, %v4135
      %v4138 = vmul.f32 %v4109, %v4135
      %v4142 = vrot.slane %v4136, 2
      %v4143 = vrot.slane %v4137, 2
      %v4144 = vsel %vm1446, %v4142, %v4143
      %v4145 = vrot.slane %v4138, 2
      %v4146 = vsel %vm1446, %v4143, %v4145
      %v4149 = vadd.f32 %v4127, %v4144
      %v4150 = vadd.f32 %v4128, %v4146
      %s4151 = scalar_lea.vmem [#allocation2], 192
      %v4152 = vld [vmem:[%s4151] sm:$0xf]
      %v4153 = vld [vmem:[%s4151 + $0x4] sm:$0xf]
      %v4154 = vld [vmem:[%s3 + $0x6] sm:$0x1]
      %v4155 = vunpack.c.l.bf16 %v4152
      %v4156 = vunpack.c.l.bf16 %v4153
      %v4157 = vlaneseq
      %v4158 = vshrl.u32 %v4157, 7
      %v4159 = vsub.s32 0, %v4158
      %v4160 = vrot.slane %v4154, %v4159
      %v4161 = vmul.f32 %v4155, %v4160
      %v4162 = vmul.f32 %v4156, %v4160
      %v4163 = vadd.f32 %v4149, %v4161
      %v4164 = vadd.f32 %v4150, %v4162
      %v4165 = vld [vmem:[%s4151 + $0x8] sm:$0x1]
      %v4166 = vld [vmem:[%s3 + $0x7] sm:$0x1]
      %v4167 = vunpack.c.l.bf16 %v4165
      %v4168 = vlaneseq
      %v4169 = vshrl.u32 %v4168, 7
      %v4170 = vsub.s32 0, %v4169
      %v4171 = vrot.slane %v4166, %v4170
      %v4172 = vmul.f32 %v4155, %v4171
      %v4173 = vmul.f32 %v4156, %v4171
      %v4174 = vmul.f32 %v4167, %v4171
      %v4178 = vrot.slane %v4172, 1
      %v4179 = vrot.slane %v4173, 1
      %v4180 = vsel %vm1423, %v4178, %v4179
      %v4181 = vrot.slane %v4174, 1
      %v4182 = vsel %vm1423, %v4179, %v4181
      %v4185 = vadd.f32 %v4163, %v4180
      %v4186 = vadd.f32 %v4164, %v4182
      %v4187 = vld [vmem:[%s4151] sm:$0xe]
      %v4188 = vld [vmem:[%s3 + $0x8] sm:$0x1]
      %v4189 = vunpack.c.l.bf16 %v4187
      %v4190 = vlaneseq
      %v4191 = vshrl.u32 %v4190, 7
      %v4192 = vsub.s32 0, %v4191
      %v4193 = vrot.slane %v4188, %v4192
      %v4194 = vmul.f32 %v4189, %v4193
      %v4195 = vmul.f32 %v4156, %v4193
      %v4196 = vmul.f32 %v4167, %v4193
      %v4200 = vrot.slane %v4194, 2
      %v4201 = vrot.slane %v4195, 2
      %v4202 = vsel %vm1446, %v4200, %v4201
      %v4203 = vrot.slane %v4196, 2
      %v4204 = vsel %vm1446, %v4201, %v4203
      %v4207 = vadd.f32 %v4185, %v4202
      %v4208 = vadd.f32 %v4186, %v4204
      %v4209 = vadd.f32 %v4207, %v1575
      %v4210 = vadd.f32 %v4208, %v1575
      %v4211 = vmax.f32 %v4209, 0.0
      %v4212 = vmax.f32 %v4210, 0.0
      %v4213 = vmin.f32 %v4211, 6.0
      %v4214 = vmin.f32 %v4212, 6.0
      %v4215 = vpack.c.bf16 %v4214, %v4213
      %v4217 = vunpack.c.l.b16 %v4215
      %v4218 = vunpack.c.h.b16 %v4215
      %v4219 = vpack.c.b16 %v4217, %v4217
      %v4220 = vpack.c.b16 %v4218, %v4218
      %4223 = vst [vmem:[#allocation3 + $0x70] sm:$0xf] %v4219
      %4224 = vst [vmem:[#allocation3 + $0x74] sm:$0xf] %v4220
      %v4225 = vld [vmem:[%s3963] sm:$0xf]
      %v4226 = vld [vmem:[%s3963 + $0x4] sm:$0xf]
      %v4227 = vld [vmem:[%s3] sm:$0x1]
      %v4228 = vunpack.c.l.bf16 %v4225
      %v4229 = vunpack.c.l.bf16 %v4226
      %v4230 = vlaneseq
      %v4231 = vshrl.u32 %v4230, 7
      %v4232 = vsub.s32 0, %v4231
      %v4233 = vrot.slane %v4227, %v4232
      %v4234 = vmul.f32 %v4228, %v4233
      %v4235 = vmul.f32 %v4229, %v4233
      %v4236 = vadd.f32 %v4234, 0.0
      %v4237 = vadd.f32 %v4235, 0.0
      %v4238 = vld [vmem:[%s3963 + $0x8] sm:$0x1]
      %v4239 = vld [vmem:[%s3 + $0x1] sm:$0x1]
      %v4240 = vunpack.c.l.bf16 %v4238
      %v4241 = vlaneseq
      %v4242 = vshrl.u32 %v4241, 7
      %v4243 = vsub.s32 0, %v4242
      %v4244 = vrot.slane %v4239, %v4243
      %v4245 = vmul.f32 %v4228, %v4244
      %v4246 = vmul.f32 %v4229, %v4244
      %v4247 = vmul.f32 %v4240, %v4244
      %v4251 = vrot.slane %v4245, 1
      %v4252 = vrot.slane %v4246, 1
      %v4253 = vsel %vm1423, %v4251, %v4252
      %v4254 = vrot.slane %v4247, 1
      %v4255 = vsel %vm1423, %v4252, %v4254
      %v4258 = vadd.f32 %v4236, %v4253
      %v4259 = vadd.f32 %v4237, %v4255
      %v4260 = vld [vmem:[%s3963] sm:$0xe]
      %v4261 = vld [vmem:[%s3 + $0x2] sm:$0x1]
      %v4262 = vunpack.c.l.bf16 %v4260
      %v4263 = vlaneseq
      %v4264 = vshrl.u32 %v4263, 7
      %v4265 = vsub.s32 0, %v4264
      %v4266 = vrot.slane %v4261, %v4265
      %v4267 = vmul.f32 %v4262, %v4266
      %v4268 = vmul.f32 %v4229, %v4266
      %v4269 = vmul.f32 %v4240, %v4266
      %v4273 = vrot.slane %v4267, 2
      %v4274 = vrot.slane %v4268, 2
      %v4275 = vsel %vm1446, %v4273, %v4274
      %v4276 = vrot.slane %v4269, 2
      %v4277 = vsel %vm1446, %v4274, %v4276
      %v4280 = vadd.f32 %v4258, %v4275
      %v4281 = vadd.f32 %v4259, %v4277
      %v4282 = vld [vmem:[%s4151] sm:$0xf]
      %v4283 = vld [vmem:[%s4151 + $0x4] sm:$0xf]
      %v4284 = vld [vmem:[%s3 + $0x3] sm:$0x1]
      %v4285 = vunpack.c.l.bf16 %v4282
      %v4286 = vunpack.c.l.bf16 %v4283
      %v4287 = vlaneseq
      %v4288 = vshrl.u32 %v4287, 7
      %v4289 = vsub.s32 0, %v4288
      %v4290 = vrot.slane %v4284, %v4289
      %v4291 = vmul.f32 %v4285, %v4290
      %v4292 = vmul.f32 %v4286, %v4290
      %v4293 = vadd.f32 %v4280, %v4291
      %v4294 = vadd.f32 %v4281, %v4292
      %v4295 = vld [vmem:[%s4151 + $0x8] sm:$0x1]
      %v4296 = vld [vmem:[%s3 + $0x4] sm:$0x1]
      %v4297 = vunpack.c.l.bf16 %v4295
      %v4298 = vlaneseq
      %v4299 = vshrl.u32 %v4298, 7
      %v4300 = vsub.s32 0, %v4299
      %v4301 = vrot.slane %v4296, %v4300
      %v4302 = vmul.f32 %v4285, %v4301
      %v4303 = vmul.f32 %v4286, %v4301
      %v4304 = vmul.f32 %v4297, %v4301
      %v4308 = vrot.slane %v4302, 1
      %v4309 = vrot.slane %v4303, 1
      %v4310 = vsel %vm1423, %v4308, %v4309
      %v4311 = vrot.slane %v4304, 1
      %v4312 = vsel %vm1423, %v4309, %v4311
      %v4315 = vadd.f32 %v4293, %v4310
      %v4316 = vadd.f32 %v4294, %v4312
      %v4317 = vld [vmem:[%s4151] sm:$0xe]
      %v4318 = vld [vmem:[%s3 + $0x5] sm:$0x1]
      %v4319 = vunpack.c.l.bf16 %v4317
      %v4320 = vlaneseq
      %v4321 = vshrl.u32 %v4320, 7
      %v4322 = vsub.s32 0, %v4321
      %v4323 = vrot.slane %v4318, %v4322
      %v4324 = vmul.f32 %v4319, %v4323
      %v4325 = vmul.f32 %v4286, %v4323
      %v4326 = vmul.f32 %v4297, %v4323
      %v4330 = vrot.slane %v4324, 2
      %v4331 = vrot.slane %v4325, 2
      %v4332 = vsel %vm1446, %v4330, %v4331
      %v4333 = vrot.slane %v4326, 2
      %v4334 = vsel %vm1446, %v4331, %v4333
      %v4337 = vadd.f32 %v4315, %v4332
      %v4338 = vadd.f32 %v4316, %v4334
      %s4339 = scalar_lea.vmem [#allocation2], 204
      %v4340 = vld [vmem:[%s4339] sm:$0xf]
      %v4341 = vld [vmem:[%s4339 + $0x4] sm:$0xf]
      %v4342 = vld [vmem:[%s3 + $0x6] sm:$0x1]
      %v4343 = vunpack.c.l.bf16 %v4340
      %v4344 = vunpack.c.l.bf16 %v4341
      %v4345 = vlaneseq
      %v4346 = vshrl.u32 %v4345, 7
      %v4347 = vsub.s32 0, %v4346
      %v4348 = vrot.slane %v4342, %v4347
      %v4349 = vmul.f32 %v4343, %v4348
      %v4350 = vmul.f32 %v4344, %v4348
      %v4351 = vadd.f32 %v4337, %v4349
      %v4352 = vadd.f32 %v4338, %v4350
      %v4353 = vld [vmem:[%s4339 + $0x8] sm:$0x1]
      %v4354 = vld [vmem:[%s3 + $0x7] sm:$0x1]
      %v4355 = vunpack.c.l.bf16 %v4353
      %v4356 = vlaneseq
      %v4357 = vshrl.u32 %v4356, 7
      %v4358 = vsub.s32 0, %v4357
      %v4359 = vrot.slane %v4354, %v4358
      %v4360 = vmul.f32 %v4343, %v4359
      %v4361 = vmul.f32 %v4344, %v4359
      %v4362 = vmul.f32 %v4355, %v4359
      %v4366 = vrot.slane %v4360, 1
      %v4367 = vrot.slane %v4361, 1
      %v4368 = vsel %vm1423, %v4366, %v4367
      %v4369 = vrot.slane %v4362, 1
      %v4370 = vsel %vm1423, %v4367, %v4369
      %v4373 = vadd.f32 %v4351, %v4368
      %v4374 = vadd.f32 %v4352, %v4370
      %v4375 = vld [vmem:[%s4339] sm:$0xe]
      %v4376 = vld [vmem:[%s3 + $0x8] sm:$0x1]
      %v4377 = vunpack.c.l.bf16 %v4375
      %v4378 = vlaneseq
      %v4379 = vshrl.u32 %v4378, 7
      %v4380 = vsub.s32 0, %v4379
      %v4381 = vrot.slane %v4376, %v4380
      %v4382 = vmul.f32 %v4377, %v4381
      %v4383 = vmul.f32 %v4344, %v4381
      %v4384 = vmul.f32 %v4355, %v4381
      %v4388 = vrot.slane %v4382, 2
      %v4389 = vrot.slane %v4383, 2
      %v4390 = vsel %vm1446, %v4388, %v4389
      %v4391 = vrot.slane %v4384, 2
      %v4392 = vsel %vm1446, %v4389, %v4391
      %v4395 = vadd.f32 %v4373, %v4390
      %v4396 = vadd.f32 %v4374, %v4392
      %v4397 = vadd.f32 %v4395, %v1575
      %v4398 = vadd.f32 %v4396, %v1575
      %v4399 = vmax.f32 %v4397, 0.0
      %v4400 = vmax.f32 %v4398, 0.0
      %v4401 = vmin.f32 %v4399, 6.0
      %v4402 = vmin.f32 %v4400, 6.0
      %v4403 = vpack.c.bf16 %v4402, %v4401
      %v4405 = vunpack.c.l.b16 %v4403
      %v4406 = vunpack.c.h.b16 %v4403
      %v4407 = vpack.c.b16 %v4405, %v4405
      %v4408 = vpack.c.b16 %v4406, %v4406
      %4411 = vst [vmem:[#allocation3 + $0x78] sm:$0xf] %v4407
      %4412 = vst [vmem:[#allocation3 + $0x7c] sm:$0xf] %v4408
      %v4413 = vld [vmem:[#allocation3] sm:$0xf]
      %v4414 = vld [vmem:[#allocation3 + $0x4] sm:$0xf]
      %v4415 = vld [vmem:[#allocation3 + $0x8] sm:$0xf]
      %v4416 = vld [vmem:[#allocation3 + $0xc] sm:$0xf]
      %v4417 = vld [vmem:[#allocation3 + $0x10] sm:$0xf]
      %v4418 = vld [vmem:[#allocation3 + $0x14] sm:$0xf]
      %v4419 = vld [vmem:[#allocation3 + $0x18] sm:$0xf]
      %v4420 = vld [vmem:[#allocation3 + $0x1c] sm:$0xf]
      %v4421 = vld [vmem:[#allocation3 + $0x20] sm:$0xf]
      %v4422 = vld [vmem:[#allocation3 + $0x24] sm:$0xf]
      %v4423 = vld [vmem:[#allocation3 + $0x28] sm:$0xf]
      %v4424 = vld [vmem:[#allocation3 + $0x2c] sm:$0xf]
      %v4425 = vld [vmem:[#allocation3 + $0x30] sm:$0xf]
      %v4426 = vld [vmem:[#allocation3 + $0x34] sm:$0xf]
      %v4427 = vld [vmem:[#allocation3 + $0x38] sm:$0xf]
      %v4428 = vld [vmem:[#allocation3 + $0x3c] sm:$0xf]
      %v4429 = vld [vmem:[#allocation3 + $0x40] sm:$0xf]
      %v4430 = vld [vmem:[#allocation3 + $0x44] sm:$0xf]
      %v4431 = vld [vmem:[#allocation3 + $0x48] sm:$0xf]
      %v4432 = vld [vmem:[#allocation3 + $0x4c] sm:$0xf]
      %v4433 = vld [vmem:[#allocation3 + $0x50] sm:$0xf]
      %v4434 = vld [vmem:[#allocation3 + $0x54] sm:$0xf]
      %v4435 = vld [vmem:[#allocation3 + $0x58] sm:$0xf]
      %v4436 = vld [vmem:[#allocation3 + $0x5c] sm:$0xf]
      %v4437 = vld [vmem:[#allocation3 + $0x60] sm:$0xf]
      %v4438 = vld [vmem:[#allocation3 + $0x64] sm:$0xf]
      %v4439 = vld [vmem:[#allocation3 + $0x68] sm:$0xf]
      %v4440 = vld [vmem:[#allocation3 + $0x6c] sm:$0xf]
      %v4441 = vld [vmem:[#allocation3 + $0x70] sm:$0xf]
      %v4442 = vld [vmem:[#allocation3 + $0x74] sm:$0xf]
      %v4443 = vld [vmem:[#allocation3 + $0x78] sm:$0xf]
      %v4444 = vld [vmem:[#allocation3 + $0x7c] sm:$0xf]
      %v4445 = vld [vmem:[%s5] sm:$0xf]
      %v4446 = vld [vmem:[%s5 + $0x4] sm:$0xf]
      %v4447 = vld [vmem:[%s5 + $0x8] sm:$0xf]
      %v4448 = vld [vmem:[%s5 + $0xc] sm:$0xf]
      %v4449 = vld [vmem:[%s5 + $0x10] sm:$0xf]
      %v4450 = vld [vmem:[%s5 + $0x14] sm:$0xf]
      %v4451 = vld [vmem:[%s5 + $0x18] sm:$0xf]
      %v4452 = vld [vmem:[%s5 + $0x1c] sm:$0xf]
      %v4453 = vld [vmem:[%s5 + $0x20] sm:$0xf]
      %v4454 = vld [vmem:[%s5 + $0x24] sm:$0xf]
      %v4455 = vld [vmem:[%s5 + $0x28] sm:$0xf]
      %v4456 = vld [vmem:[%s5 + $0x2c] sm:$0xf]
      %v4457 = vld [vmem:[%s5 + $0x30] sm:$0xf]
      %v4458 = vld [vmem:[%s5 + $0x34] sm:$0xf]
      %v4459 = vld [vmem:[%s5 + $0x38] sm:$0xf]
      %v4460 = vld [vmem:[%s5 + $0x3c] sm:$0xf]
      %v4493 = vunpack.c.l.b16 %v4413
      %v4494 = vunpack.c.l.b16 %v4414
      %v4495 = vunpack.c.l.b16 %v4415
      %v4496 = vunpack.c.l.b16 %v4416
      %v4497 = vunpack.c.l.b16 %v4417
      %v4498 = vunpack.c.l.b16 %v4418
      %v4499 = vunpack.c.l.b16 %v4419
      %v4500 = vunpack.c.l.b16 %v4420
      %v4501 = vunpack.c.l.b16 %v4421
      %v4502 = vunpack.c.l.b16 %v4422
      %v4503 = vunpack.c.l.b16 %v4423
      %v4504 = vunpack.c.l.b16 %v4424
      %v4505 = vunpack.c.l.b16 %v4425
      %v4506 = vunpack.c.l.b16 %v4426
      %v4507 = vunpack.c.l.b16 %v4427
      %v4508 = vunpack.c.l.b16 %v4428
      %v4509 = vunpack.c.l.b16 %v4429
      %v4510 = vunpack.c.l.b16 %v4430
      %v4511 = vunpack.c.l.b16 %v4431
      %v4512 = vunpack.c.l.b16 %v4432
      %v4513 = vunpack.c.l.b16 %v4433
      %v4514 = vunpack.c.l.b16 %v4434
      %v4515 = vunpack.c.l.b16 %v4435
      %v4516 = vunpack.c.l.b16 %v4436
      %v4517 = vunpack.c.l.b16 %v4437
      %v4518 = vunpack.c.l.b16 %v4438
      %v4519 = vunpack.c.l.b16 %v4439
      %v4520 = vunpack.c.l.b16 %v4440
      %v4521 = vunpack.c.l.b16 %v4441
      %v4522 = vunpack.c.l.b16 %v4442
      %v4523 = vunpack.c.l.b16 %v4443
      %v4524 = vunpack.c.l.b16 %v4444
      %v4525 = vpack.c.b16 %v4494, %v4493
      %v4526 = vpack.c.b16 %v4496, %v4495
      %v4527 = vpack.c.b16 %v4498, %v4497
      %v4528 = vpack.c.b16 %v4500, %v4499
      %v4529 = vpack.c.b16 %v4502, %v4501
      %v4530 = vpack.c.b16 %v4504, %v4503
      %v4531 = vpack.c.b16 %v4506, %v4505
      %v4532 = vpack.c.b16 %v4508, %v4507
      %v4533 = vpack.c.b16 %v4510, %v4509
      %v4534 = vpack.c.b16 %v4512, %v4511
      %v4535 = vpack.c.b16 %v4514, %v4513
      %v4536 = vpack.c.b16 %v4516, %v4515
      %v4537 = vpack.c.b16 %v4518, %v4517
      %v4538 = vpack.c.b16 %v4520, %v4519
      %v4539 = vpack.c.b16 %v4522, %v4521
      %v4540 = vpack.c.b16 %v4524, %v4523
      %v4573 = vunpack.c.l.b16 %v4445
      %v4574 = vunpack.c.l.b16 %v4446
      %v4575 = vunpack.c.l.b16 %v4447
      %v4576 = vunpack.c.l.b16 %v4448
      %v4577 = vunpack.c.l.b16 %v4449
      %v4578 = vunpack.c.l.b16 %v4450
      %v4579 = vunpack.c.l.b16 %v4451
      %v4580 = vunpack.c.l.b16 %v4452
      %v4581 = vunpack.c.l.b16 %v4453
      %v4582 = vunpack.c.l.b16 %v4454
      %v4583 = vunpack.c.l.b16 %v4455
      %v4584 = vunpack.c.l.b16 %v4456
      %v4585 = vunpack.c.l.b16 %v4457
      %v4586 = vunpack.c.l.b16 %v4458
      %v4587 = vunpack.c.l.b16 %v4459
      %v4588 = vunpack.c.l.b16 %v4460
      %v4589 = vpack.c.b16 %v4574, %v4573
      %v4590 = vpack.c.b16 %v4576, %v4575
      %v4591 = vpack.c.b16 %v4578, %v4577
      %v4592 = vpack.c.b16 %v4580, %v4579
      %v4593 = vpack.c.b16 %v4582, %v4581
      %v4594 = vpack.c.b16 %v4584, %v4583
      %v4595 = vpack.c.b16 %v4586, %v4585
      %v4596 = vpack.c.b16 %v4588, %v4587
      %4605 = vmatprep.subr.bf16.mxu0 0
      %4606 = vmatpush1.bf16.msra.mxu0 %v4596
      %4607 = vmatprep.subr.bf16.mxu0 0
      %4608 = vmatpush1.bf16.msra.mxu0 %v4595
      %4609 = vmatprep.subr.bf16.mxu0 0
      %4610 = vmatpush1.bf16.msra.mxu0 %v4594
      %4611 = vmatprep.subr.bf16.mxu0 0
      %4612 = vmatpush1.bf16.msra.mxu0 %v4593
      %4613 = vmatprep.subr.bf16.mxu0 0
      %4614 = vmatpush1.bf16.msra.mxu0 %v4592
      %4615 = vmatprep.subr.bf16.mxu0 0
      %4616 = vmatpush1.bf16.msra.mxu0 %v4591
      %4617 = vmatprep.subr.bf16.mxu0 0
      %4618 = vmatpush1.bf16.msra.mxu0 %v4590
      %4619 = vmatprep.subr.bf16.mxu0 0
      %4620 = vmatpush1.bf16.msra.mxu0 %v4589
      %4621 = vmatprep.subr.bf16.mxu0 0
      %4622 = vmatpush2.bf16.msra.mxu0 0
      %4623 = vmatprep.subr.bf16.mxu0 0
      %4624 = vmatpush2.bf16.msra.mxu0 0
      %4625 = vmatprep.subr.bf16.mxu0 0
      %4626 = vmatpush2.bf16.msra.mxu0 0
      %4627 = vmatprep.subr.bf16.mxu0 0
      %4628 = vmatpush2.bf16.msra.mxu0 0
      %4629 = vmatprep.subr.bf16.mxu0 0
      %4630 = vmatpush2.bf16.msra.mxu0 0
      %4631 = vmatprep.subr.bf16.mxu0 0
      %4632 = vmatpush2.bf16.msra.mxu0 0
      %4633 = vmatprep.subr.bf16.mxu0 0
      %4634 = vmatpush2.bf16.msra.mxu0 0
      %4635 = vmatprep.subr.bf16.mxu0 0
      %4636 = vmatpush2.bf16.msra.mxu0 0
      %4637 = vmatprep.mubr.bf16.mxu0 0
      %4638 = vmatmul.mubr.bf16.gmra.mxu0 %v4525
      %v4639 = vpop.f32.mrf.mxu0
      %v4640 = vadd.f32 0.0, %v4639
      %v4641 = vpop.f32.mrf.mxu0
      %v4642 = vpop.f32.mrf.mxu0
      %v4643 = vadd.f32 0.0, %v4642
      %v4644 = vpop.f32.mrf.mxu0
      %4645 = vmatprep.mubr.bf16.mxu0 0
      %4646 = vmatmul.mubr.bf16.gmra.mxu0 %v4526
      %v4647 = vpop.f32.mrf.mxu0
      %v4648 = vadd.f32 0.0, %v4647
      %v4649 = vpop.f32.mrf.mxu0
      %v4650 = vpop.f32.mrf.mxu0
      %v4651 = vadd.f32 0.0, %v4650
      %v4652 = vpop.f32.mrf.mxu0
      %4653 = vmatprep.mubr.bf16.mxu0 0
      %4654 = vmatmul.mubr.bf16.gmra.mxu0 %v4527
      %v4655 = vpop.f32.mrf.mxu0
      %v4656 = vadd.f32 0.0, %v4655
      %v4657 = vpop.f32.mrf.mxu0
      %v4658 = vpop.f32.mrf.mxu0
      %v4659 = vadd.f32 0.0, %v4658
      %v4660 = vpop.f32.mrf.mxu0
      %4661 = vmatprep.mubr.bf16.mxu0 0
      %4662 = vmatmul.mubr.bf16.gmra.mxu0 %v4528
      %v4663 = vpop.f32.mrf.mxu0
      %v4664 = vadd.f32 0.0, %v4663
      %v4665 = vpop.f32.mrf.mxu0
      %v4666 = vpop.f32.mrf.mxu0
      %v4667 = vadd.f32 0.0, %v4666
      %v4668 = vpop.f32.mrf.mxu0
      %4669 = vmatprep.mubr.bf16.mxu0 0
      %4670 = vmatmul.mubr.bf16.gmra.mxu0 %v4529
      %v4671 = vpop.f32.mrf.mxu0
      %v4672 = vadd.f32 0.0, %v4671
      %v4673 = vpop.f32.mrf.mxu0
      %v4674 = vpop.f32.mrf.mxu0
      %v4675 = vadd.f32 0.0, %v4674
      %v4676 = vpop.f32.mrf.mxu0
      %4677 = vmatprep.mubr.bf16.mxu0 0
      %4678 = vmatmul.mubr.bf16.gmra.mxu0 %v4530
      %v4679 = vpop.f32.mrf.mxu0
      %v4680 = vadd.f32 0.0, %v4679
      %v4681 = vpop.f32.mrf.mxu0
      %v4682 = vpop.f32.mrf.mxu0
      %v4683 = vadd.f32 0.0, %v4682
      %v4684 = vpop.f32.mrf.mxu0
      %4685 = vmatprep.mubr.bf16.mxu0 0
      %4686 = vmatmul.mubr.bf16.gmra.mxu0 %v4531
      %v4687 = vpop.f32.mrf.mxu0
      %v4688 = vadd.f32 0.0, %v4687
      %v4689 = vpop.f32.mrf.mxu0
      %v4690 = vpop.f32.mrf.mxu0
      %v4691 = vadd.f32 0.0, %v4690
      %v4692 = vpop.f32.mrf.mxu0
      %4693 = vmatprep.mubr.bf16.mxu0 0
      %4694 = vmatmul.mubr.bf16.gmra.mxu0 %v4532
      %v4695 = vpop.f32.mrf.mxu0
      %v4696 = vadd.f32 0.0, %v4695
      %v4697 = vpop.f32.mrf.mxu0
      %v4698 = vpop.f32.mrf.mxu0
      %v4699 = vadd.f32 0.0, %v4698
      %v4700 = vpop.f32.mrf.mxu0
      %4701 = vmatprep.mubr.bf16.mxu0 0
      %4702 = vmatmul.mubr.bf16.gmra.mxu0 %v4533
      %v4703 = vpop.f32.mrf.mxu0
      %v4704 = vadd.f32 0.0, %v4703
      %v4705 = vpop.f32.mrf.mxu0
      %v4706 = vpop.f32.mrf.mxu0
      %v4707 = vadd.f32 0.0, %v4706
      %v4708 = vpop.f32.mrf.mxu0
      %4709 = vmatprep.mubr.bf16.mxu0 0
      %4710 = vmatmul.mubr.bf16.gmra.mxu0 %v4534
      %v4711 = vpop.f32.mrf.mxu0
      %v4712 = vadd.f32 0.0, %v4711
      %v4713 = vpop.f32.mrf.mxu0
      %v4714 = vpop.f32.mrf.mxu0
      %v4715 = vadd.f32 0.0, %v4714
      %v4716 = vpop.f32.mrf.mxu0
      %4717 = vmatprep.mubr.bf16.mxu0 0
      %4718 = vmatmul.mubr.bf16.gmra.mxu0 %v4535
      %v4719 = vpop.f32.mrf.mxu0
      %v4720 = vadd.f32 0.0, %v4719
      %v4721 = vpop.f32.mrf.mxu0
      %v4722 = vpop.f32.mrf.mxu0
      %v4723 = vadd.f32 0.0, %v4722
      %v4724 = vpop.f32.mrf.mxu0
      %4725 = vmatprep.mubr.bf16.mxu0 0
      %4726 = vmatmul.mubr.bf16.gmra.mxu0 %v4536
      %v4727 = vpop.f32.mrf.mxu0
      %v4728 = vadd.f32 0.0, %v4727
      %v4729 = vpop.f32.mrf.mxu0
      %v4730 = vpop.f32.mrf.mxu0
      %v4731 = vadd.f32 0.0, %v4730
      %v4732 = vpop.f32.mrf.mxu0
      %4733 = vmatprep.mubr.bf16.mxu0 0
      %4734 = vmatmul.mubr.bf16.gmra.mxu0 %v4537
      %v4735 = vpop.f32.mrf.mxu0
      %v4736 = vadd.f32 0.0, %v4735
      %v4737 = vpop.f32.mrf.mxu0
      %v4738 = vpop.f32.mrf.mxu0
      %v4739 = vadd.f32 0.0, %v4738
      %v4740 = vpop.f32.mrf.mxu0
      %4741 = vmatprep.mubr.bf16.mxu0 0
      %4742 = vmatmul.mubr.bf16.gmra.mxu0 %v4538
      %v4743 = vpop.f32.mrf.mxu0
      %v4744 = vadd.f32 0.0, %v4743
      %v4745 = vpop.f32.mrf.mxu0
      %v4746 = vpop.f32.mrf.mxu0
      %v4747 = vadd.f32 0.0, %v4746
      %v4748 = vpop.f32.mrf.mxu0
      %4749 = vmatprep.mubr.bf16.mxu0 0
      %4750 = vmatmul.mubr.bf16.gmra.mxu0 %v4539
      %v4751 = vpop.f32.mrf.mxu0
      %v4752 = vadd.f32 0.0, %v4751
      %v4753 = vpop.f32.mrf.mxu0
      %v4754 = vpop.f32.mrf.mxu0
      %v4755 = vadd.f32 0.0, %v4754
      %v4756 = vpop.f32.mrf.mxu0
      %4757 = vmatprep.mubr.bf16.mxu0 0
      %4758 = vmatmul.mubr.bf16.gmra.mxu0 %v4540
      %v4759 = vpop.f32.mrf.mxu0
      %v4760 = vadd.f32 0.0, %v4759
      %v4761 = vpop.f32.mrf.mxu0
      %v4762 = vpop.f32.mrf.mxu0
      %v4763 = vadd.f32 0.0, %v4762
      %v4764 = vpop.f32.mrf.mxu0
      %4765 = vdwg.mxu0
      %v4766 = vld [vmem:[%s6] sm:$0x1]
      %v4768 = vlaneseq
      %v4769 = vshrl.u32 %v4768, 7
      %v4770 = vsub.s32 0, %v4769
      %v4771 = vrot.slane %v4766, %v4770
      %v4773 = vadd.f32 %v4640, %v4771
      %v4774 = vadd.f32 %v4643, %v4771
      %v4775 = vadd.f32 %v4648, %v4771
      %v4776 = vadd.f32 %v4651, %v4771
      %v4777 = vadd.f32 %v4656, %v4771
      %v4778 = vadd.f32 %v4659, %v4771
      %v4779 = vadd.f32 %v4664, %v4771
      %v4780 = vadd.f32 %v4667, %v4771
      %v4781 = vadd.f32 %v4672, %v4771
      %v4782 = vadd.f32 %v4675, %v4771
      %v4783 = vadd.f32 %v4680, %v4771
      %v4784 = vadd.f32 %v4683, %v4771
      %v4785 = vadd.f32 %v4688, %v4771
      %v4786 = vadd.f32 %v4691, %v4771
      %v4787 = vadd.f32 %v4696, %v4771
      %v4788 = vadd.f32 %v4699, %v4771
      %v4789 = vadd.f32 %v4704, %v4771
      %v4790 = vadd.f32 %v4707, %v4771
      %v4791 = vadd.f32 %v4712, %v4771
      %v4792 = vadd.f32 %v4715, %v4771
      %v4793 = vadd.f32 %v4720, %v4771
      %v4794 = vadd.f32 %v4723, %v4771
      %v4795 = vadd.f32 %v4728, %v4771
      %v4796 = vadd.f32 %v4731, %v4771
      %v4797 = vadd.f32 %v4736, %v4771
      %v4798 = vadd.f32 %v4739, %v4771
      %v4799 = vadd.f32 %v4744, %v4771
      %v4800 = vadd.f32 %v4747, %v4771
      %v4801 = vadd.f32 %v4752, %v4771
      %v4802 = vadd.f32 %v4755, %v4771
      %v4803 = vadd.f32 %v4760, %v4771
      %v4804 = vadd.f32 %v4763, %v4771
      %v4805 = vunpack.c.l.bf16 %v370
      %v4806 = vunpack.c.l.bf16 %v371
      %v4807 = vunpack.c.l.bf16 %v372
      %v4808 = vunpack.c.l.bf16 %v373
      %v4809 = vunpack.c.l.bf16 %v374
      %v4810 = vunpack.c.l.bf16 %v375
      %v4811 = vunpack.c.l.bf16 %v376
      %v4812 = vunpack.c.l.bf16 %v377
      %v4813 = vunpack.c.l.bf16 %v378
      %v4814 = vunpack.c.l.bf16 %v379
      %v4815 = vunpack.c.l.bf16 %v380
      %v4816 = vunpack.c.l.bf16 %v381
      %v4817 = vunpack.c.l.bf16 %v382
      %v4818 = vunpack.c.l.bf16 %v383
      %v4819 = vunpack.c.l.bf16 %v384
      %v4820 = vunpack.c.l.bf16 %v385
      %v4821 = vunpack.c.l.bf16 %v386
      %v4822 = vunpack.c.l.bf16 %v387
      %v4823 = vunpack.c.l.bf16 %v388
      %v4824 = vunpack.c.l.bf16 %v389
      %v4825 = vunpack.c.l.bf16 %v390
      %v4826 = vunpack.c.l.bf16 %v391
      %v4827 = vunpack.c.l.bf16 %v392
      %v4828 = vunpack.c.l.bf16 %v393
      %v4829 = vunpack.c.l.bf16 %v394
      %v4830 = vunpack.c.l.bf16 %v395
      %v4831 = vunpack.c.l.bf16 %v396
      %v4832 = vunpack.c.l.bf16 %v397
      %v4833 = vunpack.c.l.bf16 %v398
      %v4834 = vunpack.c.l.bf16 %v399
      %v4835 = vunpack.c.l.bf16 %v400
      %v4836 = vunpack.c.l.bf16 %v401
      %v4837 = vadd.f32 %v4773, %v4805
      %v4838 = vadd.f32 %v4774, %v4806
      %v4839 = vadd.f32 %v4775, %v4807
      %v4840 = vadd.f32 %v4776, %v4808
      %v4841 = vadd.f32 %v4777, %v4809
      %v4842 = vadd.f32 %v4778, %v4810
      %v4843 = vadd.f32 %v4779, %v4811
      %v4844 = vadd.f32 %v4780, %v4812
      %v4845 = vadd.f32 %v4781, %v4813
      %v4846 = vadd.f32 %v4782, %v4814
      %v4847 = vadd.f32 %v4783, %v4815
      %v4848 = vadd.f32 %v4784, %v4816
      %v4849 = vadd.f32 %v4785, %v4817
      %v4850 = vadd.f32 %v4786, %v4818
      %v4851 = vadd.f32 %v4787, %v4819
      %v4852 = vadd.f32 %v4788, %v4820
      %v4853 = vadd.f32 %v4789, %v4821
      %v4854 = vadd.f32 %v4790, %v4822
      %v4855 = vadd.f32 %v4791, %v4823
      %v4856 = vadd.f32 %v4792, %v4824
      %v4857 = vadd.f32 %v4793, %v4825
      %v4858 = vadd.f32 %v4794, %v4826
      %v4859 = vadd.f32 %v4795, %v4827
      %v4860 = vadd.f32 %v4796, %v4828
      %v4861 = vadd.f32 %v4797, %v4829
      %v4862 = vadd.f32 %v4798, %v4830
      %v4863 = vadd.f32 %v4799, %v4831
      %v4864 = vadd.f32 %v4800, %v4832
      %v4865 = vadd.f32 %v4801, %v4833
      %v4866 = vadd.f32 %v4802, %v4834
      %v4867 = vadd.f32 %v4803, %v4835
      %v4868 = vadd.f32 %v4804, %v4836
      %vm4869 = vcmask 31744
      %4870 = vst.msk [vmem:[%s278] sm:$0xff] %vm4869, %v4837
      %4871 = vst.msk [vmem:[%s278 + $0x8] sm:$0xff] %vm4869, %v4838
      %4872 = vst.msk [vmem:[%s278 + $0x10] sm:$0xff] %vm4869, %v4839
      %4873 = vst.msk [vmem:[%s278 + $0x18] sm:$0xff] %vm4869, %v4840
      %4874 = vst.msk [vmem:[%s278 + $0x20] sm:$0xff] %vm4869, %v4841
      %4875 = vst.msk [vmem:[%s278 + $0x28] sm:$0xff] %vm4869, %v4842
      %4876 = vst.msk [vmem:[%s278 + $0x30] sm:$0xff] %vm4869, %v4843
      %4877 = vst.msk [vmem:[%s278 + $0x38] sm:$0xff] %vm4869, %v4844
      %4878 = vst.msk [vmem:[%s278 + $0x40] sm:$0xff] %vm4869, %v4845
      %4879 = vst.msk [vmem:[%s278 + $0x48] sm:$0xff] %vm4869, %v4846
      %4880 = vst.msk [vmem:[%s278 + $0x50] sm:$0xff] %vm4869, %v4847
      %4881 = vst.msk [vmem:[%s278 + $0x58] sm:$0xff] %vm4869, %v4848
      %4882 = vst.msk [vmem:[%s278 + $0x60] sm:$0xff] %vm4869, %v4849
      %4883 = vst.msk [vmem:[%s278 + $0x68] sm:$0xff] %vm4869, %v4850
      %4884 = vst.msk [vmem:[%s278 + $0x70] sm:$0xff] %vm4869, %v4851
      %4885 = vst.msk [vmem:[%s278 + $0x78] sm:$0xff] %vm4869, %v4852
      %4886 = vst.msk [vmem:[%s278 + $0x80] sm:$0xff] %vm4869, %v4853
      %4887 = vst.msk [vmem:[%s278 + $0x88] sm:$0xff] %vm4869, %v4854
      %4888 = vst.msk [vmem:[%s278 + $0x90] sm:$0xff] %vm4869, %v4855
      %4889 = vst.msk [vmem:[%s278 + $0x98] sm:$0xff] %vm4869, %v4856
      %4890 = vst.msk [vmem:[%s278 + $0xa0] sm:$0xff] %vm4869, %v4857
      %4891 = vst.msk [vmem:[%s278 + $0xa8] sm:$0xff] %vm4869, %v4858
      %4892 = vst.msk [vmem:[%s278 + $0xb0] sm:$0xff] %vm4869, %v4859
      %4893 = vst.msk [vmem:[%s278 + $0xb8] sm:$0xff] %vm4869, %v4860
      %4894 = vst.msk [vmem:[%s278 + $0xc0] sm:$0xff] %vm4869, %v4861
      %4895 = vst.msk [vmem:[%s278 + $0xc8] sm:$0xff] %vm4869, %v4862
      %4896 = vst.msk [vmem:[%s278 + $0xd0] sm:$0xff] %vm4869, %v4863
      %4897 = vst.msk [vmem:[%s278 + $0xd8] sm:$0xff] %vm4869, %v4864
      %4898 = vst.msk [vmem:[%s278 + $0xe0] sm:$0xff] %vm4869, %v4865
      %4899 = vst.msk [vmem:[%s278 + $0xe8] sm:$0xff] %vm4869, %v4866
      %4900 = vst.msk [vmem:[%s278 + $0xf0] sm:$0xff] %vm4869, %v4867
      %4901 = vst.msk [vmem:[%s278 + $0xf8] sm:$0xff] %vm4869, %v4868
      %p4902 = scmp.lt.s32.totalorder %s18, 1
      %s4903 = scalar_select %p4902, %s18, 1
      %s4904 = smul.addr %s4903, 32
      %s4905 = smul.addr %s4904, 8
      %s4906 = scalar_lea.vmem %s7, %s4905
      // Predicated region
      $region53: #{inverted_residual.1} parent=47 // pred_check
        %p4907 = pneg %p188
      $region54: #{inverted_residual.1} parent=47 // pred_check_branch
        %4909 = sbr.rel (%p4907) target = $region56
      $region55: #{inverted_residual.1} parent=47 // pred_region
        _
      $region56: #{inverted_residual.1} parent=47 // pred_fallthru
        _
    $region48: #{inverted_residual.1} parent=5 // pred_fallthru
      _
    %p4910 = scmp.le.s32.totalorder 2, %s13
    // Predicated region
    $region57: #{inverted_residual.1} parent=5 // pred_check
      %p4911 = pneg %p4910
    $region58: #{inverted_residual.1} parent=5 // pred_check_branch
      %4913 = sbr.rel (%p4911) target = $region60
    $region59: #{inverted_residual.1} parent=5 // pred_region
      %s4914 = ssub.s32 %s13, 2
      // Predicated region
      $region61: #{inverted_residual.1} parent=59 // pred_check
        %p4915 = pneg %p194
      $region62: #{inverted_residual.1} parent=59 // pred_check_branch
        %4917 = sbr.rel (%p4915) target = $region64
      $region63: #{inverted_residual.1} parent=59 // pred_region
        %p4918 = scmp.lt.s32.totalorder %s19, 1
        %s4919 = scalar_select %p4918, %s19, 1
        %s4920 = smul.addr %s4919, 32
        %s4921 = smul.addr %s4920, 8
        %s4922 = scalar_lea.vmem %s7, %s4921
      $region64: #{inverted_residual.1} parent=59 // pred_fallthru
        _
    $region60: #{inverted_residual.1} parent=5 // pred_fallthru
      _
  $region6: #{inverted_residual.1} parent=0 // loop_footer
    %s17 = sadd.s32 1, %s13
  $region7: #{inverted_residual.1} parent=0 // loop_footer_branch
    %12 = sbr.rel target = $region3
  $region8: #{inverted_residual.1} parent=0 // loop_exit
    _

</llo_original>
